<compile_context>
chip_gen: v5e
topology: v5e:2x2
jax: 0.10.0
libtpu: 0.0.40
codegen_flags: <defaults>
</compile_context>

<pallas_src>
import math

import jax
import jax.numpy as jnp
from jax.experimental import pallas as pl
from jax.experimental.pallas import tpu as pltpu

STYLE_DIM = 512
LIP_DIM = 20
POSE_DIM = 6
ALPHA_DIM = LIP_DIM + POSE_DIM
BATCH = 2
N_BIG_LAYERS = 8          # 4 trunk fc + 2 lip fc + 2 pose fc (all 512x512)
LAYERS_PER_STEP = 4
N_STEPS = N_BIG_LAYERS // LAYERS_PER_STEP   # 2 grid steps


def generator_latent_kernel(
    wa_ref,    # (B, 512) f32, resident
    wat_ref,   # (B, 512) f32, resident
    w_ref,     # (4, 512, 512) bf16, layer-streamed (scale folded, (in, out) layout)
    b_ref,     # (8, 1, 512) f32, resident (all big-layer biases)
    wl_ref,    # (512, 26) bf16, resident: lip head, cols 20:26 are zero
    wp_ref,    # (512, 26) bf16, resident: pose head, cols 0:20 are zero
    bt_ref,    # (1, 26) f32, resident: [lb3 | pb3]
    qt_ref,    # (26, 512) bf16, resident == Q.T
    out_ref,   # (B, 512) f32, resident; written once at the last grid step
    h_sc,      # (B, 512) f32 scratch: shared-trunk activation carried across steps
):
    l = pl.program_id(0)

    def lin(x, wi, bi):
        # x @ W[wi] + b[bi], bf16 operands, f32 accumulation.
        return (jnp.dot(x.astype(jnp.bfloat16), w_ref[wi],
                        preferred_element_type=jnp.float32)
                + b_ref[bi])                                     # (B, 512) f32

    # Step 0: shared trunk, 4 chained layers, seeded with wa_t.
    @pl.when(l == 0)
    def _():
        h = wat_ref[...]
        for i in range(4):
            h = lin(h, i, i)
        h_sc[...] = h

    # Step 1: lip branch (2 layers), pose branch (2 layers), then the fused tail.
    @pl.when(l == 1)
    def _():
        h = h_sc[...]
        lip = h
        for i in range(2):
            lip = lin(lip, i, 4 + i)
        pose = h
        for i in range(2):
            pose = lin(pose, 2 + i, 6 + i)

        # alpha = [lip @ lw3 + lb3 | pose @ pw3 + pb3]  (B, 26), via zero-padded heads.
        alpha = (jnp.dot(lip.astype(jnp.bfloat16), wl_ref[...],
                         preferred_element_type=jnp.float32)
                 + jnp.dot(pose.astype(jnp.bfloat16), wp_ref[...],
                           preferred_element_type=jnp.float32)
                 + bt_ref[...])                                  # (B, 26)

        # Pose_Direction: sum_j diag_embed(alpha)[b, j, :] @ Q.T == alpha @ Q.T
        dirs = jnp.dot(alpha.astype(jnp.bfloat16), qt_ref[...],
                       preferred_element_type=jnp.float32)       # (B, 512)
        out_ref[...] = wa_ref[...] + dirs                        # latent_poseD


def latent_forward(wa, wa_t, kp):
    B = wa.shape[0]

    flops = (2 * B * STYLE_DIM * STYLE_DIM * N_BIG_LAYERS
             + 2 * 2 * B * STYLE_DIM * ALPHA_DIM
             + 2 * B * ALPHA_DIM * STYLE_DIM)
    bytes_accessed = (
        kp["W"].size * 2 + kp["B"].size * 4
        + (kp["wl"].size + kp["wp"].size + kp["qt"].size) * 2
        + kp["bt"].size * 4
        + 3 * B * STYLE_DIM * 4)

    return pl.pallas_call(
        generator_latent_kernel,
        out_shape=jax.ShapeDtypeStruct((B, STYLE_DIM), jnp.float32),
        grid_spec=pltpu.PrefetchScalarGridSpec(
            num_scalar_prefetch=0,
            grid=(N_STEPS,),
            in_specs=[
                pl.BlockSpec((B, STYLE_DIM), lambda l: (0, 0)),                 # wa
                pl.BlockSpec((B, STYLE_DIM), lambda l: (0, 0)),                 # wa_t
                pl.BlockSpec((LAYERS_PER_STEP, STYLE_DIM, STYLE_DIM),
                             lambda l: (l, 0, 0)),                              # W stream
                pl.BlockSpec((N_BIG_LAYERS, 1, STYLE_DIM), lambda l: (0, 0, 0)),  # biases
                pl.BlockSpec((STYLE_DIM, ALPHA_DIM), lambda l: (0, 0)),         # lip head
                pl.BlockSpec((STYLE_DIM, ALPHA_DIM), lambda l: (0, 0)),         # pose head
                pl.BlockSpec((1, ALPHA_DIM), lambda l: (0, 0)),                 # tail bias
                pl.BlockSpec((ALPHA_DIM, STYLE_DIM), lambda l: (0, 0)),         # Q.T
            ],
            out_specs=pl.BlockSpec((B, STYLE_DIM), lambda l: (0, 0)),
            scratch_shapes=[pltpu.VMEM((B, STYLE_DIM), jnp.float32)],
        ),
        compiler_params=pltpu.CompilerParams(
            dimension_semantics=("arbitrary",),
            vmem_limit_bytes=16 * 1024 * 1024,
        ),
        cost_estimate=pl.CostEstimate(flops=flops, transcendentals=0,
                                      bytes_accessed=bytes_accessed),
    )(wa, wa_t, kp["W"], kp["B"], kp["wl"], kp["wp"], kp["bt"], kp["qt"])


def init_params(key):
    """PyTorch-equivalent raw parameters (fp32, (out, in) weights, zero biases)."""
    def randn(k, shape):
        return jax.random.normal(k, shape, dtype=jnp.float32)

    ks = jax.random.split(key, 6)
    fcw = randn(ks[0], (4, STYLE_DIM, STYLE_DIM))
    fcb = jnp.zeros((4, STYLE_DIM), jnp.float32)
    lw = randn(ks[1], (2, STYLE_DIM, STYLE_DIM))
    lb = jnp.zeros((2, STYLE_DIM), jnp.float32)
    lw3 = randn(ks[2], (LIP_DIM, STYLE_DIM))
    lb3 = jnp.zeros((1, LIP_DIM), jnp.float32)
    pw = randn(ks[3], (2, STYLE_DIM, STYLE_DIM))
    pb = jnp.zeros((2, STYLE_DIM), jnp.float32)
    pw3 = randn(ks[4], (POSE_DIM, STYLE_DIM))
    pb3 = jnp.zeros((1, POSE_DIM), jnp.float32)

    # Pose_Direction(lip_dim + pose_dim): weight randn(512, 26); QR done host-side.
    dir_w = randn(ks[5], (STYLE_DIM, ALPHA_DIM)) + 1e-8
    q, _ = jnp.linalg.qr(dir_w)                        # (512, 26), reduced QR
    return dict(fcw=fcw, fcb=fcb, lw=lw, lb=lb, lw3=lw3, lb3=lb3,
                pw=pw, pb=pb, pw3=pw3, pb3=pb3,
                qt=q.T.astype(jnp.float32))            # (26, 512)


def prepare_params(p):
    """Kernel packing: fold EqualLinear scale, transpose to (in, out), pad tail heads, bf16."""
    scale = 1.0 / math.sqrt(STYLE_DIM)

    big_w = jnp.concatenate([p["fcw"], p["lw"], p["pw"]], axis=0)          # (8, out, in)
    big_w = jnp.transpose(big_w * scale, (0, 2, 1)).astype(jnp.bfloat16)   # (8, in, out)
    big_b = jnp.concatenate([p["fcb"], p["lb"], p["pb"]], axis=0)          # (8, 512)
    big_b = big_b.reshape(N_BIG_LAYERS, 1, STYLE_DIM).astype(jnp.float32)  # (8, 1, 512)

    wl = jnp.zeros((STYLE_DIM, ALPHA_DIM), jnp.float32)
    wl = wl.at[:, :LIP_DIM].set((p["lw3"] * scale).T)                      # (512, 26)
    wp = jnp.zeros((STYLE_DIM, ALPHA_DIM), jnp.float32)
    wp = wp.at[:, LIP_DIM:].set((p["pw3"] * scale).T)                      # (512, 26)
    bt = jnp.concatenate([p["lb3"], p["pb3"]], axis=-1)                    # (1, 26)

    return dict(
        W=big_w, B=big_b,
        wl=wl.astype(jnp.bfloat16),
        wp=wp.astype(jnp.bfloat16),
        bt=bt.astype(jnp.float32),
        qt=p["qt"].astype(jnp.bfloat16),               # (26, 512)
    )


def latent_forward_ref(wa, wa_t, kp):
    """Pure-JAX reference using the exact kernel parameter layout/precision."""
    def lin(x, i):
        return (jnp.dot(x.astype(jnp.bfloat16), kp["W"][i],
                        preferred_element_type=jnp.float32) + kp["B"][i, 0])
    h = wa_t
    for i in range(4):
        h = lin(h, i)
    lip = h
    for i in range(4, 6):
        lip = lin(lip, i)
    pose = h
    for i in range(6, 8):
        pose = lin(pose, i)
    alpha = (jnp.dot(lip.astype(jnp.bfloat16), kp["wl"], preferred_element_type=jnp.float32)
             + jnp.dot(pose.astype(jnp.bfloat16), kp["wp"], preferred_element_type=jnp.float32)
             + kp["bt"])
    dirs = jnp.dot(alpha.astype(jnp.bfloat16), kp["qt"], preferred_element_type=jnp.float32)
    return wa + dirs


def latent_forward_spec_ref(wa, wa_t, p):
    """fp32 spec-math reference (PyTorch module semantics)."""
    scale = 1.0 / math.sqrt(STYLE_DIM)
    h = wa_t
    for i in range(4):
        h = h @ (p["fcw"][i] * scale).T + p["fcb"][i]
    lip = h
    for i in range(2):
        lip = lip @ (p["lw"][i] * scale).T + p["lb"][i]
    lip = lip @ (p["lw3"] * scale).T + p["lb3"][0]
    pose = h
    for i in range(2):
        pose = pose @ (p["pw"][i] * scale).T + p["pb"][i]
    pose = pose @ (p["pw3"] * scale).T + p["pb3"][0]
    alpha = jnp.concatenate([lip, pose], axis=-1)      # (B, 26)
    dirs = alpha @ p["qt"]                             # alpha @ Q.T
    return wa + dirs


if __name__ == "__main__":
    key = jax.random.PRNGKey(0)
    k_wa, k_wat, k_p = jax.random.split(key, 3)
    wa = jax.random.normal(k_wa, (BATCH, STYLE_DIM), dtype=jnp.float32)
    wa_t = jax.random.normal(k_wat, (BATCH, STYLE_DIM), dtype=jnp.float32)

    raw = init_params(k_p)
    kp = prepare_params(raw)

    out = jax.block_until_ready(latent_forward(wa, wa_t, kp))
    assert out.shape == (BATCH, STYLE_DIM)

    # Tight check against a reference with identical (bf16-weight) numerics.
    ref = latent_forward_ref(wa, wa_t, kp)
    assert jnp.allclose(out, ref, rtol=2e-3, atol=2e-3), "mismatch vs matched-precision reference"

    # Loose semantic check against the fp32 spec math (bf16 weight rounding tolerance).
    spec = latent_forward_spec_ref(wa, wa_t, raw)
    assert jnp.allclose(out, spec, rtol=1e-1, atol=1e-1), "mismatch vs fp32 spec reference"

    print("KERNEL_OK")
</pallas_src>

<mosaic_0001>
module attributes {stable_mosaic.version = 11 : i64} {
  func.func @generator_latent_kernel(%arg0: i32, %arg1: memref<2x512xf32, #tpu.memory_space<vmem>>, %arg2: memref<2x512xf32, #tpu.memory_space<vmem>>, %arg3: memref<4x512x512xbf16, #tpu.memory_space<vmem>>, %arg4: memref<8x1x512xf32, #tpu.memory_space<vmem>>, %arg5: memref<512x26xbf16, #tpu.memory_space<vmem>>, %arg6: memref<512x26xbf16, #tpu.memory_space<vmem>>, %arg7: memref<1x26xf32, #tpu.memory_space<vmem>>, %arg8: memref<26x512xbf16, #tpu.memory_space<vmem>>, %arg9: memref<2x512xf32, #tpu.memory_space<vmem>>, %arg10: memref<2x512xf32, #tpu.memory_space<vmem>>) attributes {dimension_semantics = [#tpu.dimension_semantics<arbitrary>], iteration_bounds = array<i64: 2>, scalar_prefetch = 0 : i64, scratch_operands = 1 : i64, tpu.core_type = #tpu.core_type<tc>, window_params = [{pipeline_mode = #tpu.pipeline_mode<synchronous>, transform_indices = @transform_0, window_bounds = array<i64: 2, 512>}, {pipeline_mode = #tpu.pipeline_mode<synchronous>, transform_indices = @transform_1, window_bounds = array<i64: 2, 512>}, {transform_indices = @transform_2, window_bounds = array<i64: 4, 512, 512>}, {pipeline_mode = #tpu.pipeline_mode<synchronous>, transform_indices = @transform_3, window_bounds = array<i64: 8, 1, 512>}, {pipeline_mode = #tpu.pipeline_mode<synchronous>, transform_indices = @transform_4, window_bounds = array<i64: 512, 26>}, {pipeline_mode = #tpu.pipeline_mode<synchronous>, transform_indices = @transform_5, window_bounds = array<i64: 512, 26>}, {pipeline_mode = #tpu.pipeline_mode<synchronous>, transform_indices = @transform_6, window_bounds = array<i64: 1, 26>}, {pipeline_mode = #tpu.pipeline_mode<synchronous>, transform_indices = @transform_7, window_bounds = array<i64: 26, 512>}, {pipeline_mode = #tpu.pipeline_mode<synchronous>, transform_indices = @transform_8, window_bounds = array<i64: 2, 512>}]} {
    %c0_i32 = arith.constant 0 : i32
    %0 = arith.cmpi eq, %arg0, %c0_i32 : i32
    %1 = arith.extui %0 : i1 to i32
    %c0_i32_0 = arith.constant 0 : i32
    %2 = arith.cmpi ne, %1, %c0_i32_0 : i32
    scf.if %2 {
      %c0 = arith.constant 0 : index
      %c0_2 = arith.constant 0 : index
      %6 = vector.load %arg2[%c0, %c0_2] : memref<2x512xf32, #tpu.memory_space<vmem>>, vector<2x512xf32>
      %7 = arith.truncf %6 : vector<2x512xf32> to vector<2x512xbf16>
      %c0_3 = arith.constant 0 : index
      %c0_4 = arith.constant 0 : index
      %c0_5 = arith.constant 0 : index
      %8 = vector.load %arg3[%c0_3, %c0_4, %c0_5] : memref<4x512x512xbf16, #tpu.memory_space<vmem>>, vector<1x512x512xbf16>
      %9 = vector.shape_cast %8 : vector<1x512x512xbf16> to vector<512x512xbf16>
      %cst = arith.constant dense<0.000000e+00> : vector<2x512xf32>
      %10 = tpu.matmul %7, %9, %cst {dimension_numbers = #tpu.dot_dimension_numbers<[1], [0], [0], [1], [0, 0, 1, 1], [], []>} : vector<2x512xbf16>, vector<512x512xbf16>, vector<2x512xf32> -> vector<2x512xf32>
      %c0_6 = arith.constant 0 : index
      %c0_7 = arith.constant 0 : index
      %c0_8 = arith.constant 0 : index
      %11 = vector.load %arg4[%c0_6, %c0_7, %c0_8] : memref<8x1x512xf32, #tpu.memory_space<vmem>>, vector<1x1x512xf32>
      %12 = vector.shape_cast %11 : vector<1x1x512xf32> to vector<1x512xf32>
      %13 = vector.broadcast %12 : vector<1x512xf32> to vector<2x512xf32>
      %14 = arith.addf %10, %13 : vector<2x512xf32>
      %15 = arith.truncf %14 : vector<2x512xf32> to vector<2x512xbf16>
      %c1 = arith.constant 1 : index
      %c0_9 = arith.constant 0 : index
      %c0_10 = arith.constant 0 : index
      %16 = vector.load %arg3[%c1, %c0_9, %c0_10] : memref<4x512x512xbf16, #tpu.memory_space<vmem>>, vector<1x512x512xbf16>
      %17 = vector.shape_cast %16 : vector<1x512x512xbf16> to vector<512x512xbf16>
      %cst_11 = arith.constant dense<0.000000e+00> : vector<2x512xf32>
      %18 = tpu.matmul %15, %17, %cst_11 {dimension_numbers = #tpu.dot_dimension_numbers<[1], [0], [0], [1], [0, 0, 1, 1], [], []>} : vector<2x512xbf16>, vector<512x512xbf16>, vector<2x512xf32> -> vector<2x512xf32>
      %c1_12 = arith.constant 1 : index
      %c0_13 = arith.constant 0 : index
      %c0_14 = arith.constant 0 : index
      %19 = vector.load %arg4[%c1_12, %c0_13, %c0_14] : memref<8x1x512xf32, #tpu.memory_space<vmem>>, vector<1x1x512xf32>
      %20 = vector.shape_cast %19 : vector<1x1x512xf32> to vector<1x512xf32>
      %21 = vector.broadcast %20 : vector<1x512xf32> to vector<2x512xf32>
      %22 = arith.addf %18, %21 : vector<2x512xf32>
      %23 = arith.truncf %22 : vector<2x512xf32> to vector<2x512xbf16>
      %c2 = arith.constant 2 : index
      %c0_15 = arith.constant 0 : index
      %c0_16 = arith.constant 0 : index
      %24 = vector.load %arg3[%c2, %c0_15, %c0_16] : memref<4x512x512xbf16, #tpu.memory_space<vmem>>, vector<1x512x512xbf16>
      %25 = vector.shape_cast %24 : vector<1x512x512xbf16> to vector<512x512xbf16>
      %cst_17 = arith.constant dense<0.000000e+00> : vector<2x512xf32>
      %26 = tpu.matmul %23, %25, %cst_17 {dimension_numbers = #tpu.dot_dimension_numbers<[1], [0], [0], [1], [0, 0, 1, 1], [], []>} : vector<2x512xbf16>, vector<512x512xbf16>, vector<2x512xf32> -> vector<2x512xf32>
      %c2_18 = arith.constant 2 : index
      %c0_19 = arith.constant 0 : index
      %c0_20 = arith.constant 0 : index
      %27 = vector.load %arg4[%c2_18, %c0_19, %c0_20] : memref<8x1x512xf32, #tpu.memory_space<vmem>>, vector<1x1x512xf32>
      %28 = vector.shape_cast %27 : vector<1x1x512xf32> to vector<1x512xf32>
      %29 = vector.broadcast %28 : vector<1x512xf32> to vector<2x512xf32>
      %30 = arith.addf %26, %29 : vector<2x512xf32>
      %31 = arith.truncf %30 : vector<2x512xf32> to vector<2x512xbf16>
      %c3 = arith.constant 3 : index
      %c0_21 = arith.constant 0 : index
      %c0_22 = arith.constant 0 : index
      %32 = vector.load %arg3[%c3, %c0_21, %c0_22] : memref<4x512x512xbf16, #tpu.memory_space<vmem>>, vector<1x512x512xbf16>
      %33 = vector.shape_cast %32 : vector<1x512x512xbf16> to vector<512x512xbf16>
      %cst_23 = arith.constant dense<0.000000e+00> : vector<2x512xf32>
      %34 = tpu.matmul %31, %33, %cst_23 {dimension_numbers = #tpu.dot_dimension_numbers<[1], [0], [0], [1], [0, 0, 1, 1], [], []>} : vector<2x512xbf16>, vector<512x512xbf16>, vector<2x512xf32> -> vector<2x512xf32>
      %c3_24 = arith.constant 3 : index
      %c0_25 = arith.constant 0 : index
      %c0_26 = arith.constant 0 : index
      %35 = vector.load %arg4[%c3_24, %c0_25, %c0_26] : memref<8x1x512xf32, #tpu.memory_space<vmem>>, vector<1x1x512xf32>
      %36 = vector.shape_cast %35 : vector<1x1x512xf32> to vector<1x512xf32>
      %37 = vector.broadcast %36 : vector<1x512xf32> to vector<2x512xf32>
      %38 = arith.addf %34, %37 : vector<2x512xf32>
      %c0_27 = arith.constant 0 : index
      %c0_28 = arith.constant 0 : index
      %39 = vector.load %arg10[%c0_27, %c0_28] : memref<2x512xf32, #tpu.memory_space<vmem>>, vector<2x512xf32>
      tpu.vector_store %arg10[%c0_27, %c0_28], %38 {strides = array<i32>} : memref<2x512xf32, #tpu.memory_space<vmem>>, vector<2x512xf32>,
    } else {
    }
    %c1_i32 = arith.constant 1 : i32
    %3 = arith.cmpi eq, %arg0, %c1_i32 : i32
    %4 = arith.extui %3 : i1 to i32
    %c0_i32_1 = arith.constant 0 : i32
    %5 = arith.cmpi ne, %4, %c0_i32_1 : i32
    scf.if %5 {
      %c0 = arith.constant 0 : index
      %c0_2 = arith.constant 0 : index
      %6 = vector.load %arg10[%c0, %c0_2] : memref<2x512xf32, #tpu.memory_space<vmem>>, vector<2x512xf32>
      %7 = arith.truncf %6 : vector<2x512xf32> to vector<2x512xbf16>
      %c0_3 = arith.constant 0 : index
      %c0_4 = arith.constant 0 : index
      %c0_5 = arith.constant 0 : index
      %8 = vector.load %arg3[%c0_3, %c0_4, %c0_5] : memref<4x512x512xbf16, #tpu.memory_space<vmem>>, vector<1x512x512xbf16>
      %9 = vector.shape_cast %8 : vector<1x512x512xbf16> to vector<512x512xbf16>
      %cst = arith.constant dense<0.000000e+00> : vector<2x512xf32>
      %10 = tpu.matmul %7, %9, %cst {dimension_numbers = #tpu.dot_dimension_numbers<[1], [0], [0], [1], [0, 0, 1, 1], [], []>} : vector<2x512xbf16>, vector<512x512xbf16>, vector<2x512xf32> -> vector<2x512xf32>
      %c4 = arith.constant 4 : index
      %c0_6 = arith.constant 0 : index
      %c0_7 = arith.constant 0 : index
      %11 = vector.load %arg4[%c4, %c0_6, %c0_7] : memref<8x1x512xf32, #tpu.memory_space<vmem>>, vector<1x1x512xf32>
      %12 = vector.shape_cast %11 : vector<1x1x512xf32> to vector<1x512xf32>
      %13 = vector.broadcast %12 : vector<1x512xf32> to vector<2x512xf32>
      %14 = arith.addf %10, %13 : vector<2x512xf32>
      %15 = arith.truncf %14 : vector<2x512xf32> to vector<2x512xbf16>
      %c1 = arith.constant 1 : index
      %c0_8 = arith.constant 0 : index
      %c0_9 = arith.constant 0 : index
      %16 = vector.load %arg3[%c1, %c0_8, %c0_9] : memref<4x512x512xbf16, #tpu.memory_space<vmem>>, vector<1x512x512xbf16>
      %17 = vector.shape_cast %16 : vector<1x512x512xbf16> to vector<512x512xbf16>
      %cst_10 = arith.constant dense<0.000000e+00> : vector<2x512xf32>
      %18 = tpu.matmul %15, %17, %cst_10 {dimension_numbers = #tpu.dot_dimension_numbers<[1], [0], [0], [1], [0, 0, 1, 1], [], []>} : vector<2x512xbf16>, vector<512x512xbf16>, vector<2x512xf32> -> vector<2x512xf32>
      %c5 = arith.constant 5 : index
      %c0_11 = arith.constant 0 : index
      %c0_12 = arith.constant 0 : index
      %19 = vector.load %arg4[%c5, %c0_11, %c0_12] : memref<8x1x512xf32, #tpu.memory_space<vmem>>, vector<1x1x512xf32>
      %20 = vector.shape_cast %19 : vector<1x1x512xf32> to vector<1x512xf32>
      %21 = vector.broadcast %20 : vector<1x512xf32> to vector<2x512xf32>
      %22 = arith.addf %18, %21 : vector<2x512xf32>
      %23 = arith.truncf %6 : vector<2x512xf32> to vector<2x512xbf16>
      %c2 = arith.constant 2 : index
      %c0_13 = arith.constant 0 : index
      %c0_14 = arith.constant 0 : index
      %24 = vector.load %arg3[%c2, %c0_13, %c0_14] : memref<4x512x512xbf16, #tpu.memory_space<vmem>>, vector<1x512x512xbf16>
      %25 = vector.shape_cast %24 : vector<1x512x512xbf16> to vector<512x512xbf16>
      %cst_15 = arith.constant dense<0.000000e+00> : vector<2x512xf32>
      %26 = tpu.matmul %23, %25, %cst_15 {dimension_numbers = #tpu.dot_dimension_numbers<[1], [0], [0], [1], [0, 0, 1, 1], [], []>} : vector<2x512xbf16>, vector<512x512xbf16>, vector<2x512xf32> -> vector<2x512xf32>
      %c6 = arith.constant 6 : index
      %c0_16 = arith.constant 0 : index
      %c0_17 = arith.constant 0 : index
      %27 = vector.load %arg4[%c6, %c0_16, %c0_17] : memref<8x1x512xf32, #tpu.memory_space<vmem>>, vector<1x1x512xf32>
      %28 = vector.shape_cast %27 : vector<1x1x512xf32> to vector<1x512xf32>
      %29 = vector.broadcast %28 : vector<1x512xf32> to vector<2x512xf32>
      %30 = arith.addf %26, %29 : vector<2x512xf32>
      %31 = arith.truncf %30 : vector<2x512xf32> to vector<2x512xbf16>
      %c3 = arith.constant 3 : index
      %c0_18 = arith.constant 0 : index
      %c0_19 = arith.constant 0 : index
      %32 = vector.load %arg3[%c3, %c0_18, %c0_19] : memref<4x512x512xbf16, #tpu.memory_space<vmem>>, vector<1x512x512xbf16>
      %33 = vector.shape_cast %32 : vector<1x512x512xbf16> to vector<512x512xbf16>
      %cst_20 = arith.constant dense<0.000000e+00> : vector<2x512xf32>
      %34 = tpu.matmul %31, %33, %cst_20 {dimension_numbers = #tpu.dot_dimension_numbers<[1], [0], [0], [1], [0, 0, 1, 1], [], []>} : vector<2x512xbf16>, vector<512x512xbf16>, vector<2x512xf32> -> vector<2x512xf32>
      %c7 = arith.constant 7 : index
      %c0_21 = arith.constant 0 : index
      %c0_22 = arith.constant 0 : index
      %35 = vector.load %arg4[%c7, %c0_21, %c0_22] : memref<8x1x512xf32, #tpu.memory_space<vmem>>, vector<1x1x512xf32>
      %36 = vector.shape_cast %35 : vector<1x1x512xf32> to vector<1x512xf32>
      %37 = vector.broadcast %36 : vector<1x512xf32> to vector<2x512xf32>
      %38 = arith.addf %34, %37 : vector<2x512xf32>
      %39 = arith.truncf %22 : vector<2x512xf32> to vector<2x512xbf16>
      %c0_23 = arith.constant 0 : index
      %c0_24 = arith.constant 0 : index
      %40 = vector.load %arg5[%c0_23, %c0_24] : memref<512x26xbf16, #tpu.memory_space<vmem>>, vector<512x26xbf16>
      %cst_25 = arith.constant dense<0.000000e+00> : vector<2x26xf32>
      %41 = tpu.matmul %39, %40, %cst_25 {dimension_numbers = #tpu.dot_dimension_numbers<[1], [0], [0], [1], [0, 0, 1, 1], [], []>} : vector<2x512xbf16>, vector<512x26xbf16>, vector<2x26xf32> -> vector<2x26xf32>
      %42 = arith.truncf %38 : vector<2x512xf32> to vector<2x512xbf16>
      %c0_26 = arith.constant 0 : index
      %c0_27 = arith.constant 0 : index
      %43 = vector.load %arg6[%c0_26, %c0_27] : memref<512x26xbf16, #tpu.memory_space<vmem>>, vector<512x26xbf16>
      %cst_28 = arith.constant dense<0.000000e+00> : vector<2x26xf32>
      %44 = tpu.matmul %42, %43, %cst_28 {dimension_numbers = #tpu.dot_dimension_numbers<[1], [0], [0], [1], [0, 0, 1, 1], [], []>} : vector<2x512xbf16>, vector<512x26xbf16>, vector<2x26xf32> -> vector<2x26xf32>
      %45 = arith.addf %41, %44 : vector<2x26xf32>
      %c0_29 = arith.constant 0 : index
      %c0_30 = arith.constant 0 : index
      %46 = vector.load %arg7[%c0_29, %c0_30] : memref<1x26xf32, #tpu.memory_space<vmem>>, vector<1x26xf32>
      %47 = vector.broadcast %46 : vector<1x26xf32> to vector<2x26xf32>
      %48 = arith.addf %45, %47 : vector<2x26xf32>
      %49 = arith.truncf %48 : vector<2x26xf32> to vector<2x26xbf16>
      %c0_31 = arith.constant 0 : index
      %c0_32 = arith.constant 0 : index
      %50 = vector.load %arg8[%c0_31, %c0_32] : memref<26x512xbf16, #tpu.memory_space<vmem>>, vector<26x512xbf16>
      %cst_33 = arith.constant dense<0.000000e+00> : vector<2x512xf32>
      %51 = tpu.matmul %49, %50, %cst_33 {dimension_numbers = #tpu.dot_dimension_numbers<[1], [0], [0], [1], [0, 0, 1, 1], [], []>} : vector<2x26xbf16>, vector<26x512xbf16>, vector<2x512xf32> -> vector<2x512xf32>
      %c0_34 = arith.constant 0 : index
      %c0_35 = arith.constant 0 : index
      %52 = vector.load %arg1[%c0_34, %c0_35] : memref<2x512xf32, #tpu.memory_space<vmem>>, vector<2x512xf32>
      %53 = arith.addf %52, %51 : vector<2x512xf32>
      %c0_36 = arith.constant 0 : index
      %c0_37 = arith.constant 0 : index
      %54 = vector.load %arg9[%c0_36, %c0_37] : memref<2x512xf32, #tpu.memory_space<vmem>>, vector<2x512xf32>
      tpu.vector_store %arg9[%c0_36, %c0_37], %53 {strides = array<i32>} : memref<2x512xf32, #tpu.memory_space<vmem>>, vector<2x512xf32>,
    } else {
    }
    return
  }
  func.func @transform_0(%arg0: i32) -> (i32, i32) {
    %c0_i32 = arith.constant 0 : i32
    %c0_i32_0 = arith.constant 0 : i32
    %c0_i32_1 = arith.constant 0 : i32
    return %c0_i32, %c0_i32_0 : i32, i32
  }
  func.func @transform_1(%arg0: i32) -> (i32, i32) {
    %c0_i32 = arith.constant 0 : i32
    %c0_i32_0 = arith.constant 0 : i32
    %c0_i32_1 = arith.constant 0 : i32
    return %c0_i32, %c0_i32_0 : i32, i32
  }
  func.func @transform_2(%arg0: i32) -> (i32, i32, i32) {
    %c0_i32 = arith.constant 0 : i32
    %c0_i32_0 = arith.constant 0 : i32
    %c0_i32_1 = arith.constant 0 : i32
    return %arg0, %c0_i32, %c0_i32_0 : i32, i32, i32
  }
  func.func @transform_3(%arg0: i32) -> (i32, i32, i32) {
    %c0_i32 = arith.constant 0 : i32
    %c0_i32_0 = arith.constant 0 : i32
    %c0_i32_1 = arith.constant 0 : i32
    %c0_i32_2 = arith.constant 0 : i32
    return %c0_i32, %c0_i32_0, %c0_i32_1 : i32, i32, i32
  }
  func.func @transform_4(%arg0: i32) -> (i32, i32) {
    %c0_i32 = arith.constant 0 : i32
    %c0_i32_0 = arith.constant 0 : i32
    %c0_i32_1 = arith.constant 0 : i32
    return %c0_i32, %c0_i32_0 : i32, i32
  }
  func.func @transform_5(%arg0: i32) -> (i32, i32) {
    %c0_i32 = arith.constant 0 : i32
    %c0_i32_0 = arith.constant 0 : i32
    %c0_i32_1 = arith.constant 0 : i32
    return %c0_i32, %c0_i32_0 : i32, i32
  }
  func.func @transform_6(%arg0: i32) -> (i32, i32) {
    %c0_i32 = arith.constant 0 : i32
    %c0_i32_0 = arith.constant 0 : i32
    %c0_i32_1 = arith.constant 0 : i32
    return %c0_i32, %c0_i32_0 : i32, i32
  }
  func.func @transform_7(%arg0: i32) -> (i32, i32) {
    %c0_i32 = arith.constant 0 : i32
    %c0_i32_0 = arith.constant 0 : i32
    %c0_i32_1 = arith.constant 0 : i32
    return %c0_i32, %c0_i32_0 : i32, i32
  }
  func.func @transform_8(%arg0: i32) -> (i32, i32) {
    %c0_i32 = arith.constant 0 : i32
    %c0_i32_0 = arith.constant 0 : i32
    %c0_i32_1 = arith.constant 0 : i32
    return %c0_i32, %c0_i32_0 : i32, i32
  }
}

</mosaic_0001>

<llo_original>
// kernel: tpu_custom_call.1
$region0: #{tpu_custom_call.1}
  #allocation0 [shape = 'u32[]', space=smem, size = 0x4, offset = 0x4, fixed_abs, tag = 'smem constant byte address 0x4 - core index']
  #allocation1 [shape = 'u32[72,128]{1,0:T(1,128)}', space=vmem, size = 0x9000, scoped, tag = 'internal scratch']
  #allocation2 [shape = 'f32[2,512]{1,0:T(2,128)}', space=vmem, size = 0x1000, scoped, tag = 'scratch operand']
  %s0 = inlined_call_operand.hbm [shape: f32[2,512], index: 0, kind: input, shape index: {}]
  %s1 = inlined_call_operand.hbm [shape: f32[2,512], index: 1, kind: input, shape index: {}]
  %s2 = inlined_call_operand.hbm [shape: bf16[8,512,512], index: 2, kind: input, shape index: {}]
  %s3 = inlined_call_operand.hbm [shape: f32[8,1,512], index: 3, kind: input, shape index: {}]
  %s4 = inlined_call_operand.vmem [shape: bf16[512,26], index: 4, kind: input, shape index: {}]
  %s5 = inlined_call_operand.vmem [shape: bf16[512,26], index: 5, kind: input, shape index: {}]
  %s6 = inlined_call_operand.hbm [shape: f32[1,26], index: 6, kind: input, shape index: {}]
  %s7 = inlined_call_operand.hbm [shape: bf16[26,512], index: 7, kind: input, shape index: {}]
  %s8 = inlined_call_operand.hbm [shape: f32[2,512], index: 8, kind: output, shape index: {}]
  %s9 = sld [smem:[#allocation0]]
  $region97: #{tpu_custom_call.1} parent=0
    _
  %s11 = ssub.s32 1, %s9
  %s12 = scalar_select 0, %s11, %s9
  $region1: #{tpu_custom_call.1} parent=0
    #allocation3 [shape = 'u8[4096]{0}', space=vmem, size = 0x1000, scoped, tag = 'input window, operand 0, single buffered']
    #allocation4 [shape = 's32[2]{0}', space=sflag, size = 0x8, scoped, tag = 'scoped memory for tpu_custom_call.1']
    #allocation5 [shape = 's32[2]{0}', space=sflag, size = 0x8, scoped, tag = 'scoped memory for tpu_custom_call.1']
    #allocation6 [shape = 'u8[4096]{0}', space=vmem, size = 0x1000, scoped, tag = 'input window, operand 1, single buffered']
    #allocation7 [shape = 's32[1]{0}', space=sflag, size = 0x4, scoped, tag = 'scoped memory for tpu_custom_call.1']
    #allocation8 [shape = 'u8[4194304]{0}', space=vmem, size = 0x400000, scoped, tag = 'input window, operand 2']
    #allocation9 [shape = 'u8[16384]{0}', space=vmem, size = 0x4000, scoped, tag = 'input window, operand 3, single buffered']
    #allocation10 [shape = 'u8[512]{0}', space=vmem, size = 0x400, scoped, tag = 'input window, operand 6, single buffered']
    #allocation11 [shape = 's32[1]{0}', space=sflag, size = 0x4, scoped, tag = 'scoped memory for tpu_custom_call.1']
    #allocation12 [shape = 'u8[32768]{0}', space=vmem, size = 0x8000, scoped, tag = 'input window, operand 7, single buffered']
    #allocation13 [shape = 'u8[4096]{0}', space=vmem, size = 0x1000, scoped, tag = 'output window, operand 0, single buffered']
    %13 = vsyncpa [#allocation4], 0
    %14 = vsyncpa [#allocation7], 0
    %15 = vsyncpa [#allocation11], 0
    %16 = vsyncpa [#allocation5], 0
    loop: start=0, step=1, limit=4
    $region2: #{tpu_custom_call.1} parent=1 // loop_pre_header
      _
    $region3: #{tpu_custom_call.1} parent=1 // loop_header
      %s18 = sphi 0, %s22
      %p19 = scmp.ge.s32.totalorder %s18, 4
      %s26 = sphi 0, %s26
      %s28 = sphi 0, %s26
      %s29 = sphi 0, %s28
      %s43 = sphi 0, %s29
      %s47 = sphi 0, %s47
      %s49 = sphi 0, %s47
      %s50 = sphi 0, %s49
      %s64 = sphi 0, %s50
      %s70 = sphi 0, %s72
      %s73 = sphi 0, %s70
      %s74 = sphi 0, %s73
      %s90 = sphi 0, %s74
      %s94 = sphi 0, %s94
      %s96 = sphi 0, %s94
      %s97 = sphi 0, %s96
      %s111 = sphi 0, %s97
      %s115 = sphi 0, %s115
      %s117 = sphi 0, %s115
      %s118 = sphi 0, %s117
      %s132 = sphi 0, %s118
      %s136 = sphi 0, %s136
      %s138 = sphi 0, %s136
      %s139 = sphi 0, %s138
      %s153 = sphi 0, %s139
      %s157 = sphi 0, %s157
      %s159 = sphi 0, %s157
      %s160 = sphi 0, %s159
      %s174 = sphi 0, %s160
      %s178 = sphi 0, %s178
      %s180 = sphi 0, %s178
      %s181 = sphi 0, %s180
      %s195 = sphi 0, %s181
      %s199 = sphi 0, %s199
      %s201 = sphi 0, %s199
      %s202 = sphi 0, %s201
      %s216 = sphi 0, %s202
    $region4: #{tpu_custom_call.1} parent=1 // loop_header_branch
      %21 = sbr.rel (%p19) target = $region8
    $region5: #{tpu_custom_call.1} parent=1 // loop_body
      %s23 = ssub.s32 %s18, 1
      %s24 = ssub.s32 %s18, 2
      %s25 = sadd.s32 %s18, 1
      %s27 = sadd.s32 %s26, 1
      %p30 = scmp.eq.s32.totalorder %s18, 1
      %p31 = scmp.ne.s32.totalorder %s26, %s28
      %p32 = scmp.eq.s32.totalorder %s18, 0
      %p33 = por %p31, %p32
      %p34 = scmp.ne.s32.totalorder %s26, %s28
      %p35 = scmp.eq.s32.totalorder %s23, 1
      %p36 = por %p34, %p35
      %p37 = scmp.ne.s32.totalorder %s28, %s29
      %p38 = scmp.eq.s32.totalorder %s23, 0
      %p39 = por %p37, %p38
      %p40 = scmp.ne.s32.totalorder %s28, %s29
      %p41 = scmp.eq.s32.totalorder %s24, 1
      %p42 = por %p40, %p41
      %p44 = scmp.ne.s32.totalorder %s29, %s43
      %p45 = scmp.eq.s32.totalorder %s24, 0
      %p46 = por %p44, %p45
      %s48 = sadd.s32 %s47, 1
      %p51 = scmp.eq.s32.totalorder %s18, 1
      %p52 = scmp.ne.s32.totalorder %s47, %s49
      %p53 = scmp.eq.s32.totalorder %s18, 0
      %p54 = por %p52, %p53
      %p55 = scmp.ne.s32.totalorder %s47, %s49
      %p56 = scmp.eq.s32.totalorder %s23, 1
      %p57 = por %p55, %p56
      %p58 = scmp.ne.s32.totalorder %s49, %s50
      %p59 = scmp.eq.s32.totalorder %s23, 0
      %p60 = por %p58, %p59
      %p61 = scmp.ne.s32.totalorder %s49, %s50
      %p62 = scmp.eq.s32.totalorder %s24, 1
      %p63 = por %p61, %p62
      %p65 = scmp.ne.s32.totalorder %s50, %s64
      %p66 = scmp.eq.s32.totalorder %s24, 0
      %p67 = por %p65, %p66
      %s68 = ssub.s32 %s18, %s25
      %p69 = scmp.eq.s32.totalorder %s68, 0
      %s71 = sadd.s32 %s70, 1
      %s72 = scalar_select %p69, %s70, %s71
      %p75 = pneg %p69
      %p76 = scmp.eq.s32.totalorder %s18, 1
      %p77 = por %p75, %p76
      %p78 = scmp.ne.s32.totalorder %s70, %s73
      %p79 = scmp.eq.s32.totalorder %s18, 0
      %p80 = por %p78, %p79
      %p81 = scmp.ne.s32.totalorder %s70, %s73
      %p82 = scmp.eq.s32.totalorder %s23, 1
      %p83 = por %p81, %p82
      %p84 = scmp.ne.s32.totalorder %s73, %s74
      %p85 = scmp.eq.s32.totalorder %s23, 0
      %p86 = por %p84, %p85
      %p87 = scmp.ne.s32.totalorder %s73, %s74
      %p88 = scmp.eq.s32.totalorder %s24, 1
      %p89 = por %p87, %p88
      %p91 = scmp.ne.s32.totalorder %s74, %s90
      %p92 = scmp.eq.s32.totalorder %s24, 0
      %p93 = por %p91, %p92
      %s95 = sadd.s32 %s94, 1
      %p98 = scmp.eq.s32.totalorder %s18, 1
      %p99 = scmp.ne.s32.totalorder %s94, %s96
      %p100 = scmp.eq.s32.totalorder %s18, 0
      %p101 = por %p99, %p100
      %p102 = scmp.ne.s32.totalorder %s94, %s96
      %p103 = scmp.eq.s32.totalorder %s23, 1
      %p104 = por %p102, %p103
      %p105 = scmp.ne.s32.totalorder %s96, %s97
      %p106 = scmp.eq.s32.totalorder %s23, 0
      %p107 = por %p105, %p106
      %p108 = scmp.ne.s32.totalorder %s96, %s97
      %p109 = scmp.eq.s32.totalorder %s24, 1
      %p110 = por %p108, %p109
      %p112 = scmp.ne.s32.totalorder %s97, %s111
      %p113 = scmp.eq.s32.totalorder %s24, 0
      %p114 = por %p112, %p113
      %s116 = sadd.s32 %s115, 1
      %p119 = scmp.eq.s32.totalorder %s18, 1
      %p120 = scmp.ne.s32.totalorder %s115, %s117
      %p121 = scmp.eq.s32.totalorder %s18, 0
      %p122 = por %p120, %p121
      %p123 = scmp.ne.s32.totalorder %s115, %s117
      %p124 = scmp.eq.s32.totalorder %s23, 1
      %p125 = por %p123, %p124
      %p126 = scmp.ne.s32.totalorder %s117, %s118
      %p127 = scmp.eq.s32.totalorder %s23, 0
      %p128 = por %p126, %p127
      %p129 = scmp.ne.s32.totalorder %s117, %s118
      %p130 = scmp.eq.s32.totalorder %s24, 1
      %p131 = por %p129, %p130
      %p133 = scmp.ne.s32.totalorder %s118, %s132
      %p134 = scmp.eq.s32.totalorder %s24, 0
      %p135 = por %p133, %p134
      %s137 = sadd.s32 %s136, 1
      %p140 = scmp.eq.s32.totalorder %s18, 1
      %p141 = scmp.ne.s32.totalorder %s136, %s138
      %p142 = scmp.eq.s32.totalorder %s18, 0
      %p143 = por %p141, %p142
      %p144 = scmp.ne.s32.totalorder %s136, %s138
      %p145 = scmp.eq.s32.totalorder %s23, 1
      %p146 = por %p144, %p145
      %p147 = scmp.ne.s32.totalorder %s138, %s139
      %p148 = scmp.eq.s32.totalorder %s23, 0
      %p149 = por %p147, %p148
      %p150 = scmp.ne.s32.totalorder %s138, %s139
      %p151 = scmp.eq.s32.totalorder %s24, 1
      %p152 = por %p150, %p151
      %p154 = scmp.ne.s32.totalorder %s139, %s153
      %p155 = scmp.eq.s32.totalorder %s24, 0
      %p156 = por %p154, %p155
      %s158 = sadd.s32 %s157, 1
      %p161 = scmp.eq.s32.totalorder %s18, 1
      %p162 = scmp.ne.s32.totalorder %s157, %s159
      %p163 = scmp.eq.s32.totalorder %s18, 0
      %p164 = por %p162, %p163
      %p165 = scmp.ne.s32.totalorder %s157, %s159
      %p166 = scmp.eq.s32.totalorder %s23, 1
      %p167 = por %p165, %p166
      %p168 = scmp.ne.s32.totalorder %s159, %s160
      %p169 = scmp.eq.s32.totalorder %s23, 0
      %p170 = por %p168, %p169
      %p171 = scmp.ne.s32.totalorder %s159, %s160
      %p172 = scmp.eq.s32.totalorder %s24, 1
      %p173 = por %p171, %p172
      %p175 = scmp.ne.s32.totalorder %s160, %s174
      %p176 = scmp.eq.s32.totalorder %s24, 0
      %p177 = por %p175, %p176
      %s179 = sadd.s32 %s178, 1
      %p182 = scmp.eq.s32.totalorder %s18, 1
      %p183 = scmp.ne.s32.totalorder %s178, %s180
      %p184 = scmp.eq.s32.totalorder %s18, 0
      %p185 = por %p183, %p184
      %p186 = scmp.ne.s32.totalorder %s178, %s180
      %p187 = scmp.eq.s32.totalorder %s23, 1
      %p188 = por %p186, %p187
      %p189 = scmp.ne.s32.totalorder %s180, %s181
      %p190 = scmp.eq.s32.totalorder %s23, 0
      %p191 = por %p189, %p190
      %p192 = scmp.ne.s32.totalorder %s180, %s181
      %p193 = scmp.eq.s32.totalorder %s24, 1
      %p194 = por %p192, %p193
      %p196 = scmp.ne.s32.totalorder %s181, %s195
      %p197 = scmp.eq.s32.totalorder %s24, 0
      %p198 = por %p196, %p197
      %s200 = sadd.s32 %s199, 1
      %p203 = scmp.eq.s32.totalorder %s18, 1
      %p204 = scmp.ne.s32.totalorder %s199, %s201
      %p205 = scmp.eq.s32.totalorder %s18, 0
      %p206 = por %p204, %p205
      %p207 = scmp.ne.s32.totalorder %s199, %s201
      %p208 = scmp.eq.s32.totalorder %s23, 1
      %p209 = por %p207, %p208
      %p210 = scmp.ne.s32.totalorder %s201, %s202
      %p211 = scmp.eq.s32.totalorder %s23, 0
      %p212 = por %p210, %p211
      %p213 = scmp.ne.s32.totalorder %s201, %s202
      %p214 = scmp.eq.s32.totalorder %s24, 1
      %p215 = por %p213, %p214
      %p217 = scmp.ne.s32.totalorder %s202, %s216
      %p218 = scmp.eq.s32.totalorder %s24, 0
      %p219 = por %p217, %p218
      %p220 = scmp.le.s32.totalorder 1, %s18
      %p221 = scmp.lt.s32.totalorder %s18, 3
      %p222 = pnand %p220, %p221
      %p223 = pneg %p222
      // Predicated region
      $region9: #{tpu_custom_call.1} parent=5 // pred_check
        _
      $region10: #{tpu_custom_call.1} parent=5 // pred_check_branch
        %225 = sbr.rel (%p222) target = $region12
      $region11: #{tpu_custom_call.1} parent=5 // pred_region
        %s226 = ssub.s32 %s18, 1
        // Predicated region
        $region13: #{tpu_custom_call.1} parent=11 // pred_check
          %p227 = pneg %p39
        $region14: #{tpu_custom_call.1} parent=11 // pred_check_branch
          %229 = sbr.rel (%p227) target = $region16
        $region15: #{tpu_custom_call.1} parent=11 // pred_region
          %231 = vsyncadd [#allocation4], 0
          %s233 = sshll.u32 %s0, 4
          %s234 = int_to_ptr.hbm [resolvable:$true] %s233
          %s235 = sshll.u32 [#allocation3], 4
          %s236 = int_to_ptr.vmem [resolvable:$true] %s235
          %238 = dma.hbm_to_vmem [thread:$0]  %s234, 128, %s236, [#allocation4]
        $region16: #{tpu_custom_call.1} parent=11 // pred_fallthru
          _
        // Predicated region
        $region17: #{tpu_custom_call.1} parent=11 // pred_check
          %p239 = pneg %p60
        $region18: #{tpu_custom_call.1} parent=11 // pred_check_branch
          %241 = sbr.rel (%p239) target = $region20
        $region19: #{tpu_custom_call.1} parent=11 // pred_region
          %243 = vsyncadd [#allocation7], 0
          %s245 = sshll.u32 %s1, 4
          %s246 = int_to_ptr.hbm [resolvable:$true] %s245
          %s247 = sshll.u32 [#allocation6], 4
          %s248 = int_to_ptr.vmem [resolvable:$true] %s247
          %250 = dma.hbm_to_vmem [thread:$0]  %s246, 128, %s248, [#allocation7]
        $region20: #{tpu_custom_call.1} parent=11 // pred_fallthru
          _
        // Predicated region
        $region21: #{tpu_custom_call.1} parent=11 // pred_check
          %p251 = pneg %p107
        $region22: #{tpu_custom_call.1} parent=11 // pred_check_branch
          %253 = sbr.rel (%p251) target = $region24
        $region23: #{tpu_custom_call.1} parent=11 // pred_region
          %255 = vsyncadd [#allocation7], 0
          %s256 = sshll.u32 %s3, 4
          %s257 = int_to_ptr.hbm [resolvable:$true] %s256
          %s258 = sshll.u32 [#allocation9], 4
          %s259 = int_to_ptr.vmem [resolvable:$true] %s258
          %264 = dma.hbm_to_vmem [thread:$0]  %s257, 512, %s259, [#allocation7], 64, 64, 4
        $region24: #{tpu_custom_call.1} parent=11 // pred_fallthru
          _
        // Predicated region
        $region25: #{tpu_custom_call.1} parent=11 // pred_check
          %p265 = pneg %p128
        $region26: #{tpu_custom_call.1} parent=11 // pred_check_branch
          %267 = sbr.rel (%p265) target = $region28
        $region27: #{tpu_custom_call.1} parent=11 // pred_region
          _
        $region28: #{tpu_custom_call.1} parent=11 // pred_fallthru
          _
        // Predicated region
        $region29: #{tpu_custom_call.1} parent=11 // pred_check
          %p268 = pneg %p149
        $region30: #{tpu_custom_call.1} parent=11 // pred_check_branch
          %270 = sbr.rel (%p268) target = $region32
        $region31: #{tpu_custom_call.1} parent=11 // pred_region
          _
        $region32: #{tpu_custom_call.1} parent=11 // pred_fallthru
          _
        // Predicated region
        $region33: #{tpu_custom_call.1} parent=11 // pred_check
          %p271 = pneg %p170
        $region34: #{tpu_custom_call.1} parent=11 // pred_check_branch
          %273 = sbr.rel (%p271) target = $region36
        $region35: #{tpu_custom_call.1} parent=11 // pred_region
          %275 = vsyncadd [#allocation11], 0
          %s277 = sshll.u32 %s6, 4
          %s278 = int_to_ptr.hbm [resolvable:$true] %s277
          %s279 = sshll.u32 [#allocation10], 4
          %s280 = int_to_ptr.vmem [resolvable:$true] %s279
          %282 = dma.hbm_to_vmem [thread:$0]  %s278, 16, %s280, [#allocation11]
        $region36: #{tpu_custom_call.1} parent=11 // pred_fallthru
          _
        // Predicated region
        $region37: #{tpu_custom_call.1} parent=11 // pred_check
          %p283 = pneg %p191
        $region38: #{tpu_custom_call.1} parent=11 // pred_check_branch
          %285 = sbr.rel (%p283) target = $region40
        $region39: #{tpu_custom_call.1} parent=11 // pred_region
          %287 = vsyncadd [#allocation11], 0
          %s288 = sshll.u32 %s7, 4
          %s289 = int_to_ptr.hbm [resolvable:$true] %s288
          %s290 = sshll.u32 [#allocation12], 4
          %s291 = int_to_ptr.vmem [resolvable:$true] %s290
          %296 = dma.hbm_to_vmem [thread:$0]  %s289, 1024, %s291, [#allocation11], 256, 256, 16
        $region40: #{tpu_custom_call.1} parent=11 // pred_fallthru
          _
      $region12: #{tpu_custom_call.1} parent=5 // pred_fallthru
        _
      %p297 = scmp.lt.s32.totalorder %s18, 2
      // Predicated region
      $region41: #{tpu_custom_call.1} parent=5 // pred_check
        %p298 = pneg %p297
      $region42: #{tpu_custom_call.1} parent=5 // pred_check_branch
        %300 = sbr.rel (%p298) target = $region44
      $region43: #{tpu_custom_call.1} parent=5 // pred_region
        // Predicated region
        $region45: #{tpu_custom_call.1} parent=43 // pred_check
          %p301 = pneg %p80
        $region46: #{tpu_custom_call.1} parent=43 // pred_check_branch
          %303 = sbr.rel (%p301) target = $region48
        $region47: #{tpu_custom_call.1} parent=43 // pred_region
          %s304 = sand.u32 %s18, 1
          %s305 = scalar_lea.sflag [#allocation4], %s304
          %s306 = sand.u32 %s70, 1
          %s307 = smul.addr %s306, 4096
          %s308 = scalar_lea.vmem [#allocation8], %s307
          %s309 = smul.u32 4, %s18
          %311 = vsyncadd %s305, 0
          %s312 = smul.addr %s309, 256
          %s313 = smul.addr %s312, 4
          %s314 = scalar_lea.hbm %s2, %s313
          %s315 = sshll.u32 %s314, 4
          %s316 = int_to_ptr.hbm [resolvable:$true] %s315
          %s317 = sshll.u32 %s308, 4
          %s318 = int_to_ptr.vmem [resolvable:$true] %s317
          %323 = dma.hbm_to_vmem [thread:$0]  %s316, 65536, %s318, %s305, 256, 256, 16
        $region48: #{tpu_custom_call.1} parent=43 // pred_fallthru
          _
      $region44: #{tpu_custom_call.1} parent=5 // pred_fallthru
        _
      %p324 = scmp.le.s32.totalorder 1, %s18
      %p325 = scmp.lt.s32.totalorder %s18, 3
      %p326 = pnand %p324, %p325
      %p327 = pneg %p326
      // Predicated region
      $region49: #{tpu_custom_call.1} parent=5 // pred_check
        _
      $region50: #{tpu_custom_call.1} parent=5 // pred_check_branch
        %329 = sbr.rel (%p326) target = $region52
      $region51: #{tpu_custom_call.1} parent=5 // pred_region
        %s330 = ssub.s32 %s18, 1
        // Predicated region
        $region53: #{tpu_custom_call.1} parent=51 // pred_check
          %p331 = pneg %p39
        $region54: #{tpu_custom_call.1} parent=51 // pred_check_branch
          %333 = sbr.rel (%p331) target = $region56
        $region55: #{tpu_custom_call.1} parent=51 // pred_region
          %335 = dma.done [#allocation4], 128
        $region56: #{tpu_custom_call.1} parent=51 // pred_fallthru
          _
        // Predicated region
        $region57: #{tpu_custom_call.1} parent=51 // pred_check
          %p336 = pneg %p60
        $region58: #{tpu_custom_call.1} parent=51 // pred_check_branch
          %338 = sbr.rel (%p336) target = $region60
        $region59: #{tpu_custom_call.1} parent=51 // pred_region
          %340 = dma.done [#allocation7], 128
        $region60: #{tpu_custom_call.1} parent=51 // pred_fallthru
          _
        %s341 = sand.u32 %s23, 1
        %s342 = scalar_lea.sflag [#allocation4], %s341
        %s343 = sand.u32 %s73, 1
        %s344 = smul.addr %s343, 4096
        %s345 = scalar_lea.vmem [#allocation8], %s344
        // Predicated region
        $region61: #{tpu_custom_call.1} parent=51 // pred_check
          %p346 = pneg %p86
        $region62: #{tpu_custom_call.1} parent=51 // pred_check_branch
          %348 = sbr.rel (%p346) target = $region64
        $region63: #{tpu_custom_call.1} parent=51 // pred_region
          %350 = dma.done %s342, 65536
        $region64: #{tpu_custom_call.1} parent=51 // pred_fallthru
          _
        // Predicated region
        $region65: #{tpu_custom_call.1} parent=51 // pred_check
          %p351 = pneg %p107
        $region66: #{tpu_custom_call.1} parent=51 // pred_check_branch
          %353 = sbr.rel (%p351) target = $region68
        $region67: #{tpu_custom_call.1} parent=51 // pred_region
          %355 = dma.done [#allocation7], 512
        $region68: #{tpu_custom_call.1} parent=51 // pred_fallthru
          _
        // Predicated region
        $region69: #{tpu_custom_call.1} parent=51 // pred_check
          %p356 = pneg %p170
        $region70: #{tpu_custom_call.1} parent=51 // pred_check_branch
          %358 = sbr.rel (%p356) target = $region72
        $region71: #{tpu_custom_call.1} parent=51 // pred_region
          %360 = dma.done [#allocation11], 16
        $region72: #{tpu_custom_call.1} parent=51 // pred_fallthru
          _
        // Predicated region
        $region73: #{tpu_custom_call.1} parent=51 // pred_check
          %p361 = pneg %p191
        $region74: #{tpu_custom_call.1} parent=51 // pred_check_branch
          %363 = sbr.rel (%p361) target = $region76
        $region75: #{tpu_custom_call.1} parent=51 // pred_region
          %365 = dma.done [#allocation11], 1024
        $region76: #{tpu_custom_call.1} parent=51 // pred_fallthru
          _
        %p366 = pneg %p39
        %p367 = pneg %p36
        %p368 = pneg %p60
        %p369 = pneg %p57
        %s370 = sand.u32 %s23, 1
        %s371 = scalar_lea.sflag [#allocation4], %s370
        %s372 = sand.u32 %s73, 1
        %s373 = smul.addr %s372, 4096
        %s374 = scalar_lea.vmem [#allocation8], %s373
        %p375 = pneg %p86
        %p376 = pneg %p83
        %p377 = pneg %p107
        %p378 = pneg %p104
        %p379 = pneg %p128
        %p380 = pneg %p125
        %p381 = pneg %p149
        %p382 = pneg %p146
        %p383 = pneg %p170
        %p384 = pneg %p167
        %p385 = pneg %p191
        %p386 = pneg %p188
        %p387 = pneg %p212
        %p388 = pneg %p209
        %s389 = smul.u32 4, %s23
        %p391 = scmp.eq.s32.totalorder %s23, 0
        // Predicated region
        $region77: #{tpu_custom_call.1} parent=51 // pred_check
          %p392 = pneg %p391
        $region78: #{tpu_custom_call.1} parent=51 // pred_check_branch
          %394 = sbr.rel (%p392) target = $region80
        $region79: #{tpu_custom_call.1} parent=51 // pred_region
          %v395 = vld [vmem:[#allocation6] sm:$0xff]
          %397 = vst [vmem:[#allocation1] ss:$4 sm:$0xff] %v395
          %v398 = vld.sshfl [vmem:[#allocation1] sm:$0xff pattern:$0x73625140]
          %v399 = vld.sshfl [vmem:[#allocation1 + $0x8] sm:$0xff pattern:$0x73625140]
          %v400 = vld.sshfl [vmem:[#allocation1 + $0x10] sm:$0xff pattern:$0x73625140]
          %v401 = vld.sshfl [vmem:[#allocation1 + $0x18] sm:$0xff pattern:$0x73625140]
          %v406 = vpack.c.bf16 %v398, %v398
          %v407 = vpack.c.bf16 %v399, %v399
          %v408 = vpack.c.bf16 %v400, %v400
          %v409 = vpack.c.bf16 %v401, %v401
          %v410 = vld [vmem:[%s345] sm:$0xff]
          %v411 = vld [vmem:[%s345 + $0x8] sm:$0xff]
          %v412 = vld [vmem:[%s345 + $0x10] sm:$0xff]
          %v413 = vld [vmem:[%s345 + $0x18] sm:$0xff]
          %v414 = vld [vmem:[%s345 + $0x20] sm:$0xff]
          %v415 = vld [vmem:[%s345 + $0x28] sm:$0xff]
          %v416 = vld [vmem:[%s345 + $0x30] sm:$0xff]
          %v417 = vld [vmem:[%s345 + $0x38] sm:$0xff]
          %v418 = vld [vmem:[%s345 + $0x40] sm:$0xff]
          %v419 = vld [vmem:[%s345 + $0x48] sm:$0xff]
          %v420 = vld [vmem:[%s345 + $0x50] sm:$0xff]
          %v421 = vld [vmem:[%s345 + $0x58] sm:$0xff]
          %v422 = vld [vmem:[%s345 + $0x60] sm:$0xff]
          %v423 = vld [vmem:[%s345 + $0x68] sm:$0xff]
          %v424 = vld [vmem:[%s345 + $0x70] sm:$0xff]
          %v425 = vld [vmem:[%s345 + $0x78] sm:$0xff]
          %v426 = vld [vmem:[%s345 + $0x80] sm:$0xff]
          %v427 = vld [vmem:[%s345 + $0x88] sm:$0xff]
          %v428 = vld [vmem:[%s345 + $0x90] sm:$0xff]
          %v429 = vld [vmem:[%s345 + $0x98] sm:$0xff]
          %v430 = vld [vmem:[%s345 + $0xa0] sm:$0xff]
          %v431 = vld [vmem:[%s345 + $0xa8] sm:$0xff]
          %v432 = vld [vmem:[%s345 + $0xb0] sm:$0xff]
          %v433 = vld [vmem:[%s345 + $0xb8] sm:$0xff]
          %v434 = vld [vmem:[%s345 + $0xc0] sm:$0xff]
          %v435 = vld [vmem:[%s345 + $0xc8] sm:$0xff]
          %v436 = vld [vmem:[%s345 + $0xd0] sm:$0xff]
          %v437 = vld [vmem:[%s345 + $0xd8] sm:$0xff]
          %v438 = vld [vmem:[%s345 + $0xe0] sm:$0xff]
          %v439 = vld [vmem:[%s345 + $0xe8] sm:$0xff]
          %v440 = vld [vmem:[%s345 + $0xf0] sm:$0xff]
          %v441 = vld [vmem:[%s345 + $0xf8] sm:$0xff]
          %v442 = vld [vmem:[%s345 + $0x100] sm:$0xff]
          %v443 = vld [vmem:[%s345 + $0x108] sm:$0xff]
          %v444 = vld [vmem:[%s345 + $0x110] sm:$0xff]
          %v445 = vld [vmem:[%s345 + $0x118] sm:$0xff]
          %v446 = vld [vmem:[%s345 + $0x120] sm:$0xff]
          %v447 = vld [vmem:[%s345 + $0x128] sm:$0xff]
          %v448 = vld [vmem:[%s345 + $0x130] sm:$0xff]
          %v449 = vld [vmem:[%s345 + $0x138] sm:$0xff]
          %v450 = vld [vmem:[%s345 + $0x140] sm:$0xff]
          %v451 = vld [vmem:[%s345 + $0x148] sm:$0xff]
          %v452 = vld [vmem:[%s345 + $0x150] sm:$0xff]
          %v453 = vld [vmem:[%s345 + $0x158] sm:$0xff]
          %v454 = vld [vmem:[%s345 + $0x160] sm:$0xff]
          %v455 = vld [vmem:[%s345 + $0x168] sm:$0xff]
          %v456 = vld [vmem:[%s345 + $0x170] sm:$0xff]
          %v457 = vld [vmem:[%s345 + $0x178] sm:$0xff]
          %v458 = vld [vmem:[%s345 + $0x180] sm:$0xff]
          %v459 = vld [vmem:[%s345 + $0x188] sm:$0xff]
          %v460 = vld [vmem:[%s345 + $0x190] sm:$0xff]
          %v461 = vld [vmem:[%s345 + $0x198] sm:$0xff]
          %v462 = vld [vmem:[%s345 + $0x1a0] sm:$0xff]
          %v463 = vld [vmem:[%s345 + $0x1a8] sm:$0xff]
          %v464 = vld [vmem:[%s345 + $0x1b0] sm:$0xff]
          %v465 = vld [vmem:[%s345 + $0x1b8] sm:$0xff]
          %v466 = vld [vmem:[%s345 + $0x1c0] sm:$0xff]
          %v467 = vld [vmem:[%s345 + $0x1c8] sm:$0xff]
          %v468 = vld [vmem:[%s345 + $0x1d0] sm:$0xff]
          %v469 = vld [vmem:[%s345 + $0x1d8] sm:$0xff]
          %v470 = vld [vmem:[%s345 + $0x1e0] sm:$0xff]
          %v471 = vld [vmem:[%s345 + $0x1e8] sm:$0xff]
          %v472 = vld [vmem:[%s345 + $0x1f0] sm:$0xff]
          %v473 = vld [vmem:[%s345 + $0x1f8] sm:$0xff]
          %v474 = vld [vmem:[%s345 + $0x200] sm:$0xff]
          %v475 = vld [vmem:[%s345 + $0x208] sm:$0xff]
          %v476 = vld [vmem:[%s345 + $0x210] sm:$0xff]
          %v477 = vld [vmem:[%s345 + $0x218] sm:$0xff]
          %v478 = vld [vmem:[%s345 + $0x220] sm:$0xff]
          %v479 = vld [vmem:[%s345 + $0x228] sm:$0xff]
          %v480 = vld [vmem:[%s345 + $0x230] sm:$0xff]
          %v481 = vld [vmem:[%s345 + $0x238] sm:$0xff]
          %v482 = vld [vmem:[%s345 + $0x240] sm:$0xff]
          %v483 = vld [vmem:[%s345 + $0x248] sm:$0xff]
          %v484 = vld [vmem:[%s345 + $0x250] sm:$0xff]
          %v485 = vld [vmem:[%s345 + $0x258] sm:$0xff]
          %v486 = vld [vmem:[%s345 + $0x260] sm:$0xff]
          %v487 = vld [vmem:[%s345 + $0x268] sm:$0xff]
          %v488 = vld [vmem:[%s345 + $0x270] sm:$0xff]
          %v489 = vld [vmem:[%s345 + $0x278] sm:$0xff]
          %v490 = vld [vmem:[%s345 + $0x280] sm:$0xff]
          %v491 = vld [vmem:[%s345 + $0x288] sm:$0xff]
          %v492 = vld [vmem:[%s345 + $0x290] sm:$0xff]
          %v493 = vld [vmem:[%s345 + $0x298] sm:$0xff]
          %v494 = vld [vmem:[%s345 + $0x2a0] sm:$0xff]
          %v495 = vld [vmem:[%s345 + $0x2a8] sm:$0xff]
          %v496 = vld [vmem:[%s345 + $0x2b0] sm:$0xff]
          %v497 = vld [vmem:[%s345 + $0x2b8] sm:$0xff]
          %v498 = vld [vmem:[%s345 + $0x2c0] sm:$0xff]
          %v499 = vld [vmem:[%s345 + $0x2c8] sm:$0xff]
          %v500 = vld [vmem:[%s345 + $0x2d0] sm:$0xff]
          %v501 = vld [vmem:[%s345 + $0x2d8] sm:$0xff]
          %v502 = vld [vmem:[%s345 + $0x2e0] sm:$0xff]
          %v503 = vld [vmem:[%s345 + $0x2e8] sm:$0xff]
          %v504 = vld [vmem:[%s345 + $0x2f0] sm:$0xff]
          %v505 = vld [vmem:[%s345 + $0x2f8] sm:$0xff]
          %v506 = vld [vmem:[%s345 + $0x300] sm:$0xff]
          %v507 = vld [vmem:[%s345 + $0x308] sm:$0xff]
          %v508 = vld [vmem:[%s345 + $0x310] sm:$0xff]
          %v509 = vld [vmem:[%s345 + $0x318] sm:$0xff]
          %v510 = vld [vmem:[%s345 + $0x320] sm:$0xff]
          %v511 = vld [vmem:[%s345 + $0x328] sm:$0xff]
          %v512 = vld [vmem:[%s345 + $0x330] sm:$0xff]
          %v513 = vld [vmem:[%s345 + $0x338] sm:$0xff]
          %v514 = vld [vmem:[%s345 + $0x340] sm:$0xff]
          %v515 = vld [vmem:[%s345 + $0x348] sm:$0xff]
          %v516 = vld [vmem:[%s345 + $0x350] sm:$0xff]
          %v517 = vld [vmem:[%s345 + $0x358] sm:$0xff]
          %v518 = vld [vmem:[%s345 + $0x360] sm:$0xff]
          %v519 = vld [vmem:[%s345 + $0x368] sm:$0xff]
          %v520 = vld [vmem:[%s345 + $0x370] sm:$0xff]
          %v521 = vld [vmem:[%s345 + $0x378] sm:$0xff]
          %v522 = vld [vmem:[%s345 + $0x380] sm:$0xff]
          %v523 = vld [vmem:[%s345 + $0x388] sm:$0xff]
          %v524 = vld [vmem:[%s345 + $0x390] sm:$0xff]
          %v525 = vld [vmem:[%s345 + $0x398] sm:$0xff]
          %v526 = vld [vmem:[%s345 + $0x3a0] sm:$0xff]
          %v527 = vld [vmem:[%s345 + $0x3a8] sm:$0xff]
          %v528 = vld [vmem:[%s345 + $0x3b0] sm:$0xff]
          %v529 = vld [vmem:[%s345 + $0x3b8] sm:$0xff]
          %v530 = vld [vmem:[%s345 + $0x3c0] sm:$0xff]
          %v531 = vld [vmem:[%s345 + $0x3c8] sm:$0xff]
          %v532 = vld [vmem:[%s345 + $0x3d0] sm:$0xff]
          %v533 = vld [vmem:[%s345 + $0x3d8] sm:$0xff]
          %v534 = vld [vmem:[%s345 + $0x3e0] sm:$0xff]
          %v535 = vld [vmem:[%s345 + $0x3e8] sm:$0xff]
          %v536 = vld [vmem:[%s345 + $0x3f0] sm:$0xff]
          %v537 = vld [vmem:[%s345 + $0x3f8] sm:$0xff]
          %v538 = vld [vmem:[#allocation9] sm:$0xf]
          %v540 = vperm.slane %v538, 0
          %v541 = vperm.slane %v538, 1
          %v542 = vperm.slane %v538, 2
          %v543 = vperm.slane %v538, 3
          %v676 = vunpack.c.l.b16 %v410
          %v677 = vunpack.c.h.b16 %v410
          %v678 = vunpack.c.l.b16 %v411
          %v679 = vunpack.c.h.b16 %v411
          %v680 = vunpack.c.l.b16 %v412
          %v681 = vunpack.c.h.b16 %v412
          %v682 = vunpack.c.l.b16 %v413
          %v683 = vunpack.c.h.b16 %v413
          %v684 = vunpack.c.l.b16 %v414
          %v685 = vunpack.c.h.b16 %v414
          %v686 = vunpack.c.l.b16 %v415
          %v687 = vunpack.c.h.b16 %v415
          %v688 = vunpack.c.l.b16 %v416
          %v689 = vunpack.c.h.b16 %v416
          %v690 = vunpack.c.l.b16 %v417
          %v691 = vunpack.c.h.b16 %v417
          %v692 = vunpack.c.l.b16 %v418
          %v693 = vunpack.c.h.b16 %v418
          %v694 = vunpack.c.l.b16 %v419
          %v695 = vunpack.c.h.b16 %v419
          %v696 = vunpack.c.l.b16 %v420
          %v697 = vunpack.c.h.b16 %v420
          %v698 = vunpack.c.l.b16 %v421
          %v699 = vunpack.c.h.b16 %v421
          %v700 = vunpack.c.l.b16 %v422
          %v701 = vunpack.c.h.b16 %v422
          %v702 = vunpack.c.l.b16 %v423
          %v703 = vunpack.c.h.b16 %v423
          %v704 = vunpack.c.l.b16 %v424
          %v705 = vunpack.c.h.b16 %v424
          %v706 = vunpack.c.l.b16 %v425
          %v707 = vunpack.c.h.b16 %v425
          %v708 = vunpack.c.l.b16 %v426
          %v709 = vunpack.c.h.b16 %v426
          %v710 = vunpack.c.l.b16 %v427
          %v711 = vunpack.c.h.b16 %v427
          %v712 = vunpack.c.l.b16 %v428
          %v713 = vunpack.c.h.b16 %v428
          %v714 = vunpack.c.l.b16 %v429
          %v715 = vunpack.c.h.b16 %v429
          %v716 = vunpack.c.l.b16 %v430
          %v717 = vunpack.c.h.b16 %v430
          %v718 = vunpack.c.l.b16 %v431
          %v719 = vunpack.c.h.b16 %v431
          %v720 = vunpack.c.l.b16 %v432
          %v721 = vunpack.c.h.b16 %v432
          %v722 = vunpack.c.l.b16 %v433
          %v723 = vunpack.c.h.b16 %v433
          %v724 = vunpack.c.l.b16 %v434
          %v725 = vunpack.c.h.b16 %v434
          %v726 = vunpack.c.l.b16 %v435
          %v727 = vunpack.c.h.b16 %v435
          %v728 = vunpack.c.l.b16 %v436
          %v729 = vunpack.c.h.b16 %v436
          %v730 = vunpack.c.l.b16 %v437
          %v731 = vunpack.c.h.b16 %v437
          %v732 = vunpack.c.l.b16 %v438
          %v733 = vunpack.c.h.b16 %v438
          %v734 = vunpack.c.l.b16 %v439
          %v735 = vunpack.c.h.b16 %v439
          %v736 = vunpack.c.l.b16 %v440
          %v737 = vunpack.c.h.b16 %v440
          %v738 = vunpack.c.l.b16 %v441
          %v739 = vunpack.c.h.b16 %v441
          %v740 = vunpack.c.l.b16 %v442
          %v741 = vunpack.c.h.b16 %v442
          %v742 = vunpack.c.l.b16 %v443
          %v743 = vunpack.c.h.b16 %v443
          %v744 = vunpack.c.l.b16 %v444
          %v745 = vunpack.c.h.b16 %v444
          %v746 = vunpack.c.l.b16 %v445
          %v747 = vunpack.c.h.b16 %v445
          %v748 = vunpack.c.l.b16 %v446
          %v749 = vunpack.c.h.b16 %v446
          %v750 = vunpack.c.l.b16 %v447
          %v751 = vunpack.c.h.b16 %v447
          %v752 = vunpack.c.l.b16 %v448
          %v753 = vunpack.c.h.b16 %v448
          %v754 = vunpack.c.l.b16 %v449
          %v755 = vunpack.c.h.b16 %v449
          %v756 = vunpack.c.l.b16 %v450
          %v757 = vunpack.c.h.b16 %v450
          %v758 = vunpack.c.l.b16 %v451
          %v759 = vunpack.c.h.b16 %v451
          %v760 = vunpack.c.l.b16 %v452
          %v761 = vunpack.c.h.b16 %v452
          %v762 = vunpack.c.l.b16 %v453
          %v763 = vunpack.c.h.b16 %v453
          %v764 = vunpack.c.l.b16 %v454
          %v765 = vunpack.c.h.b16 %v454
          %v766 = vunpack.c.l.b16 %v455
          %v767 = vunpack.c.h.b16 %v455
          %v768 = vunpack.c.l.b16 %v456
          %v769 = vunpack.c.h.b16 %v456
          %v770 = vunpack.c.l.b16 %v457
          %v771 = vunpack.c.h.b16 %v457
          %v772 = vunpack.c.l.b16 %v458
          %v773 = vunpack.c.h.b16 %v458
          %v774 = vunpack.c.l.b16 %v459
          %v775 = vunpack.c.h.b16 %v459
          %v776 = vunpack.c.l.b16 %v460
          %v777 = vunpack.c.h.b16 %v460
          %v778 = vunpack.c.l.b16 %v461
          %v779 = vunpack.c.h.b16 %v461
          %v780 = vunpack.c.l.b16 %v462
          %v781 = vunpack.c.h.b16 %v462
          %v782 = vunpack.c.l.b16 %v463
          %v783 = vunpack.c.h.b16 %v463
          %v784 = vunpack.c.l.b16 %v464
          %v785 = vunpack.c.h.b16 %v464
          %v786 = vunpack.c.l.b16 %v465
          %v787 = vunpack.c.h.b16 %v465
          %v788 = vunpack.c.l.b16 %v466
          %v789 = vunpack.c.h.b16 %v466
          %v790 = vunpack.c.l.b16 %v467
          %v791 = vunpack.c.h.b16 %v467
          %v792 = vunpack.c.l.b16 %v468
          %v793 = vunpack.c.h.b16 %v468
          %v794 = vunpack.c.l.b16 %v469
          %v795 = vunpack.c.h.b16 %v469
          %v796 = vunpack.c.l.b16 %v470
          %v797 = vunpack.c.h.b16 %v470
          %v798 = vunpack.c.l.b16 %v471
          %v799 = vunpack.c.h.b16 %v471
          %v800 = vunpack.c.l.b16 %v472
          %v801 = vunpack.c.h.b16 %v472
          %v802 = vunpack.c.l.b16 %v473
          %v803 = vunpack.c.h.b16 %v473
          %v804 = vunpack.c.l.b16 %v474
          %v805 = vunpack.c.h.b16 %v474
          %v806 = vunpack.c.l.b16 %v475
          %v807 = vunpack.c.h.b16 %v475
          %v808 = vunpack.c.l.b16 %v476
          %v809 = vunpack.c.h.b16 %v476
          %v810 = vunpack.c.l.b16 %v477
          %v811 = vunpack.c.h.b16 %v477
          %v812 = vunpack.c.l.b16 %v478
          %v813 = vunpack.c.h.b16 %v478
          %v814 = vunpack.c.l.b16 %v479
          %v815 = vunpack.c.h.b16 %v479
          %v816 = vunpack.c.l.b16 %v480
          %v817 = vunpack.c.h.b16 %v480
          %v818 = vunpack.c.l.b16 %v481
          %v819 = vunpack.c.h.b16 %v481
          %v820 = vunpack.c.l.b16 %v482
          %v821 = vunpack.c.h.b16 %v482
          %v822 = vunpack.c.l.b16 %v483
          %v823 = vunpack.c.h.b16 %v483
          %v824 = vunpack.c.l.b16 %v484
          %v825 = vunpack.c.h.b16 %v484
          %v826 = vunpack.c.l.b16 %v485
          %v827 = vunpack.c.h.b16 %v485
          %v828 = vunpack.c.l.b16 %v486
          %v829 = vunpack.c.h.b16 %v486
          %v830 = vunpack.c.l.b16 %v487
          %v831 = vunpack.c.h.b16 %v487
          %v832 = vunpack.c.l.b16 %v488
          %v833 = vunpack.c.h.b16 %v488
          %v834 = vunpack.c.l.b16 %v489
          %v835 = vunpack.c.h.b16 %v489
          %v836 = vunpack.c.l.b16 %v490
          %v837 = vunpack.c.h.b16 %v490
          %v838 = vunpack.c.l.b16 %v491
          %v839 = vunpack.c.h.b16 %v491
          %v840 = vunpack.c.l.b16 %v492
          %v841 = vunpack.c.h.b16 %v492
          %v842 = vunpack.c.l.b16 %v493
          %v843 = vunpack.c.h.b16 %v493
          %v844 = vunpack.c.l.b16 %v494
          %v845 = vunpack.c.h.b16 %v494
          %v846 = vunpack.c.l.b16 %v495
          %v847 = vunpack.c.h.b16 %v495
          %v848 = vunpack.c.l.b16 %v496
          %v849 = vunpack.c.h.b16 %v496
          %v850 = vunpack.c.l.b16 %v497
          %v851 = vunpack.c.h.b16 %v497
          %v852 = vunpack.c.l.b16 %v498
          %v853 = vunpack.c.h.b16 %v498
          %v854 = vunpack.c.l.b16 %v499
          %v855 = vunpack.c.h.b16 %v499
          %v856 = vunpack.c.l.b16 %v500
          %v857 = vunpack.c.h.b16 %v500
          %v858 = vunpack.c.l.b16 %v501
          %v859 = vunpack.c.h.b16 %v501
          %v860 = vunpack.c.l.b16 %v502
          %v861 = vunpack.c.h.b16 %v502
          %v862 = vunpack.c.l.b16 %v503
          %v863 = vunpack.c.h.b16 %v503
          %v864 = vunpack.c.l.b16 %v504
          %v865 = vunpack.c.h.b16 %v504
          %v866 = vunpack.c.l.b16 %v505
          %v867 = vunpack.c.h.b16 %v505
          %v868 = vunpack.c.l.b16 %v506
          %v869 = vunpack.c.h.b16 %v506
          %v870 = vunpack.c.l.b16 %v507
          %v871 = vunpack.c.h.b16 %v507
          %v872 = vunpack.c.l.b16 %v508
          %v873 = vunpack.c.h.b16 %v508
          %v874 = vunpack.c.l.b16 %v509
          %v875 = vunpack.c.h.b16 %v509
          %v876 = vunpack.c.l.b16 %v510
          %v877 = vunpack.c.h.b16 %v510
          %v878 = vunpack.c.l.b16 %v511
          %v879 = vunpack.c.h.b16 %v511
          %v880 = vunpack.c.l.b16 %v512
          %v881 = vunpack.c.h.b16 %v512
          %v882 = vunpack.c.l.b16 %v513
          %v883 = vunpack.c.h.b16 %v513
          %v884 = vunpack.c.l.b16 %v514
          %v885 = vunpack.c.h.b16 %v514
          %v886 = vunpack.c.l.b16 %v515
          %v887 = vunpack.c.h.b16 %v515
          %v888 = vunpack.c.l.b16 %v516
          %v889 = vunpack.c.h.b16 %v516
          %v890 = vunpack.c.l.b16 %v517
          %v891 = vunpack.c.h.b16 %v517
          %v892 = vunpack.c.l.b16 %v518
          %v893 = vunpack.c.h.b16 %v518
          %v894 = vunpack.c.l.b16 %v519
          %v895 = vunpack.c.h.b16 %v519
          %v896 = vunpack.c.l.b16 %v520
          %v897 = vunpack.c.h.b16 %v520
          %v898 = vunpack.c.l.b16 %v521
          %v899 = vunpack.c.h.b16 %v521
          %v900 = vunpack.c.l.b16 %v522
          %v901 = vunpack.c.h.b16 %v522
          %v902 = vunpack.c.l.b16 %v523
          %v903 = vunpack.c.h.b16 %v523
          %v904 = vunpack.c.l.b16 %v524
          %v905 = vunpack.c.h.b16 %v524
          %v906 = vunpack.c.l.b16 %v525
          %v907 = vunpack.c.h.b16 %v525
          %v908 = vunpack.c.l.b16 %v526
          %v909 = vunpack.c.h.b16 %v526
          %v910 = vunpack.c.l.b16 %v527
          %v911 = vunpack.c.h.b16 %v527
          %v912 = vunpack.c.l.b16 %v528
          %v913 = vunpack.c.h.b16 %v528
          %v914 = vunpack.c.l.b16 %v529
          %v915 = vunpack.c.h.b16 %v529
          %v916 = vunpack.c.l.b16 %v530
          %v917 = vunpack.c.h.b16 %v530
          %v918 = vunpack.c.l.b16 %v531
          %v919 = vunpack.c.h.b16 %v531
          %v920 = vunpack.c.l.b16 %v532
          %v921 = vunpack.c.h.b16 %v532
          %v922 = vunpack.c.l.b16 %v533
          %v923 = vunpack.c.h.b16 %v533
          %v924 = vunpack.c.l.b16 %v534
          %v925 = vunpack.c.h.b16 %v534
          %v926 = vunpack.c.l.b16 %v535
          %v927 = vunpack.c.h.b16 %v535
          %v928 = vunpack.c.l.b16 %v536
          %v929 = vunpack.c.h.b16 %v536
          %v930 = vunpack.c.l.b16 %v537
          %v931 = vunpack.c.h.b16 %v537
          %v932 = vpack.c.b16 %v680, %v676
          %v933 = vpack.c.b16 %v681, %v677
          %v934 = vpack.c.b16 %v682, %v678
          %v935 = vpack.c.b16 %v683, %v679
          %v936 = vpack.c.b16 %v688, %v684
          %v937 = vpack.c.b16 %v689, %v685
          %v938 = vpack.c.b16 %v690, %v686
          %v939 = vpack.c.b16 %v691, %v687
          %v940 = vpack.c.b16 %v696, %v692
          %v941 = vpack.c.b16 %v697, %v693
          %v942 = vpack.c.b16 %v698, %v694
          %v943 = vpack.c.b16 %v699, %v695
          %v944 = vpack.c.b16 %v704, %v700
          %v945 = vpack.c.b16 %v705, %v701
          %v946 = vpack.c.b16 %v706, %v702
          %v947 = vpack.c.b16 %v707, %v703
          %v948 = vpack.c.b16 %v712, %v708
          %v949 = vpack.c.b16 %v713, %v709
          %v950 = vpack.c.b16 %v714, %v710
          %v951 = vpack.c.b16 %v715, %v711
          %v952 = vpack.c.b16 %v720, %v716
          %v953 = vpack.c.b16 %v721, %v717
          %v954 = vpack.c.b16 %v722, %v718
          %v955 = vpack.c.b16 %v723, %v719
          %v956 = vpack.c.b16 %v728, %v724
          %v957 = vpack.c.b16 %v729, %v725
          %v958 = vpack.c.b16 %v730, %v726
          %v959 = vpack.c.b16 %v731, %v727
          %v960 = vpack.c.b16 %v736, %v732
          %v961 = vpack.c.b16 %v737, %v733
          %v962 = vpack.c.b16 %v738, %v734
          %v963 = vpack.c.b16 %v739, %v735
          %v964 = vpack.c.b16 %v744, %v740
          %v965 = vpack.c.b16 %v745, %v741
          %v966 = vpack.c.b16 %v746, %v742
          %v967 = vpack.c.b16 %v747, %v743
          %v968 = vpack.c.b16 %v752, %v748
          %v969 = vpack.c.b16 %v753, %v749
          %v970 = vpack.c.b16 %v754, %v750
          %v971 = vpack.c.b16 %v755, %v751
          %v972 = vpack.c.b16 %v760, %v756
          %v973 = vpack.c.b16 %v761, %v757
          %v974 = vpack.c.b16 %v762, %v758
          %v975 = vpack.c.b16 %v763, %v759
          %v976 = vpack.c.b16 %v768, %v764
          %v977 = vpack.c.b16 %v769, %v765
          %v978 = vpack.c.b16 %v770, %v766
          %v979 = vpack.c.b16 %v771, %v767
          %v980 = vpack.c.b16 %v776, %v772
          %v981 = vpack.c.b16 %v777, %v773
          %v982 = vpack.c.b16 %v778, %v774
          %v983 = vpack.c.b16 %v779, %v775
          %v984 = vpack.c.b16 %v784, %v780
          %v985 = vpack.c.b16 %v785, %v781
          %v986 = vpack.c.b16 %v786, %v782
          %v987 = vpack.c.b16 %v787, %v783
          %v988 = vpack.c.b16 %v792, %v788
          %v989 = vpack.c.b16 %v793, %v789
          %v990 = vpack.c.b16 %v794, %v790
          %v991 = vpack.c.b16 %v795, %v791
          %v992 = vpack.c.b16 %v800, %v796
          %v993 = vpack.c.b16 %v801, %v797
          %v994 = vpack.c.b16 %v802, %v798
          %v995 = vpack.c.b16 %v803, %v799
          %v996 = vpack.c.b16 %v808, %v804
          %v997 = vpack.c.b16 %v809, %v805
          %v998 = vpack.c.b16 %v810, %v806
          %v999 = vpack.c.b16 %v811, %v807
          %v1000 = vpack.c.b16 %v816, %v812
          %v1001 = vpack.c.b16 %v817, %v813
          %v1002 = vpack.c.b16 %v818, %v814
          %v1003 = vpack.c.b16 %v819, %v815
          %v1004 = vpack.c.b16 %v824, %v820
          %v1005 = vpack.c.b16 %v825, %v821
          %v1006 = vpack.c.b16 %v826, %v822
          %v1007 = vpack.c.b16 %v827, %v823
          %v1008 = vpack.c.b16 %v832, %v828
          %v1009 = vpack.c.b16 %v833, %v829
          %v1010 = vpack.c.b16 %v834, %v830
          %v1011 = vpack.c.b16 %v835, %v831
          %v1012 = vpack.c.b16 %v840, %v836
          %v1013 = vpack.c.b16 %v841, %v837
          %v1014 = vpack.c.b16 %v842, %v838
          %v1015 = vpack.c.b16 %v843, %v839
          %v1016 = vpack.c.b16 %v848, %v844
          %v1017 = vpack.c.b16 %v849, %v845
          %v1018 = vpack.c.b16 %v850, %v846
          %v1019 = vpack.c.b16 %v851, %v847
          %v1020 = vpack.c.b16 %v856, %v852
          %v1021 = vpack.c.b16 %v857, %v853
          %v1022 = vpack.c.b16 %v858, %v854
          %v1023 = vpack.c.b16 %v859, %v855
          %v1024 = vpack.c.b16 %v864, %v860
          %v1025 = vpack.c.b16 %v865, %v861
          %v1026 = vpack.c.b16 %v866, %v862
          %v1027 = vpack.c.b16 %v867, %v863
          %v1028 = vpack.c.b16 %v872, %v868
          %v1029 = vpack.c.b16 %v873, %v869
          %v1030 = vpack.c.b16 %v874, %v870
          %v1031 = vpack.c.b16 %v875, %v871
          %v1032 = vpack.c.b16 %v880, %v876
          %v1033 = vpack.c.b16 %v881, %v877
          %v1034 = vpack.c.b16 %v882, %v878
          %v1035 = vpack.c.b16 %v883, %v879
          %v1036 = vpack.c.b16 %v888, %v884
          %v1037 = vpack.c.b16 %v889, %v885
          %v1038 = vpack.c.b16 %v890, %v886
          %v1039 = vpack.c.b16 %v891, %v887
          %v1040 = vpack.c.b16 %v896, %v892
          %v1041 = vpack.c.b16 %v897, %v893
          %v1042 = vpack.c.b16 %v898, %v894
          %v1043 = vpack.c.b16 %v899, %v895
          %v1044 = vpack.c.b16 %v904, %v900
          %v1045 = vpack.c.b16 %v905, %v901
          %v1046 = vpack.c.b16 %v906, %v902
          %v1047 = vpack.c.b16 %v907, %v903
          %v1048 = vpack.c.b16 %v912, %v908
          %v1049 = vpack.c.b16 %v913, %v909
          %v1050 = vpack.c.b16 %v914, %v910
          %v1051 = vpack.c.b16 %v915, %v911
          %v1052 = vpack.c.b16 %v920, %v916
          %v1053 = vpack.c.b16 %v921, %v917
          %v1054 = vpack.c.b16 %v922, %v918
          %v1055 = vpack.c.b16 %v923, %v919
          %v1056 = vpack.c.b16 %v928, %v924
          %v1057 = vpack.c.b16 %v929, %v925
          %v1058 = vpack.c.b16 %v930, %v926
          %v1059 = vpack.c.b16 %v931, %v927
          %1188 = vmatpush.bf16.msra.mxu0 %v960
          %1189 = vmatpush.bf16.msra.mxu0 %v956
          %1190 = vmatpush.bf16.msra.mxu0 %v952
          %1191 = vmatpush.bf16.msra.mxu0 %v948
          %1192 = vmatpush.bf16.msra.mxu0 %v944
          %1193 = vmatpush.bf16.msra.mxu0 %v940
          %1194 = vmatpush.bf16.msra.mxu0 %v936
          %1195 = vmatpush.bf16.msra.mxu0 %v932
          %1196 = vmatmul.bf16.gmra.mxu0 %v406
          %v1197 = vpop.f32.mrf.mxu0
          %v1198 = vadd.f32 %v540, %v1197
          %v1199 = vpop.f32.mrf.mxu0
          %1200 = vdwg.mxu0
          %1201 = vmatpush.bf16.msra.mxu0 %v992
          %1202 = vmatpush.bf16.msra.mxu0 %v988
          %1203 = vmatpush.bf16.msra.mxu0 %v984
          %1204 = vmatpush.bf16.msra.mxu0 %v980
          %1205 = vmatpush.bf16.msra.mxu0 %v976
          %1206 = vmatpush.bf16.msra.mxu0 %v972
          %1207 = vmatpush.bf16.msra.mxu0 %v968
          %1208 = vmatpush.bf16.msra.mxu0 %v964
          %1209 = vmatmul.bf16.gmra.mxu0 %v407
          %v1210 = vpop.f32.mrf.mxu0
          %v1211 = vadd.f32 %v1198, %v1210
          %v1212 = vpop.f32.mrf.mxu0
          %1213 = vdwg.mxu0
          %1214 = vmatpush.bf16.msra.mxu0 %v1024
          %1215 = vmatpush.bf16.msra.mxu0 %v1020
          %1216 = vmatpush.bf16.msra.mxu0 %v1016
          %1217 = vmatpush.bf16.msra.mxu0 %v1012
          %1218 = vmatpush.bf16.msra.mxu0 %v1008
          %1219 = vmatpush.bf16.msra.mxu0 %v1004
          %1220 = vmatpush.bf16.msra.mxu0 %v1000
          %1221 = vmatpush.bf16.msra.mxu0 %v996
          %1222 = vmatmul.bf16.gmra.mxu0 %v408
          %v1223 = vpop.f32.mrf.mxu0
          %v1224 = vadd.f32 %v1211, %v1223
          %v1225 = vpop.f32.mrf.mxu0
          %1226 = vdwg.mxu0
          %1227 = vmatpush.bf16.msra.mxu0 %v1056
          %1228 = vmatpush.bf16.msra.mxu0 %v1052
          %1229 = vmatpush.bf16.msra.mxu0 %v1048
          %1230 = vmatpush.bf16.msra.mxu0 %v1044
          %1231 = vmatpush.bf16.msra.mxu0 %v1040
          %1232 = vmatpush.bf16.msra.mxu0 %v1036
          %1233 = vmatpush.bf16.msra.mxu0 %v1032
          %1234 = vmatpush.bf16.msra.mxu0 %v1028
          %1235 = vmatmul.bf16.gmra.mxu0 %v409
          %v1236 = vpop.f32.mrf.mxu0
          %v1237 = vadd.f32 %v1224, %v1236
          %v1238 = vpop.f32.mrf.mxu0
          %1239 = vdwg.mxu0
          %1240 = vmatpush.bf16.msra.mxu0 %v961
          %1241 = vmatpush.bf16.msra.mxu0 %v957
          %1242 = vmatpush.bf16.msra.mxu0 %v953
          %1243 = vmatpush.bf16.msra.mxu0 %v949
          %1244 = vmatpush.bf16.msra.mxu0 %v945
          %1245 = vmatpush.bf16.msra.mxu0 %v941
          %1246 = vmatpush.bf16.msra.mxu0 %v937
          %1247 = vmatpush.bf16.msra.mxu0 %v933
          %1248 = vmatmul.bf16.gmra.mxu0 %v406
          %v1249 = vpop.f32.mrf.mxu0
          %v1250 = vadd.f32 %v541, %v1249
          %v1251 = vpop.f32.mrf.mxu0
          %1252 = vdwg.mxu0
          %1253 = vmatpush.bf16.msra.mxu0 %v993
          %1254 = vmatpush.bf16.msra.mxu0 %v989
          %1255 = vmatpush.bf16.msra.mxu0 %v985
          %1256 = vmatpush.bf16.msra.mxu0 %v981
          %1257 = vmatpush.bf16.msra.mxu0 %v977
          %1258 = vmatpush.bf16.msra.mxu0 %v973
          %1259 = vmatpush.bf16.msra.mxu0 %v969
          %1260 = vmatpush.bf16.msra.mxu0 %v965
          %1261 = vmatmul.bf16.gmra.mxu0 %v407
          %v1262 = vpop.f32.mrf.mxu0
          %v1263 = vadd.f32 %v1250, %v1262
          %v1264 = vpop.f32.mrf.mxu0
          %1265 = vdwg.mxu0
          %1266 = vmatpush.bf16.msra.mxu0 %v1025
          %1267 = vmatpush.bf16.msra.mxu0 %v1021
          %1268 = vmatpush.bf16.msra.mxu0 %v1017
          %1269 = vmatpush.bf16.msra.mxu0 %v1013
          %1270 = vmatpush.bf16.msra.mxu0 %v1009
          %1271 = vmatpush.bf16.msra.mxu0 %v1005
          %1272 = vmatpush.bf16.msra.mxu0 %v1001
          %1273 = vmatpush.bf16.msra.mxu0 %v997
          %1274 = vmatmul.bf16.gmra.mxu0 %v408
          %v1275 = vpop.f32.mrf.mxu0
          %v1276 = vadd.f32 %v1263, %v1275
          %v1277 = vpop.f32.mrf.mxu0
          %1278 = vdwg.mxu0
          %1279 = vmatpush.bf16.msra.mxu0 %v1057
          %1280 = vmatpush.bf16.msra.mxu0 %v1053
          %1281 = vmatpush.bf16.msra.mxu0 %v1049
          %1282 = vmatpush.bf16.msra.mxu0 %v1045
          %1283 = vmatpush.bf16.msra.mxu0 %v1041
          %1284 = vmatpush.bf16.msra.mxu0 %v1037
          %1285 = vmatpush.bf16.msra.mxu0 %v1033
          %1286 = vmatpush.bf16.msra.mxu0 %v1029
          %1287 = vmatmul.bf16.gmra.mxu0 %v409
          %v1288 = vpop.f32.mrf.mxu0
          %v1289 = vadd.f32 %v1276, %v1288
          %v1290 = vpop.f32.mrf.mxu0
          %1291 = vdwg.mxu0
          %1292 = vmatpush.bf16.msra.mxu0 %v962
          %1293 = vmatpush.bf16.msra.mxu0 %v958
          %1294 = vmatpush.bf16.msra.mxu0 %v954
          %1295 = vmatpush.bf16.msra.mxu0 %v950
          %1296 = vmatpush.bf16.msra.mxu0 %v946
          %1297 = vmatpush.bf16.msra.mxu0 %v942
          %1298 = vmatpush.bf16.msra.mxu0 %v938
          %1299 = vmatpush.bf16.msra.mxu0 %v934
          %1300 = vmatmul.bf16.gmra.mxu0 %v406
          %v1301 = vpop.f32.mrf.mxu0
          %v1302 = vadd.f32 %v542, %v1301
          %v1303 = vpop.f32.mrf.mxu0
          %1304 = vdwg.mxu0
          %1305 = vmatpush.bf16.msra.mxu0 %v994
          %1306 = vmatpush.bf16.msra.mxu0 %v990
          %1307 = vmatpush.bf16.msra.mxu0 %v986
          %1308 = vmatpush.bf16.msra.mxu0 %v982
          %1309 = vmatpush.bf16.msra.mxu0 %v978
          %1310 = vmatpush.bf16.msra.mxu0 %v974
          %1311 = vmatpush.bf16.msra.mxu0 %v970
          %1312 = vmatpush.bf16.msra.mxu0 %v966
          %1313 = vmatmul.bf16.gmra.mxu0 %v407
          %v1314 = vpop.f32.mrf.mxu0
          %v1315 = vadd.f32 %v1302, %v1314
          %v1316 = vpop.f32.mrf.mxu0
          %1317 = vdwg.mxu0
          %1318 = vmatpush.bf16.msra.mxu0 %v1026
          %1319 = vmatpush.bf16.msra.mxu0 %v1022
          %1320 = vmatpush.bf16.msra.mxu0 %v1018
          %1321 = vmatpush.bf16.msra.mxu0 %v1014
          %1322 = vmatpush.bf16.msra.mxu0 %v1010
          %1323 = vmatpush.bf16.msra.mxu0 %v1006
          %1324 = vmatpush.bf16.msra.mxu0 %v1002
          %1325 = vmatpush.bf16.msra.mxu0 %v998
          %1326 = vmatmul.bf16.gmra.mxu0 %v408
          %v1327 = vpop.f32.mrf.mxu0
          %v1328 = vadd.f32 %v1315, %v1327
          %v1329 = vpop.f32.mrf.mxu0
          %1330 = vdwg.mxu0
          %1331 = vmatpush.bf16.msra.mxu0 %v1058
          %1332 = vmatpush.bf16.msra.mxu0 %v1054
          %1333 = vmatpush.bf16.msra.mxu0 %v1050
          %1334 = vmatpush.bf16.msra.mxu0 %v1046
          %1335 = vmatpush.bf16.msra.mxu0 %v1042
          %1336 = vmatpush.bf16.msra.mxu0 %v1038
          %1337 = vmatpush.bf16.msra.mxu0 %v1034
          %1338 = vmatpush.bf16.msra.mxu0 %v1030
          %1339 = vmatmul.bf16.gmra.mxu0 %v409
          %v1340 = vpop.f32.mrf.mxu0
          %v1341 = vadd.f32 %v1328, %v1340
          %v1342 = vpop.f32.mrf.mxu0
          %1343 = vdwg.mxu0
          %1344 = vmatpush.bf16.msra.mxu0 %v963
          %1345 = vmatpush.bf16.msra.mxu0 %v959
          %1346 = vmatpush.bf16.msra.mxu0 %v955
          %1347 = vmatpush.bf16.msra.mxu0 %v951
          %1348 = vmatpush.bf16.msra.mxu0 %v947
          %1349 = vmatpush.bf16.msra.mxu0 %v943
          %1350 = vmatpush.bf16.msra.mxu0 %v939
          %1351 = vmatpush.bf16.msra.mxu0 %v935
          %1352 = vmatmul.bf16.gmra.mxu0 %v406
          %v1353 = vpop.f32.mrf.mxu0
          %v1354 = vadd.f32 %v543, %v1353
          %v1355 = vpop.f32.mrf.mxu0
          %1356 = vdwg.mxu0
          %1357 = vmatpush.bf16.msra.mxu0 %v995
          %1358 = vmatpush.bf16.msra.mxu0 %v991
          %1359 = vmatpush.bf16.msra.mxu0 %v987
          %1360 = vmatpush.bf16.msra.mxu0 %v983
          %1361 = vmatpush.bf16.msra.mxu0 %v979
          %1362 = vmatpush.bf16.msra.mxu0 %v975
          %1363 = vmatpush.bf16.msra.mxu0 %v971
          %1364 = vmatpush.bf16.msra.mxu0 %v967
          %1365 = vmatmul.bf16.gmra.mxu0 %v407
          %v1366 = vpop.f32.mrf.mxu0
          %v1367 = vadd.f32 %v1354, %v1366
          %v1368 = vpop.f32.mrf.mxu0
          %1369 = vdwg.mxu0
          %1370 = vmatpush.bf16.msra.mxu0 %v1027
          %1371 = vmatpush.bf16.msra.mxu0 %v1023
          %1372 = vmatpush.bf16.msra.mxu0 %v1019
          %1373 = vmatpush.bf16.msra.mxu0 %v1015
          %1374 = vmatpush.bf16.msra.mxu0 %v1011
          %1375 = vmatpush.bf16.msra.mxu0 %v1007
          %1376 = vmatpush.bf16.msra.mxu0 %v1003
          %1377 = vmatpush.bf16.msra.mxu0 %v999
          %1378 = vmatmul.bf16.gmra.mxu0 %v408
          %v1379 = vpop.f32.mrf.mxu0
          %v1380 = vadd.f32 %v1367, %v1379
          %v1381 = vpop.f32.mrf.mxu0
          %1382 = vdwg.mxu0
          %1383 = vmatpush.bf16.msra.mxu0 %v1059
          %1384 = vmatpush.bf16.msra.mxu0 %v1055
          %1385 = vmatpush.bf16.msra.mxu0 %v1051
          %1386 = vmatpush.bf16.msra.mxu0 %v1047
          %1387 = vmatpush.bf16.msra.mxu0 %v1043
          %1388 = vmatpush.bf16.msra.mxu0 %v1039
          %1389 = vmatpush.bf16.msra.mxu0 %v1035
          %1390 = vmatpush.bf16.msra.mxu0 %v1031
          %1391 = vmatmul.bf16.gmra.mxu0 %v409
          %v1392 = vpop.f32.mrf.mxu0
          %v1393 = vadd.f32 %v1380, %v1392
          %v1394 = vpop.f32.mrf.mxu0
          %1395 = vdwg.mxu0
          %v1396 = vpack.c.bf16 %v1237, %v1237
          %v1397 = vpack.c.bf16 %v1289, %v1289
          %v1398 = vpack.c.bf16 %v1341, %v1341
          %v1399 = vpack.c.bf16 %v1393, %v1393
          %s1400 = scalar_lea.vmem %s345, 1024 [#allocation8]
          %v1401 = vld [vmem:[%s1400] sm:$0xff]
          %v1402 = vld [vmem:[%s1400 + $0x8] sm:$0xff]
          %v1403 = vld [vmem:[%s1400 + $0x10] sm:$0xff]
          %v1404 = vld [vmem:[%s1400 + $0x18] sm:$0xff]
          %v1405 = vld [vmem:[%s1400 + $0x20] sm:$0xff]
          %v1406 = vld [vmem:[%s1400 + $0x28] sm:$0xff]
          %v1407 = vld [vmem:[%s1400 + $0x30] sm:$0xff]
          %v1408 = vld [vmem:[%s1400 + $0x38] sm:$0xff]
          %v1409 = vld [vmem:[%s1400 + $0x40] sm:$0xff]
          %v1410 = vld [vmem:[%s1400 + $0x48] sm:$0xff]
          %v1411 = vld [vmem:[%s1400 + $0x50] sm:$0xff]
          %v1412 = vld [vmem:[%s1400 + $0x58] sm:$0xff]
          %v1413 = vld [vmem:[%s1400 + $0x60] sm:$0xff]
          %v1414 = vld [vmem:[%s1400 + $0x68] sm:$0xff]
          %v1415 = vld [vmem:[%s1400 + $0x70] sm:$0xff]
          %v1416 = vld [vmem:[%s1400 + $0x78] sm:$0xff]
          %v1417 = vld [vmem:[%s1400 + $0x80] sm:$0xff]
          %v1418 = vld [vmem:[%s1400 + $0x88] sm:$0xff]
          %v1419 = vld [vmem:[%s1400 + $0x90] sm:$0xff]
          %v1420 = vld [vmem:[%s1400 + $0x98] sm:$0xff]
          %v1421 = vld [vmem:[%s1400 + $0xa0] sm:$0xff]
          %v1422 = vld [vmem:[%s1400 + $0xa8] sm:$0xff]
          %v1423 = vld [vmem:[%s1400 + $0xb0] sm:$0xff]
          %v1424 = vld [vmem:[%s1400 + $0xb8] sm:$0xff]
          %v1425 = vld [vmem:[%s1400 + $0xc0] sm:$0xff]
          %v1426 = vld [vmem:[%s1400 + $0xc8] sm:$0xff]
          %v1427 = vld [vmem:[%s1400 + $0xd0] sm:$0xff]
          %v1428 = vld [vmem:[%s1400 + $0xd8] sm:$0xff]
          %v1429 = vld [vmem:[%s1400 + $0xe0] sm:$0xff]
          %v1430 = vld [vmem:[%s1400 + $0xe8] sm:$0xff]
          %v1431 = vld [vmem:[%s1400 + $0xf0] sm:$0xff]
          %v1432 = vld [vmem:[%s1400 + $0xf8] sm:$0xff]
          %v1433 = vld [vmem:[%s1400 + $0x100] sm:$0xff]
          %v1434 = vld [vmem:[%s1400 + $0x108] sm:$0xff]
          %v1435 = vld [vmem:[%s1400 + $0x110] sm:$0xff]
          %v1436 = vld [vmem:[%s1400 + $0x118] sm:$0xff]
          %v1437 = vld [vmem:[%s1400 + $0x120] sm:$0xff]
          %v1438 = vld [vmem:[%s1400 + $0x128] sm:$0xff]
          %v1439 = vld [vmem:[%s1400 + $0x130] sm:$0xff]
          %v1440 = vld [vmem:[%s1400 + $0x138] sm:$0xff]
          %v1441 = vld [vmem:[%s1400 + $0x140] sm:$0xff]
          %v1442 = vld [vmem:[%s1400 + $0x148] sm:$0xff]
          %v1443 = vld [vmem:[%s1400 + $0x150] sm:$0xff]
          %v1444 = vld [vmem:[%s1400 + $0x158] sm:$0xff]
          %v1445 = vld [vmem:[%s1400 + $0x160] sm:$0xff]
          %v1446 = vld [vmem:[%s1400 + $0x168] sm:$0xff]
          %v1447 = vld [vmem:[%s1400 + $0x170] sm:$0xff]
          %v1448 = vld [vmem:[%s1400 + $0x178] sm:$0xff]
          %v1449 = vld [vmem:[%s1400 + $0x180] sm:$0xff]
          %v1450 = vld [vmem:[%s1400 + $0x188] sm:$0xff]
          %v1451 = vld [vmem:[%s1400 + $0x190] sm:$0xff]
          %v1452 = vld [vmem:[%s1400 + $0x198] sm:$0xff]
          %v1453 = vld [vmem:[%s1400 + $0x1a0] sm:$0xff]
          %v1454 = vld [vmem:[%s1400 + $0x1a8] sm:$0xff]
          %v1455 = vld [vmem:[%s1400 + $0x1b0] sm:$0xff]
          %v1456 = vld [vmem:[%s1400 + $0x1b8] sm:$0xff]
          %v1457 = vld [vmem:[%s1400 + $0x1c0] sm:$0xff]
          %v1458 = vld [vmem:[%s1400 + $0x1c8] sm:$0xff]
          %v1459 = vld [vmem:[%s1400 + $0x1d0] sm:$0xff]
          %v1460 = vld [vmem:[%s1400 + $0x1d8] sm:$0xff]
          %v1461 = vld [vmem:[%s1400 + $0x1e0] sm:$0xff]
          %v1462 = vld [vmem:[%s1400 + $0x1e8] sm:$0xff]
          %v1463 = vld [vmem:[%s1400 + $0x1f0] sm:$0xff]
          %v1464 = vld [vmem:[%s1400 + $0x1f8] sm:$0xff]
          %v1465 = vld [vmem:[%s1400 + $0x200] sm:$0xff]
          %v1466 = vld [vmem:[%s1400 + $0x208] sm:$0xff]
          %v1467 = vld [vmem:[%s1400 + $0x210] sm:$0xff]
          %v1468 = vld [vmem:[%s1400 + $0x218] sm:$0xff]
          %v1469 = vld [vmem:[%s1400 + $0x220] sm:$0xff]
          %v1470 = vld [vmem:[%s1400 + $0x228] sm:$0xff]
          %v1471 = vld [vmem:[%s1400 + $0x230] sm:$0xff]
          %v1472 = vld [vmem:[%s1400 + $0x238] sm:$0xff]
          %v1473 = vld [vmem:[%s1400 + $0x240] sm:$0xff]
          %v1474 = vld [vmem:[%s1400 + $0x248] sm:$0xff]
          %v1475 = vld [vmem:[%s1400 + $0x250] sm:$0xff]
          %v1476 = vld [vmem:[%s1400 + $0x258] sm:$0xff]
          %v1477 = vld [vmem:[%s1400 + $0x260] sm:$0xff]
          %v1478 = vld [vmem:[%s1400 + $0x268] sm:$0xff]
          %v1479 = vld [vmem:[%s1400 + $0x270] sm:$0xff]
          %v1480 = vld [vmem:[%s1400 + $0x278] sm:$0xff]
          %v1481 = vld [vmem:[%s1400 + $0x280] sm:$0xff]
          %v1482 = vld [vmem:[%s1400 + $0x288] sm:$0xff]
          %v1483 = vld [vmem:[%s1400 + $0x290] sm:$0xff]
          %v1484 = vld [vmem:[%s1400 + $0x298] sm:$0xff]
          %v1485 = vld [vmem:[%s1400 + $0x2a0] sm:$0xff]
          %v1486 = vld [vmem:[%s1400 + $0x2a8] sm:$0xff]
          %v1487 = vld [vmem:[%s1400 + $0x2b0] sm:$0xff]
          %v1488 = vld [vmem:[%s1400 + $0x2b8] sm:$0xff]
          %v1489 = vld [vmem:[%s1400 + $0x2c0] sm:$0xff]
          %v1490 = vld [vmem:[%s1400 + $0x2c8] sm:$0xff]
          %v1491 = vld [vmem:[%s1400 + $0x2d0] sm:$0xff]
          %v1492 = vld [vmem:[%s1400 + $0x2d8] sm:$0xff]
          %v1493 = vld [vmem:[%s1400 + $0x2e0] sm:$0xff]
          %v1494 = vld [vmem:[%s1400 + $0x2e8] sm:$0xff]
          %v1495 = vld [vmem:[%s1400 + $0x2f0] sm:$0xff]
          %v1496 = vld [vmem:[%s1400 + $0x2f8] sm:$0xff]
          %v1497 = vld [vmem:[%s1400 + $0x300] sm:$0xff]
          %v1498 = vld [vmem:[%s1400 + $0x308] sm:$0xff]
          %v1499 = vld [vmem:[%s1400 + $0x310] sm:$0xff]
          %v1500 = vld [vmem:[%s1400 + $0x318] sm:$0xff]
          %v1501 = vld [vmem:[%s1400 + $0x320] sm:$0xff]
          %v1502 = vld [vmem:[%s1400 + $0x328] sm:$0xff]
          %v1503 = vld [vmem:[%s1400 + $0x330] sm:$0xff]
          %v1504 = vld [vmem:[%s1400 + $0x338] sm:$0xff]
          %v1505 = vld [vmem:[%s1400 + $0x340] sm:$0xff]
          %v1506 = vld [vmem:[%s1400 + $0x348] sm:$0xff]
          %v1507 = vld [vmem:[%s1400 + $0x350] sm:$0xff]
          %v1508 = vld [vmem:[%s1400 + $0x358] sm:$0xff]
          %v1509 = vld [vmem:[%s1400 + $0x360] sm:$0xff]
          %v1510 = vld [vmem:[%s1400 + $0x368] sm:$0xff]
          %v1511 = vld [vmem:[%s1400 + $0x370] sm:$0xff]
          %v1512 = vld [vmem:[%s1400 + $0x378] sm:$0xff]
          %v1513 = vld [vmem:[%s1400 + $0x380] sm:$0xff]
          %v1514 = vld [vmem:[%s1400 + $0x388] sm:$0xff]
          %v1515 = vld [vmem:[%s1400 + $0x390] sm:$0xff]
          %v1516 = vld [vmem:[%s1400 + $0x398] sm:$0xff]
          %v1517 = vld [vmem:[%s1400 + $0x3a0] sm:$0xff]
          %v1518 = vld [vmem:[%s1400 + $0x3a8] sm:$0xff]
          %v1519 = vld [vmem:[%s1400 + $0x3b0] sm:$0xff]
          %v1520 = vld [vmem:[%s1400 + $0x3b8] sm:$0xff]
          %v1521 = vld [vmem:[%s1400 + $0x3c0] sm:$0xff]
          %v1522 = vld [vmem:[%s1400 + $0x3c8] sm:$0xff]
          %v1523 = vld [vmem:[%s1400 + $0x3d0] sm:$0xff]
          %v1524 = vld [vmem:[%s1400 + $0x3d8] sm:$0xff]
          %v1525 = vld [vmem:[%s1400 + $0x3e0] sm:$0xff]
          %v1526 = vld [vmem:[%s1400 + $0x3e8] sm:$0xff]
          %v1527 = vld [vmem:[%s1400 + $0x3f0] sm:$0xff]
          %v1528 = vld [vmem:[%s1400 + $0x3f8] sm:$0xff]
          %s1529 = scalar_lea.vmem [#allocation9], 4
          %v1530 = vld [vmem:[%s1529] sm:$0xf]
          %v1532 = vperm.slane %v1530, 0
          %v1533 = vperm.slane %v1530, 1
          %v1534 = vperm.slane %v1530, 2
          %v1535 = vperm.slane %v1530, 3
          %v1668 = vunpack.c.l.b16 %v1401
          %v1669 = vunpack.c.h.b16 %v1401
          %v1670 = vunpack.c.l.b16 %v1402
          %v1671 = vunpack.c.h.b16 %v1402
          %v1672 = vunpack.c.l.b16 %v1403
          %v1673 = vunpack.c.h.b16 %v1403
          %v1674 = vunpack.c.l.b16 %v1404
          %v1675 = vunpack.c.h.b16 %v1404
          %v1676 = vunpack.c.l.b16 %v1405
          %v1677 = vunpack.c.h.b16 %v1405
          %v1678 = vunpack.c.l.b16 %v1406
          %v1679 = vunpack.c.h.b16 %v1406
          %v1680 = vunpack.c.l.b16 %v1407
          %v1681 = vunpack.c.h.b16 %v1407
          %v1682 = vunpack.c.l.b16 %v1408
          %v1683 = vunpack.c.h.b16 %v1408
          %v1684 = vunpack.c.l.b16 %v1409
          %v1685 = vunpack.c.h.b16 %v1409
          %v1686 = vunpack.c.l.b16 %v1410
          %v1687 = vunpack.c.h.b16 %v1410
          %v1688 = vunpack.c.l.b16 %v1411
          %v1689 = vunpack.c.h.b16 %v1411
          %v1690 = vunpack.c.l.b16 %v1412
          %v1691 = vunpack.c.h.b16 %v1412
          %v1692 = vunpack.c.l.b16 %v1413
          %v1693 = vunpack.c.h.b16 %v1413
          %v1694 = vunpack.c.l.b16 %v1414
          %v1695 = vunpack.c.h.b16 %v1414
          %v1696 = vunpack.c.l.b16 %v1415
          %v1697 = vunpack.c.h.b16 %v1415
          %v1698 = vunpack.c.l.b16 %v1416
          %v1699 = vunpack.c.h.b16 %v1416
          %v1700 = vunpack.c.l.b16 %v1417
          %v1701 = vunpack.c.h.b16 %v1417
          %v1702 = vunpack.c.l.b16 %v1418
          %v1703 = vunpack.c.h.b16 %v1418
          %v1704 = vunpack.c.l.b16 %v1419
          %v1705 = vunpack.c.h.b16 %v1419
          %v1706 = vunpack.c.l.b16 %v1420
          %v1707 = vunpack.c.h.b16 %v1420
          %v1708 = vunpack.c.l.b16 %v1421
          %v1709 = vunpack.c.h.b16 %v1421
          %v1710 = vunpack.c.l.b16 %v1422
          %v1711 = vunpack.c.h.b16 %v1422
          %v1712 = vunpack.c.l.b16 %v1423
          %v1713 = vunpack.c.h.b16 %v1423
          %v1714 = vunpack.c.l.b16 %v1424
          %v1715 = vunpack.c.h.b16 %v1424
          %v1716 = vunpack.c.l.b16 %v1425
          %v1717 = vunpack.c.h.b16 %v1425
          %v1718 = vunpack.c.l.b16 %v1426
          %v1719 = vunpack.c.h.b16 %v1426
          %v1720 = vunpack.c.l.b16 %v1427
          %v1721 = vunpack.c.h.b16 %v1427
          %v1722 = vunpack.c.l.b16 %v1428
          %v1723 = vunpack.c.h.b16 %v1428
          %v1724 = vunpack.c.l.b16 %v1429
          %v1725 = vunpack.c.h.b16 %v1429
          %v1726 = vunpack.c.l.b16 %v1430
          %v1727 = vunpack.c.h.b16 %v1430
          %v1728 = vunpack.c.l.b16 %v1431
          %v1729 = vunpack.c.h.b16 %v1431
          %v1730 = vunpack.c.l.b16 %v1432
          %v1731 = vunpack.c.h.b16 %v1432
          %v1732 = vunpack.c.l.b16 %v1433
          %v1733 = vunpack.c.h.b16 %v1433
          %v1734 = vunpack.c.l.b16 %v1434
          %v1735 = vunpack.c.h.b16 %v1434
          %v1736 = vunpack.c.l.b16 %v1435
          %v1737 = vunpack.c.h.b16 %v1435
          %v1738 = vunpack.c.l.b16 %v1436
          %v1739 = vunpack.c.h.b16 %v1436
          %v1740 = vunpack.c.l.b16 %v1437
          %v1741 = vunpack.c.h.b16 %v1437
          %v1742 = vunpack.c.l.b16 %v1438
          %v1743 = vunpack.c.h.b16 %v1438
          %v1744 = vunpack.c.l.b16 %v1439
          %v1745 = vunpack.c.h.b16 %v1439
          %v1746 = vunpack.c.l.b16 %v1440
          %v1747 = vunpack.c.h.b16 %v1440
          %v1748 = vunpack.c.l.b16 %v1441
          %v1749 = vunpack.c.h.b16 %v1441
          %v1750 = vunpack.c.l.b16 %v1442
          %v1751 = vunpack.c.h.b16 %v1442
          %v1752 = vunpack.c.l.b16 %v1443
          %v1753 = vunpack.c.h.b16 %v1443
          %v1754 = vunpack.c.l.b16 %v1444
          %v1755 = vunpack.c.h.b16 %v1444
          %v1756 = vunpack.c.l.b16 %v1445
          %v1757 = vunpack.c.h.b16 %v1445
          %v1758 = vunpack.c.l.b16 %v1446
          %v1759 = vunpack.c.h.b16 %v1446
          %v1760 = vunpack.c.l.b16 %v1447
          %v1761 = vunpack.c.h.b16 %v1447
          %v1762 = vunpack.c.l.b16 %v1448
          %v1763 = vunpack.c.h.b16 %v1448
          %v1764 = vunpack.c.l.b16 %v1449
          %v1765 = vunpack.c.h.b16 %v1449
          %v1766 = vunpack.c.l.b16 %v1450
          %v1767 = vunpack.c.h.b16 %v1450
          %v1768 = vunpack.c.l.b16 %v1451
          %v1769 = vunpack.c.h.b16 %v1451
          %v1770 = vunpack.c.l.b16 %v1452
          %v1771 = vunpack.c.h.b16 %v1452
          %v1772 = vunpack.c.l.b16 %v1453
          %v1773 = vunpack.c.h.b16 %v1453
          %v1774 = vunpack.c.l.b16 %v1454
          %v1775 = vunpack.c.h.b16 %v1454
          %v1776 = vunpack.c.l.b16 %v1455
          %v1777 = vunpack.c.h.b16 %v1455
          %v1778 = vunpack.c.l.b16 %v1456
          %v1779 = vunpack.c.h.b16 %v1456
          %v1780 = vunpack.c.l.b16 %v1457
          %v1781 = vunpack.c.h.b16 %v1457
          %v1782 = vunpack.c.l.b16 %v1458
          %v1783 = vunpack.c.h.b16 %v1458
          %v1784 = vunpack.c.l.b16 %v1459
          %v1785 = vunpack.c.h.b16 %v1459
          %v1786 = vunpack.c.l.b16 %v1460
          %v1787 = vunpack.c.h.b16 %v1460
          %v1788 = vunpack.c.l.b16 %v1461
          %v1789 = vunpack.c.h.b16 %v1461
          %v1790 = vunpack.c.l.b16 %v1462
          %v1791 = vunpack.c.h.b16 %v1462
          %v1792 = vunpack.c.l.b16 %v1463
          %v1793 = vunpack.c.h.b16 %v1463
          %v1794 = vunpack.c.l.b16 %v1464
          %v1795 = vunpack.c.h.b16 %v1464
          %v1796 = vunpack.c.l.b16 %v1465
          %v1797 = vunpack.c.h.b16 %v1465
          %v1798 = vunpack.c.l.b16 %v1466
          %v1799 = vunpack.c.h.b16 %v1466
          %v1800 = vunpack.c.l.b16 %v1467
          %v1801 = vunpack.c.h.b16 %v1467
          %v1802 = vunpack.c.l.b16 %v1468
          %v1803 = vunpack.c.h.b16 %v1468
          %v1804 = vunpack.c.l.b16 %v1469
          %v1805 = vunpack.c.h.b16 %v1469
          %v1806 = vunpack.c.l.b16 %v1470
          %v1807 = vunpack.c.h.b16 %v1470
          %v1808 = vunpack.c.l.b16 %v1471
          %v1809 = vunpack.c.h.b16 %v1471
          %v1810 = vunpack.c.l.b16 %v1472
          %v1811 = vunpack.c.h.b16 %v1472
          %v1812 = vunpack.c.l.b16 %v1473
          %v1813 = vunpack.c.h.b16 %v1473
          %v1814 = vunpack.c.l.b16 %v1474
          %v1815 = vunpack.c.h.b16 %v1474
          %v1816 = vunpack.c.l.b16 %v1475
          %v1817 = vunpack.c.h.b16 %v1475
          %v1818 = vunpack.c.l.b16 %v1476
          %v1819 = vunpack.c.h.b16 %v1476
          %v1820 = vunpack.c.l.b16 %v1477
          %v1821 = vunpack.c.h.b16 %v1477
          %v1822 = vunpack.c.l.b16 %v1478
          %v1823 = vunpack.c.h.b16 %v1478
          %v1824 = vunpack.c.l.b16 %v1479
          %v1825 = vunpack.c.h.b16 %v1479
          %v1826 = vunpack.c.l.b16 %v1480
          %v1827 = vunpack.c.h.b16 %v1480
          %v1828 = vunpack.c.l.b16 %v1481
          %v1829 = vunpack.c.h.b16 %v1481
          %v1830 = vunpack.c.l.b16 %v1482
          %v1831 = vunpack.c.h.b16 %v1482
          %v1832 = vunpack.c.l.b16 %v1483
          %v1833 = vunpack.c.h.b16 %v1483
          %v1834 = vunpack.c.l.b16 %v1484
          %v1835 = vunpack.c.h.b16 %v1484
          %v1836 = vunpack.c.l.b16 %v1485
          %v1837 = vunpack.c.h.b16 %v1485
          %v1838 = vunpack.c.l.b16 %v1486
          %v1839 = vunpack.c.h.b16 %v1486
          %v1840 = vunpack.c.l.b16 %v1487
          %v1841 = vunpack.c.h.b16 %v1487
          %v1842 = vunpack.c.l.b16 %v1488
          %v1843 = vunpack.c.h.b16 %v1488
          %v1844 = vunpack.c.l.b16 %v1489
          %v1845 = vunpack.c.h.b16 %v1489
          %v1846 = vunpack.c.l.b16 %v1490
          %v1847 = vunpack.c.h.b16 %v1490
          %v1848 = vunpack.c.l.b16 %v1491
          %v1849 = vunpack.c.h.b16 %v1491
          %v1850 = vunpack.c.l.b16 %v1492
          %v1851 = vunpack.c.h.b16 %v1492
          %v1852 = vunpack.c.l.b16 %v1493
          %v1853 = vunpack.c.h.b16 %v1493
          %v1854 = vunpack.c.l.b16 %v1494
          %v1855 = vunpack.c.h.b16 %v1494
          %v1856 = vunpack.c.l.b16 %v1495
          %v1857 = vunpack.c.h.b16 %v1495
          %v1858 = vunpack.c.l.b16 %v1496
          %v1859 = vunpack.c.h.b16 %v1496
          %v1860 = vunpack.c.l.b16 %v1497
          %v1861 = vunpack.c.h.b16 %v1497
          %v1862 = vunpack.c.l.b16 %v1498
          %v1863 = vunpack.c.h.b16 %v1498
          %v1864 = vunpack.c.l.b16 %v1499
          %v1865 = vunpack.c.h.b16 %v1499
          %v1866 = vunpack.c.l.b16 %v1500
          %v1867 = vunpack.c.h.b16 %v1500
          %v1868 = vunpack.c.l.b16 %v1501
          %v1869 = vunpack.c.h.b16 %v1501
          %v1870 = vunpack.c.l.b16 %v1502
          %v1871 = vunpack.c.h.b16 %v1502
          %v1872 = vunpack.c.l.b16 %v1503
          %v1873 = vunpack.c.h.b16 %v1503
          %v1874 = vunpack.c.l.b16 %v1504
          %v1875 = vunpack.c.h.b16 %v1504
          %v1876 = vunpack.c.l.b16 %v1505
          %v1877 = vunpack.c.h.b16 %v1505
          %v1878 = vunpack.c.l.b16 %v1506
          %v1879 = vunpack.c.h.b16 %v1506
          %v1880 = vunpack.c.l.b16 %v1507
          %v1881 = vunpack.c.h.b16 %v1507
          %v1882 = vunpack.c.l.b16 %v1508
          %v1883 = vunpack.c.h.b16 %v1508
          %v1884 = vunpack.c.l.b16 %v1509
          %v1885 = vunpack.c.h.b16 %v1509
          %v1886 = vunpack.c.l.b16 %v1510
          %v1887 = vunpack.c.h.b16 %v1510
          %v1888 = vunpack.c.l.b16 %v1511
          %v1889 = vunpack.c.h.b16 %v1511
          %v1890 = vunpack.c.l.b16 %v1512
          %v1891 = vunpack.c.h.b16 %v1512
          %v1892 = vunpack.c.l.b16 %v1513
          %v1893 = vunpack.c.h.b16 %v1513
          %v1894 = vunpack.c.l.b16 %v1514
          %v1895 = vunpack.c.h.b16 %v1514
          %v1896 = vunpack.c.l.b16 %v1515
          %v1897 = vunpack.c.h.b16 %v1515
          %v1898 = vunpack.c.l.b16 %v1516
          %v1899 = vunpack.c.h.b16 %v1516
          %v1900 = vunpack.c.l.b16 %v1517
          %v1901 = vunpack.c.h.b16 %v1517
          %v1902 = vunpack.c.l.b16 %v1518
          %v1903 = vunpack.c.h.b16 %v1518
          %v1904 = vunpack.c.l.b16 %v1519
          %v1905 = vunpack.c.h.b16 %v1519
          %v1906 = vunpack.c.l.b16 %v1520
          %v1907 = vunpack.c.h.b16 %v1520
          %v1908 = vunpack.c.l.b16 %v1521
          %v1909 = vunpack.c.h.b16 %v1521
          %v1910 = vunpack.c.l.b16 %v1522
          %v1911 = vunpack.c.h.b16 %v1522
          %v1912 = vunpack.c.l.b16 %v1523
          %v1913 = vunpack.c.h.b16 %v1523
          %v1914 = vunpack.c.l.b16 %v1524
          %v1915 = vunpack.c.h.b16 %v1524
          %v1916 = vunpack.c.l.b16 %v1525
          %v1917 = vunpack.c.h.b16 %v1525
          %v1918 = vunpack.c.l.b16 %v1526
          %v1919 = vunpack.c.h.b16 %v1526
          %v1920 = vunpack.c.l.b16 %v1527
          %v1921 = vunpack.c.h.b16 %v1527
          %v1922 = vunpack.c.l.b16 %v1528
          %v1923 = vunpack.c.h.b16 %v1528
          %v1924 = vpack.c.b16 %v1672, %v1668
          %v1925 = vpack.c.b16 %v1673, %v1669
          %v1926 = vpack.c.b16 %v1674, %v1670
          %v1927 = vpack.c.b16 %v1675, %v1671
          %v1928 = vpack.c.b16 %v1680, %v1676
          %v1929 = vpack.c.b16 %v1681, %v1677
          %v1930 = vpack.c.b16 %v1682, %v1678
          %v1931 = vpack.c.b16 %v1683, %v1679
          %v1932 = vpack.c.b16 %v1688, %v1684
          %v1933 = vpack.c.b16 %v1689, %v1685
          %v1934 = vpack.c.b16 %v1690, %v1686
          %v1935 = vpack.c.b16 %v1691, %v1687
          %v1936 = vpack.c.b16 %v1696, %v1692
          %v1937 = vpack.c.b16 %v1697, %v1693
          %v1938 = vpack.c.b16 %v1698, %v1694
          %v1939 = vpack.c.b16 %v1699, %v1695
          %v1940 = vpack.c.b16 %v1704, %v1700
          %v1941 = vpack.c.b16 %v1705, %v1701
          %v1942 = vpack.c.b16 %v1706, %v1702
          %v1943 = vpack.c.b16 %v1707, %v1703
          %v1944 = vpack.c.b16 %v1712, %v1708
          %v1945 = vpack.c.b16 %v1713, %v1709
          %v1946 = vpack.c.b16 %v1714, %v1710
          %v1947 = vpack.c.b16 %v1715, %v1711
          %v1948 = vpack.c.b16 %v1720, %v1716
          %v1949 = vpack.c.b16 %v1721, %v1717
          %v1950 = vpack.c.b16 %v1722, %v1718
          %v1951 = vpack.c.b16 %v1723, %v1719
          %v1952 = vpack.c.b16 %v1728, %v1724
          %v1953 = vpack.c.b16 %v1729, %v1725
          %v1954 = vpack.c.b16 %v1730, %v1726
          %v1955 = vpack.c.b16 %v1731, %v1727
          %v1956 = vpack.c.b16 %v1736, %v1732
          %v1957 = vpack.c.b16 %v1737, %v1733
          %v1958 = vpack.c.b16 %v1738, %v1734
          %v1959 = vpack.c.b16 %v1739, %v1735
          %v1960 = vpack.c.b16 %v1744, %v1740
          %v1961 = vpack.c.b16 %v1745, %v1741
          %v1962 = vpack.c.b16 %v1746, %v1742
          %v1963 = vpack.c.b16 %v1747, %v1743
          %v1964 = vpack.c.b16 %v1752, %v1748
          %v1965 = vpack.c.b16 %v1753, %v1749
          %v1966 = vpack.c.b16 %v1754, %v1750
          %v1967 = vpack.c.b16 %v1755, %v1751
          %v1968 = vpack.c.b16 %v1760, %v1756
          %v1969 = vpack.c.b16 %v1761, %v1757
          %v1970 = vpack.c.b16 %v1762, %v1758
          %v1971 = vpack.c.b16 %v1763, %v1759
          %v1972 = vpack.c.b16 %v1768, %v1764
          %v1973 = vpack.c.b16 %v1769, %v1765
          %v1974 = vpack.c.b16 %v1770, %v1766
          %v1975 = vpack.c.b16 %v1771, %v1767
          %v1976 = vpack.c.b16 %v1776, %v1772
          %v1977 = vpack.c.b16 %v1777, %v1773
          %v1978 = vpack.c.b16 %v1778, %v1774
          %v1979 = vpack.c.b16 %v1779, %v1775
          %v1980 = vpack.c.b16 %v1784, %v1780
          %v1981 = vpack.c.b16 %v1785, %v1781
          %v1982 = vpack.c.b16 %v1786, %v1782
          %v1983 = vpack.c.b16 %v1787, %v1783
          %v1984 = vpack.c.b16 %v1792, %v1788
          %v1985 = vpack.c.b16 %v1793, %v1789
          %v1986 = vpack.c.b16 %v1794, %v1790
          %v1987 = vpack.c.b16 %v1795, %v1791
          %v1988 = vpack.c.b16 %v1800, %v1796
          %v1989 = vpack.c.b16 %v1801, %v1797
          %v1990 = vpack.c.b16 %v1802, %v1798
          %v1991 = vpack.c.b16 %v1803, %v1799
          %v1992 = vpack.c.b16 %v1808, %v1804
          %v1993 = vpack.c.b16 %v1809, %v1805
          %v1994 = vpack.c.b16 %v1810, %v1806
          %v1995 = vpack.c.b16 %v1811, %v1807
          %v1996 = vpack.c.b16 %v1816, %v1812
          %v1997 = vpack.c.b16 %v1817, %v1813
          %v1998 = vpack.c.b16 %v1818, %v1814
          %v1999 = vpack.c.b16 %v1819, %v1815
          %v2000 = vpack.c.b16 %v1824, %v1820
          %v2001 = vpack.c.b16 %v1825, %v1821
          %v2002 = vpack.c.b16 %v1826, %v1822
          %v2003 = vpack.c.b16 %v1827, %v1823
          %v2004 = vpack.c.b16 %v1832, %v1828
          %v2005 = vpack.c.b16 %v1833, %v1829
          %v2006 = vpack.c.b16 %v1834, %v1830
          %v2007 = vpack.c.b16 %v1835, %v1831
          %v2008 = vpack.c.b16 %v1840, %v1836
          %v2009 = vpack.c.b16 %v1841, %v1837
          %v2010 = vpack.c.b16 %v1842, %v1838
          %v2011 = vpack.c.b16 %v1843, %v1839
          %v2012 = vpack.c.b16 %v1848, %v1844
          %v2013 = vpack.c.b16 %v1849, %v1845
          %v2014 = vpack.c.b16 %v1850, %v1846
          %v2015 = vpack.c.b16 %v1851, %v1847
          %v2016 = vpack.c.b16 %v1856, %v1852
          %v2017 = vpack.c.b16 %v1857, %v1853
          %v2018 = vpack.c.b16 %v1858, %v1854
          %v2019 = vpack.c.b16 %v1859, %v1855
          %v2020 = vpack.c.b16 %v1864, %v1860
          %v2021 = vpack.c.b16 %v1865, %v1861
          %v2022 = vpack.c.b16 %v1866, %v1862
          %v2023 = vpack.c.b16 %v1867, %v1863
          %v2024 = vpack.c.b16 %v1872, %v1868
          %v2025 = vpack.c.b16 %v1873, %v1869
          %v2026 = vpack.c.b16 %v1874, %v1870
          %v2027 = vpack.c.b16 %v1875, %v1871
          %v2028 = vpack.c.b16 %v1880, %v1876
          %v2029 = vpack.c.b16 %v1881, %v1877
          %v2030 = vpack.c.b16 %v1882, %v1878
          %v2031 = vpack.c.b16 %v1883, %v1879
          %v2032 = vpack.c.b16 %v1888, %v1884
          %v2033 = vpack.c.b16 %v1889, %v1885
          %v2034 = vpack.c.b16 %v1890, %v1886
          %v2035 = vpack.c.b16 %v1891, %v1887
          %v2036 = vpack.c.b16 %v1896, %v1892
          %v2037 = vpack.c.b16 %v1897, %v1893
          %v2038 = vpack.c.b16 %v1898, %v1894
          %v2039 = vpack.c.b16 %v1899, %v1895
          %v2040 = vpack.c.b16 %v1904, %v1900
          %v2041 = vpack.c.b16 %v1905, %v1901
          %v2042 = vpack.c.b16 %v1906, %v1902
          %v2043 = vpack.c.b16 %v1907, %v1903
          %v2044 = vpack.c.b16 %v1912, %v1908
          %v2045 = vpack.c.b16 %v1913, %v1909
          %v2046 = vpack.c.b16 %v1914, %v1910
          %v2047 = vpack.c.b16 %v1915, %v1911
          %v2048 = vpack.c.b16 %v1920, %v1916
          %v2049 = vpack.c.b16 %v1921, %v1917
          %v2050 = vpack.c.b16 %v1922, %v1918
          %v2051 = vpack.c.b16 %v1923, %v1919
          %2180 = vmatpush.bf16.msra.mxu0 %v1952
          %2181 = vmatpush.bf16.msra.mxu0 %v1948
          %2182 = vmatpush.bf16.msra.mxu0 %v1944
          %2183 = vmatpush.bf16.msra.mxu0 %v1940
          %2184 = vmatpush.bf16.msra.mxu0 %v1936
          %2185 = vmatpush.bf16.msra.mxu0 %v1932
          %2186 = vmatpush.bf16.msra.mxu0 %v1928
          %2187 = vmatpush.bf16.msra.mxu0 %v1924
          %2188 = vmatmul.bf16.gmra.mxu0 %v1396
          %v2189 = vpop.f32.mrf.mxu0
          %v2190 = vadd.f32 %v1532, %v2189
          %v2191 = vpop.f32.mrf.mxu0
          %2192 = vdwg.mxu0
          %2193 = vmatpush.bf16.msra.mxu0 %v1984
          %2194 = vmatpush.bf16.msra.mxu0 %v1980
          %2195 = vmatpush.bf16.msra.mxu0 %v1976
          %2196 = vmatpush.bf16.msra.mxu0 %v1972
          %2197 = vmatpush.bf16.msra.mxu0 %v1968
          %2198 = vmatpush.bf16.msra.mxu0 %v1964
          %2199 = vmatpush.bf16.msra.mxu0 %v1960
          %2200 = vmatpush.bf16.msra.mxu0 %v1956
          %2201 = vmatmul.bf16.gmra.mxu0 %v1397
          %v2202 = vpop.f32.mrf.mxu0
          %v2203 = vadd.f32 %v2190, %v2202
          %v2204 = vpop.f32.mrf.mxu0
          %2205 = vdwg.mxu0
          %2206 = vmatpush.bf16.msra.mxu0 %v2016
          %2207 = vmatpush.bf16.msra.mxu0 %v2012
          %2208 = vmatpush.bf16.msra.mxu0 %v2008
          %2209 = vmatpush.bf16.msra.mxu0 %v2004
          %2210 = vmatpush.bf16.msra.mxu0 %v2000
          %2211 = vmatpush.bf16.msra.mxu0 %v1996
          %2212 = vmatpush.bf16.msra.mxu0 %v1992
          %2213 = vmatpush.bf16.msra.mxu0 %v1988
          %2214 = vmatmul.bf16.gmra.mxu0 %v1398
          %v2215 = vpop.f32.mrf.mxu0
          %v2216 = vadd.f32 %v2203, %v2215
          %v2217 = vpop.f32.mrf.mxu0
          %2218 = vdwg.mxu0
          %2219 = vmatpush.bf16.msra.mxu0 %v2048
          %2220 = vmatpush.bf16.msra.mxu0 %v2044
          %2221 = vmatpush.bf16.msra.mxu0 %v2040
          %2222 = vmatpush.bf16.msra.mxu0 %v2036
          %2223 = vmatpush.bf16.msra.mxu0 %v2032
          %2224 = vmatpush.bf16.msra.mxu0 %v2028
          %2225 = vmatpush.bf16.msra.mxu0 %v2024
          %2226 = vmatpush.bf16.msra.mxu0 %v2020
          %2227 = vmatmul.bf16.gmra.mxu0 %v1399
          %v2228 = vpop.f32.mrf.mxu0
          %v2229 = vadd.f32 %v2216, %v2228
          %v2230 = vpop.f32.mrf.mxu0
          %2231 = vdwg.mxu0
          %2232 = vmatpush.bf16.msra.mxu0 %v1953
          %2233 = vmatpush.bf16.msra.mxu0 %v1949
          %2234 = vmatpush.bf16.msra.mxu0 %v1945
          %2235 = vmatpush.bf16.msra.mxu0 %v1941
          %2236 = vmatpush.bf16.msra.mxu0 %v1937
          %2237 = vmatpush.bf16.msra.mxu0 %v1933
          %2238 = vmatpush.bf16.msra.mxu0 %v1929
          %2239 = vmatpush.bf16.msra.mxu0 %v1925
          %2240 = vmatmul.bf16.gmra.mxu0 %v1396
          %v2241 = vpop.f32.mrf.mxu0
          %v2242 = vadd.f32 %v1533, %v2241
          %v2243 = vpop.f32.mrf.mxu0
          %2244 = vdwg.mxu0
          %2245 = vmatpush.bf16.msra.mxu0 %v1985
          %2246 = vmatpush.bf16.msra.mxu0 %v1981
          %2247 = vmatpush.bf16.msra.mxu0 %v1977
          %2248 = vmatpush.bf16.msra.mxu0 %v1973
          %2249 = vmatpush.bf16.msra.mxu0 %v1969
          %2250 = vmatpush.bf16.msra.mxu0 %v1965
          %2251 = vmatpush.bf16.msra.mxu0 %v1961
          %2252 = vmatpush.bf16.msra.mxu0 %v1957
          %2253 = vmatmul.bf16.gmra.mxu0 %v1397
          %v2254 = vpop.f32.mrf.mxu0
          %v2255 = vadd.f32 %v2242, %v2254
          %v2256 = vpop.f32.mrf.mxu0
          %2257 = vdwg.mxu0
          %2258 = vmatpush.bf16.msra.mxu0 %v2017
          %2259 = vmatpush.bf16.msra.mxu0 %v2013
          %2260 = vmatpush.bf16.msra.mxu0 %v2009
          %2261 = vmatpush.bf16.msra.mxu0 %v2005
          %2262 = vmatpush.bf16.msra.mxu0 %v2001
          %2263 = vmatpush.bf16.msra.mxu0 %v1997
          %2264 = vmatpush.bf16.msra.mxu0 %v1993
          %2265 = vmatpush.bf16.msra.mxu0 %v1989
          %2266 = vmatmul.bf16.gmra.mxu0 %v1398
          %v2267 = vpop.f32.mrf.mxu0
          %v2268 = vadd.f32 %v2255, %v2267
          %v2269 = vpop.f32.mrf.mxu0
          %2270 = vdwg.mxu0
          %2271 = vmatpush.bf16.msra.mxu0 %v2049
          %2272 = vmatpush.bf16.msra.mxu0 %v2045
          %2273 = vmatpush.bf16.msra.mxu0 %v2041
          %2274 = vmatpush.bf16.msra.mxu0 %v2037
          %2275 = vmatpush.bf16.msra.mxu0 %v2033
          %2276 = vmatpush.bf16.msra.mxu0 %v2029
          %2277 = vmatpush.bf16.msra.mxu0 %v2025
          %2278 = vmatpush.bf16.msra.mxu0 %v2021
          %2279 = vmatmul.bf16.gmra.mxu0 %v1399
          %v2280 = vpop.f32.mrf.mxu0
          %v2281 = vadd.f32 %v2268, %v2280
          %v2282 = vpop.f32.mrf.mxu0
          %2283 = vdwg.mxu0
          %2284 = vmatpush.bf16.msra.mxu0 %v1954
          %2285 = vmatpush.bf16.msra.mxu0 %v1950
          %2286 = vmatpush.bf16.msra.mxu0 %v1946
          %2287 = vmatpush.bf16.msra.mxu0 %v1942
          %2288 = vmatpush.bf16.msra.mxu0 %v1938
          %2289 = vmatpush.bf16.msra.mxu0 %v1934
          %2290 = vmatpush.bf16.msra.mxu0 %v1930
          %2291 = vmatpush.bf16.msra.mxu0 %v1926
          %2292 = vmatmul.bf16.gmra.mxu0 %v1396
          %v2293 = vpop.f32.mrf.mxu0
          %v2294 = vadd.f32 %v1534, %v2293
          %v2295 = vpop.f32.mrf.mxu0
          %2296 = vdwg.mxu0
          %2297 = vmatpush.bf16.msra.mxu0 %v1986
          %2298 = vmatpush.bf16.msra.mxu0 %v1982
          %2299 = vmatpush.bf16.msra.mxu0 %v1978
          %2300 = vmatpush.bf16.msra.mxu0 %v1974
          %2301 = vmatpush.bf16.msra.mxu0 %v1970
          %2302 = vmatpush.bf16.msra.mxu0 %v1966
          %2303 = vmatpush.bf16.msra.mxu0 %v1962
          %2304 = vmatpush.bf16.msra.mxu0 %v1958
          %2305 = vmatmul.bf16.gmra.mxu0 %v1397
          %v2306 = vpop.f32.mrf.mxu0
          %v2307 = vadd.f32 %v2294, %v2306
          %v2308 = vpop.f32.mrf.mxu0
          %2309 = vdwg.mxu0
          %2310 = vmatpush.bf16.msra.mxu0 %v2018
          %2311 = vmatpush.bf16.msra.mxu0 %v2014
          %2312 = vmatpush.bf16.msra.mxu0 %v2010
          %2313 = vmatpush.bf16.msra.mxu0 %v2006
          %2314 = vmatpush.bf16.msra.mxu0 %v2002
          %2315 = vmatpush.bf16.msra.mxu0 %v1998
          %2316 = vmatpush.bf16.msra.mxu0 %v1994
          %2317 = vmatpush.bf16.msra.mxu0 %v1990
          %2318 = vmatmul.bf16.gmra.mxu0 %v1398
          %v2319 = vpop.f32.mrf.mxu0
          %v2320 = vadd.f32 %v2307, %v2319
          %v2321 = vpop.f32.mrf.mxu0
          %2322 = vdwg.mxu0
          %2323 = vmatpush.bf16.msra.mxu0 %v2050
          %2324 = vmatpush.bf16.msra.mxu0 %v2046
          %2325 = vmatpush.bf16.msra.mxu0 %v2042
          %2326 = vmatpush.bf16.msra.mxu0 %v2038
          %2327 = vmatpush.bf16.msra.mxu0 %v2034
          %2328 = vmatpush.bf16.msra.mxu0 %v2030
          %2329 = vmatpush.bf16.msra.mxu0 %v2026
          %2330 = vmatpush.bf16.msra.mxu0 %v2022
          %2331 = vmatmul.bf16.gmra.mxu0 %v1399
          %v2332 = vpop.f32.mrf.mxu0
          %v2333 = vadd.f32 %v2320, %v2332
          %v2334 = vpop.f32.mrf.mxu0
          %2335 = vdwg.mxu0
          %2336 = vmatpush.bf16.msra.mxu0 %v1955
          %2337 = vmatpush.bf16.msra.mxu0 %v1951
          %2338 = vmatpush.bf16.msra.mxu0 %v1947
          %2339 = vmatpush.bf16.msra.mxu0 %v1943
          %2340 = vmatpush.bf16.msra.mxu0 %v1939
          %2341 = vmatpush.bf16.msra.mxu0 %v1935
          %2342 = vmatpush.bf16.msra.mxu0 %v1931
          %2343 = vmatpush.bf16.msra.mxu0 %v1927
          %2344 = vmatmul.bf16.gmra.mxu0 %v1396
          %v2345 = vpop.f32.mrf.mxu0
          %v2346 = vadd.f32 %v1535, %v2345
          %v2347 = vpop.f32.mrf.mxu0
          %2348 = vdwg.mxu0
          %2349 = vmatpush.bf16.msra.mxu0 %v1987
          %2350 = vmatpush.bf16.msra.mxu0 %v1983
          %2351 = vmatpush.bf16.msra.mxu0 %v1979
          %2352 = vmatpush.bf16.msra.mxu0 %v1975
          %2353 = vmatpush.bf16.msra.mxu0 %v1971
          %2354 = vmatpush.bf16.msra.mxu0 %v1967
          %2355 = vmatpush.bf16.msra.mxu0 %v1963
          %2356 = vmatpush.bf16.msra.mxu0 %v1959
          %2357 = vmatmul.bf16.gmra.mxu0 %v1397
          %v2358 = vpop.f32.mrf.mxu0
          %v2359 = vadd.f32 %v2346, %v2358
          %v2360 = vpop.f32.mrf.mxu0
          %2361 = vdwg.mxu0
          %2362 = vmatpush.bf16.msra.mxu0 %v2019
          %2363 = vmatpush.bf16.msra.mxu0 %v2015
          %2364 = vmatpush.bf16.msra.mxu0 %v2011
          %2365 = vmatpush.bf16.msra.mxu0 %v2007
          %2366 = vmatpush.bf16.msra.mxu0 %v2003
          %2367 = vmatpush.bf16.msra.mxu0 %v1999
          %2368 = vmatpush.bf16.msra.mxu0 %v1995
          %2369 = vmatpush.bf16.msra.mxu0 %v1991
          %2370 = vmatmul.bf16.gmra.mxu0 %v1398
          %v2371 = vpop.f32.mrf.mxu0
          %v2372 = vadd.f32 %v2359, %v2371
          %v2373 = vpop.f32.mrf.mxu0
          %2374 = vdwg.mxu0
          %2375 = vmatpush.bf16.msra.mxu0 %v2051
          %2376 = vmatpush.bf16.msra.mxu0 %v2047
          %2377 = vmatpush.bf16.msra.mxu0 %v2043
          %2378 = vmatpush.bf16.msra.mxu0 %v2039
          %2379 = vmatpush.bf16.msra.mxu0 %v2035
          %2380 = vmatpush.bf16.msra.mxu0 %v2031
          %2381 = vmatpush.bf16.msra.mxu0 %v2027
          %2382 = vmatpush.bf16.msra.mxu0 %v2023
          %2383 = vmatmul.bf16.gmra.mxu0 %v1399
          %v2384 = vpop.f32.mrf.mxu0
          %v2385 = vadd.f32 %v2372, %v2384
          %v2386 = vpop.f32.mrf.mxu0
          %2387 = vdwg.mxu0
          %v2388 = vpack.c.bf16 %v2229, %v2229
          %v2389 = vpack.c.bf16 %v2281, %v2281
          %v2390 = vpack.c.bf16 %v2333, %v2333
          %v2391 = vpack.c.bf16 %v2385, %v2385
          %s2392 = scalar_lea.vmem %s345, 2048 [#allocation8]
          %v2393 = vld [vmem:[%s2392] sm:$0xff]
          %v2394 = vld [vmem:[%s2392 + $0x8] sm:$0xff]
          %v2395 = vld [vmem:[%s2392 + $0x10] sm:$0xff]
          %v2396 = vld [vmem:[%s2392 + $0x18] sm:$0xff]
          %v2397 = vld [vmem:[%s2392 + $0x20] sm:$0xff]
          %v2398 = vld [vmem:[%s2392 + $0x28] sm:$0xff]
          %v2399 = vld [vmem:[%s2392 + $0x30] sm:$0xff]
          %v2400 = vld [vmem:[%s2392 + $0x38] sm:$0xff]
          %v2401 = vld [vmem:[%s2392 + $0x40] sm:$0xff]
          %v2402 = vld [vmem:[%s2392 + $0x48] sm:$0xff]
          %v2403 = vld [vmem:[%s2392 + $0x50] sm:$0xff]
          %v2404 = vld [vmem:[%s2392 + $0x58] sm:$0xff]
          %v2405 = vld [vmem:[%s2392 + $0x60] sm:$0xff]
          %v2406 = vld [vmem:[%s2392 + $0x68] sm:$0xff]
          %v2407 = vld [vmem:[%s2392 + $0x70] sm:$0xff]
          %v2408 = vld [vmem:[%s2392 + $0x78] sm:$0xff]
          %v2409 = vld [vmem:[%s2392 + $0x80] sm:$0xff]
          %v2410 = vld [vmem:[%s2392 + $0x88] sm:$0xff]
          %v2411 = vld [vmem:[%s2392 + $0x90] sm:$0xff]
          %v2412 = vld [vmem:[%s2392 + $0x98] sm:$0xff]
          %v2413 = vld [vmem:[%s2392 + $0xa0] sm:$0xff]
          %v2414 = vld [vmem:[%s2392 + $0xa8] sm:$0xff]
          %v2415 = vld [vmem:[%s2392 + $0xb0] sm:$0xff]
          %v2416 = vld [vmem:[%s2392 + $0xb8] sm:$0xff]
          %v2417 = vld [vmem:[%s2392 + $0xc0] sm:$0xff]
          %v2418 = vld [vmem:[%s2392 + $0xc8] sm:$0xff]
          %v2419 = vld [vmem:[%s2392 + $0xd0] sm:$0xff]
          %v2420 = vld [vmem:[%s2392 + $0xd8] sm:$0xff]
          %v2421 = vld [vmem:[%s2392 + $0xe0] sm:$0xff]
          %v2422 = vld [vmem:[%s2392 + $0xe8] sm:$0xff]
          %v2423 = vld [vmem:[%s2392 + $0xf0] sm:$0xff]
          %v2424 = vld [vmem:[%s2392 + $0xf8] sm:$0xff]
          %v2425 = vld [vmem:[%s2392 + $0x100] sm:$0xff]
          %v2426 = vld [vmem:[%s2392 + $0x108] sm:$0xff]
          %v2427 = vld [vmem:[%s2392 + $0x110] sm:$0xff]
          %v2428 = vld [vmem:[%s2392 + $0x118] sm:$0xff]
          %v2429 = vld [vmem:[%s2392 + $0x120] sm:$0xff]
          %v2430 = vld [vmem:[%s2392 + $0x128] sm:$0xff]
          %v2431 = vld [vmem:[%s2392 + $0x130] sm:$0xff]
          %v2432 = vld [vmem:[%s2392 + $0x138] sm:$0xff]
          %v2433 = vld [vmem:[%s2392 + $0x140] sm:$0xff]
          %v2434 = vld [vmem:[%s2392 + $0x148] sm:$0xff]
          %v2435 = vld [vmem:[%s2392 + $0x150] sm:$0xff]
          %v2436 = vld [vmem:[%s2392 + $0x158] sm:$0xff]
          %v2437 = vld [vmem:[%s2392 + $0x160] sm:$0xff]
          %v2438 = vld [vmem:[%s2392 + $0x168] sm:$0xff]
          %v2439 = vld [vmem:[%s2392 + $0x170] sm:$0xff]
          %v2440 = vld [vmem:[%s2392 + $0x178] sm:$0xff]
          %v2441 = vld [vmem:[%s2392 + $0x180] sm:$0xff]
          %v2442 = vld [vmem:[%s2392 + $0x188] sm:$0xff]
          %v2443 = vld [vmem:[%s2392 + $0x190] sm:$0xff]
          %v2444 = vld [vmem:[%s2392 + $0x198] sm:$0xff]
          %v2445 = vld [vmem:[%s2392 + $0x1a0] sm:$0xff]
          %v2446 = vld [vmem:[%s2392 + $0x1a8] sm:$0xff]
          %v2447 = vld [vmem:[%s2392 + $0x1b0] sm:$0xff]
          %v2448 = vld [vmem:[%s2392 + $0x1b8] sm:$0xff]
          %v2449 = vld [vmem:[%s2392 + $0x1c0] sm:$0xff]
          %v2450 = vld [vmem:[%s2392 + $0x1c8] sm:$0xff]
          %v2451 = vld [vmem:[%s2392 + $0x1d0] sm:$0xff]
          %v2452 = vld [vmem:[%s2392 + $0x1d8] sm:$0xff]
          %v2453 = vld [vmem:[%s2392 + $0x1e0] sm:$0xff]
          %v2454 = vld [vmem:[%s2392 + $0x1e8] sm:$0xff]
          %v2455 = vld [vmem:[%s2392 + $0x1f0] sm:$0xff]
          %v2456 = vld [vmem:[%s2392 + $0x1f8] sm:$0xff]
          %v2457 = vld [vmem:[%s2392 + $0x200] sm:$0xff]
          %v2458 = vld [vmem:[%s2392 + $0x208] sm:$0xff]
          %v2459 = vld [vmem:[%s2392 + $0x210] sm:$0xff]
          %v2460 = vld [vmem:[%s2392 + $0x218] sm:$0xff]
          %v2461 = vld [vmem:[%s2392 + $0x220] sm:$0xff]
          %v2462 = vld [vmem:[%s2392 + $0x228] sm:$0xff]
          %v2463 = vld [vmem:[%s2392 + $0x230] sm:$0xff]
          %v2464 = vld [vmem:[%s2392 + $0x238] sm:$0xff]
          %v2465 = vld [vmem:[%s2392 + $0x240] sm:$0xff]
          %v2466 = vld [vmem:[%s2392 + $0x248] sm:$0xff]
          %v2467 = vld [vmem:[%s2392 + $0x250] sm:$0xff]
          %v2468 = vld [vmem:[%s2392 + $0x258] sm:$0xff]
          %v2469 = vld [vmem:[%s2392 + $0x260] sm:$0xff]
          %v2470 = vld [vmem:[%s2392 + $0x268] sm:$0xff]
          %v2471 = vld [vmem:[%s2392 + $0x270] sm:$0xff]
          %v2472 = vld [vmem:[%s2392 + $0x278] sm:$0xff]
          %v2473 = vld [vmem:[%s2392 + $0x280] sm:$0xff]
          %v2474 = vld [vmem:[%s2392 + $0x288] sm:$0xff]
          %v2475 = vld [vmem:[%s2392 + $0x290] sm:$0xff]
          %v2476 = vld [vmem:[%s2392 + $0x298] sm:$0xff]
          %v2477 = vld [vmem:[%s2392 + $0x2a0] sm:$0xff]
          %v2478 = vld [vmem:[%s2392 + $0x2a8] sm:$0xff]
          %v2479 = vld [vmem:[%s2392 + $0x2b0] sm:$0xff]
          %v2480 = vld [vmem:[%s2392 + $0x2b8] sm:$0xff]
          %v2481 = vld [vmem:[%s2392 + $0x2c0] sm:$0xff]
          %v2482 = vld [vmem:[%s2392 + $0x2c8] sm:$0xff]
          %v2483 = vld [vmem:[%s2392 + $0x2d0] sm:$0xff]
          %v2484 = vld [vmem:[%s2392 + $0x2d8] sm:$0xff]
          %v2485 = vld [vmem:[%s2392 + $0x2e0] sm:$0xff]
          %v2486 = vld [vmem:[%s2392 + $0x2e8] sm:$0xff]
          %v2487 = vld [vmem:[%s2392 + $0x2f0] sm:$0xff]
          %v2488 = vld [vmem:[%s2392 + $0x2f8] sm:$0xff]
          %v2489 = vld [vmem:[%s2392 + $0x300] sm:$0xff]
          %v2490 = vld [vmem:[%s2392 + $0x308] sm:$0xff]
          %v2491 = vld [vmem:[%s2392 + $0x310] sm:$0xff]
          %v2492 = vld [vmem:[%s2392 + $0x318] sm:$0xff]
          %v2493 = vld [vmem:[%s2392 + $0x320] sm:$0xff]
          %v2494 = vld [vmem:[%s2392 + $0x328] sm:$0xff]
          %v2495 = vld [vmem:[%s2392 + $0x330] sm:$0xff]
          %v2496 = vld [vmem:[%s2392 + $0x338] sm:$0xff]
          %v2497 = vld [vmem:[%s2392 + $0x340] sm:$0xff]
          %v2498 = vld [vmem:[%s2392 + $0x348] sm:$0xff]
          %v2499 = vld [vmem:[%s2392 + $0x350] sm:$0xff]
          %v2500 = vld [vmem:[%s2392 + $0x358] sm:$0xff]
          %v2501 = vld [vmem:[%s2392 + $0x360] sm:$0xff]
          %v2502 = vld [vmem:[%s2392 + $0x368] sm:$0xff]
          %v2503 = vld [vmem:[%s2392 + $0x370] sm:$0xff]
          %v2504 = vld [vmem:[%s2392 + $0x378] sm:$0xff]
          %v2505 = vld [vmem:[%s2392 + $0x380] sm:$0xff]
          %v2506 = vld [vmem:[%s2392 + $0x388] sm:$0xff]
          %v2507 = vld [vmem:[%s2392 + $0x390] sm:$0xff]
          %v2508 = vld [vmem:[%s2392 + $0x398] sm:$0xff]
          %v2509 = vld [vmem:[%s2392 + $0x3a0] sm:$0xff]
          %v2510 = vld [vmem:[%s2392 + $0x3a8] sm:$0xff]
          %v2511 = vld [vmem:[%s2392 + $0x3b0] sm:$0xff]
          %v2512 = vld [vmem:[%s2392 + $0x3b8] sm:$0xff]
          %v2513 = vld [vmem:[%s2392 + $0x3c0] sm:$0xff]
          %v2514 = vld [vmem:[%s2392 + $0x3c8] sm:$0xff]
          %v2515 = vld [vmem:[%s2392 + $0x3d0] sm:$0xff]
          %v2516 = vld [vmem:[%s2392 + $0x3d8] sm:$0xff]
          %v2517 = vld [vmem:[%s2392 + $0x3e0] sm:$0xff]
          %v2518 = vld [vmem:[%s2392 + $0x3e8] sm:$0xff]
          %v2519 = vld [vmem:[%s2392 + $0x3f0] sm:$0xff]
          %v2520 = vld [vmem:[%s2392 + $0x3f8] sm:$0xff]
          %s2521 = scalar_lea.vmem [#allocation9], 8
          %v2522 = vld [vmem:[%s2521] sm:$0xf]
          %v2524 = vperm.slane %v2522, 0
          %v2525 = vperm.slane %v2522, 1
          %v2526 = vperm.slane %v2522, 2
          %v2527 = vperm.slane %v2522, 3
          %v2660 = vunpack.c.l.b16 %v2393
          %v2661 = vunpack.c.h.b16 %v2393
          %v2662 = vunpack.c.l.b16 %v2394
          %v2663 = vunpack.c.h.b16 %v2394
          %v2664 = vunpack.c.l.b16 %v2395
          %v2665 = vunpack.c.h.b16 %v2395
          %v2666 = vunpack.c.l.b16 %v2396
          %v2667 = vunpack.c.h.b16 %v2396
          %v2668 = vunpack.c.l.b16 %v2397
          %v2669 = vunpack.c.h.b16 %v2397
          %v2670 = vunpack.c.l.b16 %v2398
          %v2671 = vunpack.c.h.b16 %v2398
          %v2672 = vunpack.c.l.b16 %v2399
          %v2673 = vunpack.c.h.b16 %v2399
          %v2674 = vunpack.c.l.b16 %v2400
          %v2675 = vunpack.c.h.b16 %v2400
          %v2676 = vunpack.c.l.b16 %v2401
          %v2677 = vunpack.c.h.b16 %v2401
          %v2678 = vunpack.c.l.b16 %v2402
          %v2679 = vunpack.c.h.b16 %v2402
          %v2680 = vunpack.c.l.b16 %v2403
          %v2681 = vunpack.c.h.b16 %v2403
          %v2682 = vunpack.c.l.b16 %v2404
          %v2683 = vunpack.c.h.b16 %v2404
          %v2684 = vunpack.c.l.b16 %v2405
          %v2685 = vunpack.c.h.b16 %v2405
          %v2686 = vunpack.c.l.b16 %v2406
          %v2687 = vunpack.c.h.b16 %v2406
          %v2688 = vunpack.c.l.b16 %v2407
          %v2689 = vunpack.c.h.b16 %v2407
          %v2690 = vunpack.c.l.b16 %v2408
          %v2691 = vunpack.c.h.b16 %v2408
          %v2692 = vunpack.c.l.b16 %v2409
          %v2693 = vunpack.c.h.b16 %v2409
          %v2694 = vunpack.c.l.b16 %v2410
          %v2695 = vunpack.c.h.b16 %v2410
          %v2696 = vunpack.c.l.b16 %v2411
          %v2697 = vunpack.c.h.b16 %v2411
          %v2698 = vunpack.c.l.b16 %v2412
          %v2699 = vunpack.c.h.b16 %v2412
          %v2700 = vunpack.c.l.b16 %v2413
          %v2701 = vunpack.c.h.b16 %v2413
          %v2702 = vunpack.c.l.b16 %v2414
          %v2703 = vunpack.c.h.b16 %v2414
          %v2704 = vunpack.c.l.b16 %v2415
          %v2705 = vunpack.c.h.b16 %v2415
          %v2706 = vunpack.c.l.b16 %v2416
          %v2707 = vunpack.c.h.b16 %v2416
          %v2708 = vunpack.c.l.b16 %v2417
          %v2709 = vunpack.c.h.b16 %v2417
          %v2710 = vunpack.c.l.b16 %v2418
          %v2711 = vunpack.c.h.b16 %v2418
          %v2712 = vunpack.c.l.b16 %v2419
          %v2713 = vunpack.c.h.b16 %v2419
          %v2714 = vunpack.c.l.b16 %v2420
          %v2715 = vunpack.c.h.b16 %v2420
          %v2716 = vunpack.c.l.b16 %v2421
          %v2717 = vunpack.c.h.b16 %v2421
          %v2718 = vunpack.c.l.b16 %v2422
          %v2719 = vunpack.c.h.b16 %v2422
          %v2720 = vunpack.c.l.b16 %v2423
          %v2721 = vunpack.c.h.b16 %v2423
          %v2722 = vunpack.c.l.b16 %v2424
          %v2723 = vunpack.c.h.b16 %v2424
          %v2724 = vunpack.c.l.b16 %v2425
          %v2725 = vunpack.c.h.b16 %v2425
          %v2726 = vunpack.c.l.b16 %v2426
          %v2727 = vunpack.c.h.b16 %v2426
          %v2728 = vunpack.c.l.b16 %v2427
          %v2729 = vunpack.c.h.b16 %v2427
          %v2730 = vunpack.c.l.b16 %v2428
          %v2731 = vunpack.c.h.b16 %v2428
          %v2732 = vunpack.c.l.b16 %v2429
          %v2733 = vunpack.c.h.b16 %v2429
          %v2734 = vunpack.c.l.b16 %v2430
          %v2735 = vunpack.c.h.b16 %v2430
          %v2736 = vunpack.c.l.b16 %v2431
          %v2737 = vunpack.c.h.b16 %v2431
          %v2738 = vunpack.c.l.b16 %v2432
          %v2739 = vunpack.c.h.b16 %v2432
          %v2740 = vunpack.c.l.b16 %v2433
          %v2741 = vunpack.c.h.b16 %v2433
          %v2742 = vunpack.c.l.b16 %v2434
          %v2743 = vunpack.c.h.b16 %v2434
          %v2744 = vunpack.c.l.b16 %v2435
          %v2745 = vunpack.c.h.b16 %v2435
          %v2746 = vunpack.c.l.b16 %v2436
          %v2747 = vunpack.c.h.b16 %v2436
          %v2748 = vunpack.c.l.b16 %v2437
          %v2749 = vunpack.c.h.b16 %v2437
          %v2750 = vunpack.c.l.b16 %v2438
          %v2751 = vunpack.c.h.b16 %v2438
          %v2752 = vunpack.c.l.b16 %v2439
          %v2753 = vunpack.c.h.b16 %v2439
          %v2754 = vunpack.c.l.b16 %v2440
          %v2755 = vunpack.c.h.b16 %v2440
          %v2756 = vunpack.c.l.b16 %v2441
          %v2757 = vunpack.c.h.b16 %v2441
          %v2758 = vunpack.c.l.b16 %v2442
          %v2759 = vunpack.c.h.b16 %v2442
          %v2760 = vunpack.c.l.b16 %v2443
          %v2761 = vunpack.c.h.b16 %v2443
          %v2762 = vunpack.c.l.b16 %v2444
          %v2763 = vunpack.c.h.b16 %v2444
          %v2764 = vunpack.c.l.b16 %v2445
          %v2765 = vunpack.c.h.b16 %v2445
          %v2766 = vunpack.c.l.b16 %v2446
          %v2767 = vunpack.c.h.b16 %v2446
          %v2768 = vunpack.c.l.b16 %v2447
          %v2769 = vunpack.c.h.b16 %v2447
          %v2770 = vunpack.c.l.b16 %v2448
          %v2771 = vunpack.c.h.b16 %v2448
          %v2772 = vunpack.c.l.b16 %v2449
          %v2773 = vunpack.c.h.b16 %v2449
          %v2774 = vunpack.c.l.b16 %v2450
          %v2775 = vunpack.c.h.b16 %v2450
          %v2776 = vunpack.c.l.b16 %v2451
          %v2777 = vunpack.c.h.b16 %v2451
          %v2778 = vunpack.c.l.b16 %v2452
          %v2779 = vunpack.c.h.b16 %v2452
          %v2780 = vunpack.c.l.b16 %v2453
          %v2781 = vunpack.c.h.b16 %v2453
          %v2782 = vunpack.c.l.b16 %v2454
          %v2783 = vunpack.c.h.b16 %v2454
          %v2784 = vunpack.c.l.b16 %v2455
          %v2785 = vunpack.c.h.b16 %v2455
          %v2786 = vunpack.c.l.b16 %v2456
          %v2787 = vunpack.c.h.b16 %v2456
          %v2788 = vunpack.c.l.b16 %v2457
          %v2789 = vunpack.c.h.b16 %v2457
          %v2790 = vunpack.c.l.b16 %v2458
          %v2791 = vunpack.c.h.b16 %v2458
          %v2792 = vunpack.c.l.b16 %v2459
          %v2793 = vunpack.c.h.b16 %v2459
          %v2794 = vunpack.c.l.b16 %v2460
          %v2795 = vunpack.c.h.b16 %v2460
          %v2796 = vunpack.c.l.b16 %v2461
          %v2797 = vunpack.c.h.b16 %v2461
          %v2798 = vunpack.c.l.b16 %v2462
          %v2799 = vunpack.c.h.b16 %v2462
          %v2800 = vunpack.c.l.b16 %v2463
          %v2801 = vunpack.c.h.b16 %v2463
          %v2802 = vunpack.c.l.b16 %v2464
          %v2803 = vunpack.c.h.b16 %v2464
          %v2804 = vunpack.c.l.b16 %v2465
          %v2805 = vunpack.c.h.b16 %v2465
          %v2806 = vunpack.c.l.b16 %v2466
          %v2807 = vunpack.c.h.b16 %v2466
          %v2808 = vunpack.c.l.b16 %v2467
          %v2809 = vunpack.c.h.b16 %v2467
          %v2810 = vunpack.c.l.b16 %v2468
          %v2811 = vunpack.c.h.b16 %v2468
          %v2812 = vunpack.c.l.b16 %v2469
          %v2813 = vunpack.c.h.b16 %v2469
          %v2814 = vunpack.c.l.b16 %v2470
          %v2815 = vunpack.c.h.b16 %v2470
          %v2816 = vunpack.c.l.b16 %v2471
          %v2817 = vunpack.c.h.b16 %v2471
          %v2818 = vunpack.c.l.b16 %v2472
          %v2819 = vunpack.c.h.b16 %v2472
          %v2820 = vunpack.c.l.b16 %v2473
          %v2821 = vunpack.c.h.b16 %v2473
          %v2822 = vunpack.c.l.b16 %v2474
          %v2823 = vunpack.c.h.b16 %v2474
          %v2824 = vunpack.c.l.b16 %v2475
          %v2825 = vunpack.c.h.b16 %v2475
          %v2826 = vunpack.c.l.b16 %v2476
          %v2827 = vunpack.c.h.b16 %v2476
          %v2828 = vunpack.c.l.b16 %v2477
          %v2829 = vunpack.c.h.b16 %v2477
          %v2830 = vunpack.c.l.b16 %v2478
          %v2831 = vunpack.c.h.b16 %v2478
          %v2832 = vunpack.c.l.b16 %v2479
          %v2833 = vunpack.c.h.b16 %v2479
          %v2834 = vunpack.c.l.b16 %v2480
          %v2835 = vunpack.c.h.b16 %v2480
          %v2836 = vunpack.c.l.b16 %v2481
          %v2837 = vunpack.c.h.b16 %v2481
          %v2838 = vunpack.c.l.b16 %v2482
          %v2839 = vunpack.c.h.b16 %v2482
          %v2840 = vunpack.c.l.b16 %v2483
          %v2841 = vunpack.c.h.b16 %v2483
          %v2842 = vunpack.c.l.b16 %v2484
          %v2843 = vunpack.c.h.b16 %v2484
          %v2844 = vunpack.c.l.b16 %v2485
          %v2845 = vunpack.c.h.b16 %v2485
          %v2846 = vunpack.c.l.b16 %v2486
          %v2847 = vunpack.c.h.b16 %v2486
          %v2848 = vunpack.c.l.b16 %v2487
          %v2849 = vunpack.c.h.b16 %v2487
          %v2850 = vunpack.c.l.b16 %v2488
          %v2851 = vunpack.c.h.b16 %v2488
          %v2852 = vunpack.c.l.b16 %v2489
          %v2853 = vunpack.c.h.b16 %v2489
          %v2854 = vunpack.c.l.b16 %v2490
          %v2855 = vunpack.c.h.b16 %v2490
          %v2856 = vunpack.c.l.b16 %v2491
          %v2857 = vunpack.c.h.b16 %v2491
          %v2858 = vunpack.c.l.b16 %v2492
          %v2859 = vunpack.c.h.b16 %v2492
          %v2860 = vunpack.c.l.b16 %v2493
          %v2861 = vunpack.c.h.b16 %v2493
          %v2862 = vunpack.c.l.b16 %v2494
          %v2863 = vunpack.c.h.b16 %v2494
          %v2864 = vunpack.c.l.b16 %v2495
          %v2865 = vunpack.c.h.b16 %v2495
          %v2866 = vunpack.c.l.b16 %v2496
          %v2867 = vunpack.c.h.b16 %v2496
          %v2868 = vunpack.c.l.b16 %v2497
          %v2869 = vunpack.c.h.b16 %v2497
          %v2870 = vunpack.c.l.b16 %v2498
          %v2871 = vunpack.c.h.b16 %v2498
          %v2872 = vunpack.c.l.b16 %v2499
          %v2873 = vunpack.c.h.b16 %v2499
          %v2874 = vunpack.c.l.b16 %v2500
          %v2875 = vunpack.c.h.b16 %v2500
          %v2876 = vunpack.c.l.b16 %v2501
          %v2877 = vunpack.c.h.b16 %v2501
          %v2878 = vunpack.c.l.b16 %v2502
          %v2879 = vunpack.c.h.b16 %v2502
          %v2880 = vunpack.c.l.b16 %v2503
          %v2881 = vunpack.c.h.b16 %v2503
          %v2882 = vunpack.c.l.b16 %v2504
          %v2883 = vunpack.c.h.b16 %v2504
          %v2884 = vunpack.c.l.b16 %v2505
          %v2885 = vunpack.c.h.b16 %v2505
          %v2886 = vunpack.c.l.b16 %v2506
          %v2887 = vunpack.c.h.b16 %v2506
          %v2888 = vunpack.c.l.b16 %v2507
          %v2889 = vunpack.c.h.b16 %v2507
          %v2890 = vunpack.c.l.b16 %v2508
          %v2891 = vunpack.c.h.b16 %v2508
          %v2892 = vunpack.c.l.b16 %v2509
          %v2893 = vunpack.c.h.b16 %v2509
          %v2894 = vunpack.c.l.b16 %v2510
          %v2895 = vunpack.c.h.b16 %v2510
          %v2896 = vunpack.c.l.b16 %v2511
          %v2897 = vunpack.c.h.b16 %v2511
          %v2898 = vunpack.c.l.b16 %v2512
          %v2899 = vunpack.c.h.b16 %v2512
          %v2900 = vunpack.c.l.b16 %v2513
          %v2901 = vunpack.c.h.b16 %v2513
          %v2902 = vunpack.c.l.b16 %v2514
          %v2903 = vunpack.c.h.b16 %v2514
          %v2904 = vunpack.c.l.b16 %v2515
          %v2905 = vunpack.c.h.b16 %v2515
          %v2906 = vunpack.c.l.b16 %v2516
          %v2907 = vunpack.c.h.b16 %v2516
          %v2908 = vunpack.c.l.b16 %v2517
          %v2909 = vunpack.c.h.b16 %v2517
          %v2910 = vunpack.c.l.b16 %v2518
          %v2911 = vunpack.c.h.b16 %v2518
          %v2912 = vunpack.c.l.b16 %v2519
          %v2913 = vunpack.c.h.b16 %v2519
          %v2914 = vunpack.c.l.b16 %v2520
          %v2915 = vunpack.c.h.b16 %v2520
          %v2916 = vpack.c.b16 %v2664, %v2660
          %v2917 = vpack.c.b16 %v2665, %v2661
          %v2918 = vpack.c.b16 %v2666, %v2662
          %v2919 = vpack.c.b16 %v2667, %v2663
          %v2920 = vpack.c.b16 %v2672, %v2668
          %v2921 = vpack.c.b16 %v2673, %v2669
          %v2922 = vpack.c.b16 %v2674, %v2670
          %v2923 = vpack.c.b16 %v2675, %v2671
          %v2924 = vpack.c.b16 %v2680, %v2676
          %v2925 = vpack.c.b16 %v2681, %v2677
          %v2926 = vpack.c.b16 %v2682, %v2678
          %v2927 = vpack.c.b16 %v2683, %v2679
          %v2928 = vpack.c.b16 %v2688, %v2684
          %v2929 = vpack.c.b16 %v2689, %v2685
          %v2930 = vpack.c.b16 %v2690, %v2686
          %v2931 = vpack.c.b16 %v2691, %v2687
          %v2932 = vpack.c.b16 %v2696, %v2692
          %v2933 = vpack.c.b16 %v2697, %v2693
          %v2934 = vpack.c.b16 %v2698, %v2694
          %v2935 = vpack.c.b16 %v2699, %v2695
          %v2936 = vpack.c.b16 %v2704, %v2700
          %v2937 = vpack.c.b16 %v2705, %v2701
          %v2938 = vpack.c.b16 %v2706, %v2702
          %v2939 = vpack.c.b16 %v2707, %v2703
          %v2940 = vpack.c.b16 %v2712, %v2708
          %v2941 = vpack.c.b16 %v2713, %v2709
          %v2942 = vpack.c.b16 %v2714, %v2710
          %v2943 = vpack.c.b16 %v2715, %v2711
          %v2944 = vpack.c.b16 %v2720, %v2716
          %v2945 = vpack.c.b16 %v2721, %v2717
          %v2946 = vpack.c.b16 %v2722, %v2718
          %v2947 = vpack.c.b16 %v2723, %v2719
          %v2948 = vpack.c.b16 %v2728, %v2724
          %v2949 = vpack.c.b16 %v2729, %v2725
          %v2950 = vpack.c.b16 %v2730, %v2726
          %v2951 = vpack.c.b16 %v2731, %v2727
          %v2952 = vpack.c.b16 %v2736, %v2732
          %v2953 = vpack.c.b16 %v2737, %v2733
          %v2954 = vpack.c.b16 %v2738, %v2734
          %v2955 = vpack.c.b16 %v2739, %v2735
          %v2956 = vpack.c.b16 %v2744, %v2740
          %v2957 = vpack.c.b16 %v2745, %v2741
          %v2958 = vpack.c.b16 %v2746, %v2742
          %v2959 = vpack.c.b16 %v2747, %v2743
          %v2960 = vpack.c.b16 %v2752, %v2748
          %v2961 = vpack.c.b16 %v2753, %v2749
          %v2962 = vpack.c.b16 %v2754, %v2750
          %v2963 = vpack.c.b16 %v2755, %v2751
          %v2964 = vpack.c.b16 %v2760, %v2756
          %v2965 = vpack.c.b16 %v2761, %v2757
          %v2966 = vpack.c.b16 %v2762, %v2758
          %v2967 = vpack.c.b16 %v2763, %v2759
          %v2968 = vpack.c.b16 %v2768, %v2764
          %v2969 = vpack.c.b16 %v2769, %v2765
          %v2970 = vpack.c.b16 %v2770, %v2766
          %v2971 = vpack.c.b16 %v2771, %v2767
          %v2972 = vpack.c.b16 %v2776, %v2772
          %v2973 = vpack.c.b16 %v2777, %v2773
          %v2974 = vpack.c.b16 %v2778, %v2774
          %v2975 = vpack.c.b16 %v2779, %v2775
          %v2976 = vpack.c.b16 %v2784, %v2780
          %v2977 = vpack.c.b16 %v2785, %v2781
          %v2978 = vpack.c.b16 %v2786, %v2782
          %v2979 = vpack.c.b16 %v2787, %v2783
          %v2980 = vpack.c.b16 %v2792, %v2788
          %v2981 = vpack.c.b16 %v2793, %v2789
          %v2982 = vpack.c.b16 %v2794, %v2790
          %v2983 = vpack.c.b16 %v2795, %v2791
          %v2984 = vpack.c.b16 %v2800, %v2796
          %v2985 = vpack.c.b16 %v2801, %v2797
          %v2986 = vpack.c.b16 %v2802, %v2798
          %v2987 = vpack.c.b16 %v2803, %v2799
          %v2988 = vpack.c.b16 %v2808, %v2804
          %v2989 = vpack.c.b16 %v2809, %v2805
          %v2990 = vpack.c.b16 %v2810, %v2806
          %v2991 = vpack.c.b16 %v2811, %v2807
          %v2992 = vpack.c.b16 %v2816, %v2812
          %v2993 = vpack.c.b16 %v2817, %v2813
          %v2994 = vpack.c.b16 %v2818, %v2814
          %v2995 = vpack.c.b16 %v2819, %v2815
          %v2996 = vpack.c.b16 %v2824, %v2820
          %v2997 = vpack.c.b16 %v2825, %v2821
          %v2998 = vpack.c.b16 %v2826, %v2822
          %v2999 = vpack.c.b16 %v2827, %v2823
          %v3000 = vpack.c.b16 %v2832, %v2828
          %v3001 = vpack.c.b16 %v2833, %v2829
          %v3002 = vpack.c.b16 %v2834, %v2830
          %v3003 = vpack.c.b16 %v2835, %v2831
          %v3004 = vpack.c.b16 %v2840, %v2836
          %v3005 = vpack.c.b16 %v2841, %v2837
          %v3006 = vpack.c.b16 %v2842, %v2838
          %v3007 = vpack.c.b16 %v2843, %v2839
          %v3008 = vpack.c.b16 %v2848, %v2844
          %v3009 = vpack.c.b16 %v2849, %v2845
          %v3010 = vpack.c.b16 %v2850, %v2846
          %v3011 = vpack.c.b16 %v2851, %v2847
          %v3012 = vpack.c.b16 %v2856, %v2852
          %v3013 = vpack.c.b16 %v2857, %v2853
          %v3014 = vpack.c.b16 %v2858, %v2854
          %v3015 = vpack.c.b16 %v2859, %v2855
          %v3016 = vpack.c.b16 %v2864, %v2860
          %v3017 = vpack.c.b16 %v2865, %v2861
          %v3018 = vpack.c.b16 %v2866, %v2862
          %v3019 = vpack.c.b16 %v2867, %v2863
          %v3020 = vpack.c.b16 %v2872, %v2868
          %v3021 = vpack.c.b16 %v2873, %v2869
          %v3022 = vpack.c.b16 %v2874, %v2870
          %v3023 = vpack.c.b16 %v2875, %v2871
          %v3024 = vpack.c.b16 %v2880, %v2876
          %v3025 = vpack.c.b16 %v2881, %v2877
          %v3026 = vpack.c.b16 %v2882, %v2878
          %v3027 = vpack.c.b16 %v2883, %v2879
          %v3028 = vpack.c.b16 %v2888, %v2884
          %v3029 = vpack.c.b16 %v2889, %v2885
          %v3030 = vpack.c.b16 %v2890, %v2886
          %v3031 = vpack.c.b16 %v2891, %v2887
          %v3032 = vpack.c.b16 %v2896, %v2892
          %v3033 = vpack.c.b16 %v2897, %v2893
          %v3034 = vpack.c.b16 %v2898, %v2894
          %v3035 = vpack.c.b16 %v2899, %v2895
          %v3036 = vpack.c.b16 %v2904, %v2900
          %v3037 = vpack.c.b16 %v2905, %v2901
          %v3038 = vpack.c.b16 %v2906, %v2902
          %v3039 = vpack.c.b16 %v2907, %v2903
          %v3040 = vpack.c.b16 %v2912, %v2908
          %v3041 = vpack.c.b16 %v2913, %v2909
          %v3042 = vpack.c.b16 %v2914, %v2910
          %v3043 = vpack.c.b16 %v2915, %v2911
          %3172 = vmatpush.bf16.msra.mxu0 %v2944
          %3173 = vmatpush.bf16.msra.mxu0 %v2940
          %3174 = vmatpush.bf16.msra.mxu0 %v2936
          %3175 = vmatpush.bf16.msra.mxu0 %v2932
          %3176 = vmatpush.bf16.msra.mxu0 %v2928
          %3177 = vmatpush.bf16.msra.mxu0 %v2924
          %3178 = vmatpush.bf16.msra.mxu0 %v2920
          %3179 = vmatpush.bf16.msra.mxu0 %v2916
          %3180 = vmatmul.bf16.gmra.mxu0 %v2388
          %v3181 = vpop.f32.mrf.mxu0
          %v3182 = vadd.f32 %v2524, %v3181
          %v3183 = vpop.f32.mrf.mxu0
          %3184 = vdwg.mxu0
          %3185 = vmatpush.bf16.msra.mxu0 %v2976
          %3186 = vmatpush.bf16.msra.mxu0 %v2972
          %3187 = vmatpush.bf16.msra.mxu0 %v2968
          %3188 = vmatpush.bf16.msra.mxu0 %v2964
          %3189 = vmatpush.bf16.msra.mxu0 %v2960
          %3190 = vmatpush.bf16.msra.mxu0 %v2956
          %3191 = vmatpush.bf16.msra.mxu0 %v2952
          %3192 = vmatpush.bf16.msra.mxu0 %v2948
          %3193 = vmatmul.bf16.gmra.mxu0 %v2389
          %v3194 = vpop.f32.mrf.mxu0
          %v3195 = vadd.f32 %v3182, %v3194
          %v3196 = vpop.f32.mrf.mxu0
          %3197 = vdwg.mxu0
          %3198 = vmatpush.bf16.msra.mxu0 %v3008
          %3199 = vmatpush.bf16.msra.mxu0 %v3004
          %3200 = vmatpush.bf16.msra.mxu0 %v3000
          %3201 = vmatpush.bf16.msra.mxu0 %v2996
          %3202 = vmatpush.bf16.msra.mxu0 %v2992
          %3203 = vmatpush.bf16.msra.mxu0 %v2988
          %3204 = vmatpush.bf16.msra.mxu0 %v2984
          %3205 = vmatpush.bf16.msra.mxu0 %v2980
          %3206 = vmatmul.bf16.gmra.mxu0 %v2390
          %v3207 = vpop.f32.mrf.mxu0
          %v3208 = vadd.f32 %v3195, %v3207
          %v3209 = vpop.f32.mrf.mxu0
          %3210 = vdwg.mxu0
          %3211 = vmatpush.bf16.msra.mxu0 %v3040
          %3212 = vmatpush.bf16.msra.mxu0 %v3036
          %3213 = vmatpush.bf16.msra.mxu0 %v3032
          %3214 = vmatpush.bf16.msra.mxu0 %v3028
          %3215 = vmatpush.bf16.msra.mxu0 %v3024
          %3216 = vmatpush.bf16.msra.mxu0 %v3020
          %3217 = vmatpush.bf16.msra.mxu0 %v3016
          %3218 = vmatpush.bf16.msra.mxu0 %v3012
          %3219 = vmatmul.bf16.gmra.mxu0 %v2391
          %v3220 = vpop.f32.mrf.mxu0
          %v3221 = vadd.f32 %v3208, %v3220
          %v3222 = vpop.f32.mrf.mxu0
          %3223 = vdwg.mxu0
          %3224 = vmatpush.bf16.msra.mxu0 %v2945
          %3225 = vmatpush.bf16.msra.mxu0 %v2941
          %3226 = vmatpush.bf16.msra.mxu0 %v2937
          %3227 = vmatpush.bf16.msra.mxu0 %v2933
          %3228 = vmatpush.bf16.msra.mxu0 %v2929
          %3229 = vmatpush.bf16.msra.mxu0 %v2925
          %3230 = vmatpush.bf16.msra.mxu0 %v2921
          %3231 = vmatpush.bf16.msra.mxu0 %v2917
          %3232 = vmatmul.bf16.gmra.mxu0 %v2388
          %v3233 = vpop.f32.mrf.mxu0
          %v3234 = vadd.f32 %v2525, %v3233
          %v3235 = vpop.f32.mrf.mxu0
          %3236 = vdwg.mxu0
          %3237 = vmatpush.bf16.msra.mxu0 %v2977
          %3238 = vmatpush.bf16.msra.mxu0 %v2973
          %3239 = vmatpush.bf16.msra.mxu0 %v2969
          %3240 = vmatpush.bf16.msra.mxu0 %v2965
          %3241 = vmatpush.bf16.msra.mxu0 %v2961
          %3242 = vmatpush.bf16.msra.mxu0 %v2957
          %3243 = vmatpush.bf16.msra.mxu0 %v2953
          %3244 = vmatpush.bf16.msra.mxu0 %v2949
          %3245 = vmatmul.bf16.gmra.mxu0 %v2389
          %v3246 = vpop.f32.mrf.mxu0
          %v3247 = vadd.f32 %v3234, %v3246
          %v3248 = vpop.f32.mrf.mxu0
          %3249 = vdwg.mxu0
          %3250 = vmatpush.bf16.msra.mxu0 %v3009
          %3251 = vmatpush.bf16.msra.mxu0 %v3005
          %3252 = vmatpush.bf16.msra.mxu0 %v3001
          %3253 = vmatpush.bf16.msra.mxu0 %v2997
          %3254 = vmatpush.bf16.msra.mxu0 %v2993
          %3255 = vmatpush.bf16.msra.mxu0 %v2989
          %3256 = vmatpush.bf16.msra.mxu0 %v2985
          %3257 = vmatpush.bf16.msra.mxu0 %v2981
          %3258 = vmatmul.bf16.gmra.mxu0 %v2390
          %v3259 = vpop.f32.mrf.mxu0
          %v3260 = vadd.f32 %v3247, %v3259
          %v3261 = vpop.f32.mrf.mxu0
          %3262 = vdwg.mxu0
          %3263 = vmatpush.bf16.msra.mxu0 %v3041
          %3264 = vmatpush.bf16.msra.mxu0 %v3037
          %3265 = vmatpush.bf16.msra.mxu0 %v3033
          %3266 = vmatpush.bf16.msra.mxu0 %v3029
          %3267 = vmatpush.bf16.msra.mxu0 %v3025
          %3268 = vmatpush.bf16.msra.mxu0 %v3021
          %3269 = vmatpush.bf16.msra.mxu0 %v3017
          %3270 = vmatpush.bf16.msra.mxu0 %v3013
          %3271 = vmatmul.bf16.gmra.mxu0 %v2391
          %v3272 = vpop.f32.mrf.mxu0
          %v3273 = vadd.f32 %v3260, %v3272
          %v3274 = vpop.f32.mrf.mxu0
          %3275 = vdwg.mxu0
          %3276 = vmatpush.bf16.msra.mxu0 %v2946
          %3277 = vmatpush.bf16.msra.mxu0 %v2942
          %3278 = vmatpush.bf16.msra.mxu0 %v2938
          %3279 = vmatpush.bf16.msra.mxu0 %v2934
          %3280 = vmatpush.bf16.msra.mxu0 %v2930
          %3281 = vmatpush.bf16.msra.mxu0 %v2926
          %3282 = vmatpush.bf16.msra.mxu0 %v2922
          %3283 = vmatpush.bf16.msra.mxu0 %v2918
          %3284 = vmatmul.bf16.gmra.mxu0 %v2388
          %v3285 = vpop.f32.mrf.mxu0
          %v3286 = vadd.f32 %v2526, %v3285
          %v3287 = vpop.f32.mrf.mxu0
          %3288 = vdwg.mxu0
          %3289 = vmatpush.bf16.msra.mxu0 %v2978
          %3290 = vmatpush.bf16.msra.mxu0 %v2974
          %3291 = vmatpush.bf16.msra.mxu0 %v2970
          %3292 = vmatpush.bf16.msra.mxu0 %v2966
          %3293 = vmatpush.bf16.msra.mxu0 %v2962
          %3294 = vmatpush.bf16.msra.mxu0 %v2958
          %3295 = vmatpush.bf16.msra.mxu0 %v2954
          %3296 = vmatpush.bf16.msra.mxu0 %v2950
          %3297 = vmatmul.bf16.gmra.mxu0 %v2389
          %v3298 = vpop.f32.mrf.mxu0
          %v3299 = vadd.f32 %v3286, %v3298
          %v3300 = vpop.f32.mrf.mxu0
          %3301 = vdwg.mxu0
          %3302 = vmatpush.bf16.msra.mxu0 %v3010
          %3303 = vmatpush.bf16.msra.mxu0 %v3006
          %3304 = vmatpush.bf16.msra.mxu0 %v3002
          %3305 = vmatpush.bf16.msra.mxu0 %v2998
          %3306 = vmatpush.bf16.msra.mxu0 %v2994
          %3307 = vmatpush.bf16.msra.mxu0 %v2990
          %3308 = vmatpush.bf16.msra.mxu0 %v2986
          %3309 = vmatpush.bf16.msra.mxu0 %v2982
          %3310 = vmatmul.bf16.gmra.mxu0 %v2390
          %v3311 = vpop.f32.mrf.mxu0
          %v3312 = vadd.f32 %v3299, %v3311
          %v3313 = vpop.f32.mrf.mxu0
          %3314 = vdwg.mxu0
          %3315 = vmatpush.bf16.msra.mxu0 %v3042
          %3316 = vmatpush.bf16.msra.mxu0 %v3038
          %3317 = vmatpush.bf16.msra.mxu0 %v3034
          %3318 = vmatpush.bf16.msra.mxu0 %v3030
          %3319 = vmatpush.bf16.msra.mxu0 %v3026
          %3320 = vmatpush.bf16.msra.mxu0 %v3022
          %3321 = vmatpush.bf16.msra.mxu0 %v3018
          %3322 = vmatpush.bf16.msra.mxu0 %v3014
          %3323 = vmatmul.bf16.gmra.mxu0 %v2391
          %v3324 = vpop.f32.mrf.mxu0
          %v3325 = vadd.f32 %v3312, %v3324
          %v3326 = vpop.f32.mrf.mxu0
          %3327 = vdwg.mxu0
          %3328 = vmatpush.bf16.msra.mxu0 %v2947
          %3329 = vmatpush.bf16.msra.mxu0 %v2943
          %3330 = vmatpush.bf16.msra.mxu0 %v2939
          %3331 = vmatpush.bf16.msra.mxu0 %v2935
          %3332 = vmatpush.bf16.msra.mxu0 %v2931
          %3333 = vmatpush.bf16.msra.mxu0 %v2927
          %3334 = vmatpush.bf16.msra.mxu0 %v2923
          %3335 = vmatpush.bf16.msra.mxu0 %v2919
          %3336 = vmatmul.bf16.gmra.mxu0 %v2388
          %v3337 = vpop.f32.mrf.mxu0
          %v3338 = vadd.f32 %v2527, %v3337
          %v3339 = vpop.f32.mrf.mxu0
          %3340 = vdwg.mxu0
          %3341 = vmatpush.bf16.msra.mxu0 %v2979
          %3342 = vmatpush.bf16.msra.mxu0 %v2975
          %3343 = vmatpush.bf16.msra.mxu0 %v2971
          %3344 = vmatpush.bf16.msra.mxu0 %v2967
          %3345 = vmatpush.bf16.msra.mxu0 %v2963
          %3346 = vmatpush.bf16.msra.mxu0 %v2959
          %3347 = vmatpush.bf16.msra.mxu0 %v2955
          %3348 = vmatpush.bf16.msra.mxu0 %v2951
          %3349 = vmatmul.bf16.gmra.mxu0 %v2389
          %v3350 = vpop.f32.mrf.mxu0
          %v3351 = vadd.f32 %v3338, %v3350
          %v3352 = vpop.f32.mrf.mxu0
          %3353 = vdwg.mxu0
          %3354 = vmatpush.bf16.msra.mxu0 %v3011
          %3355 = vmatpush.bf16.msra.mxu0 %v3007
          %3356 = vmatpush.bf16.msra.mxu0 %v3003
          %3357 = vmatpush.bf16.msra.mxu0 %v2999
          %3358 = vmatpush.bf16.msra.mxu0 %v2995
          %3359 = vmatpush.bf16.msra.mxu0 %v2991
          %3360 = vmatpush.bf16.msra.mxu0 %v2987
          %3361 = vmatpush.bf16.msra.mxu0 %v2983
          %3362 = vmatmul.bf16.gmra.mxu0 %v2390
          %v3363 = vpop.f32.mrf.mxu0
          %v3364 = vadd.f32 %v3351, %v3363
          %v3365 = vpop.f32.mrf.mxu0
          %3366 = vdwg.mxu0
          %3367 = vmatpush.bf16.msra.mxu0 %v3043
          %3368 = vmatpush.bf16.msra.mxu0 %v3039
          %3369 = vmatpush.bf16.msra.mxu0 %v3035
          %3370 = vmatpush.bf16.msra.mxu0 %v3031
          %3371 = vmatpush.bf16.msra.mxu0 %v3027
          %3372 = vmatpush.bf16.msra.mxu0 %v3023
          %3373 = vmatpush.bf16.msra.mxu0 %v3019
          %3374 = vmatpush.bf16.msra.mxu0 %v3015
          %3375 = vmatmul.bf16.gmra.mxu0 %v2391
          %v3376 = vpop.f32.mrf.mxu0
          %v3377 = vadd.f32 %v3364, %v3376
          %v3378 = vpop.f32.mrf.mxu0
          %3379 = vdwg.mxu0
          %v3380 = vpack.c.bf16 %v3221, %v3221
          %v3381 = vpack.c.bf16 %v3273, %v3273
          %v3382 = vpack.c.bf16 %v3325, %v3325
          %v3383 = vpack.c.bf16 %v3377, %v3377
          %s3384 = scalar_lea.vmem %s345, 3072 [#allocation8]
          %v3385 = vld [vmem:[%s3384] sm:$0xff]
          %v3386 = vld [vmem:[%s3384 + $0x8] sm:$0xff]
          %v3387 = vld [vmem:[%s3384 + $0x10] sm:$0xff]
          %v3388 = vld [vmem:[%s3384 + $0x18] sm:$0xff]
          %v3389 = vld [vmem:[%s3384 + $0x20] sm:$0xff]
          %v3390 = vld [vmem:[%s3384 + $0x28] sm:$0xff]
          %v3391 = vld [vmem:[%s3384 + $0x30] sm:$0xff]
          %v3392 = vld [vmem:[%s3384 + $0x38] sm:$0xff]
          %v3393 = vld [vmem:[%s3384 + $0x40] sm:$0xff]
          %v3394 = vld [vmem:[%s3384 + $0x48] sm:$0xff]
          %v3395 = vld [vmem:[%s3384 + $0x50] sm:$0xff]
          %v3396 = vld [vmem:[%s3384 + $0x58] sm:$0xff]
          %v3397 = vld [vmem:[%s3384 + $0x60] sm:$0xff]
          %v3398 = vld [vmem:[%s3384 + $0x68] sm:$0xff]
          %v3399 = vld [vmem:[%s3384 + $0x70] sm:$0xff]
          %v3400 = vld [vmem:[%s3384 + $0x78] sm:$0xff]
          %v3401 = vld [vmem:[%s3384 + $0x80] sm:$0xff]
          %v3402 = vld [vmem:[%s3384 + $0x88] sm:$0xff]
          %v3403 = vld [vmem:[%s3384 + $0x90] sm:$0xff]
          %v3404 = vld [vmem:[%s3384 + $0x98] sm:$0xff]
          %v3405 = vld [vmem:[%s3384 + $0xa0] sm:$0xff]
          %v3406 = vld [vmem:[%s3384 + $0xa8] sm:$0xff]
          %v3407 = vld [vmem:[%s3384 + $0xb0] sm:$0xff]
          %v3408 = vld [vmem:[%s3384 + $0xb8] sm:$0xff]
          %v3409 = vld [vmem:[%s3384 + $0xc0] sm:$0xff]
          %v3410 = vld [vmem:[%s3384 + $0xc8] sm:$0xff]
          %v3411 = vld [vmem:[%s3384 + $0xd0] sm:$0xff]
          %v3412 = vld [vmem:[%s3384 + $0xd8] sm:$0xff]
          %v3413 = vld [vmem:[%s3384 + $0xe0] sm:$0xff]
          %v3414 = vld [vmem:[%s3384 + $0xe8] sm:$0xff]
          %v3415 = vld [vmem:[%s3384 + $0xf0] sm:$0xff]
          %v3416 = vld [vmem:[%s3384 + $0xf8] sm:$0xff]
          %v3417 = vld [vmem:[%s3384 + $0x100] sm:$0xff]
          %v3418 = vld [vmem:[%s3384 + $0x108] sm:$0xff]
          %v3419 = vld [vmem:[%s3384 + $0x110] sm:$0xff]
          %v3420 = vld [vmem:[%s3384 + $0x118] sm:$0xff]
          %v3421 = vld [vmem:[%s3384 + $0x120] sm:$0xff]
          %v3422 = vld [vmem:[%s3384 + $0x128] sm:$0xff]
          %v3423 = vld [vmem:[%s3384 + $0x130] sm:$0xff]
          %v3424 = vld [vmem:[%s3384 + $0x138] sm:$0xff]
          %v3425 = vld [vmem:[%s3384 + $0x140] sm:$0xff]
          %v3426 = vld [vmem:[%s3384 + $0x148] sm:$0xff]
          %v3427 = vld [vmem:[%s3384 + $0x150] sm:$0xff]
          %v3428 = vld [vmem:[%s3384 + $0x158] sm:$0xff]
          %v3429 = vld [vmem:[%s3384 + $0x160] sm:$0xff]
          %v3430 = vld [vmem:[%s3384 + $0x168] sm:$0xff]
          %v3431 = vld [vmem:[%s3384 + $0x170] sm:$0xff]
          %v3432 = vld [vmem:[%s3384 + $0x178] sm:$0xff]
          %v3433 = vld [vmem:[%s3384 + $0x180] sm:$0xff]
          %v3434 = vld [vmem:[%s3384 + $0x188] sm:$0xff]
          %v3435 = vld [vmem:[%s3384 + $0x190] sm:$0xff]
          %v3436 = vld [vmem:[%s3384 + $0x198] sm:$0xff]
          %v3437 = vld [vmem:[%s3384 + $0x1a0] sm:$0xff]
          %v3438 = vld [vmem:[%s3384 + $0x1a8] sm:$0xff]
          %v3439 = vld [vmem:[%s3384 + $0x1b0] sm:$0xff]
          %v3440 = vld [vmem:[%s3384 + $0x1b8] sm:$0xff]
          %v3441 = vld [vmem:[%s3384 + $0x1c0] sm:$0xff]
          %v3442 = vld [vmem:[%s3384 + $0x1c8] sm:$0xff]
          %v3443 = vld [vmem:[%s3384 + $0x1d0] sm:$0xff]
          %v3444 = vld [vmem:[%s3384 + $0x1d8] sm:$0xff]
          %v3445 = vld [vmem:[%s3384 + $0x1e0] sm:$0xff]
          %v3446 = vld [vmem:[%s3384 + $0x1e8] sm:$0xff]
          %v3447 = vld [vmem:[%s3384 + $0x1f0] sm:$0xff]
          %v3448 = vld [vmem:[%s3384 + $0x1f8] sm:$0xff]
          %v3449 = vld [vmem:[%s3384 + $0x200] sm:$0xff]
          %v3450 = vld [vmem:[%s3384 + $0x208] sm:$0xff]
          %v3451 = vld [vmem:[%s3384 + $0x210] sm:$0xff]
          %v3452 = vld [vmem:[%s3384 + $0x218] sm:$0xff]
          %v3453 = vld [vmem:[%s3384 + $0x220] sm:$0xff]
          %v3454 = vld [vmem:[%s3384 + $0x228] sm:$0xff]
          %v3455 = vld [vmem:[%s3384 + $0x230] sm:$0xff]
          %v3456 = vld [vmem:[%s3384 + $0x238] sm:$0xff]
          %v3457 = vld [vmem:[%s3384 + $0x240] sm:$0xff]
          %v3458 = vld [vmem:[%s3384 + $0x248] sm:$0xff]
          %v3459 = vld [vmem:[%s3384 + $0x250] sm:$0xff]
          %v3460 = vld [vmem:[%s3384 + $0x258] sm:$0xff]
          %v3461 = vld [vmem:[%s3384 + $0x260] sm:$0xff]
          %v3462 = vld [vmem:[%s3384 + $0x268] sm:$0xff]
          %v3463 = vld [vmem:[%s3384 + $0x270] sm:$0xff]
          %v3464 = vld [vmem:[%s3384 + $0x278] sm:$0xff]
          %v3465 = vld [vmem:[%s3384 + $0x280] sm:$0xff]
          %v3466 = vld [vmem:[%s3384 + $0x288] sm:$0xff]
          %v3467 = vld [vmem:[%s3384 + $0x290] sm:$0xff]
          %v3468 = vld [vmem:[%s3384 + $0x298] sm:$0xff]
          %v3469 = vld [vmem:[%s3384 + $0x2a0] sm:$0xff]
          %v3470 = vld [vmem:[%s3384 + $0x2a8] sm:$0xff]
          %v3471 = vld [vmem:[%s3384 + $0x2b0] sm:$0xff]
          %v3472 = vld [vmem:[%s3384 + $0x2b8] sm:$0xff]
          %v3473 = vld [vmem:[%s3384 + $0x2c0] sm:$0xff]
          %v3474 = vld [vmem:[%s3384 + $0x2c8] sm:$0xff]
          %v3475 = vld [vmem:[%s3384 + $0x2d0] sm:$0xff]
          %v3476 = vld [vmem:[%s3384 + $0x2d8] sm:$0xff]
          %v3477 = vld [vmem:[%s3384 + $0x2e0] sm:$0xff]
          %v3478 = vld [vmem:[%s3384 + $0x2e8] sm:$0xff]
          %v3479 = vld [vmem:[%s3384 + $0x2f0] sm:$0xff]
          %v3480 = vld [vmem:[%s3384 + $0x2f8] sm:$0xff]
          %v3481 = vld [vmem:[%s3384 + $0x300] sm:$0xff]
          %v3482 = vld [vmem:[%s3384 + $0x308] sm:$0xff]
          %v3483 = vld [vmem:[%s3384 + $0x310] sm:$0xff]
          %v3484 = vld [vmem:[%s3384 + $0x318] sm:$0xff]
          %v3485 = vld [vmem:[%s3384 + $0x320] sm:$0xff]
          %v3486 = vld [vmem:[%s3384 + $0x328] sm:$0xff]
          %v3487 = vld [vmem:[%s3384 + $0x330] sm:$0xff]
          %v3488 = vld [vmem:[%s3384 + $0x338] sm:$0xff]
          %v3489 = vld [vmem:[%s3384 + $0x340] sm:$0xff]
          %v3490 = vld [vmem:[%s3384 + $0x348] sm:$0xff]
          %v3491 = vld [vmem:[%s3384 + $0x350] sm:$0xff]
          %v3492 = vld [vmem:[%s3384 + $0x358] sm:$0xff]
          %v3493 = vld [vmem:[%s3384 + $0x360] sm:$0xff]
          %v3494 = vld [vmem:[%s3384 + $0x368] sm:$0xff]
          %v3495 = vld [vmem:[%s3384 + $0x370] sm:$0xff]
          %v3496 = vld [vmem:[%s3384 + $0x378] sm:$0xff]
          %v3497 = vld [vmem:[%s3384 + $0x380] sm:$0xff]
          %v3498 = vld [vmem:[%s3384 + $0x388] sm:$0xff]
          %v3499 = vld [vmem:[%s3384 + $0x390] sm:$0xff]
          %v3500 = vld [vmem:[%s3384 + $0x398] sm:$0xff]
          %v3501 = vld [vmem:[%s3384 + $0x3a0] sm:$0xff]
          %v3502 = vld [vmem:[%s3384 + $0x3a8] sm:$0xff]
          %v3503 = vld [vmem:[%s3384 + $0x3b0] sm:$0xff]
          %v3504 = vld [vmem:[%s3384 + $0x3b8] sm:$0xff]
          %v3505 = vld [vmem:[%s3384 + $0x3c0] sm:$0xff]
          %v3506 = vld [vmem:[%s3384 + $0x3c8] sm:$0xff]
          %v3507 = vld [vmem:[%s3384 + $0x3d0] sm:$0xff]
          %v3508 = vld [vmem:[%s3384 + $0x3d8] sm:$0xff]
          %v3509 = vld [vmem:[%s3384 + $0x3e0] sm:$0xff]
          %v3510 = vld [vmem:[%s3384 + $0x3e8] sm:$0xff]
          %v3511 = vld [vmem:[%s3384 + $0x3f0] sm:$0xff]
          %v3512 = vld [vmem:[%s3384 + $0x3f8] sm:$0xff]
          %s3513 = scalar_lea.vmem [#allocation9], 12
          %v3514 = vld [vmem:[%s3513] sm:$0xf]
          %v3516 = vperm.slane %v3514, 0
          %v3517 = vperm.slane %v3514, 1
          %v3518 = vperm.slane %v3514, 2
          %v3519 = vperm.slane %v3514, 3
          %v3652 = vunpack.c.l.b16 %v3385
          %v3653 = vunpack.c.h.b16 %v3385
          %v3654 = vunpack.c.l.b16 %v3386
          %v3655 = vunpack.c.h.b16 %v3386
          %v3656 = vunpack.c.l.b16 %v3387
          %v3657 = vunpack.c.h.b16 %v3387
          %v3658 = vunpack.c.l.b16 %v3388
          %v3659 = vunpack.c.h.b16 %v3388
          %v3660 = vunpack.c.l.b16 %v3389
          %v3661 = vunpack.c.h.b16 %v3389
          %v3662 = vunpack.c.l.b16 %v3390
          %v3663 = vunpack.c.h.b16 %v3390
          %v3664 = vunpack.c.l.b16 %v3391
          %v3665 = vunpack.c.h.b16 %v3391
          %v3666 = vunpack.c.l.b16 %v3392
          %v3667 = vunpack.c.h.b16 %v3392
          %v3668 = vunpack.c.l.b16 %v3393
          %v3669 = vunpack.c.h.b16 %v3393
          %v3670 = vunpack.c.l.b16 %v3394
          %v3671 = vunpack.c.h.b16 %v3394
          %v3672 = vunpack.c.l.b16 %v3395
          %v3673 = vunpack.c.h.b16 %v3395
          %v3674 = vunpack.c.l.b16 %v3396
          %v3675 = vunpack.c.h.b16 %v3396
          %v3676 = vunpack.c.l.b16 %v3397
          %v3677 = vunpack.c.h.b16 %v3397
          %v3678 = vunpack.c.l.b16 %v3398
          %v3679 = vunpack.c.h.b16 %v3398
          %v3680 = vunpack.c.l.b16 %v3399
          %v3681 = vunpack.c.h.b16 %v3399
          %v3682 = vunpack.c.l.b16 %v3400
          %v3683 = vunpack.c.h.b16 %v3400
          %v3684 = vunpack.c.l.b16 %v3401
          %v3685 = vunpack.c.h.b16 %v3401
          %v3686 = vunpack.c.l.b16 %v3402
          %v3687 = vunpack.c.h.b16 %v3402
          %v3688 = vunpack.c.l.b16 %v3403
          %v3689 = vunpack.c.h.b16 %v3403
          %v3690 = vunpack.c.l.b16 %v3404
          %v3691 = vunpack.c.h.b16 %v3404
          %v3692 = vunpack.c.l.b16 %v3405
          %v3693 = vunpack.c.h.b16 %v3405
          %v3694 = vunpack.c.l.b16 %v3406
          %v3695 = vunpack.c.h.b16 %v3406
          %v3696 = vunpack.c.l.b16 %v3407
          %v3697 = vunpack.c.h.b16 %v3407
          %v3698 = vunpack.c.l.b16 %v3408
          %v3699 = vunpack.c.h.b16 %v3408
          %v3700 = vunpack.c.l.b16 %v3409
          %v3701 = vunpack.c.h.b16 %v3409
          %v3702 = vunpack.c.l.b16 %v3410
          %v3703 = vunpack.c.h.b16 %v3410
          %v3704 = vunpack.c.l.b16 %v3411
          %v3705 = vunpack.c.h.b16 %v3411
          %v3706 = vunpack.c.l.b16 %v3412
          %v3707 = vunpack.c.h.b16 %v3412
          %v3708 = vunpack.c.l.b16 %v3413
          %v3709 = vunpack.c.h.b16 %v3413
          %v3710 = vunpack.c.l.b16 %v3414
          %v3711 = vunpack.c.h.b16 %v3414
          %v3712 = vunpack.c.l.b16 %v3415
          %v3713 = vunpack.c.h.b16 %v3415
          %v3714 = vunpack.c.l.b16 %v3416
          %v3715 = vunpack.c.h.b16 %v3416
          %v3716 = vunpack.c.l.b16 %v3417
          %v3717 = vunpack.c.h.b16 %v3417
          %v3718 = vunpack.c.l.b16 %v3418
          %v3719 = vunpack.c.h.b16 %v3418
          %v3720 = vunpack.c.l.b16 %v3419
          %v3721 = vunpack.c.h.b16 %v3419
          %v3722 = vunpack.c.l.b16 %v3420
          %v3723 = vunpack.c.h.b16 %v3420
          %v3724 = vunpack.c.l.b16 %v3421
          %v3725 = vunpack.c.h.b16 %v3421
          %v3726 = vunpack.c.l.b16 %v3422
          %v3727 = vunpack.c.h.b16 %v3422
          %v3728 = vunpack.c.l.b16 %v3423
          %v3729 = vunpack.c.h.b16 %v3423
          %v3730 = vunpack.c.l.b16 %v3424
          %v3731 = vunpack.c.h.b16 %v3424
          %v3732 = vunpack.c.l.b16 %v3425
          %v3733 = vunpack.c.h.b16 %v3425
          %v3734 = vunpack.c.l.b16 %v3426
          %v3735 = vunpack.c.h.b16 %v3426
          %v3736 = vunpack.c.l.b16 %v3427
          %v3737 = vunpack.c.h.b16 %v3427
          %v3738 = vunpack.c.l.b16 %v3428
          %v3739 = vunpack.c.h.b16 %v3428
          %v3740 = vunpack.c.l.b16 %v3429
          %v3741 = vunpack.c.h.b16 %v3429
          %v3742 = vunpack.c.l.b16 %v3430
          %v3743 = vunpack.c.h.b16 %v3430
          %v3744 = vunpack.c.l.b16 %v3431
          %v3745 = vunpack.c.h.b16 %v3431
          %v3746 = vunpack.c.l.b16 %v3432
          %v3747 = vunpack.c.h.b16 %v3432
          %v3748 = vunpack.c.l.b16 %v3433
          %v3749 = vunpack.c.h.b16 %v3433
          %v3750 = vunpack.c.l.b16 %v3434
          %v3751 = vunpack.c.h.b16 %v3434
          %v3752 = vunpack.c.l.b16 %v3435
          %v3753 = vunpack.c.h.b16 %v3435
          %v3754 = vunpack.c.l.b16 %v3436
          %v3755 = vunpack.c.h.b16 %v3436
          %v3756 = vunpack.c.l.b16 %v3437
          %v3757 = vunpack.c.h.b16 %v3437
          %v3758 = vunpack.c.l.b16 %v3438
          %v3759 = vunpack.c.h.b16 %v3438
          %v3760 = vunpack.c.l.b16 %v3439
          %v3761 = vunpack.c.h.b16 %v3439
          %v3762 = vunpack.c.l.b16 %v3440
          %v3763 = vunpack.c.h.b16 %v3440
          %v3764 = vunpack.c.l.b16 %v3441
          %v3765 = vunpack.c.h.b16 %v3441
          %v3766 = vunpack.c.l.b16 %v3442
          %v3767 = vunpack.c.h.b16 %v3442
          %v3768 = vunpack.c.l.b16 %v3443
          %v3769 = vunpack.c.h.b16 %v3443
          %v3770 = vunpack.c.l.b16 %v3444
          %v3771 = vunpack.c.h.b16 %v3444
          %v3772 = vunpack.c.l.b16 %v3445
          %v3773 = vunpack.c.h.b16 %v3445
          %v3774 = vunpack.c.l.b16 %v3446
          %v3775 = vunpack.c.h.b16 %v3446
          %v3776 = vunpack.c.l.b16 %v3447
          %v3777 = vunpack.c.h.b16 %v3447
          %v3778 = vunpack.c.l.b16 %v3448
          %v3779 = vunpack.c.h.b16 %v3448
          %v3780 = vunpack.c.l.b16 %v3449
          %v3781 = vunpack.c.h.b16 %v3449
          %v3782 = vunpack.c.l.b16 %v3450
          %v3783 = vunpack.c.h.b16 %v3450
          %v3784 = vunpack.c.l.b16 %v3451
          %v3785 = vunpack.c.h.b16 %v3451
          %v3786 = vunpack.c.l.b16 %v3452
          %v3787 = vunpack.c.h.b16 %v3452
          %v3788 = vunpack.c.l.b16 %v3453
          %v3789 = vunpack.c.h.b16 %v3453
          %v3790 = vunpack.c.l.b16 %v3454
          %v3791 = vunpack.c.h.b16 %v3454
          %v3792 = vunpack.c.l.b16 %v3455
          %v3793 = vunpack.c.h.b16 %v3455
          %v3794 = vunpack.c.l.b16 %v3456
          %v3795 = vunpack.c.h.b16 %v3456
          %v3796 = vunpack.c.l.b16 %v3457
          %v3797 = vunpack.c.h.b16 %v3457
          %v3798 = vunpack.c.l.b16 %v3458
          %v3799 = vunpack.c.h.b16 %v3458
          %v3800 = vunpack.c.l.b16 %v3459
          %v3801 = vunpack.c.h.b16 %v3459
          %v3802 = vunpack.c.l.b16 %v3460
          %v3803 = vunpack.c.h.b16 %v3460
          %v3804 = vunpack.c.l.b16 %v3461
          %v3805 = vunpack.c.h.b16 %v3461
          %v3806 = vunpack.c.l.b16 %v3462
          %v3807 = vunpack.c.h.b16 %v3462
          %v3808 = vunpack.c.l.b16 %v3463
          %v3809 = vunpack.c.h.b16 %v3463
          %v3810 = vunpack.c.l.b16 %v3464
          %v3811 = vunpack.c.h.b16 %v3464
          %v3812 = vunpack.c.l.b16 %v3465
          %v3813 = vunpack.c.h.b16 %v3465
          %v3814 = vunpack.c.l.b16 %v3466
          %v3815 = vunpack.c.h.b16 %v3466
          %v3816 = vunpack.c.l.b16 %v3467
          %v3817 = vunpack.c.h.b16 %v3467
          %v3818 = vunpack.c.l.b16 %v3468
          %v3819 = vunpack.c.h.b16 %v3468
          %v3820 = vunpack.c.l.b16 %v3469
          %v3821 = vunpack.c.h.b16 %v3469
          %v3822 = vunpack.c.l.b16 %v3470
          %v3823 = vunpack.c.h.b16 %v3470
          %v3824 = vunpack.c.l.b16 %v3471
          %v3825 = vunpack.c.h.b16 %v3471
          %v3826 = vunpack.c.l.b16 %v3472
          %v3827 = vunpack.c.h.b16 %v3472
          %v3828 = vunpack.c.l.b16 %v3473
          %v3829 = vunpack.c.h.b16 %v3473
          %v3830 = vunpack.c.l.b16 %v3474
          %v3831 = vunpack.c.h.b16 %v3474
          %v3832 = vunpack.c.l.b16 %v3475
          %v3833 = vunpack.c.h.b16 %v3475
          %v3834 = vunpack.c.l.b16 %v3476
          %v3835 = vunpack.c.h.b16 %v3476
          %v3836 = vunpack.c.l.b16 %v3477
          %v3837 = vunpack.c.h.b16 %v3477
          %v3838 = vunpack.c.l.b16 %v3478
          %v3839 = vunpack.c.h.b16 %v3478
          %v3840 = vunpack.c.l.b16 %v3479
          %v3841 = vunpack.c.h.b16 %v3479
          %v3842 = vunpack.c.l.b16 %v3480
          %v3843 = vunpack.c.h.b16 %v3480
          %v3844 = vunpack.c.l.b16 %v3481
          %v3845 = vunpack.c.h.b16 %v3481
          %v3846 = vunpack.c.l.b16 %v3482
          %v3847 = vunpack.c.h.b16 %v3482
          %v3848 = vunpack.c.l.b16 %v3483
          %v3849 = vunpack.c.h.b16 %v3483
          %v3850 = vunpack.c.l.b16 %v3484
          %v3851 = vunpack.c.h.b16 %v3484
          %v3852 = vunpack.c.l.b16 %v3485
          %v3853 = vunpack.c.h.b16 %v3485
          %v3854 = vunpack.c.l.b16 %v3486
          %v3855 = vunpack.c.h.b16 %v3486
          %v3856 = vunpack.c.l.b16 %v3487
          %v3857 = vunpack.c.h.b16 %v3487
          %v3858 = vunpack.c.l.b16 %v3488
          %v3859 = vunpack.c.h.b16 %v3488
          %v3860 = vunpack.c.l.b16 %v3489
          %v3861 = vunpack.c.h.b16 %v3489
          %v3862 = vunpack.c.l.b16 %v3490
          %v3863 = vunpack.c.h.b16 %v3490
          %v3864 = vunpack.c.l.b16 %v3491
          %v3865 = vunpack.c.h.b16 %v3491
          %v3866 = vunpack.c.l.b16 %v3492
          %v3867 = vunpack.c.h.b16 %v3492
          %v3868 = vunpack.c.l.b16 %v3493
          %v3869 = vunpack.c.h.b16 %v3493
          %v3870 = vunpack.c.l.b16 %v3494
          %v3871 = vunpack.c.h.b16 %v3494
          %v3872 = vunpack.c.l.b16 %v3495
          %v3873 = vunpack.c.h.b16 %v3495
          %v3874 = vunpack.c.l.b16 %v3496
          %v3875 = vunpack.c.h.b16 %v3496
          %v3876 = vunpack.c.l.b16 %v3497
          %v3877 = vunpack.c.h.b16 %v3497
          %v3878 = vunpack.c.l.b16 %v3498
          %v3879 = vunpack.c.h.b16 %v3498
          %v3880 = vunpack.c.l.b16 %v3499
          %v3881 = vunpack.c.h.b16 %v3499
          %v3882 = vunpack.c.l.b16 %v3500
          %v3883 = vunpack.c.h.b16 %v3500
          %v3884 = vunpack.c.l.b16 %v3501
          %v3885 = vunpack.c.h.b16 %v3501
          %v3886 = vunpack.c.l.b16 %v3502
          %v3887 = vunpack.c.h.b16 %v3502
          %v3888 = vunpack.c.l.b16 %v3503
          %v3889 = vunpack.c.h.b16 %v3503
          %v3890 = vunpack.c.l.b16 %v3504
          %v3891 = vunpack.c.h.b16 %v3504
          %v3892 = vunpack.c.l.b16 %v3505
          %v3893 = vunpack.c.h.b16 %v3505
          %v3894 = vunpack.c.l.b16 %v3506
          %v3895 = vunpack.c.h.b16 %v3506
          %v3896 = vunpack.c.l.b16 %v3507
          %v3897 = vunpack.c.h.b16 %v3507
          %v3898 = vunpack.c.l.b16 %v3508
          %v3899 = vunpack.c.h.b16 %v3508
          %v3900 = vunpack.c.l.b16 %v3509
          %v3901 = vunpack.c.h.b16 %v3509
          %v3902 = vunpack.c.l.b16 %v3510
          %v3903 = vunpack.c.h.b16 %v3510
          %v3904 = vunpack.c.l.b16 %v3511
          %v3905 = vunpack.c.h.b16 %v3511
          %v3906 = vunpack.c.l.b16 %v3512
          %v3907 = vunpack.c.h.b16 %v3512
          %v3908 = vpack.c.b16 %v3656, %v3652
          %v3909 = vpack.c.b16 %v3657, %v3653
          %v3910 = vpack.c.b16 %v3658, %v3654
          %v3911 = vpack.c.b16 %v3659, %v3655
          %v3912 = vpack.c.b16 %v3664, %v3660
          %v3913 = vpack.c.b16 %v3665, %v3661
          %v3914 = vpack.c.b16 %v3666, %v3662
          %v3915 = vpack.c.b16 %v3667, %v3663
          %v3916 = vpack.c.b16 %v3672, %v3668
          %v3917 = vpack.c.b16 %v3673, %v3669
          %v3918 = vpack.c.b16 %v3674, %v3670
          %v3919 = vpack.c.b16 %v3675, %v3671
          %v3920 = vpack.c.b16 %v3680, %v3676
          %v3921 = vpack.c.b16 %v3681, %v3677
          %v3922 = vpack.c.b16 %v3682, %v3678
          %v3923 = vpack.c.b16 %v3683, %v3679
          %v3924 = vpack.c.b16 %v3688, %v3684
          %v3925 = vpack.c.b16 %v3689, %v3685
          %v3926 = vpack.c.b16 %v3690, %v3686
          %v3927 = vpack.c.b16 %v3691, %v3687
          %v3928 = vpack.c.b16 %v3696, %v3692
          %v3929 = vpack.c.b16 %v3697, %v3693
          %v3930 = vpack.c.b16 %v3698, %v3694
          %v3931 = vpack.c.b16 %v3699, %v3695
          %v3932 = vpack.c.b16 %v3704, %v3700
          %v3933 = vpack.c.b16 %v3705, %v3701
          %v3934 = vpack.c.b16 %v3706, %v3702
          %v3935 = vpack.c.b16 %v3707, %v3703
          %v3936 = vpack.c.b16 %v3712, %v3708
          %v3937 = vpack.c.b16 %v3713, %v3709
          %v3938 = vpack.c.b16 %v3714, %v3710
          %v3939 = vpack.c.b16 %v3715, %v3711
          %v3940 = vpack.c.b16 %v3720, %v3716
          %v3941 = vpack.c.b16 %v3721, %v3717
          %v3942 = vpack.c.b16 %v3722, %v3718
          %v3943 = vpack.c.b16 %v3723, %v3719
          %v3944 = vpack.c.b16 %v3728, %v3724
          %v3945 = vpack.c.b16 %v3729, %v3725
          %v3946 = vpack.c.b16 %v3730, %v3726
          %v3947 = vpack.c.b16 %v3731, %v3727
          %v3948 = vpack.c.b16 %v3736, %v3732
          %v3949 = vpack.c.b16 %v3737, %v3733
          %v3950 = vpack.c.b16 %v3738, %v3734
          %v3951 = vpack.c.b16 %v3739, %v3735
          %v3952 = vpack.c.b16 %v3744, %v3740
          %v3953 = vpack.c.b16 %v3745, %v3741
          %v3954 = vpack.c.b16 %v3746, %v3742
          %v3955 = vpack.c.b16 %v3747, %v3743
          %v3956 = vpack.c.b16 %v3752, %v3748
          %v3957 = vpack.c.b16 %v3753, %v3749
          %v3958 = vpack.c.b16 %v3754, %v3750
          %v3959 = vpack.c.b16 %v3755, %v3751
          %v3960 = vpack.c.b16 %v3760, %v3756
          %v3961 = vpack.c.b16 %v3761, %v3757
          %v3962 = vpack.c.b16 %v3762, %v3758
          %v3963 = vpack.c.b16 %v3763, %v3759
          %v3964 = vpack.c.b16 %v3768, %v3764
          %v3965 = vpack.c.b16 %v3769, %v3765
          %v3966 = vpack.c.b16 %v3770, %v3766
          %v3967 = vpack.c.b16 %v3771, %v3767
          %v3968 = vpack.c.b16 %v3776, %v3772
          %v3969 = vpack.c.b16 %v3777, %v3773
          %v3970 = vpack.c.b16 %v3778, %v3774
          %v3971 = vpack.c.b16 %v3779, %v3775
          %v3972 = vpack.c.b16 %v3784, %v3780
          %v3973 = vpack.c.b16 %v3785, %v3781
          %v3974 = vpack.c.b16 %v3786, %v3782
          %v3975 = vpack.c.b16 %v3787, %v3783
          %v3976 = vpack.c.b16 %v3792, %v3788
          %v3977 = vpack.c.b16 %v3793, %v3789
          %v3978 = vpack.c.b16 %v3794, %v3790
          %v3979 = vpack.c.b16 %v3795, %v3791
          %v3980 = vpack.c.b16 %v3800, %v3796
          %v3981 = vpack.c.b16 %v3801, %v3797
          %v3982 = vpack.c.b16 %v3802, %v3798
          %v3983 = vpack.c.b16 %v3803, %v3799
          %v3984 = vpack.c.b16 %v3808, %v3804
          %v3985 = vpack.c.b16 %v3809, %v3805
          %v3986 = vpack.c.b16 %v3810, %v3806
          %v3987 = vpack.c.b16 %v3811, %v3807
          %v3988 = vpack.c.b16 %v3816, %v3812
          %v3989 = vpack.c.b16 %v3817, %v3813
          %v3990 = vpack.c.b16 %v3818, %v3814
          %v3991 = vpack.c.b16 %v3819, %v3815
          %v3992 = vpack.c.b16 %v3824, %v3820
          %v3993 = vpack.c.b16 %v3825, %v3821
          %v3994 = vpack.c.b16 %v3826, %v3822
          %v3995 = vpack.c.b16 %v3827, %v3823
          %v3996 = vpack.c.b16 %v3832, %v3828
          %v3997 = vpack.c.b16 %v3833, %v3829
          %v3998 = vpack.c.b16 %v3834, %v3830
          %v3999 = vpack.c.b16 %v3835, %v3831
          %v4000 = vpack.c.b16 %v3840, %v3836
          %v4001 = vpack.c.b16 %v3841, %v3837
          %v4002 = vpack.c.b16 %v3842, %v3838
          %v4003 = vpack.c.b16 %v3843, %v3839
          %v4004 = vpack.c.b16 %v3848, %v3844
          %v4005 = vpack.c.b16 %v3849, %v3845
          %v4006 = vpack.c.b16 %v3850, %v3846
          %v4007 = vpack.c.b16 %v3851, %v3847
          %v4008 = vpack.c.b16 %v3856, %v3852
          %v4009 = vpack.c.b16 %v3857, %v3853
          %v4010 = vpack.c.b16 %v3858, %v3854
          %v4011 = vpack.c.b16 %v3859, %v3855
          %v4012 = vpack.c.b16 %v3864, %v3860
          %v4013 = vpack.c.b16 %v3865, %v3861
          %v4014 = vpack.c.b16 %v3866, %v3862
          %v4015 = vpack.c.b16 %v3867, %v3863
          %v4016 = vpack.c.b16 %v3872, %v3868
          %v4017 = vpack.c.b16 %v3873, %v3869
          %v4018 = vpack.c.b16 %v3874, %v3870
          %v4019 = vpack.c.b16 %v3875, %v3871
          %v4020 = vpack.c.b16 %v3880, %v3876
          %v4021 = vpack.c.b16 %v3881, %v3877
          %v4022 = vpack.c.b16 %v3882, %v3878
          %v4023 = vpack.c.b16 %v3883, %v3879
          %v4024 = vpack.c.b16 %v3888, %v3884
          %v4025 = vpack.c.b16 %v3889, %v3885
          %v4026 = vpack.c.b16 %v3890, %v3886
          %v4027 = vpack.c.b16 %v3891, %v3887
          %v4028 = vpack.c.b16 %v3896, %v3892
          %v4029 = vpack.c.b16 %v3897, %v3893
          %v4030 = vpack.c.b16 %v3898, %v3894
          %v4031 = vpack.c.b16 %v3899, %v3895
          %v4032 = vpack.c.b16 %v3904, %v3900
          %v4033 = vpack.c.b16 %v3905, %v3901
          %v4034 = vpack.c.b16 %v3906, %v3902
          %v4035 = vpack.c.b16 %v3907, %v3903
          %4164 = vmatpush.bf16.msra.mxu0 %v3936
          %4165 = vmatpush.bf16.msra.mxu0 %v3932
          %4166 = vmatpush.bf16.msra.mxu0 %v3928
          %4167 = vmatpush.bf16.msra.mxu0 %v3924
          %4168 = vmatpush.bf16.msra.mxu0 %v3920
          %4169 = vmatpush.bf16.msra.mxu0 %v3916
          %4170 = vmatpush.bf16.msra.mxu0 %v3912
          %4171 = vmatpush.bf16.msra.mxu0 %v3908
          %4172 = vmatmul.bf16.gmra.mxu0 %v3380
          %v4173 = vpop.f32.mrf.mxu0
          %v4174 = vadd.f32 %v3516, %v4173
          %v4175 = vpop.f32.mrf.mxu0
          %4176 = vdwg.mxu0
          %4177 = vmatpush.bf16.msra.mxu0 %v3968
          %4178 = vmatpush.bf16.msra.mxu0 %v3964
          %4179 = vmatpush.bf16.msra.mxu0 %v3960
          %4180 = vmatpush.bf16.msra.mxu0 %v3956
          %4181 = vmatpush.bf16.msra.mxu0 %v3952
          %4182 = vmatpush.bf16.msra.mxu0 %v3948
          %4183 = vmatpush.bf16.msra.mxu0 %v3944
          %4184 = vmatpush.bf16.msra.mxu0 %v3940
          %4185 = vmatmul.bf16.gmra.mxu0 %v3381
          %v4186 = vpop.f32.mrf.mxu0
          %v4187 = vadd.f32 %v4174, %v4186
          %v4188 = vpop.f32.mrf.mxu0
          %4189 = vdwg.mxu0
          %4190 = vmatpush.bf16.msra.mxu0 %v4000
          %4191 = vmatpush.bf16.msra.mxu0 %v3996
          %4192 = vmatpush.bf16.msra.mxu0 %v3992
          %4193 = vmatpush.bf16.msra.mxu0 %v3988
          %4194 = vmatpush.bf16.msra.mxu0 %v3984
          %4195 = vmatpush.bf16.msra.mxu0 %v3980
          %4196 = vmatpush.bf16.msra.mxu0 %v3976
          %4197 = vmatpush.bf16.msra.mxu0 %v3972
          %4198 = vmatmul.bf16.gmra.mxu0 %v3382
          %v4199 = vpop.f32.mrf.mxu0
          %v4200 = vadd.f32 %v4187, %v4199
          %v4201 = vpop.f32.mrf.mxu0
          %4202 = vdwg.mxu0
          %4203 = vmatpush.bf16.msra.mxu0 %v4032
          %4204 = vmatpush.bf16.msra.mxu0 %v4028
          %4205 = vmatpush.bf16.msra.mxu0 %v4024
          %4206 = vmatpush.bf16.msra.mxu0 %v4020
          %4207 = vmatpush.bf16.msra.mxu0 %v4016
          %4208 = vmatpush.bf16.msra.mxu0 %v4012
          %4209 = vmatpush.bf16.msra.mxu0 %v4008
          %4210 = vmatpush.bf16.msra.mxu0 %v4004
          %4211 = vmatmul.bf16.gmra.mxu0 %v3383
          %v4212 = vpop.f32.mrf.mxu0
          %v4213 = vadd.f32 %v4200, %v4212
          %v4214 = vpop.f32.mrf.mxu0
          %4215 = vdwg.mxu0
          %4216 = vmatpush.bf16.msra.mxu0 %v3937
          %4217 = vmatpush.bf16.msra.mxu0 %v3933
          %4218 = vmatpush.bf16.msra.mxu0 %v3929
          %4219 = vmatpush.bf16.msra.mxu0 %v3925
          %4220 = vmatpush.bf16.msra.mxu0 %v3921
          %4221 = vmatpush.bf16.msra.mxu0 %v3917
          %4222 = vmatpush.bf16.msra.mxu0 %v3913
          %4223 = vmatpush.bf16.msra.mxu0 %v3909
          %4224 = vmatmul.bf16.gmra.mxu0 %v3380
          %v4225 = vpop.f32.mrf.mxu0
          %v4226 = vadd.f32 %v3517, %v4225
          %v4227 = vpop.f32.mrf.mxu0
          %4228 = vdwg.mxu0
          %4229 = vmatpush.bf16.msra.mxu0 %v3969
          %4230 = vmatpush.bf16.msra.mxu0 %v3965
          %4231 = vmatpush.bf16.msra.mxu0 %v3961
          %4232 = vmatpush.bf16.msra.mxu0 %v3957
          %4233 = vmatpush.bf16.msra.mxu0 %v3953
          %4234 = vmatpush.bf16.msra.mxu0 %v3949
          %4235 = vmatpush.bf16.msra.mxu0 %v3945
          %4236 = vmatpush.bf16.msra.mxu0 %v3941
          %4237 = vmatmul.bf16.gmra.mxu0 %v3381
          %v4238 = vpop.f32.mrf.mxu0
          %v4239 = vadd.f32 %v4226, %v4238
          %v4240 = vpop.f32.mrf.mxu0
          %4241 = vdwg.mxu0
          %4242 = vmatpush.bf16.msra.mxu0 %v4001
          %4243 = vmatpush.bf16.msra.mxu0 %v3997
          %4244 = vmatpush.bf16.msra.mxu0 %v3993
          %4245 = vmatpush.bf16.msra.mxu0 %v3989
          %4246 = vmatpush.bf16.msra.mxu0 %v3985
          %4247 = vmatpush.bf16.msra.mxu0 %v3981
          %4248 = vmatpush.bf16.msra.mxu0 %v3977
          %4249 = vmatpush.bf16.msra.mxu0 %v3973
          %4250 = vmatmul.bf16.gmra.mxu0 %v3382
          %v4251 = vpop.f32.mrf.mxu0
          %v4252 = vadd.f32 %v4239, %v4251
          %v4253 = vpop.f32.mrf.mxu0
          %4254 = vdwg.mxu0
          %4255 = vmatpush.bf16.msra.mxu0 %v4033
          %4256 = vmatpush.bf16.msra.mxu0 %v4029
          %4257 = vmatpush.bf16.msra.mxu0 %v4025
          %4258 = vmatpush.bf16.msra.mxu0 %v4021
          %4259 = vmatpush.bf16.msra.mxu0 %v4017
          %4260 = vmatpush.bf16.msra.mxu0 %v4013
          %4261 = vmatpush.bf16.msra.mxu0 %v4009
          %4262 = vmatpush.bf16.msra.mxu0 %v4005
          %4263 = vmatmul.bf16.gmra.mxu0 %v3383
          %v4264 = vpop.f32.mrf.mxu0
          %v4265 = vadd.f32 %v4252, %v4264
          %v4266 = vpop.f32.mrf.mxu0
          %4267 = vdwg.mxu0
          %4268 = vmatpush.bf16.msra.mxu0 %v3938
          %4269 = vmatpush.bf16.msra.mxu0 %v3934
          %4270 = vmatpush.bf16.msra.mxu0 %v3930
          %4271 = vmatpush.bf16.msra.mxu0 %v3926
          %4272 = vmatpush.bf16.msra.mxu0 %v3922
          %4273 = vmatpush.bf16.msra.mxu0 %v3918
          %4274 = vmatpush.bf16.msra.mxu0 %v3914
          %4275 = vmatpush.bf16.msra.mxu0 %v3910
          %4276 = vmatmul.bf16.gmra.mxu0 %v3380
          %v4277 = vpop.f32.mrf.mxu0
          %v4278 = vadd.f32 %v3518, %v4277
          %v4279 = vpop.f32.mrf.mxu0
          %4280 = vdwg.mxu0
          %4281 = vmatpush.bf16.msra.mxu0 %v3970
          %4282 = vmatpush.bf16.msra.mxu0 %v3966
          %4283 = vmatpush.bf16.msra.mxu0 %v3962
          %4284 = vmatpush.bf16.msra.mxu0 %v3958
          %4285 = vmatpush.bf16.msra.mxu0 %v3954
          %4286 = vmatpush.bf16.msra.mxu0 %v3950
          %4287 = vmatpush.bf16.msra.mxu0 %v3946
          %4288 = vmatpush.bf16.msra.mxu0 %v3942
          %4289 = vmatmul.bf16.gmra.mxu0 %v3381
          %v4290 = vpop.f32.mrf.mxu0
          %v4291 = vadd.f32 %v4278, %v4290
          %v4292 = vpop.f32.mrf.mxu0
          %4293 = vdwg.mxu0
          %4294 = vmatpush.bf16.msra.mxu0 %v4002
          %4295 = vmatpush.bf16.msra.mxu0 %v3998
          %4296 = vmatpush.bf16.msra.mxu0 %v3994
          %4297 = vmatpush.bf16.msra.mxu0 %v3990
          %4298 = vmatpush.bf16.msra.mxu0 %v3986
          %4299 = vmatpush.bf16.msra.mxu0 %v3982
          %4300 = vmatpush.bf16.msra.mxu0 %v3978
          %4301 = vmatpush.bf16.msra.mxu0 %v3974
          %4302 = vmatmul.bf16.gmra.mxu0 %v3382
          %v4303 = vpop.f32.mrf.mxu0
          %v4304 = vadd.f32 %v4291, %v4303
          %v4305 = vpop.f32.mrf.mxu0
          %4306 = vdwg.mxu0
          %4307 = vmatpush.bf16.msra.mxu0 %v4034
          %4308 = vmatpush.bf16.msra.mxu0 %v4030
          %4309 = vmatpush.bf16.msra.mxu0 %v4026
          %4310 = vmatpush.bf16.msra.mxu0 %v4022
          %4311 = vmatpush.bf16.msra.mxu0 %v4018
          %4312 = vmatpush.bf16.msra.mxu0 %v4014
          %4313 = vmatpush.bf16.msra.mxu0 %v4010
          %4314 = vmatpush.bf16.msra.mxu0 %v4006
          %4315 = vmatmul.bf16.gmra.mxu0 %v3383
          %v4316 = vpop.f32.mrf.mxu0
          %v4317 = vadd.f32 %v4304, %v4316
          %v4318 = vpop.f32.mrf.mxu0
          %4319 = vdwg.mxu0
          %4320 = vmatpush.bf16.msra.mxu0 %v3939
          %4321 = vmatpush.bf16.msra.mxu0 %v3935
          %4322 = vmatpush.bf16.msra.mxu0 %v3931
          %4323 = vmatpush.bf16.msra.mxu0 %v3927
          %4324 = vmatpush.bf16.msra.mxu0 %v3923
          %4325 = vmatpush.bf16.msra.mxu0 %v3919
          %4326 = vmatpush.bf16.msra.mxu0 %v3915
          %4327 = vmatpush.bf16.msra.mxu0 %v3911
          %4328 = vmatmul.bf16.gmra.mxu0 %v3380
          %v4329 = vpop.f32.mrf.mxu0
          %v4330 = vadd.f32 %v3519, %v4329
          %v4331 = vpop.f32.mrf.mxu0
          %4332 = vdwg.mxu0
          %4333 = vmatpush.bf16.msra.mxu0 %v3971
          %4334 = vmatpush.bf16.msra.mxu0 %v3967
          %4335 = vmatpush.bf16.msra.mxu0 %v3963
          %4336 = vmatpush.bf16.msra.mxu0 %v3959
          %4337 = vmatpush.bf16.msra.mxu0 %v3955
          %4338 = vmatpush.bf16.msra.mxu0 %v3951
          %4339 = vmatpush.bf16.msra.mxu0 %v3947
          %4340 = vmatpush.bf16.msra.mxu0 %v3943
          %4341 = vmatmul.bf16.gmra.mxu0 %v3381
          %v4342 = vpop.f32.mrf.mxu0
          %v4343 = vadd.f32 %v4330, %v4342
          %v4344 = vpop.f32.mrf.mxu0
          %4345 = vdwg.mxu0
          %4346 = vmatpush.bf16.msra.mxu0 %v4003
          %4347 = vmatpush.bf16.msra.mxu0 %v3999
          %4348 = vmatpush.bf16.msra.mxu0 %v3995
          %4349 = vmatpush.bf16.msra.mxu0 %v3991
          %4350 = vmatpush.bf16.msra.mxu0 %v3987
          %4351 = vmatpush.bf16.msra.mxu0 %v3983
          %4352 = vmatpush.bf16.msra.mxu0 %v3979
          %4353 = vmatpush.bf16.msra.mxu0 %v3975
          %4354 = vmatmul.bf16.gmra.mxu0 %v3382
          %v4355 = vpop.f32.mrf.mxu0
          %v4356 = vadd.f32 %v4343, %v4355
          %v4357 = vpop.f32.mrf.mxu0
          %4358 = vdwg.mxu0
          %4359 = vmatpush.bf16.msra.mxu0 %v4035
          %4360 = vmatpush.bf16.msra.mxu0 %v4031
          %4361 = vmatpush.bf16.msra.mxu0 %v4027
          %4362 = vmatpush.bf16.msra.mxu0 %v4023
          %4363 = vmatpush.bf16.msra.mxu0 %v4019
          %4364 = vmatpush.bf16.msra.mxu0 %v4015
          %4365 = vmatpush.bf16.msra.mxu0 %v4011
          %4366 = vmatpush.bf16.msra.mxu0 %v4007
          %4367 = vmatmul.bf16.gmra.mxu0 %v3383
          %v4368 = vpop.f32.mrf.mxu0
          %v4369 = vadd.f32 %v4356, %v4368
          %v4370 = vpop.f32.mrf.mxu0
          %4371 = vdwg.mxu0
          %v4376 = vrot.slane %v4265, 6
          %v4377 = vrot.slane %v4317, 4
          %v4378 = vrot.slane %v4369, 2
          %vm4379 = vcmask 1041408
          %v4380 = vsel %vm4379, %v4213, %v4376
          %vm4381 = vcmask 1045508
          %v4382 = vsel %vm4381, %v4377, %v4378
          %vm4383 = vcmask 1043456
          %v4384 = vsel %vm4383, %v4380, %v4382
          %4386 = vst [vmem:[#allocation2] sm:$0xff] %v4384
        $region80: #{tpu_custom_call.1} parent=51 // pred_fallthru
          _
        %p4387 = scmp.eq.s32.totalorder %s23, 1
        // Predicated region
        $region81: #{tpu_custom_call.1} parent=51 // pred_check
          %p4388 = pneg %p4387
        $region82: #{tpu_custom_call.1} parent=51 // pred_check_branch
          %4390 = sbr.rel (%p4388) target = $region84
        $region83: #{tpu_custom_call.1} parent=51 // pred_region
          %v4391 = vld [vmem:[#allocation2] sm:$0xff]
          %4393 = vst [vmem:[#allocation1] ss:$4 sm:$0xff] %v4391
          %v4394 = vld.sshfl [vmem:[#allocation1] sm:$0xff pattern:$0x73625140]
          %v4395 = vld.sshfl [vmem:[#allocation1 + $0x8] sm:$0xff pattern:$0x73625140]
          %v4396 = vld.sshfl [vmem:[#allocation1 + $0x10] sm:$0xff pattern:$0x73625140]
          %v4397 = vld.sshfl [vmem:[#allocation1 + $0x18] sm:$0xff pattern:$0x73625140]
          %v4402 = vpack.c.bf16 %v4394, %v4394
          %v4403 = vpack.c.bf16 %v4395, %v4395
          %v4404 = vpack.c.bf16 %v4396, %v4396
          %v4405 = vpack.c.bf16 %v4397, %v4397
          %v4406 = vld [vmem:[%s345] sm:$0xff]
          %v4407 = vld [vmem:[%s345 + $0x8] sm:$0xff]
          %v4408 = vld [vmem:[%s345 + $0x10] sm:$0xff]
          %v4409 = vld [vmem:[%s345 + $0x18] sm:$0xff]
          %v4410 = vld [vmem:[%s345 + $0x20] sm:$0xff]
          %v4411 = vld [vmem:[%s345 + $0x28] sm:$0xff]
          %v4412 = vld [vmem:[%s345 + $0x30] sm:$0xff]
          %v4413 = vld [vmem:[%s345 + $0x38] sm:$0xff]
          %v4414 = vld [vmem:[%s345 + $0x40] sm:$0xff]
          %v4415 = vld [vmem:[%s345 + $0x48] sm:$0xff]
          %v4416 = vld [vmem:[%s345 + $0x50] sm:$0xff]
          %v4417 = vld [vmem:[%s345 + $0x58] sm:$0xff]
          %v4418 = vld [vmem:[%s345 + $0x60] sm:$0xff]
          %v4419 = vld [vmem:[%s345 + $0x68] sm:$0xff]
          %v4420 = vld [vmem:[%s345 + $0x70] sm:$0xff]
          %v4421 = vld [vmem:[%s345 + $0x78] sm:$0xff]
          %v4422 = vld [vmem:[%s345 + $0x80] sm:$0xff]
          %v4423 = vld [vmem:[%s345 + $0x88] sm:$0xff]
          %v4424 = vld [vmem:[%s345 + $0x90] sm:$0xff]
          %v4425 = vld [vmem:[%s345 + $0x98] sm:$0xff]
          %v4426 = vld [vmem:[%s345 + $0xa0] sm:$0xff]
          %v4427 = vld [vmem:[%s345 + $0xa8] sm:$0xff]
          %v4428 = vld [vmem:[%s345 + $0xb0] sm:$0xff]
          %v4429 = vld [vmem:[%s345 + $0xb8] sm:$0xff]
          %v4430 = vld [vmem:[%s345 + $0xc0] sm:$0xff]
          %v4431 = vld [vmem:[%s345 + $0xc8] sm:$0xff]
          %v4432 = vld [vmem:[%s345 + $0xd0] sm:$0xff]
          %v4433 = vld [vmem:[%s345 + $0xd8] sm:$0xff]
          %v4434 = vld [vmem:[%s345 + $0xe0] sm:$0xff]
          %v4435 = vld [vmem:[%s345 + $0xe8] sm:$0xff]
          %v4436 = vld [vmem:[%s345 + $0xf0] sm:$0xff]
          %v4437 = vld [vmem:[%s345 + $0xf8] sm:$0xff]
          %v4438 = vld [vmem:[%s345 + $0x100] sm:$0xff]
          %v4439 = vld [vmem:[%s345 + $0x108] sm:$0xff]
          %v4440 = vld [vmem:[%s345 + $0x110] sm:$0xff]
          %v4441 = vld [vmem:[%s345 + $0x118] sm:$0xff]
          %v4442 = vld [vmem:[%s345 + $0x120] sm:$0xff]
          %v4443 = vld [vmem:[%s345 + $0x128] sm:$0xff]
          %v4444 = vld [vmem:[%s345 + $0x130] sm:$0xff]
          %v4445 = vld [vmem:[%s345 + $0x138] sm:$0xff]
          %v4446 = vld [vmem:[%s345 + $0x140] sm:$0xff]
          %v4447 = vld [vmem:[%s345 + $0x148] sm:$0xff]
          %v4448 = vld [vmem:[%s345 + $0x150] sm:$0xff]
          %v4449 = vld [vmem:[%s345 + $0x158] sm:$0xff]
          %v4450 = vld [vmem:[%s345 + $0x160] sm:$0xff]
          %v4451 = vld [vmem:[%s345 + $0x168] sm:$0xff]
          %v4452 = vld [vmem:[%s345 + $0x170] sm:$0xff]
          %v4453 = vld [vmem:[%s345 + $0x178] sm:$0xff]
          %v4454 = vld [vmem:[%s345 + $0x180] sm:$0xff]
          %v4455 = vld [vmem:[%s345 + $0x188] sm:$0xff]
          %v4456 = vld [vmem:[%s345 + $0x190] sm:$0xff]
          %v4457 = vld [vmem:[%s345 + $0x198] sm:$0xff]
          %v4458 = vld [vmem:[%s345 + $0x1a0] sm:$0xff]
          %v4459 = vld [vmem:[%s345 + $0x1a8] sm:$0xff]
          %v4460 = vld [vmem:[%s345 + $0x1b0] sm:$0xff]
          %v4461 = vld [vmem:[%s345 + $0x1b8] sm:$0xff]
          %v4462 = vld [vmem:[%s345 + $0x1c0] sm:$0xff]
          %v4463 = vld [vmem:[%s345 + $0x1c8] sm:$0xff]
          %v4464 = vld [vmem:[%s345 + $0x1d0] sm:$0xff]
          %v4465 = vld [vmem:[%s345 + $0x1d8] sm:$0xff]
          %v4466 = vld [vmem:[%s345 + $0x1e0] sm:$0xff]
          %v4467 = vld [vmem:[%s345 + $0x1e8] sm:$0xff]
          %v4468 = vld [vmem:[%s345 + $0x1f0] sm:$0xff]
          %v4469 = vld [vmem:[%s345 + $0x1f8] sm:$0xff]
          %v4470 = vld [vmem:[%s345 + $0x200] sm:$0xff]
          %v4471 = vld [vmem:[%s345 + $0x208] sm:$0xff]
          %v4472 = vld [vmem:[%s345 + $0x210] sm:$0xff]
          %v4473 = vld [vmem:[%s345 + $0x218] sm:$0xff]
          %v4474 = vld [vmem:[%s345 + $0x220] sm:$0xff]
          %v4475 = vld [vmem:[%s345 + $0x228] sm:$0xff]
          %v4476 = vld [vmem:[%s345 + $0x230] sm:$0xff]
          %v4477 = vld [vmem:[%s345 + $0x238] sm:$0xff]
          %v4478 = vld [vmem:[%s345 + $0x240] sm:$0xff]
          %v4479 = vld [vmem:[%s345 + $0x248] sm:$0xff]
          %v4480 = vld [vmem:[%s345 + $0x250] sm:$0xff]
          %v4481 = vld [vmem:[%s345 + $0x258] sm:$0xff]
          %v4482 = vld [vmem:[%s345 + $0x260] sm:$0xff]
          %v4483 = vld [vmem:[%s345 + $0x268] sm:$0xff]
          %v4484 = vld [vmem:[%s345 + $0x270] sm:$0xff]
          %v4485 = vld [vmem:[%s345 + $0x278] sm:$0xff]
          %v4486 = vld [vmem:[%s345 + $0x280] sm:$0xff]
          %v4487 = vld [vmem:[%s345 + $0x288] sm:$0xff]
          %v4488 = vld [vmem:[%s345 + $0x290] sm:$0xff]
          %v4489 = vld [vmem:[%s345 + $0x298] sm:$0xff]
          %v4490 = vld [vmem:[%s345 + $0x2a0] sm:$0xff]
          %v4491 = vld [vmem:[%s345 + $0x2a8] sm:$0xff]
          %v4492 = vld [vmem:[%s345 + $0x2b0] sm:$0xff]
          %v4493 = vld [vmem:[%s345 + $0x2b8] sm:$0xff]
          %v4494 = vld [vmem:[%s345 + $0x2c0] sm:$0xff]
          %v4495 = vld [vmem:[%s345 + $0x2c8] sm:$0xff]
          %v4496 = vld [vmem:[%s345 + $0x2d0] sm:$0xff]
          %v4497 = vld [vmem:[%s345 + $0x2d8] sm:$0xff]
          %v4498 = vld [vmem:[%s345 + $0x2e0] sm:$0xff]
          %v4499 = vld [vmem:[%s345 + $0x2e8] sm:$0xff]
          %v4500 = vld [vmem:[%s345 + $0x2f0] sm:$0xff]
          %v4501 = vld [vmem:[%s345 + $0x2f8] sm:$0xff]
          %v4502 = vld [vmem:[%s345 + $0x300] sm:$0xff]
          %v4503 = vld [vmem:[%s345 + $0x308] sm:$0xff]
          %v4504 = vld [vmem:[%s345 + $0x310] sm:$0xff]
          %v4505 = vld [vmem:[%s345 + $0x318] sm:$0xff]
          %v4506 = vld [vmem:[%s345 + $0x320] sm:$0xff]
          %v4507 = vld [vmem:[%s345 + $0x328] sm:$0xff]
          %v4508 = vld [vmem:[%s345 + $0x330] sm:$0xff]
          %v4509 = vld [vmem:[%s345 + $0x338] sm:$0xff]
          %v4510 = vld [vmem:[%s345 + $0x340] sm:$0xff]
          %v4511 = vld [vmem:[%s345 + $0x348] sm:$0xff]
          %v4512 = vld [vmem:[%s345 + $0x350] sm:$0xff]
          %v4513 = vld [vmem:[%s345 + $0x358] sm:$0xff]
          %v4514 = vld [vmem:[%s345 + $0x360] sm:$0xff]
          %v4515 = vld [vmem:[%s345 + $0x368] sm:$0xff]
          %v4516 = vld [vmem:[%s345 + $0x370] sm:$0xff]
          %v4517 = vld [vmem:[%s345 + $0x378] sm:$0xff]
          %v4518 = vld [vmem:[%s345 + $0x380] sm:$0xff]
          %v4519 = vld [vmem:[%s345 + $0x388] sm:$0xff]
          %v4520 = vld [vmem:[%s345 + $0x390] sm:$0xff]
          %v4521 = vld [vmem:[%s345 + $0x398] sm:$0xff]
          %v4522 = vld [vmem:[%s345 + $0x3a0] sm:$0xff]
          %v4523 = vld [vmem:[%s345 + $0x3a8] sm:$0xff]
          %v4524 = vld [vmem:[%s345 + $0x3b0] sm:$0xff]
          %v4525 = vld [vmem:[%s345 + $0x3b8] sm:$0xff]
          %v4526 = vld [vmem:[%s345 + $0x3c0] sm:$0xff]
          %v4527 = vld [vmem:[%s345 + $0x3c8] sm:$0xff]
          %v4528 = vld [vmem:[%s345 + $0x3d0] sm:$0xff]
          %v4529 = vld [vmem:[%s345 + $0x3d8] sm:$0xff]
          %v4530 = vld [vmem:[%s345 + $0x3e0] sm:$0xff]
          %v4531 = vld [vmem:[%s345 + $0x3e8] sm:$0xff]
          %v4532 = vld [vmem:[%s345 + $0x3f0] sm:$0xff]
          %v4533 = vld [vmem:[%s345 + $0x3f8] sm:$0xff]
          %s4534 = scalar_lea.vmem [#allocation9], 16
          %v4535 = vld [vmem:[%s4534] sm:$0xf]
          %v4537 = vperm.slane %v4535, 0
          %v4538 = vperm.slane %v4535, 1
          %v4539 = vperm.slane %v4535, 2
          %v4540 = vperm.slane %v4535, 3
          %v4673 = vunpack.c.l.b16 %v4406
          %v4674 = vunpack.c.h.b16 %v4406
          %v4675 = vunpack.c.l.b16 %v4407
          %v4676 = vunpack.c.h.b16 %v4407
          %v4677 = vunpack.c.l.b16 %v4408
          %v4678 = vunpack.c.h.b16 %v4408
          %v4679 = vunpack.c.l.b16 %v4409
          %v4680 = vunpack.c.h.b16 %v4409
          %v4681 = vunpack.c.l.b16 %v4410
          %v4682 = vunpack.c.h.b16 %v4410
          %v4683 = vunpack.c.l.b16 %v4411
          %v4684 = vunpack.c.h.b16 %v4411
          %v4685 = vunpack.c.l.b16 %v4412
          %v4686 = vunpack.c.h.b16 %v4412
          %v4687 = vunpack.c.l.b16 %v4413
          %v4688 = vunpack.c.h.b16 %v4413
          %v4689 = vunpack.c.l.b16 %v4414
          %v4690 = vunpack.c.h.b16 %v4414
          %v4691 = vunpack.c.l.b16 %v4415
          %v4692 = vunpack.c.h.b16 %v4415
          %v4693 = vunpack.c.l.b16 %v4416
          %v4694 = vunpack.c.h.b16 %v4416
          %v4695 = vunpack.c.l.b16 %v4417
          %v4696 = vunpack.c.h.b16 %v4417
          %v4697 = vunpack.c.l.b16 %v4418
          %v4698 = vunpack.c.h.b16 %v4418
          %v4699 = vunpack.c.l.b16 %v4419
          %v4700 = vunpack.c.h.b16 %v4419
          %v4701 = vunpack.c.l.b16 %v4420
          %v4702 = vunpack.c.h.b16 %v4420
          %v4703 = vunpack.c.l.b16 %v4421
          %v4704 = vunpack.c.h.b16 %v4421
          %v4705 = vunpack.c.l.b16 %v4422
          %v4706 = vunpack.c.h.b16 %v4422
          %v4707 = vunpack.c.l.b16 %v4423
          %v4708 = vunpack.c.h.b16 %v4423
          %v4709 = vunpack.c.l.b16 %v4424
          %v4710 = vunpack.c.h.b16 %v4424
          %v4711 = vunpack.c.l.b16 %v4425
          %v4712 = vunpack.c.h.b16 %v4425
          %v4713 = vunpack.c.l.b16 %v4426
          %v4714 = vunpack.c.h.b16 %v4426
          %v4715 = vunpack.c.l.b16 %v4427
          %v4716 = vunpack.c.h.b16 %v4427
          %v4717 = vunpack.c.l.b16 %v4428
          %v4718 = vunpack.c.h.b16 %v4428
          %v4719 = vunpack.c.l.b16 %v4429
          %v4720 = vunpack.c.h.b16 %v4429
          %v4721 = vunpack.c.l.b16 %v4430
          %v4722 = vunpack.c.h.b16 %v4430
          %v4723 = vunpack.c.l.b16 %v4431
          %v4724 = vunpack.c.h.b16 %v4431
          %v4725 = vunpack.c.l.b16 %v4432
          %v4726 = vunpack.c.h.b16 %v4432
          %v4727 = vunpack.c.l.b16 %v4433
          %v4728 = vunpack.c.h.b16 %v4433
          %v4729 = vunpack.c.l.b16 %v4434
          %v4730 = vunpack.c.h.b16 %v4434
          %v4731 = vunpack.c.l.b16 %v4435
          %v4732 = vunpack.c.h.b16 %v4435
          %v4733 = vunpack.c.l.b16 %v4436
          %v4734 = vunpack.c.h.b16 %v4436
          %v4735 = vunpack.c.l.b16 %v4437
          %v4736 = vunpack.c.h.b16 %v4437
          %v4737 = vunpack.c.l.b16 %v4438
          %v4738 = vunpack.c.h.b16 %v4438
          %v4739 = vunpack.c.l.b16 %v4439
          %v4740 = vunpack.c.h.b16 %v4439
          %v4741 = vunpack.c.l.b16 %v4440
          %v4742 = vunpack.c.h.b16 %v4440
          %v4743 = vunpack.c.l.b16 %v4441
          %v4744 = vunpack.c.h.b16 %v4441
          %v4745 = vunpack.c.l.b16 %v4442
          %v4746 = vunpack.c.h.b16 %v4442
          %v4747 = vunpack.c.l.b16 %v4443
          %v4748 = vunpack.c.h.b16 %v4443
          %v4749 = vunpack.c.l.b16 %v4444
          %v4750 = vunpack.c.h.b16 %v4444
          %v4751 = vunpack.c.l.b16 %v4445
          %v4752 = vunpack.c.h.b16 %v4445
          %v4753 = vunpack.c.l.b16 %v4446
          %v4754 = vunpack.c.h.b16 %v4446
          %v4755 = vunpack.c.l.b16 %v4447
          %v4756 = vunpack.c.h.b16 %v4447
          %v4757 = vunpack.c.l.b16 %v4448
          %v4758 = vunpack.c.h.b16 %v4448
          %v4759 = vunpack.c.l.b16 %v4449
          %v4760 = vunpack.c.h.b16 %v4449
          %v4761 = vunpack.c.l.b16 %v4450
          %v4762 = vunpack.c.h.b16 %v4450
          %v4763 = vunpack.c.l.b16 %v4451
          %v4764 = vunpack.c.h.b16 %v4451
          %v4765 = vunpack.c.l.b16 %v4452
          %v4766 = vunpack.c.h.b16 %v4452
          %v4767 = vunpack.c.l.b16 %v4453
          %v4768 = vunpack.c.h.b16 %v4453
          %v4769 = vunpack.c.l.b16 %v4454
          %v4770 = vunpack.c.h.b16 %v4454
          %v4771 = vunpack.c.l.b16 %v4455
          %v4772 = vunpack.c.h.b16 %v4455
          %v4773 = vunpack.c.l.b16 %v4456
          %v4774 = vunpack.c.h.b16 %v4456
          %v4775 = vunpack.c.l.b16 %v4457
          %v4776 = vunpack.c.h.b16 %v4457
          %v4777 = vunpack.c.l.b16 %v4458
          %v4778 = vunpack.c.h.b16 %v4458
          %v4779 = vunpack.c.l.b16 %v4459
          %v4780 = vunpack.c.h.b16 %v4459
          %v4781 = vunpack.c.l.b16 %v4460
          %v4782 = vunpack.c.h.b16 %v4460
          %v4783 = vunpack.c.l.b16 %v4461
          %v4784 = vunpack.c.h.b16 %v4461
          %v4785 = vunpack.c.l.b16 %v4462
          %v4786 = vunpack.c.h.b16 %v4462
          %v4787 = vunpack.c.l.b16 %v4463
          %v4788 = vunpack.c.h.b16 %v4463
          %v4789 = vunpack.c.l.b16 %v4464
          %v4790 = vunpack.c.h.b16 %v4464
          %v4791 = vunpack.c.l.b16 %v4465
          %v4792 = vunpack.c.h.b16 %v4465
          %v4793 = vunpack.c.l.b16 %v4466
          %v4794 = vunpack.c.h.b16 %v4466
          %v4795 = vunpack.c.l.b16 %v4467
          %v4796 = vunpack.c.h.b16 %v4467
          %v4797 = vunpack.c.l.b16 %v4468
          %v4798 = vunpack.c.h.b16 %v4468
          %v4799 = vunpack.c.l.b16 %v4469
          %v4800 = vunpack.c.h.b16 %v4469
          %v4801 = vunpack.c.l.b16 %v4470
          %v4802 = vunpack.c.h.b16 %v4470
          %v4803 = vunpack.c.l.b16 %v4471
          %v4804 = vunpack.c.h.b16 %v4471
          %v4805 = vunpack.c.l.b16 %v4472
          %v4806 = vunpack.c.h.b16 %v4472
          %v4807 = vunpack.c.l.b16 %v4473
          %v4808 = vunpack.c.h.b16 %v4473
          %v4809 = vunpack.c.l.b16 %v4474
          %v4810 = vunpack.c.h.b16 %v4474
          %v4811 = vunpack.c.l.b16 %v4475
          %v4812 = vunpack.c.h.b16 %v4475
          %v4813 = vunpack.c.l.b16 %v4476
          %v4814 = vunpack.c.h.b16 %v4476
          %v4815 = vunpack.c.l.b16 %v4477
          %v4816 = vunpack.c.h.b16 %v4477
          %v4817 = vunpack.c.l.b16 %v4478
          %v4818 = vunpack.c.h.b16 %v4478
          %v4819 = vunpack.c.l.b16 %v4479
          %v4820 = vunpack.c.h.b16 %v4479
          %v4821 = vunpack.c.l.b16 %v4480
          %v4822 = vunpack.c.h.b16 %v4480
          %v4823 = vunpack.c.l.b16 %v4481
          %v4824 = vunpack.c.h.b16 %v4481
          %v4825 = vunpack.c.l.b16 %v4482
          %v4826 = vunpack.c.h.b16 %v4482
          %v4827 = vunpack.c.l.b16 %v4483
          %v4828 = vunpack.c.h.b16 %v4483
          %v4829 = vunpack.c.l.b16 %v4484
          %v4830 = vunpack.c.h.b16 %v4484
          %v4831 = vunpack.c.l.b16 %v4485
          %v4832 = vunpack.c.h.b16 %v4485
          %v4833 = vunpack.c.l.b16 %v4486
          %v4834 = vunpack.c.h.b16 %v4486
          %v4835 = vunpack.c.l.b16 %v4487
          %v4836 = vunpack.c.h.b16 %v4487
          %v4837 = vunpack.c.l.b16 %v4488
          %v4838 = vunpack.c.h.b16 %v4488
          %v4839 = vunpack.c.l.b16 %v4489
          %v4840 = vunpack.c.h.b16 %v4489
          %v4841 = vunpack.c.l.b16 %v4490
          %v4842 = vunpack.c.h.b16 %v4490
          %v4843 = vunpack.c.l.b16 %v4491
          %v4844 = vunpack.c.h.b16 %v4491
          %v4845 = vunpack.c.l.b16 %v4492
          %v4846 = vunpack.c.h.b16 %v4492
          %v4847 = vunpack.c.l.b16 %v4493
          %v4848 = vunpack.c.h.b16 %v4493
          %v4849 = vunpack.c.l.b16 %v4494
          %v4850 = vunpack.c.h.b16 %v4494
          %v4851 = vunpack.c.l.b16 %v4495
          %v4852 = vunpack.c.h.b16 %v4495
          %v4853 = vunpack.c.l.b16 %v4496
          %v4854 = vunpack.c.h.b16 %v4496
          %v4855 = vunpack.c.l.b16 %v4497
          %v4856 = vunpack.c.h.b16 %v4497
          %v4857 = vunpack.c.l.b16 %v4498
          %v4858 = vunpack.c.h.b16 %v4498
          %v4859 = vunpack.c.l.b16 %v4499
          %v4860 = vunpack.c.h.b16 %v4499
          %v4861 = vunpack.c.l.b16 %v4500
          %v4862 = vunpack.c.h.b16 %v4500
          %v4863 = vunpack.c.l.b16 %v4501
          %v4864 = vunpack.c.h.b16 %v4501
          %v4865 = vunpack.c.l.b16 %v4502
          %v4866 = vunpack.c.h.b16 %v4502
          %v4867 = vunpack.c.l.b16 %v4503
          %v4868 = vunpack.c.h.b16 %v4503
          %v4869 = vunpack.c.l.b16 %v4504
          %v4870 = vunpack.c.h.b16 %v4504
          %v4871 = vunpack.c.l.b16 %v4505
          %v4872 = vunpack.c.h.b16 %v4505
          %v4873 = vunpack.c.l.b16 %v4506
          %v4874 = vunpack.c.h.b16 %v4506
          %v4875 = vunpack.c.l.b16 %v4507
          %v4876 = vunpack.c.h.b16 %v4507
          %v4877 = vunpack.c.l.b16 %v4508
          %v4878 = vunpack.c.h.b16 %v4508
          %v4879 = vunpack.c.l.b16 %v4509
          %v4880 = vunpack.c.h.b16 %v4509
          %v4881 = vunpack.c.l.b16 %v4510
          %v4882 = vunpack.c.h.b16 %v4510
          %v4883 = vunpack.c.l.b16 %v4511
          %v4884 = vunpack.c.h.b16 %v4511
          %v4885 = vunpack.c.l.b16 %v4512
          %v4886 = vunpack.c.h.b16 %v4512
          %v4887 = vunpack.c.l.b16 %v4513
          %v4888 = vunpack.c.h.b16 %v4513
          %v4889 = vunpack.c.l.b16 %v4514
          %v4890 = vunpack.c.h.b16 %v4514
          %v4891 = vunpack.c.l.b16 %v4515
          %v4892 = vunpack.c.h.b16 %v4515
          %v4893 = vunpack.c.l.b16 %v4516
          %v4894 = vunpack.c.h.b16 %v4516
          %v4895 = vunpack.c.l.b16 %v4517
          %v4896 = vunpack.c.h.b16 %v4517
          %v4897 = vunpack.c.l.b16 %v4518
          %v4898 = vunpack.c.h.b16 %v4518
          %v4899 = vunpack.c.l.b16 %v4519
          %v4900 = vunpack.c.h.b16 %v4519
          %v4901 = vunpack.c.l.b16 %v4520
          %v4902 = vunpack.c.h.b16 %v4520
          %v4903 = vunpack.c.l.b16 %v4521
          %v4904 = vunpack.c.h.b16 %v4521
          %v4905 = vunpack.c.l.b16 %v4522
          %v4906 = vunpack.c.h.b16 %v4522
          %v4907 = vunpack.c.l.b16 %v4523
          %v4908 = vunpack.c.h.b16 %v4523
          %v4909 = vunpack.c.l.b16 %v4524
          %v4910 = vunpack.c.h.b16 %v4524
          %v4911 = vunpack.c.l.b16 %v4525
          %v4912 = vunpack.c.h.b16 %v4525
          %v4913 = vunpack.c.l.b16 %v4526
          %v4914 = vunpack.c.h.b16 %v4526
          %v4915 = vunpack.c.l.b16 %v4527
          %v4916 = vunpack.c.h.b16 %v4527
          %v4917 = vunpack.c.l.b16 %v4528
          %v4918 = vunpack.c.h.b16 %v4528
          %v4919 = vunpack.c.l.b16 %v4529
          %v4920 = vunpack.c.h.b16 %v4529
          %v4921 = vunpack.c.l.b16 %v4530
          %v4922 = vunpack.c.h.b16 %v4530
          %v4923 = vunpack.c.l.b16 %v4531
          %v4924 = vunpack.c.h.b16 %v4531
          %v4925 = vunpack.c.l.b16 %v4532
          %v4926 = vunpack.c.h.b16 %v4532
          %v4927 = vunpack.c.l.b16 %v4533
          %v4928 = vunpack.c.h.b16 %v4533
          %v4929 = vpack.c.b16 %v4677, %v4673
          %v4930 = vpack.c.b16 %v4678, %v4674
          %v4931 = vpack.c.b16 %v4679, %v4675
          %v4932 = vpack.c.b16 %v4680, %v4676
          %v4933 = vpack.c.b16 %v4685, %v4681
          %v4934 = vpack.c.b16 %v4686, %v4682
          %v4935 = vpack.c.b16 %v4687, %v4683
          %v4936 = vpack.c.b16 %v4688, %v4684
          %v4937 = vpack.c.b16 %v4693, %v4689
          %v4938 = vpack.c.b16 %v4694, %v4690
          %v4939 = vpack.c.b16 %v4695, %v4691
          %v4940 = vpack.c.b16 %v4696, %v4692
          %v4941 = vpack.c.b16 %v4701, %v4697
          %v4942 = vpack.c.b16 %v4702, %v4698
          %v4943 = vpack.c.b16 %v4703, %v4699
          %v4944 = vpack.c.b16 %v4704, %v4700
          %v4945 = vpack.c.b16 %v4709, %v4705
          %v4946 = vpack.c.b16 %v4710, %v4706
          %v4947 = vpack.c.b16 %v4711, %v4707
          %v4948 = vpack.c.b16 %v4712, %v4708
          %v4949 = vpack.c.b16 %v4717, %v4713
          %v4950 = vpack.c.b16 %v4718, %v4714
          %v4951 = vpack.c.b16 %v4719, %v4715
          %v4952 = vpack.c.b16 %v4720, %v4716
          %v4953 = vpack.c.b16 %v4725, %v4721
          %v4954 = vpack.c.b16 %v4726, %v4722
          %v4955 = vpack.c.b16 %v4727, %v4723
          %v4956 = vpack.c.b16 %v4728, %v4724
          %v4957 = vpack.c.b16 %v4733, %v4729
          %v4958 = vpack.c.b16 %v4734, %v4730
          %v4959 = vpack.c.b16 %v4735, %v4731
          %v4960 = vpack.c.b16 %v4736, %v4732
          %v4961 = vpack.c.b16 %v4741, %v4737
          %v4962 = vpack.c.b16 %v4742, %v4738
          %v4963 = vpack.c.b16 %v4743, %v4739
          %v4964 = vpack.c.b16 %v4744, %v4740
          %v4965 = vpack.c.b16 %v4749, %v4745
          %v4966 = vpack.c.b16 %v4750, %v4746
          %v4967 = vpack.c.b16 %v4751, %v4747
          %v4968 = vpack.c.b16 %v4752, %v4748
          %v4969 = vpack.c.b16 %v4757, %v4753
          %v4970 = vpack.c.b16 %v4758, %v4754
          %v4971 = vpack.c.b16 %v4759, %v4755
          %v4972 = vpack.c.b16 %v4760, %v4756
          %v4973 = vpack.c.b16 %v4765, %v4761
          %v4974 = vpack.c.b16 %v4766, %v4762
          %v4975 = vpack.c.b16 %v4767, %v4763
          %v4976 = vpack.c.b16 %v4768, %v4764
          %v4977 = vpack.c.b16 %v4773, %v4769
          %v4978 = vpack.c.b16 %v4774, %v4770
          %v4979 = vpack.c.b16 %v4775, %v4771
          %v4980 = vpack.c.b16 %v4776, %v4772
          %v4981 = vpack.c.b16 %v4781, %v4777
          %v4982 = vpack.c.b16 %v4782, %v4778
          %v4983 = vpack.c.b16 %v4783, %v4779
          %v4984 = vpack.c.b16 %v4784, %v4780
          %v4985 = vpack.c.b16 %v4789, %v4785
          %v4986 = vpack.c.b16 %v4790, %v4786
          %v4987 = vpack.c.b16 %v4791, %v4787
          %v4988 = vpack.c.b16 %v4792, %v4788
          %v4989 = vpack.c.b16 %v4797, %v4793
          %v4990 = vpack.c.b16 %v4798, %v4794
          %v4991 = vpack.c.b16 %v4799, %v4795
          %v4992 = vpack.c.b16 %v4800, %v4796
          %v4993 = vpack.c.b16 %v4805, %v4801
          %v4994 = vpack.c.b16 %v4806, %v4802
          %v4995 = vpack.c.b16 %v4807, %v4803
          %v4996 = vpack.c.b16 %v4808, %v4804
          %v4997 = vpack.c.b16 %v4813, %v4809
          %v4998 = vpack.c.b16 %v4814, %v4810
          %v4999 = vpack.c.b16 %v4815, %v4811
          %v5000 = vpack.c.b16 %v4816, %v4812
          %v5001 = vpack.c.b16 %v4821, %v4817
          %v5002 = vpack.c.b16 %v4822, %v4818
          %v5003 = vpack.c.b16 %v4823, %v4819
          %v5004 = vpack.c.b16 %v4824, %v4820
          %v5005 = vpack.c.b16 %v4829, %v4825
          %v5006 = vpack.c.b16 %v4830, %v4826
          %v5007 = vpack.c.b16 %v4831, %v4827
          %v5008 = vpack.c.b16 %v4832, %v4828
          %v5009 = vpack.c.b16 %v4837, %v4833
          %v5010 = vpack.c.b16 %v4838, %v4834
          %v5011 = vpack.c.b16 %v4839, %v4835
          %v5012 = vpack.c.b16 %v4840, %v4836
          %v5013 = vpack.c.b16 %v4845, %v4841
          %v5014 = vpack.c.b16 %v4846, %v4842
          %v5015 = vpack.c.b16 %v4847, %v4843
          %v5016 = vpack.c.b16 %v4848, %v4844
          %v5017 = vpack.c.b16 %v4853, %v4849
          %v5018 = vpack.c.b16 %v4854, %v4850
          %v5019 = vpack.c.b16 %v4855, %v4851
          %v5020 = vpack.c.b16 %v4856, %v4852
          %v5021 = vpack.c.b16 %v4861, %v4857
          %v5022 = vpack.c.b16 %v4862, %v4858
          %v5023 = vpack.c.b16 %v4863, %v4859
          %v5024 = vpack.c.b16 %v4864, %v4860
          %v5025 = vpack.c.b16 %v4869, %v4865
          %v5026 = vpack.c.b16 %v4870, %v4866
          %v5027 = vpack.c.b16 %v4871, %v4867
          %v5028 = vpack.c.b16 %v4872, %v4868
          %v5029 = vpack.c.b16 %v4877, %v4873
          %v5030 = vpack.c.b16 %v4878, %v4874
          %v5031 = vpack.c.b16 %v4879, %v4875
          %v5032 = vpack.c.b16 %v4880, %v4876
          %v5033 = vpack.c.b16 %v4885, %v4881
          %v5034 = vpack.c.b16 %v4886, %v4882
          %v5035 = vpack.c.b16 %v4887, %v4883
          %v5036 = vpack.c.b16 %v4888, %v4884
          %v5037 = vpack.c.b16 %v4893, %v4889
          %v5038 = vpack.c.b16 %v4894, %v4890
          %v5039 = vpack.c.b16 %v4895, %v4891
          %v5040 = vpack.c.b16 %v4896, %v4892
          %v5041 = vpack.c.b16 %v4901, %v4897
          %v5042 = vpack.c.b16 %v4902, %v4898
          %v5043 = vpack.c.b16 %v4903, %v4899
          %v5044 = vpack.c.b16 %v4904, %v4900
          %v5045 = vpack.c.b16 %v4909, %v4905
          %v5046 = vpack.c.b16 %v4910, %v4906
          %v5047 = vpack.c.b16 %v4911, %v4907
          %v5048 = vpack.c.b16 %v4912, %v4908
          %v5049 = vpack.c.b16 %v4917, %v4913
          %v5050 = vpack.c.b16 %v4918, %v4914
          %v5051 = vpack.c.b16 %v4919, %v4915
          %v5052 = vpack.c.b16 %v4920, %v4916
          %v5053 = vpack.c.b16 %v4925, %v4921
          %v5054 = vpack.c.b16 %v4926, %v4922
          %v5055 = vpack.c.b16 %v4927, %v4923
          %v5056 = vpack.c.b16 %v4928, %v4924
          %5185 = vmatpush.bf16.msra.mxu0 %v4957
          %5186 = vmatpush.bf16.msra.mxu0 %v4953
          %5187 = vmatpush.bf16.msra.mxu0 %v4949
          %5188 = vmatpush.bf16.msra.mxu0 %v4945
          %5189 = vmatpush.bf16.msra.mxu0 %v4941
          %5190 = vmatpush.bf16.msra.mxu0 %v4937
          %5191 = vmatpush.bf16.msra.mxu0 %v4933
          %5192 = vmatpush.bf16.msra.mxu0 %v4929
          %5193 = vmatmul.bf16.gmra.mxu0 %v4402
          %v5194 = vpop.f32.mrf.mxu0
          %v5195 = vadd.f32 %v4537, %v5194
          %v5196 = vpop.f32.mrf.mxu0
          %5197 = vdwg.mxu0
          %5198 = vmatpush.bf16.msra.mxu0 %v4989
          %5199 = vmatpush.bf16.msra.mxu0 %v4985
          %5200 = vmatpush.bf16.msra.mxu0 %v4981
          %5201 = vmatpush.bf16.msra.mxu0 %v4977
          %5202 = vmatpush.bf16.msra.mxu0 %v4973
          %5203 = vmatpush.bf16.msra.mxu0 %v4969
          %5204 = vmatpush.bf16.msra.mxu0 %v4965
          %5205 = vmatpush.bf16.msra.mxu0 %v4961
          %5206 = vmatmul.bf16.gmra.mxu0 %v4403
          %v5207 = vpop.f32.mrf.mxu0
          %v5208 = vadd.f32 %v5195, %v5207
          %v5209 = vpop.f32.mrf.mxu0
          %5210 = vdwg.mxu0
          %5211 = vmatpush.bf16.msra.mxu0 %v5021
          %5212 = vmatpush.bf16.msra.mxu0 %v5017
          %5213 = vmatpush.bf16.msra.mxu0 %v5013
          %5214 = vmatpush.bf16.msra.mxu0 %v5009
          %5215 = vmatpush.bf16.msra.mxu0 %v5005
          %5216 = vmatpush.bf16.msra.mxu0 %v5001
          %5217 = vmatpush.bf16.msra.mxu0 %v4997
          %5218 = vmatpush.bf16.msra.mxu0 %v4993
          %5219 = vmatmul.bf16.gmra.mxu0 %v4404
          %v5220 = vpop.f32.mrf.mxu0
          %v5221 = vadd.f32 %v5208, %v5220
          %v5222 = vpop.f32.mrf.mxu0
          %5223 = vdwg.mxu0
          %5224 = vmatpush.bf16.msra.mxu0 %v5053
          %5225 = vmatpush.bf16.msra.mxu0 %v5049
          %5226 = vmatpush.bf16.msra.mxu0 %v5045
          %5227 = vmatpush.bf16.msra.mxu0 %v5041
          %5228 = vmatpush.bf16.msra.mxu0 %v5037
          %5229 = vmatpush.bf16.msra.mxu0 %v5033
          %5230 = vmatpush.bf16.msra.mxu0 %v5029
          %5231 = vmatpush.bf16.msra.mxu0 %v5025
          %5232 = vmatmul.bf16.gmra.mxu0 %v4405
          %v5233 = vpop.f32.mrf.mxu0
          %v5234 = vadd.f32 %v5221, %v5233
          %v5235 = vpop.f32.mrf.mxu0
          %5236 = vdwg.mxu0
          %5237 = vmatpush.bf16.msra.mxu0 %v4958
          %5238 = vmatpush.bf16.msra.mxu0 %v4954
          %5239 = vmatpush.bf16.msra.mxu0 %v4950
          %5240 = vmatpush.bf16.msra.mxu0 %v4946
          %5241 = vmatpush.bf16.msra.mxu0 %v4942
          %5242 = vmatpush.bf16.msra.mxu0 %v4938
          %5243 = vmatpush.bf16.msra.mxu0 %v4934
          %5244 = vmatpush.bf16.msra.mxu0 %v4930
          %5245 = vmatmul.bf16.gmra.mxu0 %v4402
          %v5246 = vpop.f32.mrf.mxu0
          %v5247 = vadd.f32 %v4538, %v5246
          %v5248 = vpop.f32.mrf.mxu0
          %5249 = vdwg.mxu0
          %5250 = vmatpush.bf16.msra.mxu0 %v4990
          %5251 = vmatpush.bf16.msra.mxu0 %v4986
          %5252 = vmatpush.bf16.msra.mxu0 %v4982
          %5253 = vmatpush.bf16.msra.mxu0 %v4978
          %5254 = vmatpush.bf16.msra.mxu0 %v4974
          %5255 = vmatpush.bf16.msra.mxu0 %v4970
          %5256 = vmatpush.bf16.msra.mxu0 %v4966
          %5257 = vmatpush.bf16.msra.mxu0 %v4962
          %5258 = vmatmul.bf16.gmra.mxu0 %v4403
          %v5259 = vpop.f32.mrf.mxu0
          %v5260 = vadd.f32 %v5247, %v5259
          %v5261 = vpop.f32.mrf.mxu0
          %5262 = vdwg.mxu0
          %5263 = vmatpush.bf16.msra.mxu0 %v5022
          %5264 = vmatpush.bf16.msra.mxu0 %v5018
          %5265 = vmatpush.bf16.msra.mxu0 %v5014
          %5266 = vmatpush.bf16.msra.mxu0 %v5010
          %5267 = vmatpush.bf16.msra.mxu0 %v5006
          %5268 = vmatpush.bf16.msra.mxu0 %v5002
          %5269 = vmatpush.bf16.msra.mxu0 %v4998
          %5270 = vmatpush.bf16.msra.mxu0 %v4994
          %5271 = vmatmul.bf16.gmra.mxu0 %v4404
          %v5272 = vpop.f32.mrf.mxu0
          %v5273 = vadd.f32 %v5260, %v5272
          %v5274 = vpop.f32.mrf.mxu0
          %5275 = vdwg.mxu0
          %5276 = vmatpush.bf16.msra.mxu0 %v5054
          %5277 = vmatpush.bf16.msra.mxu0 %v5050
          %5278 = vmatpush.bf16.msra.mxu0 %v5046
          %5279 = vmatpush.bf16.msra.mxu0 %v5042
          %5280 = vmatpush.bf16.msra.mxu0 %v5038
          %5281 = vmatpush.bf16.msra.mxu0 %v5034
          %5282 = vmatpush.bf16.msra.mxu0 %v5030
          %5283 = vmatpush.bf16.msra.mxu0 %v5026
          %5284 = vmatmul.bf16.gmra.mxu0 %v4405
          %v5285 = vpop.f32.mrf.mxu0
          %v5286 = vadd.f32 %v5273, %v5285
          %v5287 = vpop.f32.mrf.mxu0
          %5288 = vdwg.mxu0
          %5289 = vmatpush.bf16.msra.mxu0 %v4959
          %5290 = vmatpush.bf16.msra.mxu0 %v4955
          %5291 = vmatpush.bf16.msra.mxu0 %v4951
          %5292 = vmatpush.bf16.msra.mxu0 %v4947
          %5293 = vmatpush.bf16.msra.mxu0 %v4943
          %5294 = vmatpush.bf16.msra.mxu0 %v4939
          %5295 = vmatpush.bf16.msra.mxu0 %v4935
          %5296 = vmatpush.bf16.msra.mxu0 %v4931
          %5297 = vmatmul.bf16.gmra.mxu0 %v4402
          %v5298 = vpop.f32.mrf.mxu0
          %v5299 = vadd.f32 %v4539, %v5298
          %v5300 = vpop.f32.mrf.mxu0
          %5301 = vdwg.mxu0
          %5302 = vmatpush.bf16.msra.mxu0 %v4991
          %5303 = vmatpush.bf16.msra.mxu0 %v4987
          %5304 = vmatpush.bf16.msra.mxu0 %v4983
          %5305 = vmatpush.bf16.msra.mxu0 %v4979
          %5306 = vmatpush.bf16.msra.mxu0 %v4975
          %5307 = vmatpush.bf16.msra.mxu0 %v4971
          %5308 = vmatpush.bf16.msra.mxu0 %v4967
          %5309 = vmatpush.bf16.msra.mxu0 %v4963
          %5310 = vmatmul.bf16.gmra.mxu0 %v4403
          %v5311 = vpop.f32.mrf.mxu0
          %v5312 = vadd.f32 %v5299, %v5311
          %v5313 = vpop.f32.mrf.mxu0
          %5314 = vdwg.mxu0
          %5315 = vmatpush.bf16.msra.mxu0 %v5023
          %5316 = vmatpush.bf16.msra.mxu0 %v5019
          %5317 = vmatpush.bf16.msra.mxu0 %v5015
          %5318 = vmatpush.bf16.msra.mxu0 %v5011
          %5319 = vmatpush.bf16.msra.mxu0 %v5007
          %5320 = vmatpush.bf16.msra.mxu0 %v5003
          %5321 = vmatpush.bf16.msra.mxu0 %v4999
          %5322 = vmatpush.bf16.msra.mxu0 %v4995
          %5323 = vmatmul.bf16.gmra.mxu0 %v4404
          %v5324 = vpop.f32.mrf.mxu0
          %v5325 = vadd.f32 %v5312, %v5324
          %v5326 = vpop.f32.mrf.mxu0
          %5327 = vdwg.mxu0
          %5328 = vmatpush.bf16.msra.mxu0 %v5055
          %5329 = vmatpush.bf16.msra.mxu0 %v5051
          %5330 = vmatpush.bf16.msra.mxu0 %v5047
          %5331 = vmatpush.bf16.msra.mxu0 %v5043
          %5332 = vmatpush.bf16.msra.mxu0 %v5039
          %5333 = vmatpush.bf16.msra.mxu0 %v5035
          %5334 = vmatpush.bf16.msra.mxu0 %v5031
          %5335 = vmatpush.bf16.msra.mxu0 %v5027
          %5336 = vmatmul.bf16.gmra.mxu0 %v4405
          %v5337 = vpop.f32.mrf.mxu0
          %v5338 = vadd.f32 %v5325, %v5337
          %v5339 = vpop.f32.mrf.mxu0
          %5340 = vdwg.mxu0
          %5341 = vmatpush.bf16.msra.mxu0 %v4960
          %5342 = vmatpush.bf16.msra.mxu0 %v4956
          %5343 = vmatpush.bf16.msra.mxu0 %v4952
          %5344 = vmatpush.bf16.msra.mxu0 %v4948
          %5345 = vmatpush.bf16.msra.mxu0 %v4944
          %5346 = vmatpush.bf16.msra.mxu0 %v4940
          %5347 = vmatpush.bf16.msra.mxu0 %v4936
          %5348 = vmatpush.bf16.msra.mxu0 %v4932
          %5349 = vmatmul.bf16.gmra.mxu0 %v4402
          %v5350 = vpop.f32.mrf.mxu0
          %v5351 = vadd.f32 %v4540, %v5350
          %v5352 = vpop.f32.mrf.mxu0
          %5353 = vdwg.mxu0
          %5354 = vmatpush.bf16.msra.mxu0 %v4992
          %5355 = vmatpush.bf16.msra.mxu0 %v4988
          %5356 = vmatpush.bf16.msra.mxu0 %v4984
          %5357 = vmatpush.bf16.msra.mxu0 %v4980
          %5358 = vmatpush.bf16.msra.mxu0 %v4976
          %5359 = vmatpush.bf16.msra.mxu0 %v4972
          %5360 = vmatpush.bf16.msra.mxu0 %v4968
          %5361 = vmatpush.bf16.msra.mxu0 %v4964
          %5362 = vmatmul.bf16.gmra.mxu0 %v4403
          %v5363 = vpop.f32.mrf.mxu0
          %v5364 = vadd.f32 %v5351, %v5363
          %v5365 = vpop.f32.mrf.mxu0
          %5366 = vdwg.mxu0
          %5367 = vmatpush.bf16.msra.mxu0 %v5024
          %5368 = vmatpush.bf16.msra.mxu0 %v5020
          %5369 = vmatpush.bf16.msra.mxu0 %v5016
          %5370 = vmatpush.bf16.msra.mxu0 %v5012
          %5371 = vmatpush.bf16.msra.mxu0 %v5008
          %5372 = vmatpush.bf16.msra.mxu0 %v5004
          %5373 = vmatpush.bf16.msra.mxu0 %v5000
          %5374 = vmatpush.bf16.msra.mxu0 %v4996
          %5375 = vmatmul.bf16.gmra.mxu0 %v4404
          %v5376 = vpop.f32.mrf.mxu0
          %v5377 = vadd.f32 %v5364, %v5376
          %v5378 = vpop.f32.mrf.mxu0
          %5379 = vdwg.mxu0
          %5380 = vmatpush.bf16.msra.mxu0 %v5056
          %5381 = vmatpush.bf16.msra.mxu0 %v5052
          %5382 = vmatpush.bf16.msra.mxu0 %v5048
          %5383 = vmatpush.bf16.msra.mxu0 %v5044
          %5384 = vmatpush.bf16.msra.mxu0 %v5040
          %5385 = vmatpush.bf16.msra.mxu0 %v5036
          %5386 = vmatpush.bf16.msra.mxu0 %v5032
          %5387 = vmatpush.bf16.msra.mxu0 %v5028
          %5388 = vmatmul.bf16.gmra.mxu0 %v4405
          %v5389 = vpop.f32.mrf.mxu0
          %v5390 = vadd.f32 %v5377, %v5389
          %v5391 = vpop.f32.mrf.mxu0
          %5392 = vdwg.mxu0
          %v5393 = vpack.c.bf16 %v5234, %v5234
          %v5394 = vpack.c.bf16 %v5286, %v5286
          %v5395 = vpack.c.bf16 %v5338, %v5338
          %v5396 = vpack.c.bf16 %v5390, %v5390
          %s5397 = scalar_lea.vmem %s345, 1024 [#allocation8]
          %v5398 = vld [vmem:[%s5397] sm:$0xff]
          %v5399 = vld [vmem:[%s5397 + $0x8] sm:$0xff]
          %v5400 = vld [vmem:[%s5397 + $0x10] sm:$0xff]
          %v5401 = vld [vmem:[%s5397 + $0x18] sm:$0xff]
          %v5402 = vld [vmem:[%s5397 + $0x20] sm:$0xff]
          %v5403 = vld [vmem:[%s5397 + $0x28] sm:$0xff]
          %v5404 = vld [vmem:[%s5397 + $0x30] sm:$0xff]
          %v5405 = vld [vmem:[%s5397 + $0x38] sm:$0xff]
          %v5406 = vld [vmem:[%s5397 + $0x40] sm:$0xff]
          %v5407 = vld [vmem:[%s5397 + $0x48] sm:$0xff]
          %v5408 = vld [vmem:[%s5397 + $0x50] sm:$0xff]
          %v5409 = vld [vmem:[%s5397 + $0x58] sm:$0xff]
          %v5410 = vld [vmem:[%s5397 + $0x60] sm:$0xff]
          %v5411 = vld [vmem:[%s5397 + $0x68] sm:$0xff]
          %v5412 = vld [vmem:[%s5397 + $0x70] sm:$0xff]
          %v5413 = vld [vmem:[%s5397 + $0x78] sm:$0xff]
          %v5414 = vld [vmem:[%s5397 + $0x80] sm:$0xff]
          %v5415 = vld [vmem:[%s5397 + $0x88] sm:$0xff]
          %v5416 = vld [vmem:[%s5397 + $0x90] sm:$0xff]
          %v5417 = vld [vmem:[%s5397 + $0x98] sm:$0xff]
          %v5418 = vld [vmem:[%s5397 + $0xa0] sm:$0xff]
          %v5419 = vld [vmem:[%s5397 + $0xa8] sm:$0xff]
          %v5420 = vld [vmem:[%s5397 + $0xb0] sm:$0xff]
          %v5421 = vld [vmem:[%s5397 + $0xb8] sm:$0xff]
          %v5422 = vld [vmem:[%s5397 + $0xc0] sm:$0xff]
          %v5423 = vld [vmem:[%s5397 + $0xc8] sm:$0xff]
          %v5424 = vld [vmem:[%s5397 + $0xd0] sm:$0xff]
          %v5425 = vld [vmem:[%s5397 + $0xd8] sm:$0xff]
          %v5426 = vld [vmem:[%s5397 + $0xe0] sm:$0xff]
          %v5427 = vld [vmem:[%s5397 + $0xe8] sm:$0xff]
          %v5428 = vld [vmem:[%s5397 + $0xf0] sm:$0xff]
          %v5429 = vld [vmem:[%s5397 + $0xf8] sm:$0xff]
          %v5430 = vld [vmem:[%s5397 + $0x100] sm:$0xff]
          %v5431 = vld [vmem:[%s5397 + $0x108] sm:$0xff]
          %v5432 = vld [vmem:[%s5397 + $0x110] sm:$0xff]
          %v5433 = vld [vmem:[%s5397 + $0x118] sm:$0xff]
          %v5434 = vld [vmem:[%s5397 + $0x120] sm:$0xff]
          %v5435 = vld [vmem:[%s5397 + $0x128] sm:$0xff]
          %v5436 = vld [vmem:[%s5397 + $0x130] sm:$0xff]
          %v5437 = vld [vmem:[%s5397 + $0x138] sm:$0xff]
          %v5438 = vld [vmem:[%s5397 + $0x140] sm:$0xff]
          %v5439 = vld [vmem:[%s5397 + $0x148] sm:$0xff]
          %v5440 = vld [vmem:[%s5397 + $0x150] sm:$0xff]
          %v5441 = vld [vmem:[%s5397 + $0x158] sm:$0xff]
          %v5442 = vld [vmem:[%s5397 + $0x160] sm:$0xff]
          %v5443 = vld [vmem:[%s5397 + $0x168] sm:$0xff]
          %v5444 = vld [vmem:[%s5397 + $0x170] sm:$0xff]
          %v5445 = vld [vmem:[%s5397 + $0x178] sm:$0xff]
          %v5446 = vld [vmem:[%s5397 + $0x180] sm:$0xff]
          %v5447 = vld [vmem:[%s5397 + $0x188] sm:$0xff]
          %v5448 = vld [vmem:[%s5397 + $0x190] sm:$0xff]
          %v5449 = vld [vmem:[%s5397 + $0x198] sm:$0xff]
          %v5450 = vld [vmem:[%s5397 + $0x1a0] sm:$0xff]
          %v5451 = vld [vmem:[%s5397 + $0x1a8] sm:$0xff]
          %v5452 = vld [vmem:[%s5397 + $0x1b0] sm:$0xff]
          %v5453 = vld [vmem:[%s5397 + $0x1b8] sm:$0xff]
          %v5454 = vld [vmem:[%s5397 + $0x1c0] sm:$0xff]
          %v5455 = vld [vmem:[%s5397 + $0x1c8] sm:$0xff]
          %v5456 = vld [vmem:[%s5397 + $0x1d0] sm:$0xff]
          %v5457 = vld [vmem:[%s5397 + $0x1d8] sm:$0xff]
          %v5458 = vld [vmem:[%s5397 + $0x1e0] sm:$0xff]
          %v5459 = vld [vmem:[%s5397 + $0x1e8] sm:$0xff]
          %v5460 = vld [vmem:[%s5397 + $0x1f0] sm:$0xff]
          %v5461 = vld [vmem:[%s5397 + $0x1f8] sm:$0xff]
          %v5462 = vld [vmem:[%s5397 + $0x200] sm:$0xff]
          %v5463 = vld [vmem:[%s5397 + $0x208] sm:$0xff]
          %v5464 = vld [vmem:[%s5397 + $0x210] sm:$0xff]
          %v5465 = vld [vmem:[%s5397 + $0x218] sm:$0xff]
          %v5466 = vld [vmem:[%s5397 + $0x220] sm:$0xff]
          %v5467 = vld [vmem:[%s5397 + $0x228] sm:$0xff]
          %v5468 = vld [vmem:[%s5397 + $0x230] sm:$0xff]
          %v5469 = vld [vmem:[%s5397 + $0x238] sm:$0xff]
          %v5470 = vld [vmem:[%s5397 + $0x240] sm:$0xff]
          %v5471 = vld [vmem:[%s5397 + $0x248] sm:$0xff]
          %v5472 = vld [vmem:[%s5397 + $0x250] sm:$0xff]
          %v5473 = vld [vmem:[%s5397 + $0x258] sm:$0xff]
          %v5474 = vld [vmem:[%s5397 + $0x260] sm:$0xff]
          %v5475 = vld [vmem:[%s5397 + $0x268] sm:$0xff]
          %v5476 = vld [vmem:[%s5397 + $0x270] sm:$0xff]
          %v5477 = vld [vmem:[%s5397 + $0x278] sm:$0xff]
          %v5478 = vld [vmem:[%s5397 + $0x280] sm:$0xff]
          %v5479 = vld [vmem:[%s5397 + $0x288] sm:$0xff]
          %v5480 = vld [vmem:[%s5397 + $0x290] sm:$0xff]
          %v5481 = vld [vmem:[%s5397 + $0x298] sm:$0xff]
          %v5482 = vld [vmem:[%s5397 + $0x2a0] sm:$0xff]
          %v5483 = vld [vmem:[%s5397 + $0x2a8] sm:$0xff]
          %v5484 = vld [vmem:[%s5397 + $0x2b0] sm:$0xff]
          %v5485 = vld [vmem:[%s5397 + $0x2b8] sm:$0xff]
          %v5486 = vld [vmem:[%s5397 + $0x2c0] sm:$0xff]
          %v5487 = vld [vmem:[%s5397 + $0x2c8] sm:$0xff]
          %v5488 = vld [vmem:[%s5397 + $0x2d0] sm:$0xff]
          %v5489 = vld [vmem:[%s5397 + $0x2d8] sm:$0xff]
          %v5490 = vld [vmem:[%s5397 + $0x2e0] sm:$0xff]
          %v5491 = vld [vmem:[%s5397 + $0x2e8] sm:$0xff]
          %v5492 = vld [vmem:[%s5397 + $0x2f0] sm:$0xff]
          %v5493 = vld [vmem:[%s5397 + $0x2f8] sm:$0xff]
          %v5494 = vld [vmem:[%s5397 + $0x300] sm:$0xff]
          %v5495 = vld [vmem:[%s5397 + $0x308] sm:$0xff]
          %v5496 = vld [vmem:[%s5397 + $0x310] sm:$0xff]
          %v5497 = vld [vmem:[%s5397 + $0x318] sm:$0xff]
          %v5498 = vld [vmem:[%s5397 + $0x320] sm:$0xff]
          %v5499 = vld [vmem:[%s5397 + $0x328] sm:$0xff]
          %v5500 = vld [vmem:[%s5397 + $0x330] sm:$0xff]
          %v5501 = vld [vmem:[%s5397 + $0x338] sm:$0xff]
          %v5502 = vld [vmem:[%s5397 + $0x340] sm:$0xff]
          %v5503 = vld [vmem:[%s5397 + $0x348] sm:$0xff]
          %v5504 = vld [vmem:[%s5397 + $0x350] sm:$0xff]
          %v5505 = vld [vmem:[%s5397 + $0x358] sm:$0xff]
          %v5506 = vld [vmem:[%s5397 + $0x360] sm:$0xff]
          %v5507 = vld [vmem:[%s5397 + $0x368] sm:$0xff]
          %v5508 = vld [vmem:[%s5397 + $0x370] sm:$0xff]
          %v5509 = vld [vmem:[%s5397 + $0x378] sm:$0xff]
          %v5510 = vld [vmem:[%s5397 + $0x380] sm:$0xff]
          %v5511 = vld [vmem:[%s5397 + $0x388] sm:$0xff]
          %v5512 = vld [vmem:[%s5397 + $0x390] sm:$0xff]
          %v5513 = vld [vmem:[%s5397 + $0x398] sm:$0xff]
          %v5514 = vld [vmem:[%s5397 + $0x3a0] sm:$0xff]
          %v5515 = vld [vmem:[%s5397 + $0x3a8] sm:$0xff]
          %v5516 = vld [vmem:[%s5397 + $0x3b0] sm:$0xff]
          %v5517 = vld [vmem:[%s5397 + $0x3b8] sm:$0xff]
          %v5518 = vld [vmem:[%s5397 + $0x3c0] sm:$0xff]
          %v5519 = vld [vmem:[%s5397 + $0x3c8] sm:$0xff]
          %v5520 = vld [vmem:[%s5397 + $0x3d0] sm:$0xff]
          %v5521 = vld [vmem:[%s5397 + $0x3d8] sm:$0xff]
          %v5522 = vld [vmem:[%s5397 + $0x3e0] sm:$0xff]
          %v5523 = vld [vmem:[%s5397 + $0x3e8] sm:$0xff]
          %v5524 = vld [vmem:[%s5397 + $0x3f0] sm:$0xff]
          %v5525 = vld [vmem:[%s5397 + $0x3f8] sm:$0xff]
          %s5526 = scalar_lea.vmem [#allocation9], 20
          %v5527 = vld [vmem:[%s5526] sm:$0xf]
          %v5529 = vperm.slane %v5527, 0
          %v5530 = vperm.slane %v5527, 1
          %v5531 = vperm.slane %v5527, 2
          %v5532 = vperm.slane %v5527, 3
          %v5665 = vunpack.c.l.b16 %v5398
          %v5666 = vunpack.c.h.b16 %v5398
          %v5667 = vunpack.c.l.b16 %v5399
          %v5668 = vunpack.c.h.b16 %v5399
          %v5669 = vunpack.c.l.b16 %v5400
          %v5670 = vunpack.c.h.b16 %v5400
          %v5671 = vunpack.c.l.b16 %v5401
          %v5672 = vunpack.c.h.b16 %v5401
          %v5673 = vunpack.c.l.b16 %v5402
          %v5674 = vunpack.c.h.b16 %v5402
          %v5675 = vunpack.c.l.b16 %v5403
          %v5676 = vunpack.c.h.b16 %v5403
          %v5677 = vunpack.c.l.b16 %v5404
          %v5678 = vunpack.c.h.b16 %v5404
          %v5679 = vunpack.c.l.b16 %v5405
          %v5680 = vunpack.c.h.b16 %v5405
          %v5681 = vunpack.c.l.b16 %v5406
          %v5682 = vunpack.c.h.b16 %v5406
          %v5683 = vunpack.c.l.b16 %v5407
          %v5684 = vunpack.c.h.b16 %v5407
          %v5685 = vunpack.c.l.b16 %v5408
          %v5686 = vunpack.c.h.b16 %v5408
          %v5687 = vunpack.c.l.b16 %v5409
          %v5688 = vunpack.c.h.b16 %v5409
          %v5689 = vunpack.c.l.b16 %v5410
          %v5690 = vunpack.c.h.b16 %v5410
          %v5691 = vunpack.c.l.b16 %v5411
          %v5692 = vunpack.c.h.b16 %v5411
          %v5693 = vunpack.c.l.b16 %v5412
          %v5694 = vunpack.c.h.b16 %v5412
          %v5695 = vunpack.c.l.b16 %v5413
          %v5696 = vunpack.c.h.b16 %v5413
          %v5697 = vunpack.c.l.b16 %v5414
          %v5698 = vunpack.c.h.b16 %v5414
          %v5699 = vunpack.c.l.b16 %v5415
          %v5700 = vunpack.c.h.b16 %v5415
          %v5701 = vunpack.c.l.b16 %v5416
          %v5702 = vunpack.c.h.b16 %v5416
          %v5703 = vunpack.c.l.b16 %v5417
          %v5704 = vunpack.c.h.b16 %v5417
          %v5705 = vunpack.c.l.b16 %v5418
          %v5706 = vunpack.c.h.b16 %v5418
          %v5707 = vunpack.c.l.b16 %v5419
          %v5708 = vunpack.c.h.b16 %v5419
          %v5709 = vunpack.c.l.b16 %v5420
          %v5710 = vunpack.c.h.b16 %v5420
          %v5711 = vunpack.c.l.b16 %v5421
          %v5712 = vunpack.c.h.b16 %v5421
          %v5713 = vunpack.c.l.b16 %v5422
          %v5714 = vunpack.c.h.b16 %v5422
          %v5715 = vunpack.c.l.b16 %v5423
          %v5716 = vunpack.c.h.b16 %v5423
          %v5717 = vunpack.c.l.b16 %v5424
          %v5718 = vunpack.c.h.b16 %v5424
          %v5719 = vunpack.c.l.b16 %v5425
          %v5720 = vunpack.c.h.b16 %v5425
          %v5721 = vunpack.c.l.b16 %v5426
          %v5722 = vunpack.c.h.b16 %v5426
          %v5723 = vunpack.c.l.b16 %v5427
          %v5724 = vunpack.c.h.b16 %v5427
          %v5725 = vunpack.c.l.b16 %v5428
          %v5726 = vunpack.c.h.b16 %v5428
          %v5727 = vunpack.c.l.b16 %v5429
          %v5728 = vunpack.c.h.b16 %v5429
          %v5729 = vunpack.c.l.b16 %v5430
          %v5730 = vunpack.c.h.b16 %v5430
          %v5731 = vunpack.c.l.b16 %v5431
          %v5732 = vunpack.c.h.b16 %v5431
          %v5733 = vunpack.c.l.b16 %v5432
          %v5734 = vunpack.c.h.b16 %v5432
          %v5735 = vunpack.c.l.b16 %v5433
          %v5736 = vunpack.c.h.b16 %v5433
          %v5737 = vunpack.c.l.b16 %v5434
          %v5738 = vunpack.c.h.b16 %v5434
          %v5739 = vunpack.c.l.b16 %v5435
          %v5740 = vunpack.c.h.b16 %v5435
          %v5741 = vunpack.c.l.b16 %v5436
          %v5742 = vunpack.c.h.b16 %v5436
          %v5743 = vunpack.c.l.b16 %v5437
          %v5744 = vunpack.c.h.b16 %v5437
          %v5745 = vunpack.c.l.b16 %v5438
          %v5746 = vunpack.c.h.b16 %v5438
          %v5747 = vunpack.c.l.b16 %v5439
          %v5748 = vunpack.c.h.b16 %v5439
          %v5749 = vunpack.c.l.b16 %v5440
          %v5750 = vunpack.c.h.b16 %v5440
          %v5751 = vunpack.c.l.b16 %v5441
          %v5752 = vunpack.c.h.b16 %v5441
          %v5753 = vunpack.c.l.b16 %v5442
          %v5754 = vunpack.c.h.b16 %v5442
          %v5755 = vunpack.c.l.b16 %v5443
          %v5756 = vunpack.c.h.b16 %v5443
          %v5757 = vunpack.c.l.b16 %v5444
          %v5758 = vunpack.c.h.b16 %v5444
          %v5759 = vunpack.c.l.b16 %v5445
          %v5760 = vunpack.c.h.b16 %v5445
          %v5761 = vunpack.c.l.b16 %v5446
          %v5762 = vunpack.c.h.b16 %v5446
          %v5763 = vunpack.c.l.b16 %v5447
          %v5764 = vunpack.c.h.b16 %v5447
          %v5765 = vunpack.c.l.b16 %v5448
          %v5766 = vunpack.c.h.b16 %v5448
          %v5767 = vunpack.c.l.b16 %v5449
          %v5768 = vunpack.c.h.b16 %v5449
          %v5769 = vunpack.c.l.b16 %v5450
          %v5770 = vunpack.c.h.b16 %v5450
          %v5771 = vunpack.c.l.b16 %v5451
          %v5772 = vunpack.c.h.b16 %v5451
          %v5773 = vunpack.c.l.b16 %v5452
          %v5774 = vunpack.c.h.b16 %v5452
          %v5775 = vunpack.c.l.b16 %v5453
          %v5776 = vunpack.c.h.b16 %v5453
          %v5777 = vunpack.c.l.b16 %v5454
          %v5778 = vunpack.c.h.b16 %v5454
          %v5779 = vunpack.c.l.b16 %v5455
          %v5780 = vunpack.c.h.b16 %v5455
          %v5781 = vunpack.c.l.b16 %v5456
          %v5782 = vunpack.c.h.b16 %v5456
          %v5783 = vunpack.c.l.b16 %v5457
          %v5784 = vunpack.c.h.b16 %v5457
          %v5785 = vunpack.c.l.b16 %v5458
          %v5786 = vunpack.c.h.b16 %v5458
          %v5787 = vunpack.c.l.b16 %v5459
          %v5788 = vunpack.c.h.b16 %v5459
          %v5789 = vunpack.c.l.b16 %v5460
          %v5790 = vunpack.c.h.b16 %v5460
          %v5791 = vunpack.c.l.b16 %v5461
          %v5792 = vunpack.c.h.b16 %v5461
          %v5793 = vunpack.c.l.b16 %v5462
          %v5794 = vunpack.c.h.b16 %v5462
          %v5795 = vunpack.c.l.b16 %v5463
          %v5796 = vunpack.c.h.b16 %v5463
          %v5797 = vunpack.c.l.b16 %v5464
          %v5798 = vunpack.c.h.b16 %v5464
          %v5799 = vunpack.c.l.b16 %v5465
          %v5800 = vunpack.c.h.b16 %v5465
          %v5801 = vunpack.c.l.b16 %v5466
          %v5802 = vunpack.c.h.b16 %v5466
          %v5803 = vunpack.c.l.b16 %v5467
          %v5804 = vunpack.c.h.b16 %v5467
          %v5805 = vunpack.c.l.b16 %v5468
          %v5806 = vunpack.c.h.b16 %v5468
          %v5807 = vunpack.c.l.b16 %v5469
          %v5808 = vunpack.c.h.b16 %v5469
          %v5809 = vunpack.c.l.b16 %v5470
          %v5810 = vunpack.c.h.b16 %v5470
          %v5811 = vunpack.c.l.b16 %v5471
          %v5812 = vunpack.c.h.b16 %v5471
          %v5813 = vunpack.c.l.b16 %v5472
          %v5814 = vunpack.c.h.b16 %v5472
          %v5815 = vunpack.c.l.b16 %v5473
          %v5816 = vunpack.c.h.b16 %v5473
          %v5817 = vunpack.c.l.b16 %v5474
          %v5818 = vunpack.c.h.b16 %v5474
          %v5819 = vunpack.c.l.b16 %v5475
          %v5820 = vunpack.c.h.b16 %v5475
          %v5821 = vunpack.c.l.b16 %v5476
          %v5822 = vunpack.c.h.b16 %v5476
          %v5823 = vunpack.c.l.b16 %v5477
          %v5824 = vunpack.c.h.b16 %v5477
          %v5825 = vunpack.c.l.b16 %v5478
          %v5826 = vunpack.c.h.b16 %v5478
          %v5827 = vunpack.c.l.b16 %v5479
          %v5828 = vunpack.c.h.b16 %v5479
          %v5829 = vunpack.c.l.b16 %v5480
          %v5830 = vunpack.c.h.b16 %v5480
          %v5831 = vunpack.c.l.b16 %v5481
          %v5832 = vunpack.c.h.b16 %v5481
          %v5833 = vunpack.c.l.b16 %v5482
          %v5834 = vunpack.c.h.b16 %v5482
          %v5835 = vunpack.c.l.b16 %v5483
          %v5836 = vunpack.c.h.b16 %v5483
          %v5837 = vunpack.c.l.b16 %v5484
          %v5838 = vunpack.c.h.b16 %v5484
          %v5839 = vunpack.c.l.b16 %v5485
          %v5840 = vunpack.c.h.b16 %v5485
          %v5841 = vunpack.c.l.b16 %v5486
          %v5842 = vunpack.c.h.b16 %v5486
          %v5843 = vunpack.c.l.b16 %v5487
          %v5844 = vunpack.c.h.b16 %v5487
          %v5845 = vunpack.c.l.b16 %v5488
          %v5846 = vunpack.c.h.b16 %v5488
          %v5847 = vunpack.c.l.b16 %v5489
          %v5848 = vunpack.c.h.b16 %v5489
          %v5849 = vunpack.c.l.b16 %v5490
          %v5850 = vunpack.c.h.b16 %v5490
          %v5851 = vunpack.c.l.b16 %v5491
          %v5852 = vunpack.c.h.b16 %v5491
          %v5853 = vunpack.c.l.b16 %v5492
          %v5854 = vunpack.c.h.b16 %v5492
          %v5855 = vunpack.c.l.b16 %v5493
          %v5856 = vunpack.c.h.b16 %v5493
          %v5857 = vunpack.c.l.b16 %v5494
          %v5858 = vunpack.c.h.b16 %v5494
          %v5859 = vunpack.c.l.b16 %v5495
          %v5860 = vunpack.c.h.b16 %v5495
          %v5861 = vunpack.c.l.b16 %v5496
          %v5862 = vunpack.c.h.b16 %v5496
          %v5863 = vunpack.c.l.b16 %v5497
          %v5864 = vunpack.c.h.b16 %v5497
          %v5865 = vunpack.c.l.b16 %v5498
          %v5866 = vunpack.c.h.b16 %v5498
          %v5867 = vunpack.c.l.b16 %v5499
          %v5868 = vunpack.c.h.b16 %v5499
          %v5869 = vunpack.c.l.b16 %v5500
          %v5870 = vunpack.c.h.b16 %v5500
          %v5871 = vunpack.c.l.b16 %v5501
          %v5872 = vunpack.c.h.b16 %v5501
          %v5873 = vunpack.c.l.b16 %v5502
          %v5874 = vunpack.c.h.b16 %v5502
          %v5875 = vunpack.c.l.b16 %v5503
          %v5876 = vunpack.c.h.b16 %v5503
          %v5877 = vunpack.c.l.b16 %v5504
          %v5878 = vunpack.c.h.b16 %v5504
          %v5879 = vunpack.c.l.b16 %v5505
          %v5880 = vunpack.c.h.b16 %v5505
          %v5881 = vunpack.c.l.b16 %v5506
          %v5882 = vunpack.c.h.b16 %v5506
          %v5883 = vunpack.c.l.b16 %v5507
          %v5884 = vunpack.c.h.b16 %v5507
          %v5885 = vunpack.c.l.b16 %v5508
          %v5886 = vunpack.c.h.b16 %v5508
          %v5887 = vunpack.c.l.b16 %v5509
          %v5888 = vunpack.c.h.b16 %v5509
          %v5889 = vunpack.c.l.b16 %v5510
          %v5890 = vunpack.c.h.b16 %v5510
          %v5891 = vunpack.c.l.b16 %v5511
          %v5892 = vunpack.c.h.b16 %v5511
          %v5893 = vunpack.c.l.b16 %v5512
          %v5894 = vunpack.c.h.b16 %v5512
          %v5895 = vunpack.c.l.b16 %v5513
          %v5896 = vunpack.c.h.b16 %v5513
          %v5897 = vunpack.c.l.b16 %v5514
          %v5898 = vunpack.c.h.b16 %v5514
          %v5899 = vunpack.c.l.b16 %v5515
          %v5900 = vunpack.c.h.b16 %v5515
          %v5901 = vunpack.c.l.b16 %v5516
          %v5902 = vunpack.c.h.b16 %v5516
          %v5903 = vunpack.c.l.b16 %v5517
          %v5904 = vunpack.c.h.b16 %v5517
          %v5905 = vunpack.c.l.b16 %v5518
          %v5906 = vunpack.c.h.b16 %v5518
          %v5907 = vunpack.c.l.b16 %v5519
          %v5908 = vunpack.c.h.b16 %v5519
          %v5909 = vunpack.c.l.b16 %v5520
          %v5910 = vunpack.c.h.b16 %v5520
          %v5911 = vunpack.c.l.b16 %v5521
          %v5912 = vunpack.c.h.b16 %v5521
          %v5913 = vunpack.c.l.b16 %v5522
          %v5914 = vunpack.c.h.b16 %v5522
          %v5915 = vunpack.c.l.b16 %v5523
          %v5916 = vunpack.c.h.b16 %v5523
          %v5917 = vunpack.c.l.b16 %v5524
          %v5918 = vunpack.c.h.b16 %v5524
          %v5919 = vunpack.c.l.b16 %v5525
          %v5920 = vunpack.c.h.b16 %v5525
          %v5921 = vpack.c.b16 %v5669, %v5665
          %v5922 = vpack.c.b16 %v5670, %v5666
          %v5923 = vpack.c.b16 %v5671, %v5667
          %v5924 = vpack.c.b16 %v5672, %v5668
          %v5925 = vpack.c.b16 %v5677, %v5673
          %v5926 = vpack.c.b16 %v5678, %v5674
          %v5927 = vpack.c.b16 %v5679, %v5675
          %v5928 = vpack.c.b16 %v5680, %v5676
          %v5929 = vpack.c.b16 %v5685, %v5681
          %v5930 = vpack.c.b16 %v5686, %v5682
          %v5931 = vpack.c.b16 %v5687, %v5683
          %v5932 = vpack.c.b16 %v5688, %v5684
          %v5933 = vpack.c.b16 %v5693, %v5689
          %v5934 = vpack.c.b16 %v5694, %v5690
          %v5935 = vpack.c.b16 %v5695, %v5691
          %v5936 = vpack.c.b16 %v5696, %v5692
          %v5937 = vpack.c.b16 %v5701, %v5697
          %v5938 = vpack.c.b16 %v5702, %v5698
          %v5939 = vpack.c.b16 %v5703, %v5699
          %v5940 = vpack.c.b16 %v5704, %v5700
          %v5941 = vpack.c.b16 %v5709, %v5705
          %v5942 = vpack.c.b16 %v5710, %v5706
          %v5943 = vpack.c.b16 %v5711, %v5707
          %v5944 = vpack.c.b16 %v5712, %v5708
          %v5945 = vpack.c.b16 %v5717, %v5713
          %v5946 = vpack.c.b16 %v5718, %v5714
          %v5947 = vpack.c.b16 %v5719, %v5715
          %v5948 = vpack.c.b16 %v5720, %v5716
          %v5949 = vpack.c.b16 %v5725, %v5721
          %v5950 = vpack.c.b16 %v5726, %v5722
          %v5951 = vpack.c.b16 %v5727, %v5723
          %v5952 = vpack.c.b16 %v5728, %v5724
          %v5953 = vpack.c.b16 %v5733, %v5729
          %v5954 = vpack.c.b16 %v5734, %v5730
          %v5955 = vpack.c.b16 %v5735, %v5731
          %v5956 = vpack.c.b16 %v5736, %v5732
          %v5957 = vpack.c.b16 %v5741, %v5737
          %v5958 = vpack.c.b16 %v5742, %v5738
          %v5959 = vpack.c.b16 %v5743, %v5739
          %v5960 = vpack.c.b16 %v5744, %v5740
          %v5961 = vpack.c.b16 %v5749, %v5745
          %v5962 = vpack.c.b16 %v5750, %v5746
          %v5963 = vpack.c.b16 %v5751, %v5747
          %v5964 = vpack.c.b16 %v5752, %v5748
          %v5965 = vpack.c.b16 %v5757, %v5753
          %v5966 = vpack.c.b16 %v5758, %v5754
          %v5967 = vpack.c.b16 %v5759, %v5755
          %v5968 = vpack.c.b16 %v5760, %v5756
          %v5969 = vpack.c.b16 %v5765, %v5761
          %v5970 = vpack.c.b16 %v5766, %v5762
          %v5971 = vpack.c.b16 %v5767, %v5763
          %v5972 = vpack.c.b16 %v5768, %v5764
          %v5973 = vpack.c.b16 %v5773, %v5769
          %v5974 = vpack.c.b16 %v5774, %v5770
          %v5975 = vpack.c.b16 %v5775, %v5771
          %v5976 = vpack.c.b16 %v5776, %v5772
          %v5977 = vpack.c.b16 %v5781, %v5777
          %v5978 = vpack.c.b16 %v5782, %v5778
          %v5979 = vpack.c.b16 %v5783, %v5779
          %v5980 = vpack.c.b16 %v5784, %v5780
          %v5981 = vpack.c.b16 %v5789, %v5785
          %v5982 = vpack.c.b16 %v5790, %v5786
          %v5983 = vpack.c.b16 %v5791, %v5787
          %v5984 = vpack.c.b16 %v5792, %v5788
          %v5985 = vpack.c.b16 %v5797, %v5793
          %v5986 = vpack.c.b16 %v5798, %v5794
          %v5987 = vpack.c.b16 %v5799, %v5795
          %v5988 = vpack.c.b16 %v5800, %v5796
          %v5989 = vpack.c.b16 %v5805, %v5801
          %v5990 = vpack.c.b16 %v5806, %v5802
          %v5991 = vpack.c.b16 %v5807, %v5803
          %v5992 = vpack.c.b16 %v5808, %v5804
          %v5993 = vpack.c.b16 %v5813, %v5809
          %v5994 = vpack.c.b16 %v5814, %v5810
          %v5995 = vpack.c.b16 %v5815, %v5811
          %v5996 = vpack.c.b16 %v5816, %v5812
          %v5997 = vpack.c.b16 %v5821, %v5817
          %v5998 = vpack.c.b16 %v5822, %v5818
          %v5999 = vpack.c.b16 %v5823, %v5819
          %v6000 = vpack.c.b16 %v5824, %v5820
          %v6001 = vpack.c.b16 %v5829, %v5825
          %v6002 = vpack.c.b16 %v5830, %v5826
          %v6003 = vpack.c.b16 %v5831, %v5827
          %v6004 = vpack.c.b16 %v5832, %v5828
          %v6005 = vpack.c.b16 %v5837, %v5833
          %v6006 = vpack.c.b16 %v5838, %v5834
          %v6007 = vpack.c.b16 %v5839, %v5835
          %v6008 = vpack.c.b16 %v5840, %v5836
          %v6009 = vpack.c.b16 %v5845, %v5841
          %v6010 = vpack.c.b16 %v5846, %v5842
          %v6011 = vpack.c.b16 %v5847, %v5843
          %v6012 = vpack.c.b16 %v5848, %v5844
          %v6013 = vpack.c.b16 %v5853, %v5849
          %v6014 = vpack.c.b16 %v5854, %v5850
          %v6015 = vpack.c.b16 %v5855, %v5851
          %v6016 = vpack.c.b16 %v5856, %v5852
          %v6017 = vpack.c.b16 %v5861, %v5857
          %v6018 = vpack.c.b16 %v5862, %v5858
          %v6019 = vpack.c.b16 %v5863, %v5859
          %v6020 = vpack.c.b16 %v5864, %v5860
          %v6021 = vpack.c.b16 %v5869, %v5865
          %v6022 = vpack.c.b16 %v5870, %v5866
          %v6023 = vpack.c.b16 %v5871, %v5867
          %v6024 = vpack.c.b16 %v5872, %v5868
          %v6025 = vpack.c.b16 %v5877, %v5873
          %v6026 = vpack.c.b16 %v5878, %v5874
          %v6027 = vpack.c.b16 %v5879, %v5875
          %v6028 = vpack.c.b16 %v5880, %v5876
          %v6029 = vpack.c.b16 %v5885, %v5881
          %v6030 = vpack.c.b16 %v5886, %v5882
          %v6031 = vpack.c.b16 %v5887, %v5883
          %v6032 = vpack.c.b16 %v5888, %v5884
          %v6033 = vpack.c.b16 %v5893, %v5889
          %v6034 = vpack.c.b16 %v5894, %v5890
          %v6035 = vpack.c.b16 %v5895, %v5891
          %v6036 = vpack.c.b16 %v5896, %v5892
          %v6037 = vpack.c.b16 %v5901, %v5897
          %v6038 = vpack.c.b16 %v5902, %v5898
          %v6039 = vpack.c.b16 %v5903, %v5899
          %v6040 = vpack.c.b16 %v5904, %v5900
          %v6041 = vpack.c.b16 %v5909, %v5905
          %v6042 = vpack.c.b16 %v5910, %v5906
          %v6043 = vpack.c.b16 %v5911, %v5907
          %v6044 = vpack.c.b16 %v5912, %v5908
          %v6045 = vpack.c.b16 %v5917, %v5913
          %v6046 = vpack.c.b16 %v5918, %v5914
          %v6047 = vpack.c.b16 %v5919, %v5915
          %v6048 = vpack.c.b16 %v5920, %v5916
          %6177 = vmatpush.bf16.msra.mxu0 %v5949
          %6178 = vmatpush.bf16.msra.mxu0 %v5945
          %6179 = vmatpush.bf16.msra.mxu0 %v5941
          %6180 = vmatpush.bf16.msra.mxu0 %v5937
          %6181 = vmatpush.bf16.msra.mxu0 %v5933
          %6182 = vmatpush.bf16.msra.mxu0 %v5929
          %6183 = vmatpush.bf16.msra.mxu0 %v5925
          %6184 = vmatpush.bf16.msra.mxu0 %v5921
          %6185 = vmatmul.bf16.gmra.mxu0 %v5393
          %v6186 = vpop.f32.mrf.mxu0
          %v6187 = vadd.f32 %v5529, %v6186
          %v6188 = vpop.f32.mrf.mxu0
          %6189 = vdwg.mxu0
          %6190 = vmatpush.bf16.msra.mxu0 %v5981
          %6191 = vmatpush.bf16.msra.mxu0 %v5977
          %6192 = vmatpush.bf16.msra.mxu0 %v5973
          %6193 = vmatpush.bf16.msra.mxu0 %v5969
          %6194 = vmatpush.bf16.msra.mxu0 %v5965
          %6195 = vmatpush.bf16.msra.mxu0 %v5961
          %6196 = vmatpush.bf16.msra.mxu0 %v5957
          %6197 = vmatpush.bf16.msra.mxu0 %v5953
          %6198 = vmatmul.bf16.gmra.mxu0 %v5394
          %v6199 = vpop.f32.mrf.mxu0
          %v6200 = vadd.f32 %v6187, %v6199
          %v6201 = vpop.f32.mrf.mxu0
          %6202 = vdwg.mxu0
          %6203 = vmatpush.bf16.msra.mxu0 %v6013
          %6204 = vmatpush.bf16.msra.mxu0 %v6009
          %6205 = vmatpush.bf16.msra.mxu0 %v6005
          %6206 = vmatpush.bf16.msra.mxu0 %v6001
          %6207 = vmatpush.bf16.msra.mxu0 %v5997
          %6208 = vmatpush.bf16.msra.mxu0 %v5993
          %6209 = vmatpush.bf16.msra.mxu0 %v5989
          %6210 = vmatpush.bf16.msra.mxu0 %v5985
          %6211 = vmatmul.bf16.gmra.mxu0 %v5395
          %v6212 = vpop.f32.mrf.mxu0
          %v6213 = vadd.f32 %v6200, %v6212
          %v6214 = vpop.f32.mrf.mxu0
          %6215 = vdwg.mxu0
          %6216 = vmatpush.bf16.msra.mxu0 %v6045
          %6217 = vmatpush.bf16.msra.mxu0 %v6041
          %6218 = vmatpush.bf16.msra.mxu0 %v6037
          %6219 = vmatpush.bf16.msra.mxu0 %v6033
          %6220 = vmatpush.bf16.msra.mxu0 %v6029
          %6221 = vmatpush.bf16.msra.mxu0 %v6025
          %6222 = vmatpush.bf16.msra.mxu0 %v6021
          %6223 = vmatpush.bf16.msra.mxu0 %v6017
          %6224 = vmatmul.bf16.gmra.mxu0 %v5396
          %v6225 = vpop.f32.mrf.mxu0
          %v6226 = vadd.f32 %v6213, %v6225
          %v6227 = vpop.f32.mrf.mxu0
          %6228 = vdwg.mxu0
          %6229 = vmatpush.bf16.msra.mxu0 %v5950
          %6230 = vmatpush.bf16.msra.mxu0 %v5946
          %6231 = vmatpush.bf16.msra.mxu0 %v5942
          %6232 = vmatpush.bf16.msra.mxu0 %v5938
          %6233 = vmatpush.bf16.msra.mxu0 %v5934
          %6234 = vmatpush.bf16.msra.mxu0 %v5930
          %6235 = vmatpush.bf16.msra.mxu0 %v5926
          %6236 = vmatpush.bf16.msra.mxu0 %v5922
          %6237 = vmatmul.bf16.gmra.mxu0 %v5393
          %v6238 = vpop.f32.mrf.mxu0
          %v6239 = vadd.f32 %v5530, %v6238
          %v6240 = vpop.f32.mrf.mxu0
          %6241 = vdwg.mxu0
          %6242 = vmatpush.bf16.msra.mxu0 %v5982
          %6243 = vmatpush.bf16.msra.mxu0 %v5978
          %6244 = vmatpush.bf16.msra.mxu0 %v5974
          %6245 = vmatpush.bf16.msra.mxu0 %v5970
          %6246 = vmatpush.bf16.msra.mxu0 %v5966
          %6247 = vmatpush.bf16.msra.mxu0 %v5962
          %6248 = vmatpush.bf16.msra.mxu0 %v5958
          %6249 = vmatpush.bf16.msra.mxu0 %v5954
          %6250 = vmatmul.bf16.gmra.mxu0 %v5394
          %v6251 = vpop.f32.mrf.mxu0
          %v6252 = vadd.f32 %v6239, %v6251
          %v6253 = vpop.f32.mrf.mxu0
          %6254 = vdwg.mxu0
          %6255 = vmatpush.bf16.msra.mxu0 %v6014
          %6256 = vmatpush.bf16.msra.mxu0 %v6010
          %6257 = vmatpush.bf16.msra.mxu0 %v6006
          %6258 = vmatpush.bf16.msra.mxu0 %v6002
          %6259 = vmatpush.bf16.msra.mxu0 %v5998
          %6260 = vmatpush.bf16.msra.mxu0 %v5994
          %6261 = vmatpush.bf16.msra.mxu0 %v5990
          %6262 = vmatpush.bf16.msra.mxu0 %v5986
          %6263 = vmatmul.bf16.gmra.mxu0 %v5395
          %v6264 = vpop.f32.mrf.mxu0
          %v6265 = vadd.f32 %v6252, %v6264
          %v6266 = vpop.f32.mrf.mxu0
          %6267 = vdwg.mxu0
          %6268 = vmatpush.bf16.msra.mxu0 %v6046
          %6269 = vmatpush.bf16.msra.mxu0 %v6042
          %6270 = vmatpush.bf16.msra.mxu0 %v6038
          %6271 = vmatpush.bf16.msra.mxu0 %v6034
          %6272 = vmatpush.bf16.msra.mxu0 %v6030
          %6273 = vmatpush.bf16.msra.mxu0 %v6026
          %6274 = vmatpush.bf16.msra.mxu0 %v6022
          %6275 = vmatpush.bf16.msra.mxu0 %v6018
          %6276 = vmatmul.bf16.gmra.mxu0 %v5396
          %v6277 = vpop.f32.mrf.mxu0
          %v6278 = vadd.f32 %v6265, %v6277
          %v6279 = vpop.f32.mrf.mxu0
          %6280 = vdwg.mxu0
          %6281 = vmatpush.bf16.msra.mxu0 %v5951
          %6282 = vmatpush.bf16.msra.mxu0 %v5947
          %6283 = vmatpush.bf16.msra.mxu0 %v5943
          %6284 = vmatpush.bf16.msra.mxu0 %v5939
          %6285 = vmatpush.bf16.msra.mxu0 %v5935
          %6286 = vmatpush.bf16.msra.mxu0 %v5931
          %6287 = vmatpush.bf16.msra.mxu0 %v5927
          %6288 = vmatpush.bf16.msra.mxu0 %v5923
          %6289 = vmatmul.bf16.gmra.mxu0 %v5393
          %v6290 = vpop.f32.mrf.mxu0
          %v6291 = vadd.f32 %v5531, %v6290
          %v6292 = vpop.f32.mrf.mxu0
          %6293 = vdwg.mxu0
          %6294 = vmatpush.bf16.msra.mxu0 %v5983
          %6295 = vmatpush.bf16.msra.mxu0 %v5979
          %6296 = vmatpush.bf16.msra.mxu0 %v5975
          %6297 = vmatpush.bf16.msra.mxu0 %v5971
          %6298 = vmatpush.bf16.msra.mxu0 %v5967
          %6299 = vmatpush.bf16.msra.mxu0 %v5963
          %6300 = vmatpush.bf16.msra.mxu0 %v5959
          %6301 = vmatpush.bf16.msra.mxu0 %v5955
          %6302 = vmatmul.bf16.gmra.mxu0 %v5394
          %v6303 = vpop.f32.mrf.mxu0
          %v6304 = vadd.f32 %v6291, %v6303
          %v6305 = vpop.f32.mrf.mxu0
          %6306 = vdwg.mxu0
          %6307 = vmatpush.bf16.msra.mxu0 %v6015
          %6308 = vmatpush.bf16.msra.mxu0 %v6011
          %6309 = vmatpush.bf16.msra.mxu0 %v6007
          %6310 = vmatpush.bf16.msra.mxu0 %v6003
          %6311 = vmatpush.bf16.msra.mxu0 %v5999
          %6312 = vmatpush.bf16.msra.mxu0 %v5995
          %6313 = vmatpush.bf16.msra.mxu0 %v5991
          %6314 = vmatpush.bf16.msra.mxu0 %v5987
          %6315 = vmatmul.bf16.gmra.mxu0 %v5395
          %v6316 = vpop.f32.mrf.mxu0
          %v6317 = vadd.f32 %v6304, %v6316
          %v6318 = vpop.f32.mrf.mxu0
          %6319 = vdwg.mxu0
          %6320 = vmatpush.bf16.msra.mxu0 %v6047
          %6321 = vmatpush.bf16.msra.mxu0 %v6043
          %6322 = vmatpush.bf16.msra.mxu0 %v6039
          %6323 = vmatpush.bf16.msra.mxu0 %v6035
          %6324 = vmatpush.bf16.msra.mxu0 %v6031
          %6325 = vmatpush.bf16.msra.mxu0 %v6027
          %6326 = vmatpush.bf16.msra.mxu0 %v6023
          %6327 = vmatpush.bf16.msra.mxu0 %v6019
          %6328 = vmatmul.bf16.gmra.mxu0 %v5396
          %v6329 = vpop.f32.mrf.mxu0
          %v6330 = vadd.f32 %v6317, %v6329
          %v6331 = vpop.f32.mrf.mxu0
          %6332 = vdwg.mxu0
          %6333 = vmatpush.bf16.msra.mxu0 %v5952
          %6334 = vmatpush.bf16.msra.mxu0 %v5948
          %6335 = vmatpush.bf16.msra.mxu0 %v5944
          %6336 = vmatpush.bf16.msra.mxu0 %v5940
          %6337 = vmatpush.bf16.msra.mxu0 %v5936
          %6338 = vmatpush.bf16.msra.mxu0 %v5932
          %6339 = vmatpush.bf16.msra.mxu0 %v5928
          %6340 = vmatpush.bf16.msra.mxu0 %v5924
          %6341 = vmatmul.bf16.gmra.mxu0 %v5393
          %v6342 = vpop.f32.mrf.mxu0
          %v6343 = vadd.f32 %v5532, %v6342
          %v6344 = vpop.f32.mrf.mxu0
          %6345 = vdwg.mxu0
          %6346 = vmatpush.bf16.msra.mxu0 %v5984
          %6347 = vmatpush.bf16.msra.mxu0 %v5980
          %6348 = vmatpush.bf16.msra.mxu0 %v5976
          %6349 = vmatpush.bf16.msra.mxu0 %v5972
          %6350 = vmatpush.bf16.msra.mxu0 %v5968
          %6351 = vmatpush.bf16.msra.mxu0 %v5964
          %6352 = vmatpush.bf16.msra.mxu0 %v5960
          %6353 = vmatpush.bf16.msra.mxu0 %v5956
          %6354 = vmatmul.bf16.gmra.mxu0 %v5394
          %v6355 = vpop.f32.mrf.mxu0
          %v6356 = vadd.f32 %v6343, %v6355
          %v6357 = vpop.f32.mrf.mxu0
          %6358 = vdwg.mxu0
          %6359 = vmatpush.bf16.msra.mxu0 %v6016
          %6360 = vmatpush.bf16.msra.mxu0 %v6012
          %6361 = vmatpush.bf16.msra.mxu0 %v6008
          %6362 = vmatpush.bf16.msra.mxu0 %v6004
          %6363 = vmatpush.bf16.msra.mxu0 %v6000
          %6364 = vmatpush.bf16.msra.mxu0 %v5996
          %6365 = vmatpush.bf16.msra.mxu0 %v5992
          %6366 = vmatpush.bf16.msra.mxu0 %v5988
          %6367 = vmatmul.bf16.gmra.mxu0 %v5395
          %v6368 = vpop.f32.mrf.mxu0
          %v6369 = vadd.f32 %v6356, %v6368
          %v6370 = vpop.f32.mrf.mxu0
          %6371 = vdwg.mxu0
          %6372 = vmatpush.bf16.msra.mxu0 %v6048
          %6373 = vmatpush.bf16.msra.mxu0 %v6044
          %6374 = vmatpush.bf16.msra.mxu0 %v6040
          %6375 = vmatpush.bf16.msra.mxu0 %v6036
          %6376 = vmatpush.bf16.msra.mxu0 %v6032
          %6377 = vmatpush.bf16.msra.mxu0 %v6028
          %6378 = vmatpush.bf16.msra.mxu0 %v6024
          %6379 = vmatpush.bf16.msra.mxu0 %v6020
          %6380 = vmatmul.bf16.gmra.mxu0 %v5396
          %v6381 = vpop.f32.mrf.mxu0
          %v6382 = vadd.f32 %v6369, %v6381
          %v6383 = vpop.f32.mrf.mxu0
          %6384 = vdwg.mxu0
          %s6385 = scalar_lea.vmem %s345, 2048 [#allocation8]
          %v6386 = vld [vmem:[%s6385] sm:$0xff]
          %v6387 = vld [vmem:[%s6385 + $0x8] sm:$0xff]
          %v6388 = vld [vmem:[%s6385 + $0x10] sm:$0xff]
          %v6389 = vld [vmem:[%s6385 + $0x18] sm:$0xff]
          %v6390 = vld [vmem:[%s6385 + $0x20] sm:$0xff]
          %v6391 = vld [vmem:[%s6385 + $0x28] sm:$0xff]
          %v6392 = vld [vmem:[%s6385 + $0x30] sm:$0xff]
          %v6393 = vld [vmem:[%s6385 + $0x38] sm:$0xff]
          %v6394 = vld [vmem:[%s6385 + $0x40] sm:$0xff]
          %v6395 = vld [vmem:[%s6385 + $0x48] sm:$0xff]
          %v6396 = vld [vmem:[%s6385 + $0x50] sm:$0xff]
          %v6397 = vld [vmem:[%s6385 + $0x58] sm:$0xff]
          %v6398 = vld [vmem:[%s6385 + $0x60] sm:$0xff]
          %v6399 = vld [vmem:[%s6385 + $0x68] sm:$0xff]
          %v6400 = vld [vmem:[%s6385 + $0x70] sm:$0xff]
          %v6401 = vld [vmem:[%s6385 + $0x78] sm:$0xff]
          %v6402 = vld [vmem:[%s6385 + $0x80] sm:$0xff]
          %v6403 = vld [vmem:[%s6385 + $0x88] sm:$0xff]
          %v6404 = vld [vmem:[%s6385 + $0x90] sm:$0xff]
          %v6405 = vld [vmem:[%s6385 + $0x98] sm:$0xff]
          %v6406 = vld [vmem:[%s6385 + $0xa0] sm:$0xff]
          %v6407 = vld [vmem:[%s6385 + $0xa8] sm:$0xff]
          %v6408 = vld [vmem:[%s6385 + $0xb0] sm:$0xff]
          %v6409 = vld [vmem:[%s6385 + $0xb8] sm:$0xff]
          %v6410 = vld [vmem:[%s6385 + $0xc0] sm:$0xff]
          %v6411 = vld [vmem:[%s6385 + $0xc8] sm:$0xff]
          %v6412 = vld [vmem:[%s6385 + $0xd0] sm:$0xff]
          %v6413 = vld [vmem:[%s6385 + $0xd8] sm:$0xff]
          %v6414 = vld [vmem:[%s6385 + $0xe0] sm:$0xff]
          %v6415 = vld [vmem:[%s6385 + $0xe8] sm:$0xff]
          %v6416 = vld [vmem:[%s6385 + $0xf0] sm:$0xff]
          %v6417 = vld [vmem:[%s6385 + $0xf8] sm:$0xff]
          %v6418 = vld [vmem:[%s6385 + $0x100] sm:$0xff]
          %v6419 = vld [vmem:[%s6385 + $0x108] sm:$0xff]
          %v6420 = vld [vmem:[%s6385 + $0x110] sm:$0xff]
          %v6421 = vld [vmem:[%s6385 + $0x118] sm:$0xff]
          %v6422 = vld [vmem:[%s6385 + $0x120] sm:$0xff]
          %v6423 = vld [vmem:[%s6385 + $0x128] sm:$0xff]
          %v6424 = vld [vmem:[%s6385 + $0x130] sm:$0xff]
          %v6425 = vld [vmem:[%s6385 + $0x138] sm:$0xff]
          %v6426 = vld [vmem:[%s6385 + $0x140] sm:$0xff]
          %v6427 = vld [vmem:[%s6385 + $0x148] sm:$0xff]
          %v6428 = vld [vmem:[%s6385 + $0x150] sm:$0xff]
          %v6429 = vld [vmem:[%s6385 + $0x158] sm:$0xff]
          %v6430 = vld [vmem:[%s6385 + $0x160] sm:$0xff]
          %v6431 = vld [vmem:[%s6385 + $0x168] sm:$0xff]
          %v6432 = vld [vmem:[%s6385 + $0x170] sm:$0xff]
          %v6433 = vld [vmem:[%s6385 + $0x178] sm:$0xff]
          %v6434 = vld [vmem:[%s6385 + $0x180] sm:$0xff]
          %v6435 = vld [vmem:[%s6385 + $0x188] sm:$0xff]
          %v6436 = vld [vmem:[%s6385 + $0x190] sm:$0xff]
          %v6437 = vld [vmem:[%s6385 + $0x198] sm:$0xff]
          %v6438 = vld [vmem:[%s6385 + $0x1a0] sm:$0xff]
          %v6439 = vld [vmem:[%s6385 + $0x1a8] sm:$0xff]
          %v6440 = vld [vmem:[%s6385 + $0x1b0] sm:$0xff]
          %v6441 = vld [vmem:[%s6385 + $0x1b8] sm:$0xff]
          %v6442 = vld [vmem:[%s6385 + $0x1c0] sm:$0xff]
          %v6443 = vld [vmem:[%s6385 + $0x1c8] sm:$0xff]
          %v6444 = vld [vmem:[%s6385 + $0x1d0] sm:$0xff]
          %v6445 = vld [vmem:[%s6385 + $0x1d8] sm:$0xff]
          %v6446 = vld [vmem:[%s6385 + $0x1e0] sm:$0xff]
          %v6447 = vld [vmem:[%s6385 + $0x1e8] sm:$0xff]
          %v6448 = vld [vmem:[%s6385 + $0x1f0] sm:$0xff]
          %v6449 = vld [vmem:[%s6385 + $0x1f8] sm:$0xff]
          %v6450 = vld [vmem:[%s6385 + $0x200] sm:$0xff]
          %v6451 = vld [vmem:[%s6385 + $0x208] sm:$0xff]
          %v6452 = vld [vmem:[%s6385 + $0x210] sm:$0xff]
          %v6453 = vld [vmem:[%s6385 + $0x218] sm:$0xff]
          %v6454 = vld [vmem:[%s6385 + $0x220] sm:$0xff]
          %v6455 = vld [vmem:[%s6385 + $0x228] sm:$0xff]
          %v6456 = vld [vmem:[%s6385 + $0x230] sm:$0xff]
          %v6457 = vld [vmem:[%s6385 + $0x238] sm:$0xff]
          %v6458 = vld [vmem:[%s6385 + $0x240] sm:$0xff]
          %v6459 = vld [vmem:[%s6385 + $0x248] sm:$0xff]
          %v6460 = vld [vmem:[%s6385 + $0x250] sm:$0xff]
          %v6461 = vld [vmem:[%s6385 + $0x258] sm:$0xff]
          %v6462 = vld [vmem:[%s6385 + $0x260] sm:$0xff]
          %v6463 = vld [vmem:[%s6385 + $0x268] sm:$0xff]
          %v6464 = vld [vmem:[%s6385 + $0x270] sm:$0xff]
          %v6465 = vld [vmem:[%s6385 + $0x278] sm:$0xff]
          %v6466 = vld [vmem:[%s6385 + $0x280] sm:$0xff]
          %v6467 = vld [vmem:[%s6385 + $0x288] sm:$0xff]
          %v6468 = vld [vmem:[%s6385 + $0x290] sm:$0xff]
          %v6469 = vld [vmem:[%s6385 + $0x298] sm:$0xff]
          %v6470 = vld [vmem:[%s6385 + $0x2a0] sm:$0xff]
          %v6471 = vld [vmem:[%s6385 + $0x2a8] sm:$0xff]
          %v6472 = vld [vmem:[%s6385 + $0x2b0] sm:$0xff]
          %v6473 = vld [vmem:[%s6385 + $0x2b8] sm:$0xff]
          %v6474 = vld [vmem:[%s6385 + $0x2c0] sm:$0xff]
          %v6475 = vld [vmem:[%s6385 + $0x2c8] sm:$0xff]
          %v6476 = vld [vmem:[%s6385 + $0x2d0] sm:$0xff]
          %v6477 = vld [vmem:[%s6385 + $0x2d8] sm:$0xff]
          %v6478 = vld [vmem:[%s6385 + $0x2e0] sm:$0xff]
          %v6479 = vld [vmem:[%s6385 + $0x2e8] sm:$0xff]
          %v6480 = vld [vmem:[%s6385 + $0x2f0] sm:$0xff]
          %v6481 = vld [vmem:[%s6385 + $0x2f8] sm:$0xff]
          %v6482 = vld [vmem:[%s6385 + $0x300] sm:$0xff]
          %v6483 = vld [vmem:[%s6385 + $0x308] sm:$0xff]
          %v6484 = vld [vmem:[%s6385 + $0x310] sm:$0xff]
          %v6485 = vld [vmem:[%s6385 + $0x318] sm:$0xff]
          %v6486 = vld [vmem:[%s6385 + $0x320] sm:$0xff]
          %v6487 = vld [vmem:[%s6385 + $0x328] sm:$0xff]
          %v6488 = vld [vmem:[%s6385 + $0x330] sm:$0xff]
          %v6489 = vld [vmem:[%s6385 + $0x338] sm:$0xff]
          %v6490 = vld [vmem:[%s6385 + $0x340] sm:$0xff]
          %v6491 = vld [vmem:[%s6385 + $0x348] sm:$0xff]
          %v6492 = vld [vmem:[%s6385 + $0x350] sm:$0xff]
          %v6493 = vld [vmem:[%s6385 + $0x358] sm:$0xff]
          %v6494 = vld [vmem:[%s6385 + $0x360] sm:$0xff]
          %v6495 = vld [vmem:[%s6385 + $0x368] sm:$0xff]
          %v6496 = vld [vmem:[%s6385 + $0x370] sm:$0xff]
          %v6497 = vld [vmem:[%s6385 + $0x378] sm:$0xff]
          %v6498 = vld [vmem:[%s6385 + $0x380] sm:$0xff]
          %v6499 = vld [vmem:[%s6385 + $0x388] sm:$0xff]
          %v6500 = vld [vmem:[%s6385 + $0x390] sm:$0xff]
          %v6501 = vld [vmem:[%s6385 + $0x398] sm:$0xff]
          %v6502 = vld [vmem:[%s6385 + $0x3a0] sm:$0xff]
          %v6503 = vld [vmem:[%s6385 + $0x3a8] sm:$0xff]
          %v6504 = vld [vmem:[%s6385 + $0x3b0] sm:$0xff]
          %v6505 = vld [vmem:[%s6385 + $0x3b8] sm:$0xff]
          %v6506 = vld [vmem:[%s6385 + $0x3c0] sm:$0xff]
          %v6507 = vld [vmem:[%s6385 + $0x3c8] sm:$0xff]
          %v6508 = vld [vmem:[%s6385 + $0x3d0] sm:$0xff]
          %v6509 = vld [vmem:[%s6385 + $0x3d8] sm:$0xff]
          %v6510 = vld [vmem:[%s6385 + $0x3e0] sm:$0xff]
          %v6511 = vld [vmem:[%s6385 + $0x3e8] sm:$0xff]
          %v6512 = vld [vmem:[%s6385 + $0x3f0] sm:$0xff]
          %v6513 = vld [vmem:[%s6385 + $0x3f8] sm:$0xff]
          %s6514 = scalar_lea.vmem [#allocation9], 24
          %v6515 = vld [vmem:[%s6514] sm:$0xf]
          %v6517 = vperm.slane %v6515, 0
          %v6518 = vperm.slane %v6515, 1
          %v6519 = vperm.slane %v6515, 2
          %v6520 = vperm.slane %v6515, 3
          %v6653 = vunpack.c.l.b16 %v6386
          %v6654 = vunpack.c.h.b16 %v6386
          %v6655 = vunpack.c.l.b16 %v6387
          %v6656 = vunpack.c.h.b16 %v6387
          %v6657 = vunpack.c.l.b16 %v6388
          %v6658 = vunpack.c.h.b16 %v6388
          %v6659 = vunpack.c.l.b16 %v6389
          %v6660 = vunpack.c.h.b16 %v6389
          %v6661 = vunpack.c.l.b16 %v6390
          %v6662 = vunpack.c.h.b16 %v6390
          %v6663 = vunpack.c.l.b16 %v6391
          %v6664 = vunpack.c.h.b16 %v6391
          %v6665 = vunpack.c.l.b16 %v6392
          %v6666 = vunpack.c.h.b16 %v6392
          %v6667 = vunpack.c.l.b16 %v6393
          %v6668 = vunpack.c.h.b16 %v6393
          %v6669 = vunpack.c.l.b16 %v6394
          %v6670 = vunpack.c.h.b16 %v6394
          %v6671 = vunpack.c.l.b16 %v6395
          %v6672 = vunpack.c.h.b16 %v6395
          %v6673 = vunpack.c.l.b16 %v6396
          %v6674 = vunpack.c.h.b16 %v6396
          %v6675 = vunpack.c.l.b16 %v6397
          %v6676 = vunpack.c.h.b16 %v6397
          %v6677 = vunpack.c.l.b16 %v6398
          %v6678 = vunpack.c.h.b16 %v6398
          %v6679 = vunpack.c.l.b16 %v6399
          %v6680 = vunpack.c.h.b16 %v6399
          %v6681 = vunpack.c.l.b16 %v6400
          %v6682 = vunpack.c.h.b16 %v6400
          %v6683 = vunpack.c.l.b16 %v6401
          %v6684 = vunpack.c.h.b16 %v6401
          %v6685 = vunpack.c.l.b16 %v6402
          %v6686 = vunpack.c.h.b16 %v6402
          %v6687 = vunpack.c.l.b16 %v6403
          %v6688 = vunpack.c.h.b16 %v6403
          %v6689 = vunpack.c.l.b16 %v6404
          %v6690 = vunpack.c.h.b16 %v6404
          %v6691 = vunpack.c.l.b16 %v6405
          %v6692 = vunpack.c.h.b16 %v6405
          %v6693 = vunpack.c.l.b16 %v6406
          %v6694 = vunpack.c.h.b16 %v6406
          %v6695 = vunpack.c.l.b16 %v6407
          %v6696 = vunpack.c.h.b16 %v6407
          %v6697 = vunpack.c.l.b16 %v6408
          %v6698 = vunpack.c.h.b16 %v6408
          %v6699 = vunpack.c.l.b16 %v6409
          %v6700 = vunpack.c.h.b16 %v6409
          %v6701 = vunpack.c.l.b16 %v6410
          %v6702 = vunpack.c.h.b16 %v6410
          %v6703 = vunpack.c.l.b16 %v6411
          %v6704 = vunpack.c.h.b16 %v6411
          %v6705 = vunpack.c.l.b16 %v6412
          %v6706 = vunpack.c.h.b16 %v6412
          %v6707 = vunpack.c.l.b16 %v6413
          %v6708 = vunpack.c.h.b16 %v6413
          %v6709 = vunpack.c.l.b16 %v6414
          %v6710 = vunpack.c.h.b16 %v6414
          %v6711 = vunpack.c.l.b16 %v6415
          %v6712 = vunpack.c.h.b16 %v6415
          %v6713 = vunpack.c.l.b16 %v6416
          %v6714 = vunpack.c.h.b16 %v6416
          %v6715 = vunpack.c.l.b16 %v6417
          %v6716 = vunpack.c.h.b16 %v6417
          %v6717 = vunpack.c.l.b16 %v6418
          %v6718 = vunpack.c.h.b16 %v6418
          %v6719 = vunpack.c.l.b16 %v6419
          %v6720 = vunpack.c.h.b16 %v6419
          %v6721 = vunpack.c.l.b16 %v6420
          %v6722 = vunpack.c.h.b16 %v6420
          %v6723 = vunpack.c.l.b16 %v6421
          %v6724 = vunpack.c.h.b16 %v6421
          %v6725 = vunpack.c.l.b16 %v6422
          %v6726 = vunpack.c.h.b16 %v6422
          %v6727 = vunpack.c.l.b16 %v6423
          %v6728 = vunpack.c.h.b16 %v6423
          %v6729 = vunpack.c.l.b16 %v6424
          %v6730 = vunpack.c.h.b16 %v6424
          %v6731 = vunpack.c.l.b16 %v6425
          %v6732 = vunpack.c.h.b16 %v6425
          %v6733 = vunpack.c.l.b16 %v6426
          %v6734 = vunpack.c.h.b16 %v6426
          %v6735 = vunpack.c.l.b16 %v6427
          %v6736 = vunpack.c.h.b16 %v6427
          %v6737 = vunpack.c.l.b16 %v6428
          %v6738 = vunpack.c.h.b16 %v6428
          %v6739 = vunpack.c.l.b16 %v6429
          %v6740 = vunpack.c.h.b16 %v6429
          %v6741 = vunpack.c.l.b16 %v6430
          %v6742 = vunpack.c.h.b16 %v6430
          %v6743 = vunpack.c.l.b16 %v6431
          %v6744 = vunpack.c.h.b16 %v6431
          %v6745 = vunpack.c.l.b16 %v6432
          %v6746 = vunpack.c.h.b16 %v6432
          %v6747 = vunpack.c.l.b16 %v6433
          %v6748 = vunpack.c.h.b16 %v6433
          %v6749 = vunpack.c.l.b16 %v6434
          %v6750 = vunpack.c.h.b16 %v6434
          %v6751 = vunpack.c.l.b16 %v6435
          %v6752 = vunpack.c.h.b16 %v6435
          %v6753 = vunpack.c.l.b16 %v6436
          %v6754 = vunpack.c.h.b16 %v6436
          %v6755 = vunpack.c.l.b16 %v6437
          %v6756 = vunpack.c.h.b16 %v6437
          %v6757 = vunpack.c.l.b16 %v6438
          %v6758 = vunpack.c.h.b16 %v6438
          %v6759 = vunpack.c.l.b16 %v6439
          %v6760 = vunpack.c.h.b16 %v6439
          %v6761 = vunpack.c.l.b16 %v6440
          %v6762 = vunpack.c.h.b16 %v6440
          %v6763 = vunpack.c.l.b16 %v6441
          %v6764 = vunpack.c.h.b16 %v6441
          %v6765 = vunpack.c.l.b16 %v6442
          %v6766 = vunpack.c.h.b16 %v6442
          %v6767 = vunpack.c.l.b16 %v6443
          %v6768 = vunpack.c.h.b16 %v6443
          %v6769 = vunpack.c.l.b16 %v6444
          %v6770 = vunpack.c.h.b16 %v6444
          %v6771 = vunpack.c.l.b16 %v6445
          %v6772 = vunpack.c.h.b16 %v6445
          %v6773 = vunpack.c.l.b16 %v6446
          %v6774 = vunpack.c.h.b16 %v6446
          %v6775 = vunpack.c.l.b16 %v6447
          %v6776 = vunpack.c.h.b16 %v6447
          %v6777 = vunpack.c.l.b16 %v6448
          %v6778 = vunpack.c.h.b16 %v6448
          %v6779 = vunpack.c.l.b16 %v6449
          %v6780 = vunpack.c.h.b16 %v6449
          %v6781 = vunpack.c.l.b16 %v6450
          %v6782 = vunpack.c.h.b16 %v6450
          %v6783 = vunpack.c.l.b16 %v6451
          %v6784 = vunpack.c.h.b16 %v6451
          %v6785 = vunpack.c.l.b16 %v6452
          %v6786 = vunpack.c.h.b16 %v6452
          %v6787 = vunpack.c.l.b16 %v6453
          %v6788 = vunpack.c.h.b16 %v6453
          %v6789 = vunpack.c.l.b16 %v6454
          %v6790 = vunpack.c.h.b16 %v6454
          %v6791 = vunpack.c.l.b16 %v6455
          %v6792 = vunpack.c.h.b16 %v6455
          %v6793 = vunpack.c.l.b16 %v6456
          %v6794 = vunpack.c.h.b16 %v6456
          %v6795 = vunpack.c.l.b16 %v6457
          %v6796 = vunpack.c.h.b16 %v6457
          %v6797 = vunpack.c.l.b16 %v6458
          %v6798 = vunpack.c.h.b16 %v6458
          %v6799 = vunpack.c.l.b16 %v6459
          %v6800 = vunpack.c.h.b16 %v6459
          %v6801 = vunpack.c.l.b16 %v6460
          %v6802 = vunpack.c.h.b16 %v6460
          %v6803 = vunpack.c.l.b16 %v6461
          %v6804 = vunpack.c.h.b16 %v6461
          %v6805 = vunpack.c.l.b16 %v6462
          %v6806 = vunpack.c.h.b16 %v6462
          %v6807 = vunpack.c.l.b16 %v6463
          %v6808 = vunpack.c.h.b16 %v6463
          %v6809 = vunpack.c.l.b16 %v6464
          %v6810 = vunpack.c.h.b16 %v6464
          %v6811 = vunpack.c.l.b16 %v6465
          %v6812 = vunpack.c.h.b16 %v6465
          %v6813 = vunpack.c.l.b16 %v6466
          %v6814 = vunpack.c.h.b16 %v6466
          %v6815 = vunpack.c.l.b16 %v6467
          %v6816 = vunpack.c.h.b16 %v6467
          %v6817 = vunpack.c.l.b16 %v6468
          %v6818 = vunpack.c.h.b16 %v6468
          %v6819 = vunpack.c.l.b16 %v6469
          %v6820 = vunpack.c.h.b16 %v6469
          %v6821 = vunpack.c.l.b16 %v6470
          %v6822 = vunpack.c.h.b16 %v6470
          %v6823 = vunpack.c.l.b16 %v6471
          %v6824 = vunpack.c.h.b16 %v6471
          %v6825 = vunpack.c.l.b16 %v6472
          %v6826 = vunpack.c.h.b16 %v6472
          %v6827 = vunpack.c.l.b16 %v6473
          %v6828 = vunpack.c.h.b16 %v6473
          %v6829 = vunpack.c.l.b16 %v6474
          %v6830 = vunpack.c.h.b16 %v6474
          %v6831 = vunpack.c.l.b16 %v6475
          %v6832 = vunpack.c.h.b16 %v6475
          %v6833 = vunpack.c.l.b16 %v6476
          %v6834 = vunpack.c.h.b16 %v6476
          %v6835 = vunpack.c.l.b16 %v6477
          %v6836 = vunpack.c.h.b16 %v6477
          %v6837 = vunpack.c.l.b16 %v6478
          %v6838 = vunpack.c.h.b16 %v6478
          %v6839 = vunpack.c.l.b16 %v6479
          %v6840 = vunpack.c.h.b16 %v6479
          %v6841 = vunpack.c.l.b16 %v6480
          %v6842 = vunpack.c.h.b16 %v6480
          %v6843 = vunpack.c.l.b16 %v6481
          %v6844 = vunpack.c.h.b16 %v6481
          %v6845 = vunpack.c.l.b16 %v6482
          %v6846 = vunpack.c.h.b16 %v6482
          %v6847 = vunpack.c.l.b16 %v6483
          %v6848 = vunpack.c.h.b16 %v6483
          %v6849 = vunpack.c.l.b16 %v6484
          %v6850 = vunpack.c.h.b16 %v6484
          %v6851 = vunpack.c.l.b16 %v6485
          %v6852 = vunpack.c.h.b16 %v6485
          %v6853 = vunpack.c.l.b16 %v6486
          %v6854 = vunpack.c.h.b16 %v6486
          %v6855 = vunpack.c.l.b16 %v6487
          %v6856 = vunpack.c.h.b16 %v6487
          %v6857 = vunpack.c.l.b16 %v6488
          %v6858 = vunpack.c.h.b16 %v6488
          %v6859 = vunpack.c.l.b16 %v6489
          %v6860 = vunpack.c.h.b16 %v6489
          %v6861 = vunpack.c.l.b16 %v6490
          %v6862 = vunpack.c.h.b16 %v6490
          %v6863 = vunpack.c.l.b16 %v6491
          %v6864 = vunpack.c.h.b16 %v6491
          %v6865 = vunpack.c.l.b16 %v6492
          %v6866 = vunpack.c.h.b16 %v6492
          %v6867 = vunpack.c.l.b16 %v6493
          %v6868 = vunpack.c.h.b16 %v6493
          %v6869 = vunpack.c.l.b16 %v6494
          %v6870 = vunpack.c.h.b16 %v6494
          %v6871 = vunpack.c.l.b16 %v6495
          %v6872 = vunpack.c.h.b16 %v6495
          %v6873 = vunpack.c.l.b16 %v6496
          %v6874 = vunpack.c.h.b16 %v6496
          %v6875 = vunpack.c.l.b16 %v6497
          %v6876 = vunpack.c.h.b16 %v6497
          %v6877 = vunpack.c.l.b16 %v6498
          %v6878 = vunpack.c.h.b16 %v6498
          %v6879 = vunpack.c.l.b16 %v6499
          %v6880 = vunpack.c.h.b16 %v6499
          %v6881 = vunpack.c.l.b16 %v6500
          %v6882 = vunpack.c.h.b16 %v6500
          %v6883 = vunpack.c.l.b16 %v6501
          %v6884 = vunpack.c.h.b16 %v6501
          %v6885 = vunpack.c.l.b16 %v6502
          %v6886 = vunpack.c.h.b16 %v6502
          %v6887 = vunpack.c.l.b16 %v6503
          %v6888 = vunpack.c.h.b16 %v6503
          %v6889 = vunpack.c.l.b16 %v6504
          %v6890 = vunpack.c.h.b16 %v6504
          %v6891 = vunpack.c.l.b16 %v6505
          %v6892 = vunpack.c.h.b16 %v6505
          %v6893 = vunpack.c.l.b16 %v6506
          %v6894 = vunpack.c.h.b16 %v6506
          %v6895 = vunpack.c.l.b16 %v6507
          %v6896 = vunpack.c.h.b16 %v6507
          %v6897 = vunpack.c.l.b16 %v6508
          %v6898 = vunpack.c.h.b16 %v6508
          %v6899 = vunpack.c.l.b16 %v6509
          %v6900 = vunpack.c.h.b16 %v6509
          %v6901 = vunpack.c.l.b16 %v6510
          %v6902 = vunpack.c.h.b16 %v6510
          %v6903 = vunpack.c.l.b16 %v6511
          %v6904 = vunpack.c.h.b16 %v6511
          %v6905 = vunpack.c.l.b16 %v6512
          %v6906 = vunpack.c.h.b16 %v6512
          %v6907 = vunpack.c.l.b16 %v6513
          %v6908 = vunpack.c.h.b16 %v6513
          %v6909 = vpack.c.b16 %v6657, %v6653
          %v6910 = vpack.c.b16 %v6658, %v6654
          %v6911 = vpack.c.b16 %v6659, %v6655
          %v6912 = vpack.c.b16 %v6660, %v6656
          %v6913 = vpack.c.b16 %v6665, %v6661
          %v6914 = vpack.c.b16 %v6666, %v6662
          %v6915 = vpack.c.b16 %v6667, %v6663
          %v6916 = vpack.c.b16 %v6668, %v6664
          %v6917 = vpack.c.b16 %v6673, %v6669
          %v6918 = vpack.c.b16 %v6674, %v6670
          %v6919 = vpack.c.b16 %v6675, %v6671
          %v6920 = vpack.c.b16 %v6676, %v6672
          %v6921 = vpack.c.b16 %v6681, %v6677
          %v6922 = vpack.c.b16 %v6682, %v6678
          %v6923 = vpack.c.b16 %v6683, %v6679
          %v6924 = vpack.c.b16 %v6684, %v6680
          %v6925 = vpack.c.b16 %v6689, %v6685
          %v6926 = vpack.c.b16 %v6690, %v6686
          %v6927 = vpack.c.b16 %v6691, %v6687
          %v6928 = vpack.c.b16 %v6692, %v6688
          %v6929 = vpack.c.b16 %v6697, %v6693
          %v6930 = vpack.c.b16 %v6698, %v6694
          %v6931 = vpack.c.b16 %v6699, %v6695
          %v6932 = vpack.c.b16 %v6700, %v6696
          %v6933 = vpack.c.b16 %v6705, %v6701
          %v6934 = vpack.c.b16 %v6706, %v6702
          %v6935 = vpack.c.b16 %v6707, %v6703
          %v6936 = vpack.c.b16 %v6708, %v6704
          %v6937 = vpack.c.b16 %v6713, %v6709
          %v6938 = vpack.c.b16 %v6714, %v6710
          %v6939 = vpack.c.b16 %v6715, %v6711
          %v6940 = vpack.c.b16 %v6716, %v6712
          %v6941 = vpack.c.b16 %v6721, %v6717
          %v6942 = vpack.c.b16 %v6722, %v6718
          %v6943 = vpack.c.b16 %v6723, %v6719
          %v6944 = vpack.c.b16 %v6724, %v6720
          %v6945 = vpack.c.b16 %v6729, %v6725
          %v6946 = vpack.c.b16 %v6730, %v6726
          %v6947 = vpack.c.b16 %v6731, %v6727
          %v6948 = vpack.c.b16 %v6732, %v6728
          %v6949 = vpack.c.b16 %v6737, %v6733
          %v6950 = vpack.c.b16 %v6738, %v6734
          %v6951 = vpack.c.b16 %v6739, %v6735
          %v6952 = vpack.c.b16 %v6740, %v6736
          %v6953 = vpack.c.b16 %v6745, %v6741
          %v6954 = vpack.c.b16 %v6746, %v6742
          %v6955 = vpack.c.b16 %v6747, %v6743
          %v6956 = vpack.c.b16 %v6748, %v6744
          %v6957 = vpack.c.b16 %v6753, %v6749
          %v6958 = vpack.c.b16 %v6754, %v6750
          %v6959 = vpack.c.b16 %v6755, %v6751
          %v6960 = vpack.c.b16 %v6756, %v6752
          %v6961 = vpack.c.b16 %v6761, %v6757
          %v6962 = vpack.c.b16 %v6762, %v6758
          %v6963 = vpack.c.b16 %v6763, %v6759
          %v6964 = vpack.c.b16 %v6764, %v6760
          %v6965 = vpack.c.b16 %v6769, %v6765
          %v6966 = vpack.c.b16 %v6770, %v6766
          %v6967 = vpack.c.b16 %v6771, %v6767
          %v6968 = vpack.c.b16 %v6772, %v6768
          %v6969 = vpack.c.b16 %v6777, %v6773
          %v6970 = vpack.c.b16 %v6778, %v6774
          %v6971 = vpack.c.b16 %v6779, %v6775
          %v6972 = vpack.c.b16 %v6780, %v6776
          %v6973 = vpack.c.b16 %v6785, %v6781
          %v6974 = vpack.c.b16 %v6786, %v6782
          %v6975 = vpack.c.b16 %v6787, %v6783
          %v6976 = vpack.c.b16 %v6788, %v6784
          %v6977 = vpack.c.b16 %v6793, %v6789
          %v6978 = vpack.c.b16 %v6794, %v6790
          %v6979 = vpack.c.b16 %v6795, %v6791
          %v6980 = vpack.c.b16 %v6796, %v6792
          %v6981 = vpack.c.b16 %v6801, %v6797
          %v6982 = vpack.c.b16 %v6802, %v6798
          %v6983 = vpack.c.b16 %v6803, %v6799
          %v6984 = vpack.c.b16 %v6804, %v6800
          %v6985 = vpack.c.b16 %v6809, %v6805
          %v6986 = vpack.c.b16 %v6810, %v6806
          %v6987 = vpack.c.b16 %v6811, %v6807
          %v6988 = vpack.c.b16 %v6812, %v6808
          %v6989 = vpack.c.b16 %v6817, %v6813
          %v6990 = vpack.c.b16 %v6818, %v6814
          %v6991 = vpack.c.b16 %v6819, %v6815
          %v6992 = vpack.c.b16 %v6820, %v6816
          %v6993 = vpack.c.b16 %v6825, %v6821
          %v6994 = vpack.c.b16 %v6826, %v6822
          %v6995 = vpack.c.b16 %v6827, %v6823
          %v6996 = vpack.c.b16 %v6828, %v6824
          %v6997 = vpack.c.b16 %v6833, %v6829
          %v6998 = vpack.c.b16 %v6834, %v6830
          %v6999 = vpack.c.b16 %v6835, %v6831
          %v7000 = vpack.c.b16 %v6836, %v6832
          %v7001 = vpack.c.b16 %v6841, %v6837
          %v7002 = vpack.c.b16 %v6842, %v6838
          %v7003 = vpack.c.b16 %v6843, %v6839
          %v7004 = vpack.c.b16 %v6844, %v6840
          %v7005 = vpack.c.b16 %v6849, %v6845
          %v7006 = vpack.c.b16 %v6850, %v6846
          %v7007 = vpack.c.b16 %v6851, %v6847
          %v7008 = vpack.c.b16 %v6852, %v6848
          %v7009 = vpack.c.b16 %v6857, %v6853
          %v7010 = vpack.c.b16 %v6858, %v6854
          %v7011 = vpack.c.b16 %v6859, %v6855
          %v7012 = vpack.c.b16 %v6860, %v6856
          %v7013 = vpack.c.b16 %v6865, %v6861
          %v7014 = vpack.c.b16 %v6866, %v6862
          %v7015 = vpack.c.b16 %v6867, %v6863
          %v7016 = vpack.c.b16 %v6868, %v6864
          %v7017 = vpack.c.b16 %v6873, %v6869
          %v7018 = vpack.c.b16 %v6874, %v6870
          %v7019 = vpack.c.b16 %v6875, %v6871
          %v7020 = vpack.c.b16 %v6876, %v6872
          %v7021 = vpack.c.b16 %v6881, %v6877
          %v7022 = vpack.c.b16 %v6882, %v6878
          %v7023 = vpack.c.b16 %v6883, %v6879
          %v7024 = vpack.c.b16 %v6884, %v6880
          %v7025 = vpack.c.b16 %v6889, %v6885
          %v7026 = vpack.c.b16 %v6890, %v6886
          %v7027 = vpack.c.b16 %v6891, %v6887
          %v7028 = vpack.c.b16 %v6892, %v6888
          %v7029 = vpack.c.b16 %v6897, %v6893
          %v7030 = vpack.c.b16 %v6898, %v6894
          %v7031 = vpack.c.b16 %v6899, %v6895
          %v7032 = vpack.c.b16 %v6900, %v6896
          %v7033 = vpack.c.b16 %v6905, %v6901
          %v7034 = vpack.c.b16 %v6906, %v6902
          %v7035 = vpack.c.b16 %v6907, %v6903
          %v7036 = vpack.c.b16 %v6908, %v6904
          %7165 = vmatpush.bf16.msra.mxu0 %v6937
          %7166 = vmatpush.bf16.msra.mxu0 %v6933
          %7167 = vmatpush.bf16.msra.mxu0 %v6929
          %7168 = vmatpush.bf16.msra.mxu0 %v6925
          %7169 = vmatpush.bf16.msra.mxu0 %v6921
          %7170 = vmatpush.bf16.msra.mxu0 %v6917
          %7171 = vmatpush.bf16.msra.mxu0 %v6913
          %7172 = vmatpush.bf16.msra.mxu0 %v6909
          %7173 = vmatmul.bf16.gmra.mxu0 %v4402
          %v7174 = vpop.f32.mrf.mxu0
          %v7175 = vadd.f32 %v6517, %v7174
          %v7176 = vpop.f32.mrf.mxu0
          %7177 = vdwg.mxu0
          %7178 = vmatpush.bf16.msra.mxu0 %v6969
          %7179 = vmatpush.bf16.msra.mxu0 %v6965
          %7180 = vmatpush.bf16.msra.mxu0 %v6961
          %7181 = vmatpush.bf16.msra.mxu0 %v6957
          %7182 = vmatpush.bf16.msra.mxu0 %v6953
          %7183 = vmatpush.bf16.msra.mxu0 %v6949
          %7184 = vmatpush.bf16.msra.mxu0 %v6945
          %7185 = vmatpush.bf16.msra.mxu0 %v6941
          %7186 = vmatmul.bf16.gmra.mxu0 %v4403
          %v7187 = vpop.f32.mrf.mxu0
          %v7188 = vadd.f32 %v7175, %v7187
          %v7189 = vpop.f32.mrf.mxu0
          %7190 = vdwg.mxu0
          %7191 = vmatpush.bf16.msra.mxu0 %v7001
          %7192 = vmatpush.bf16.msra.mxu0 %v6997
          %7193 = vmatpush.bf16.msra.mxu0 %v6993
          %7194 = vmatpush.bf16.msra.mxu0 %v6989
          %7195 = vmatpush.bf16.msra.mxu0 %v6985
          %7196 = vmatpush.bf16.msra.mxu0 %v6981
          %7197 = vmatpush.bf16.msra.mxu0 %v6977
          %7198 = vmatpush.bf16.msra.mxu0 %v6973
          %7199 = vmatmul.bf16.gmra.mxu0 %v4404
          %v7200 = vpop.f32.mrf.mxu0
          %v7201 = vadd.f32 %v7188, %v7200
          %v7202 = vpop.f32.mrf.mxu0
          %7203 = vdwg.mxu0
          %7204 = vmatpush.bf16.msra.mxu0 %v7033
          %7205 = vmatpush.bf16.msra.mxu0 %v7029
          %7206 = vmatpush.bf16.msra.mxu0 %v7025
          %7207 = vmatpush.bf16.msra.mxu0 %v7021
          %7208 = vmatpush.bf16.msra.mxu0 %v7017
          %7209 = vmatpush.bf16.msra.mxu0 %v7013
          %7210 = vmatpush.bf16.msra.mxu0 %v7009
          %7211 = vmatpush.bf16.msra.mxu0 %v7005
          %7212 = vmatmul.bf16.gmra.mxu0 %v4405
          %v7213 = vpop.f32.mrf.mxu0
          %v7214 = vadd.f32 %v7201, %v7213
          %v7215 = vpop.f32.mrf.mxu0
          %7216 = vdwg.mxu0
          %7217 = vmatpush.bf16.msra.mxu0 %v6938
          %7218 = vmatpush.bf16.msra.mxu0 %v6934
          %7219 = vmatpush.bf16.msra.mxu0 %v6930
          %7220 = vmatpush.bf16.msra.mxu0 %v6926
          %7221 = vmatpush.bf16.msra.mxu0 %v6922
          %7222 = vmatpush.bf16.msra.mxu0 %v6918
          %7223 = vmatpush.bf16.msra.mxu0 %v6914
          %7224 = vmatpush.bf16.msra.mxu0 %v6910
          %7225 = vmatmul.bf16.gmra.mxu0 %v4402
          %v7226 = vpop.f32.mrf.mxu0
          %v7227 = vadd.f32 %v6518, %v7226
          %v7228 = vpop.f32.mrf.mxu0
          %7229 = vdwg.mxu0
          %7230 = vmatpush.bf16.msra.mxu0 %v6970
          %7231 = vmatpush.bf16.msra.mxu0 %v6966
          %7232 = vmatpush.bf16.msra.mxu0 %v6962
          %7233 = vmatpush.bf16.msra.mxu0 %v6958
          %7234 = vmatpush.bf16.msra.mxu0 %v6954
          %7235 = vmatpush.bf16.msra.mxu0 %v6950
          %7236 = vmatpush.bf16.msra.mxu0 %v6946
          %7237 = vmatpush.bf16.msra.mxu0 %v6942
          %7238 = vmatmul.bf16.gmra.mxu0 %v4403
          %v7239 = vpop.f32.mrf.mxu0
          %v7240 = vadd.f32 %v7227, %v7239
          %v7241 = vpop.f32.mrf.mxu0
          %7242 = vdwg.mxu0
          %7243 = vmatpush.bf16.msra.mxu0 %v7002
          %7244 = vmatpush.bf16.msra.mxu0 %v6998
          %7245 = vmatpush.bf16.msra.mxu0 %v6994
          %7246 = vmatpush.bf16.msra.mxu0 %v6990
          %7247 = vmatpush.bf16.msra.mxu0 %v6986
          %7248 = vmatpush.bf16.msra.mxu0 %v6982
          %7249 = vmatpush.bf16.msra.mxu0 %v6978
          %7250 = vmatpush.bf16.msra.mxu0 %v6974
          %7251 = vmatmul.bf16.gmra.mxu0 %v4404
          %v7252 = vpop.f32.mrf.mxu0
          %v7253 = vadd.f32 %v7240, %v7252
          %v7254 = vpop.f32.mrf.mxu0
          %7255 = vdwg.mxu0
          %7256 = vmatpush.bf16.msra.mxu0 %v7034
          %7257 = vmatpush.bf16.msra.mxu0 %v7030
          %7258 = vmatpush.bf16.msra.mxu0 %v7026
          %7259 = vmatpush.bf16.msra.mxu0 %v7022
          %7260 = vmatpush.bf16.msra.mxu0 %v7018
          %7261 = vmatpush.bf16.msra.mxu0 %v7014
          %7262 = vmatpush.bf16.msra.mxu0 %v7010
          %7263 = vmatpush.bf16.msra.mxu0 %v7006
          %7264 = vmatmul.bf16.gmra.mxu0 %v4405
          %v7265 = vpop.f32.mrf.mxu0
          %v7266 = vadd.f32 %v7253, %v7265
          %v7267 = vpop.f32.mrf.mxu0
          %7268 = vdwg.mxu0
          %7269 = vmatpush.bf16.msra.mxu0 %v6939
          %7270 = vmatpush.bf16.msra.mxu0 %v6935
          %7271 = vmatpush.bf16.msra.mxu0 %v6931
          %7272 = vmatpush.bf16.msra.mxu0 %v6927
          %7273 = vmatpush.bf16.msra.mxu0 %v6923
          %7274 = vmatpush.bf16.msra.mxu0 %v6919
          %7275 = vmatpush.bf16.msra.mxu0 %v6915
          %7276 = vmatpush.bf16.msra.mxu0 %v6911
          %7277 = vmatmul.bf16.gmra.mxu0 %v4402
          %v7278 = vpop.f32.mrf.mxu0
          %v7279 = vadd.f32 %v6519, %v7278
          %v7280 = vpop.f32.mrf.mxu0
          %7281 = vdwg.mxu0
          %7282 = vmatpush.bf16.msra.mxu0 %v6971
          %7283 = vmatpush.bf16.msra.mxu0 %v6967
          %7284 = vmatpush.bf16.msra.mxu0 %v6963
          %7285 = vmatpush.bf16.msra.mxu0 %v6959
          %7286 = vmatpush.bf16.msra.mxu0 %v6955
          %7287 = vmatpush.bf16.msra.mxu0 %v6951
          %7288 = vmatpush.bf16.msra.mxu0 %v6947
          %7289 = vmatpush.bf16.msra.mxu0 %v6943
          %7290 = vmatmul.bf16.gmra.mxu0 %v4403
          %v7291 = vpop.f32.mrf.mxu0
          %v7292 = vadd.f32 %v7279, %v7291
          %v7293 = vpop.f32.mrf.mxu0
          %7294 = vdwg.mxu0
          %7295 = vmatpush.bf16.msra.mxu0 %v7003
          %7296 = vmatpush.bf16.msra.mxu0 %v6999
          %7297 = vmatpush.bf16.msra.mxu0 %v6995
          %7298 = vmatpush.bf16.msra.mxu0 %v6991
          %7299 = vmatpush.bf16.msra.mxu0 %v6987
          %7300 = vmatpush.bf16.msra.mxu0 %v6983
          %7301 = vmatpush.bf16.msra.mxu0 %v6979
          %7302 = vmatpush.bf16.msra.mxu0 %v6975
          %7303 = vmatmul.bf16.gmra.mxu0 %v4404
          %v7304 = vpop.f32.mrf.mxu0
          %v7305 = vadd.f32 %v7292, %v7304
          %v7306 = vpop.f32.mrf.mxu0
          %7307 = vdwg.mxu0
          %7308 = vmatpush.bf16.msra.mxu0 %v7035
          %7309 = vmatpush.bf16.msra.mxu0 %v7031
          %7310 = vmatpush.bf16.msra.mxu0 %v7027
          %7311 = vmatpush.bf16.msra.mxu0 %v7023
          %7312 = vmatpush.bf16.msra.mxu0 %v7019
          %7313 = vmatpush.bf16.msra.mxu0 %v7015
          %7314 = vmatpush.bf16.msra.mxu0 %v7011
          %7315 = vmatpush.bf16.msra.mxu0 %v7007
          %7316 = vmatmul.bf16.gmra.mxu0 %v4405
          %v7317 = vpop.f32.mrf.mxu0
          %v7318 = vadd.f32 %v7305, %v7317
          %v7319 = vpop.f32.mrf.mxu0
          %7320 = vdwg.mxu0
          %7321 = vmatpush.bf16.msra.mxu0 %v6940
          %7322 = vmatpush.bf16.msra.mxu0 %v6936
          %7323 = vmatpush.bf16.msra.mxu0 %v6932
          %7324 = vmatpush.bf16.msra.mxu0 %v6928
          %7325 = vmatpush.bf16.msra.mxu0 %v6924
          %7326 = vmatpush.bf16.msra.mxu0 %v6920
          %7327 = vmatpush.bf16.msra.mxu0 %v6916
          %7328 = vmatpush.bf16.msra.mxu0 %v6912
          %7329 = vmatmul.bf16.gmra.mxu0 %v4402
          %v7330 = vpop.f32.mrf.mxu0
          %v7331 = vadd.f32 %v6520, %v7330
          %v7332 = vpop.f32.mrf.mxu0
          %7333 = vdwg.mxu0
          %7334 = vmatpush.bf16.msra.mxu0 %v6972
          %7335 = vmatpush.bf16.msra.mxu0 %v6968
          %7336 = vmatpush.bf16.msra.mxu0 %v6964
          %7337 = vmatpush.bf16.msra.mxu0 %v6960
          %7338 = vmatpush.bf16.msra.mxu0 %v6956
          %7339 = vmatpush.bf16.msra.mxu0 %v6952
          %7340 = vmatpush.bf16.msra.mxu0 %v6948
          %7341 = vmatpush.bf16.msra.mxu0 %v6944
          %7342 = vmatmul.bf16.gmra.mxu0 %v4403
          %v7343 = vpop.f32.mrf.mxu0
          %v7344 = vadd.f32 %v7331, %v7343
          %v7345 = vpop.f32.mrf.mxu0
          %7346 = vdwg.mxu0
          %7347 = vmatpush.bf16.msra.mxu0 %v7004
          %7348 = vmatpush.bf16.msra.mxu0 %v7000
          %7349 = vmatpush.bf16.msra.mxu0 %v6996
          %7350 = vmatpush.bf16.msra.mxu0 %v6992
          %7351 = vmatpush.bf16.msra.mxu0 %v6988
          %7352 = vmatpush.bf16.msra.mxu0 %v6984
          %7353 = vmatpush.bf16.msra.mxu0 %v6980
          %7354 = vmatpush.bf16.msra.mxu0 %v6976
          %7355 = vmatmul.bf16.gmra.mxu0 %v4404
          %v7356 = vpop.f32.mrf.mxu0
          %v7357 = vadd.f32 %v7344, %v7356
          %v7358 = vpop.f32.mrf.mxu0
          %7359 = vdwg.mxu0
          %7360 = vmatpush.bf16.msra.mxu0 %v7036
          %7361 = vmatpush.bf16.msra.mxu0 %v7032
          %7362 = vmatpush.bf16.msra.mxu0 %v7028
          %7363 = vmatpush.bf16.msra.mxu0 %v7024
          %7364 = vmatpush.bf16.msra.mxu0 %v7020
          %7365 = vmatpush.bf16.msra.mxu0 %v7016
          %7366 = vmatpush.bf16.msra.mxu0 %v7012
          %7367 = vmatpush.bf16.msra.mxu0 %v7008
          %7368 = vmatmul.bf16.gmra.mxu0 %v4405
          %v7369 = vpop.f32.mrf.mxu0
          %v7370 = vadd.f32 %v7357, %v7369
          %v7371 = vpop.f32.mrf.mxu0
          %7372 = vdwg.mxu0
          %v7373 = vpack.c.bf16 %v7214, %v7214
          %v7374 = vpack.c.bf16 %v7266, %v7266
          %v7375 = vpack.c.bf16 %v7318, %v7318
          %v7376 = vpack.c.bf16 %v7370, %v7370
          %s7377 = scalar_lea.vmem %s345, 3072 [#allocation8]
          %v7378 = vld [vmem:[%s7377] sm:$0xff]
          %v7379 = vld [vmem:[%s7377 + $0x8] sm:$0xff]
          %v7380 = vld [vmem:[%s7377 + $0x10] sm:$0xff]
          %v7381 = vld [vmem:[%s7377 + $0x18] sm:$0xff]
          %v7382 = vld [vmem:[%s7377 + $0x20] sm:$0xff]
          %v7383 = vld [vmem:[%s7377 + $0x28] sm:$0xff]
          %v7384 = vld [vmem:[%s7377 + $0x30] sm:$0xff]
          %v7385 = vld [vmem:[%s7377 + $0x38] sm:$0xff]
          %v7386 = vld [vmem:[%s7377 + $0x40] sm:$0xff]
          %v7387 = vld [vmem:[%s7377 + $0x48] sm:$0xff]
          %v7388 = vld [vmem:[%s7377 + $0x50] sm:$0xff]
          %v7389 = vld [vmem:[%s7377 + $0x58] sm:$0xff]
          %v7390 = vld [vmem:[%s7377 + $0x60] sm:$0xff]
          %v7391 = vld [vmem:[%s7377 + $0x68] sm:$0xff]
          %v7392 = vld [vmem:[%s7377 + $0x70] sm:$0xff]
          %v7393 = vld [vmem:[%s7377 + $0x78] sm:$0xff]
          %v7394 = vld [vmem:[%s7377 + $0x80] sm:$0xff]
          %v7395 = vld [vmem:[%s7377 + $0x88] sm:$0xff]
          %v7396 = vld [vmem:[%s7377 + $0x90] sm:$0xff]
          %v7397 = vld [vmem:[%s7377 + $0x98] sm:$0xff]
          %v7398 = vld [vmem:[%s7377 + $0xa0] sm:$0xff]
          %v7399 = vld [vmem:[%s7377 + $0xa8] sm:$0xff]
          %v7400 = vld [vmem:[%s7377 + $0xb0] sm:$0xff]
          %v7401 = vld [vmem:[%s7377 + $0xb8] sm:$0xff]
          %v7402 = vld [vmem:[%s7377 + $0xc0] sm:$0xff]
          %v7403 = vld [vmem:[%s7377 + $0xc8] sm:$0xff]
          %v7404 = vld [vmem:[%s7377 + $0xd0] sm:$0xff]
          %v7405 = vld [vmem:[%s7377 + $0xd8] sm:$0xff]
          %v7406 = vld [vmem:[%s7377 + $0xe0] sm:$0xff]
          %v7407 = vld [vmem:[%s7377 + $0xe8] sm:$0xff]
          %v7408 = vld [vmem:[%s7377 + $0xf0] sm:$0xff]
          %v7409 = vld [vmem:[%s7377 + $0xf8] sm:$0xff]
          %v7410 = vld [vmem:[%s7377 + $0x100] sm:$0xff]
          %v7411 = vld [vmem:[%s7377 + $0x108] sm:$0xff]
          %v7412 = vld [vmem:[%s7377 + $0x110] sm:$0xff]
          %v7413 = vld [vmem:[%s7377 + $0x118] sm:$0xff]
          %v7414 = vld [vmem:[%s7377 + $0x120] sm:$0xff]
          %v7415 = vld [vmem:[%s7377 + $0x128] sm:$0xff]
          %v7416 = vld [vmem:[%s7377 + $0x130] sm:$0xff]
          %v7417 = vld [vmem:[%s7377 + $0x138] sm:$0xff]
          %v7418 = vld [vmem:[%s7377 + $0x140] sm:$0xff]
          %v7419 = vld [vmem:[%s7377 + $0x148] sm:$0xff]
          %v7420 = vld [vmem:[%s7377 + $0x150] sm:$0xff]
          %v7421 = vld [vmem:[%s7377 + $0x158] sm:$0xff]
          %v7422 = vld [vmem:[%s7377 + $0x160] sm:$0xff]
          %v7423 = vld [vmem:[%s7377 + $0x168] sm:$0xff]
          %v7424 = vld [vmem:[%s7377 + $0x170] sm:$0xff]
          %v7425 = vld [vmem:[%s7377 + $0x178] sm:$0xff]
          %v7426 = vld [vmem:[%s7377 + $0x180] sm:$0xff]
          %v7427 = vld [vmem:[%s7377 + $0x188] sm:$0xff]
          %v7428 = vld [vmem:[%s7377 + $0x190] sm:$0xff]
          %v7429 = vld [vmem:[%s7377 + $0x198] sm:$0xff]
          %v7430 = vld [vmem:[%s7377 + $0x1a0] sm:$0xff]
          %v7431 = vld [vmem:[%s7377 + $0x1a8] sm:$0xff]
          %v7432 = vld [vmem:[%s7377 + $0x1b0] sm:$0xff]
          %v7433 = vld [vmem:[%s7377 + $0x1b8] sm:$0xff]
          %v7434 = vld [vmem:[%s7377 + $0x1c0] sm:$0xff]
          %v7435 = vld [vmem:[%s7377 + $0x1c8] sm:$0xff]
          %v7436 = vld [vmem:[%s7377 + $0x1d0] sm:$0xff]
          %v7437 = vld [vmem:[%s7377 + $0x1d8] sm:$0xff]
          %v7438 = vld [vmem:[%s7377 + $0x1e0] sm:$0xff]
          %v7439 = vld [vmem:[%s7377 + $0x1e8] sm:$0xff]
          %v7440 = vld [vmem:[%s7377 + $0x1f0] sm:$0xff]
          %v7441 = vld [vmem:[%s7377 + $0x1f8] sm:$0xff]
          %v7442 = vld [vmem:[%s7377 + $0x200] sm:$0xff]
          %v7443 = vld [vmem:[%s7377 + $0x208] sm:$0xff]
          %v7444 = vld [vmem:[%s7377 + $0x210] sm:$0xff]
          %v7445 = vld [vmem:[%s7377 + $0x218] sm:$0xff]
          %v7446 = vld [vmem:[%s7377 + $0x220] sm:$0xff]
          %v7447 = vld [vmem:[%s7377 + $0x228] sm:$0xff]
          %v7448 = vld [vmem:[%s7377 + $0x230] sm:$0xff]
          %v7449 = vld [vmem:[%s7377 + $0x238] sm:$0xff]
          %v7450 = vld [vmem:[%s7377 + $0x240] sm:$0xff]
          %v7451 = vld [vmem:[%s7377 + $0x248] sm:$0xff]
          %v7452 = vld [vmem:[%s7377 + $0x250] sm:$0xff]
          %v7453 = vld [vmem:[%s7377 + $0x258] sm:$0xff]
          %v7454 = vld [vmem:[%s7377 + $0x260] sm:$0xff]
          %v7455 = vld [vmem:[%s7377 + $0x268] sm:$0xff]
          %v7456 = vld [vmem:[%s7377 + $0x270] sm:$0xff]
          %v7457 = vld [vmem:[%s7377 + $0x278] sm:$0xff]
          %v7458 = vld [vmem:[%s7377 + $0x280] sm:$0xff]
          %v7459 = vld [vmem:[%s7377 + $0x288] sm:$0xff]
          %v7460 = vld [vmem:[%s7377 + $0x290] sm:$0xff]
          %v7461 = vld [vmem:[%s7377 + $0x298] sm:$0xff]
          %v7462 = vld [vmem:[%s7377 + $0x2a0] sm:$0xff]
          %v7463 = vld [vmem:[%s7377 + $0x2a8] sm:$0xff]
          %v7464 = vld [vmem:[%s7377 + $0x2b0] sm:$0xff]
          %v7465 = vld [vmem:[%s7377 + $0x2b8] sm:$0xff]
          %v7466 = vld [vmem:[%s7377 + $0x2c0] sm:$0xff]
          %v7467 = vld [vmem:[%s7377 + $0x2c8] sm:$0xff]
          %v7468 = vld [vmem:[%s7377 + $0x2d0] sm:$0xff]
          %v7469 = vld [vmem:[%s7377 + $0x2d8] sm:$0xff]
          %v7470 = vld [vmem:[%s7377 + $0x2e0] sm:$0xff]
          %v7471 = vld [vmem:[%s7377 + $0x2e8] sm:$0xff]
          %v7472 = vld [vmem:[%s7377 + $0x2f0] sm:$0xff]
          %v7473 = vld [vmem:[%s7377 + $0x2f8] sm:$0xff]
          %v7474 = vld [vmem:[%s7377 + $0x300] sm:$0xff]
          %v7475 = vld [vmem:[%s7377 + $0x308] sm:$0xff]
          %v7476 = vld [vmem:[%s7377 + $0x310] sm:$0xff]
          %v7477 = vld [vmem:[%s7377 + $0x318] sm:$0xff]
          %v7478 = vld [vmem:[%s7377 + $0x320] sm:$0xff]
          %v7479 = vld [vmem:[%s7377 + $0x328] sm:$0xff]
          %v7480 = vld [vmem:[%s7377 + $0x330] sm:$0xff]
          %v7481 = vld [vmem:[%s7377 + $0x338] sm:$0xff]
          %v7482 = vld [vmem:[%s7377 + $0x340] sm:$0xff]
          %v7483 = vld [vmem:[%s7377 + $0x348] sm:$0xff]
          %v7484 = vld [vmem:[%s7377 + $0x350] sm:$0xff]
          %v7485 = vld [vmem:[%s7377 + $0x358] sm:$0xff]
          %v7486 = vld [vmem:[%s7377 + $0x360] sm:$0xff]
          %v7487 = vld [vmem:[%s7377 + $0x368] sm:$0xff]
          %v7488 = vld [vmem:[%s7377 + $0x370] sm:$0xff]
          %v7489 = vld [vmem:[%s7377 + $0x378] sm:$0xff]
          %v7490 = vld [vmem:[%s7377 + $0x380] sm:$0xff]
          %v7491 = vld [vmem:[%s7377 + $0x388] sm:$0xff]
          %v7492 = vld [vmem:[%s7377 + $0x390] sm:$0xff]
          %v7493 = vld [vmem:[%s7377 + $0x398] sm:$0xff]
          %v7494 = vld [vmem:[%s7377 + $0x3a0] sm:$0xff]
          %v7495 = vld [vmem:[%s7377 + $0x3a8] sm:$0xff]
          %v7496 = vld [vmem:[%s7377 + $0x3b0] sm:$0xff]
          %v7497 = vld [vmem:[%s7377 + $0x3b8] sm:$0xff]
          %v7498 = vld [vmem:[%s7377 + $0x3c0] sm:$0xff]
          %v7499 = vld [vmem:[%s7377 + $0x3c8] sm:$0xff]
          %v7500 = vld [vmem:[%s7377 + $0x3d0] sm:$0xff]
          %v7501 = vld [vmem:[%s7377 + $0x3d8] sm:$0xff]
          %v7502 = vld [vmem:[%s7377 + $0x3e0] sm:$0xff]
          %v7503 = vld [vmem:[%s7377 + $0x3e8] sm:$0xff]
          %v7504 = vld [vmem:[%s7377 + $0x3f0] sm:$0xff]
          %v7505 = vld [vmem:[%s7377 + $0x3f8] sm:$0xff]
          %s7506 = scalar_lea.vmem [#allocation9], 28
          %v7507 = vld [vmem:[%s7506] sm:$0xf]
          %v7509 = vperm.slane %v7507, 0
          %v7510 = vperm.slane %v7507, 1
          %v7511 = vperm.slane %v7507, 2
          %v7512 = vperm.slane %v7507, 3
          %v7645 = vunpack.c.l.b16 %v7378
          %v7646 = vunpack.c.h.b16 %v7378
          %v7647 = vunpack.c.l.b16 %v7379
          %v7648 = vunpack.c.h.b16 %v7379
          %v7649 = vunpack.c.l.b16 %v7380
          %v7650 = vunpack.c.h.b16 %v7380
          %v7651 = vunpack.c.l.b16 %v7381
          %v7652 = vunpack.c.h.b16 %v7381
          %v7653 = vunpack.c.l.b16 %v7382
          %v7654 = vunpack.c.h.b16 %v7382
          %v7655 = vunpack.c.l.b16 %v7383
          %v7656 = vunpack.c.h.b16 %v7383
          %v7657 = vunpack.c.l.b16 %v7384
          %v7658 = vunpack.c.h.b16 %v7384
          %v7659 = vunpack.c.l.b16 %v7385
          %v7660 = vunpack.c.h.b16 %v7385
          %v7661 = vunpack.c.l.b16 %v7386
          %v7662 = vunpack.c.h.b16 %v7386
          %v7663 = vunpack.c.l.b16 %v7387
          %v7664 = vunpack.c.h.b16 %v7387
          %v7665 = vunpack.c.l.b16 %v7388
          %v7666 = vunpack.c.h.b16 %v7388
          %v7667 = vunpack.c.l.b16 %v7389
          %v7668 = vunpack.c.h.b16 %v7389
          %v7669 = vunpack.c.l.b16 %v7390
          %v7670 = vunpack.c.h.b16 %v7390
          %v7671 = vunpack.c.l.b16 %v7391
          %v7672 = vunpack.c.h.b16 %v7391
          %v7673 = vunpack.c.l.b16 %v7392
          %v7674 = vunpack.c.h.b16 %v7392
          %v7675 = vunpack.c.l.b16 %v7393
          %v7676 = vunpack.c.h.b16 %v7393
          %v7677 = vunpack.c.l.b16 %v7394
          %v7678 = vunpack.c.h.b16 %v7394
          %v7679 = vunpack.c.l.b16 %v7395
          %v7680 = vunpack.c.h.b16 %v7395
          %v7681 = vunpack.c.l.b16 %v7396
          %v7682 = vunpack.c.h.b16 %v7396
          %v7683 = vunpack.c.l.b16 %v7397
          %v7684 = vunpack.c.h.b16 %v7397
          %v7685 = vunpack.c.l.b16 %v7398
          %v7686 = vunpack.c.h.b16 %v7398
          %v7687 = vunpack.c.l.b16 %v7399
          %v7688 = vunpack.c.h.b16 %v7399
          %v7689 = vunpack.c.l.b16 %v7400
          %v7690 = vunpack.c.h.b16 %v7400
          %v7691 = vunpack.c.l.b16 %v7401
          %v7692 = vunpack.c.h.b16 %v7401
          %v7693 = vunpack.c.l.b16 %v7402
          %v7694 = vunpack.c.h.b16 %v7402
          %v7695 = vunpack.c.l.b16 %v7403
          %v7696 = vunpack.c.h.b16 %v7403
          %v7697 = vunpack.c.l.b16 %v7404
          %v7698 = vunpack.c.h.b16 %v7404
          %v7699 = vunpack.c.l.b16 %v7405
          %v7700 = vunpack.c.h.b16 %v7405
          %v7701 = vunpack.c.l.b16 %v7406
          %v7702 = vunpack.c.h.b16 %v7406
          %v7703 = vunpack.c.l.b16 %v7407
          %v7704 = vunpack.c.h.b16 %v7407
          %v7705 = vunpack.c.l.b16 %v7408
          %v7706 = vunpack.c.h.b16 %v7408
          %v7707 = vunpack.c.l.b16 %v7409
          %v7708 = vunpack.c.h.b16 %v7409
          %v7709 = vunpack.c.l.b16 %v7410
          %v7710 = vunpack.c.h.b16 %v7410
          %v7711 = vunpack.c.l.b16 %v7411
          %v7712 = vunpack.c.h.b16 %v7411
          %v7713 = vunpack.c.l.b16 %v7412
          %v7714 = vunpack.c.h.b16 %v7412
          %v7715 = vunpack.c.l.b16 %v7413
          %v7716 = vunpack.c.h.b16 %v7413
          %v7717 = vunpack.c.l.b16 %v7414
          %v7718 = vunpack.c.h.b16 %v7414
          %v7719 = vunpack.c.l.b16 %v7415
          %v7720 = vunpack.c.h.b16 %v7415
          %v7721 = vunpack.c.l.b16 %v7416
          %v7722 = vunpack.c.h.b16 %v7416
          %v7723 = vunpack.c.l.b16 %v7417
          %v7724 = vunpack.c.h.b16 %v7417
          %v7725 = vunpack.c.l.b16 %v7418
          %v7726 = vunpack.c.h.b16 %v7418
          %v7727 = vunpack.c.l.b16 %v7419
          %v7728 = vunpack.c.h.b16 %v7419
          %v7729 = vunpack.c.l.b16 %v7420
          %v7730 = vunpack.c.h.b16 %v7420
          %v7731 = vunpack.c.l.b16 %v7421
          %v7732 = vunpack.c.h.b16 %v7421
          %v7733 = vunpack.c.l.b16 %v7422
          %v7734 = vunpack.c.h.b16 %v7422
          %v7735 = vunpack.c.l.b16 %v7423
          %v7736 = vunpack.c.h.b16 %v7423
          %v7737 = vunpack.c.l.b16 %v7424
          %v7738 = vunpack.c.h.b16 %v7424
          %v7739 = vunpack.c.l.b16 %v7425
          %v7740 = vunpack.c.h.b16 %v7425
          %v7741 = vunpack.c.l.b16 %v7426
          %v7742 = vunpack.c.h.b16 %v7426
          %v7743 = vunpack.c.l.b16 %v7427
          %v7744 = vunpack.c.h.b16 %v7427
          %v7745 = vunpack.c.l.b16 %v7428
          %v7746 = vunpack.c.h.b16 %v7428
          %v7747 = vunpack.c.l.b16 %v7429
          %v7748 = vunpack.c.h.b16 %v7429
          %v7749 = vunpack.c.l.b16 %v7430
          %v7750 = vunpack.c.h.b16 %v7430
          %v7751 = vunpack.c.l.b16 %v7431
          %v7752 = vunpack.c.h.b16 %v7431
          %v7753 = vunpack.c.l.b16 %v7432
          %v7754 = vunpack.c.h.b16 %v7432
          %v7755 = vunpack.c.l.b16 %v7433
          %v7756 = vunpack.c.h.b16 %v7433
          %v7757 = vunpack.c.l.b16 %v7434
          %v7758 = vunpack.c.h.b16 %v7434
          %v7759 = vunpack.c.l.b16 %v7435
          %v7760 = vunpack.c.h.b16 %v7435
          %v7761 = vunpack.c.l.b16 %v7436
          %v7762 = vunpack.c.h.b16 %v7436
          %v7763 = vunpack.c.l.b16 %v7437
          %v7764 = vunpack.c.h.b16 %v7437
          %v7765 = vunpack.c.l.b16 %v7438
          %v7766 = vunpack.c.h.b16 %v7438
          %v7767 = vunpack.c.l.b16 %v7439
          %v7768 = vunpack.c.h.b16 %v7439
          %v7769 = vunpack.c.l.b16 %v7440
          %v7770 = vunpack.c.h.b16 %v7440
          %v7771 = vunpack.c.l.b16 %v7441
          %v7772 = vunpack.c.h.b16 %v7441
          %v7773 = vunpack.c.l.b16 %v7442
          %v7774 = vunpack.c.h.b16 %v7442
          %v7775 = vunpack.c.l.b16 %v7443
          %v7776 = vunpack.c.h.b16 %v7443
          %v7777 = vunpack.c.l.b16 %v7444
          %v7778 = vunpack.c.h.b16 %v7444
          %v7779 = vunpack.c.l.b16 %v7445
          %v7780 = vunpack.c.h.b16 %v7445
          %v7781 = vunpack.c.l.b16 %v7446
          %v7782 = vunpack.c.h.b16 %v7446
          %v7783 = vunpack.c.l.b16 %v7447
          %v7784 = vunpack.c.h.b16 %v7447
          %v7785 = vunpack.c.l.b16 %v7448
          %v7786 = vunpack.c.h.b16 %v7448
          %v7787 = vunpack.c.l.b16 %v7449
          %v7788 = vunpack.c.h.b16 %v7449
          %v7789 = vunpack.c.l.b16 %v7450
          %v7790 = vunpack.c.h.b16 %v7450
          %v7791 = vunpack.c.l.b16 %v7451
          %v7792 = vunpack.c.h.b16 %v7451
          %v7793 = vunpack.c.l.b16 %v7452
          %v7794 = vunpack.c.h.b16 %v7452
          %v7795 = vunpack.c.l.b16 %v7453
          %v7796 = vunpack.c.h.b16 %v7453
          %v7797 = vunpack.c.l.b16 %v7454
          %v7798 = vunpack.c.h.b16 %v7454
          %v7799 = vunpack.c.l.b16 %v7455
          %v7800 = vunpack.c.h.b16 %v7455
          %v7801 = vunpack.c.l.b16 %v7456
          %v7802 = vunpack.c.h.b16 %v7456
          %v7803 = vunpack.c.l.b16 %v7457
          %v7804 = vunpack.c.h.b16 %v7457
          %v7805 = vunpack.c.l.b16 %v7458
          %v7806 = vunpack.c.h.b16 %v7458
          %v7807 = vunpack.c.l.b16 %v7459
          %v7808 = vunpack.c.h.b16 %v7459
          %v7809 = vunpack.c.l.b16 %v7460
          %v7810 = vunpack.c.h.b16 %v7460
          %v7811 = vunpack.c.l.b16 %v7461
          %v7812 = vunpack.c.h.b16 %v7461
          %v7813 = vunpack.c.l.b16 %v7462
          %v7814 = vunpack.c.h.b16 %v7462
          %v7815 = vunpack.c.l.b16 %v7463
          %v7816 = vunpack.c.h.b16 %v7463
          %v7817 = vunpack.c.l.b16 %v7464
          %v7818 = vunpack.c.h.b16 %v7464
          %v7819 = vunpack.c.l.b16 %v7465
          %v7820 = vunpack.c.h.b16 %v7465
          %v7821 = vunpack.c.l.b16 %v7466
          %v7822 = vunpack.c.h.b16 %v7466
          %v7823 = vunpack.c.l.b16 %v7467
          %v7824 = vunpack.c.h.b16 %v7467
          %v7825 = vunpack.c.l.b16 %v7468
          %v7826 = vunpack.c.h.b16 %v7468
          %v7827 = vunpack.c.l.b16 %v7469
          %v7828 = vunpack.c.h.b16 %v7469
          %v7829 = vunpack.c.l.b16 %v7470
          %v7830 = vunpack.c.h.b16 %v7470
          %v7831 = vunpack.c.l.b16 %v7471
          %v7832 = vunpack.c.h.b16 %v7471
          %v7833 = vunpack.c.l.b16 %v7472
          %v7834 = vunpack.c.h.b16 %v7472
          %v7835 = vunpack.c.l.b16 %v7473
          %v7836 = vunpack.c.h.b16 %v7473
          %v7837 = vunpack.c.l.b16 %v7474
          %v7838 = vunpack.c.h.b16 %v7474
          %v7839 = vunpack.c.l.b16 %v7475
          %v7840 = vunpack.c.h.b16 %v7475
          %v7841 = vunpack.c.l.b16 %v7476
          %v7842 = vunpack.c.h.b16 %v7476
          %v7843 = vunpack.c.l.b16 %v7477
          %v7844 = vunpack.c.h.b16 %v7477
          %v7845 = vunpack.c.l.b16 %v7478
          %v7846 = vunpack.c.h.b16 %v7478
          %v7847 = vunpack.c.l.b16 %v7479
          %v7848 = vunpack.c.h.b16 %v7479
          %v7849 = vunpack.c.l.b16 %v7480
          %v7850 = vunpack.c.h.b16 %v7480
          %v7851 = vunpack.c.l.b16 %v7481
          %v7852 = vunpack.c.h.b16 %v7481
          %v7853 = vunpack.c.l.b16 %v7482
          %v7854 = vunpack.c.h.b16 %v7482
          %v7855 = vunpack.c.l.b16 %v7483
          %v7856 = vunpack.c.h.b16 %v7483
          %v7857 = vunpack.c.l.b16 %v7484
          %v7858 = vunpack.c.h.b16 %v7484
          %v7859 = vunpack.c.l.b16 %v7485
          %v7860 = vunpack.c.h.b16 %v7485
          %v7861 = vunpack.c.l.b16 %v7486
          %v7862 = vunpack.c.h.b16 %v7486
          %v7863 = vunpack.c.l.b16 %v7487
          %v7864 = vunpack.c.h.b16 %v7487
          %v7865 = vunpack.c.l.b16 %v7488
          %v7866 = vunpack.c.h.b16 %v7488
          %v7867 = vunpack.c.l.b16 %v7489
          %v7868 = vunpack.c.h.b16 %v7489
          %v7869 = vunpack.c.l.b16 %v7490
          %v7870 = vunpack.c.h.b16 %v7490
          %v7871 = vunpack.c.l.b16 %v7491
          %v7872 = vunpack.c.h.b16 %v7491
          %v7873 = vunpack.c.l.b16 %v7492
          %v7874 = vunpack.c.h.b16 %v7492
          %v7875 = vunpack.c.l.b16 %v7493
          %v7876 = vunpack.c.h.b16 %v7493
          %v7877 = vunpack.c.l.b16 %v7494
          %v7878 = vunpack.c.h.b16 %v7494
          %v7879 = vunpack.c.l.b16 %v7495
          %v7880 = vunpack.c.h.b16 %v7495
          %v7881 = vunpack.c.l.b16 %v7496
          %v7882 = vunpack.c.h.b16 %v7496
          %v7883 = vunpack.c.l.b16 %v7497
          %v7884 = vunpack.c.h.b16 %v7497
          %v7885 = vunpack.c.l.b16 %v7498
          %v7886 = vunpack.c.h.b16 %v7498
          %v7887 = vunpack.c.l.b16 %v7499
          %v7888 = vunpack.c.h.b16 %v7499
          %v7889 = vunpack.c.l.b16 %v7500
          %v7890 = vunpack.c.h.b16 %v7500
          %v7891 = vunpack.c.l.b16 %v7501
          %v7892 = vunpack.c.h.b16 %v7501
          %v7893 = vunpack.c.l.b16 %v7502
          %v7894 = vunpack.c.h.b16 %v7502
          %v7895 = vunpack.c.l.b16 %v7503
          %v7896 = vunpack.c.h.b16 %v7503
          %v7897 = vunpack.c.l.b16 %v7504
          %v7898 = vunpack.c.h.b16 %v7504
          %v7899 = vunpack.c.l.b16 %v7505
          %v7900 = vunpack.c.h.b16 %v7505
          %v7901 = vpack.c.b16 %v7649, %v7645
          %v7902 = vpack.c.b16 %v7650, %v7646
          %v7903 = vpack.c.b16 %v7651, %v7647
          %v7904 = vpack.c.b16 %v7652, %v7648
          %v7905 = vpack.c.b16 %v7657, %v7653
          %v7906 = vpack.c.b16 %v7658, %v7654
          %v7907 = vpack.c.b16 %v7659, %v7655
          %v7908 = vpack.c.b16 %v7660, %v7656
          %v7909 = vpack.c.b16 %v7665, %v7661
          %v7910 = vpack.c.b16 %v7666, %v7662
          %v7911 = vpack.c.b16 %v7667, %v7663
          %v7912 = vpack.c.b16 %v7668, %v7664
          %v7913 = vpack.c.b16 %v7673, %v7669
          %v7914 = vpack.c.b16 %v7674, %v7670
          %v7915 = vpack.c.b16 %v7675, %v7671
          %v7916 = vpack.c.b16 %v7676, %v7672
          %v7917 = vpack.c.b16 %v7681, %v7677
          %v7918 = vpack.c.b16 %v7682, %v7678
          %v7919 = vpack.c.b16 %v7683, %v7679
          %v7920 = vpack.c.b16 %v7684, %v7680
          %v7921 = vpack.c.b16 %v7689, %v7685
          %v7922 = vpack.c.b16 %v7690, %v7686
          %v7923 = vpack.c.b16 %v7691, %v7687
          %v7924 = vpack.c.b16 %v7692, %v7688
          %v7925 = vpack.c.b16 %v7697, %v7693
          %v7926 = vpack.c.b16 %v7698, %v7694
          %v7927 = vpack.c.b16 %v7699, %v7695
          %v7928 = vpack.c.b16 %v7700, %v7696
          %v7929 = vpack.c.b16 %v7705, %v7701
          %v7930 = vpack.c.b16 %v7706, %v7702
          %v7931 = vpack.c.b16 %v7707, %v7703
          %v7932 = vpack.c.b16 %v7708, %v7704
          %v7933 = vpack.c.b16 %v7713, %v7709
          %v7934 = vpack.c.b16 %v7714, %v7710
          %v7935 = vpack.c.b16 %v7715, %v7711
          %v7936 = vpack.c.b16 %v7716, %v7712
          %v7937 = vpack.c.b16 %v7721, %v7717
          %v7938 = vpack.c.b16 %v7722, %v7718
          %v7939 = vpack.c.b16 %v7723, %v7719
          %v7940 = vpack.c.b16 %v7724, %v7720
          %v7941 = vpack.c.b16 %v7729, %v7725
          %v7942 = vpack.c.b16 %v7730, %v7726
          %v7943 = vpack.c.b16 %v7731, %v7727
          %v7944 = vpack.c.b16 %v7732, %v7728
          %v7945 = vpack.c.b16 %v7737, %v7733
          %v7946 = vpack.c.b16 %v7738, %v7734
          %v7947 = vpack.c.b16 %v7739, %v7735
          %v7948 = vpack.c.b16 %v7740, %v7736
          %v7949 = vpack.c.b16 %v7745, %v7741
          %v7950 = vpack.c.b16 %v7746, %v7742
          %v7951 = vpack.c.b16 %v7747, %v7743
          %v7952 = vpack.c.b16 %v7748, %v7744
          %v7953 = vpack.c.b16 %v7753, %v7749
          %v7954 = vpack.c.b16 %v7754, %v7750
          %v7955 = vpack.c.b16 %v7755, %v7751
          %v7956 = vpack.c.b16 %v7756, %v7752
          %v7957 = vpack.c.b16 %v7761, %v7757
          %v7958 = vpack.c.b16 %v7762, %v7758
          %v7959 = vpack.c.b16 %v7763, %v7759
          %v7960 = vpack.c.b16 %v7764, %v7760
          %v7961 = vpack.c.b16 %v7769, %v7765
          %v7962 = vpack.c.b16 %v7770, %v7766
          %v7963 = vpack.c.b16 %v7771, %v7767
          %v7964 = vpack.c.b16 %v7772, %v7768
          %v7965 = vpack.c.b16 %v7777, %v7773
          %v7966 = vpack.c.b16 %v7778, %v7774
          %v7967 = vpack.c.b16 %v7779, %v7775
          %v7968 = vpack.c.b16 %v7780, %v7776
          %v7969 = vpack.c.b16 %v7785, %v7781
          %v7970 = vpack.c.b16 %v7786, %v7782
          %v7971 = vpack.c.b16 %v7787, %v7783
          %v7972 = vpack.c.b16 %v7788, %v7784
          %v7973 = vpack.c.b16 %v7793, %v7789
          %v7974 = vpack.c.b16 %v7794, %v7790
          %v7975 = vpack.c.b16 %v7795, %v7791
          %v7976 = vpack.c.b16 %v7796, %v7792
          %v7977 = vpack.c.b16 %v7801, %v7797
          %v7978 = vpack.c.b16 %v7802, %v7798
          %v7979 = vpack.c.b16 %v7803, %v7799
          %v7980 = vpack.c.b16 %v7804, %v7800
          %v7981 = vpack.c.b16 %v7809, %v7805
          %v7982 = vpack.c.b16 %v7810, %v7806
          %v7983 = vpack.c.b16 %v7811, %v7807
          %v7984 = vpack.c.b16 %v7812, %v7808
          %v7985 = vpack.c.b16 %v7817, %v7813
          %v7986 = vpack.c.b16 %v7818, %v7814
          %v7987 = vpack.c.b16 %v7819, %v7815
          %v7988 = vpack.c.b16 %v7820, %v7816
          %v7989 = vpack.c.b16 %v7825, %v7821
          %v7990 = vpack.c.b16 %v7826, %v7822
          %v7991 = vpack.c.b16 %v7827, %v7823
          %v7992 = vpack.c.b16 %v7828, %v7824
          %v7993 = vpack.c.b16 %v7833, %v7829
          %v7994 = vpack.c.b16 %v7834, %v7830
          %v7995 = vpack.c.b16 %v7835, %v7831
          %v7996 = vpack.c.b16 %v7836, %v7832
          %v7997 = vpack.c.b16 %v7841, %v7837
          %v7998 = vpack.c.b16 %v7842, %v7838
          %v7999 = vpack.c.b16 %v7843, %v7839
          %v8000 = vpack.c.b16 %v7844, %v7840
          %v8001 = vpack.c.b16 %v7849, %v7845
          %v8002 = vpack.c.b16 %v7850, %v7846
          %v8003 = vpack.c.b16 %v7851, %v7847
          %v8004 = vpack.c.b16 %v7852, %v7848
          %v8005 = vpack.c.b16 %v7857, %v7853
          %v8006 = vpack.c.b16 %v7858, %v7854
          %v8007 = vpack.c.b16 %v7859, %v7855
          %v8008 = vpack.c.b16 %v7860, %v7856
          %v8009 = vpack.c.b16 %v7865, %v7861
          %v8010 = vpack.c.b16 %v7866, %v7862
          %v8011 = vpack.c.b16 %v7867, %v7863
          %v8012 = vpack.c.b16 %v7868, %v7864
          %v8013 = vpack.c.b16 %v7873, %v7869
          %v8014 = vpack.c.b16 %v7874, %v7870
          %v8015 = vpack.c.b16 %v7875, %v7871
          %v8016 = vpack.c.b16 %v7876, %v7872
          %v8017 = vpack.c.b16 %v7881, %v7877
          %v8018 = vpack.c.b16 %v7882, %v7878
          %v8019 = vpack.c.b16 %v7883, %v7879
          %v8020 = vpack.c.b16 %v7884, %v7880
          %v8021 = vpack.c.b16 %v7889, %v7885
          %v8022 = vpack.c.b16 %v7890, %v7886
          %v8023 = vpack.c.b16 %v7891, %v7887
          %v8024 = vpack.c.b16 %v7892, %v7888
          %v8025 = vpack.c.b16 %v7897, %v7893
          %v8026 = vpack.c.b16 %v7898, %v7894
          %v8027 = vpack.c.b16 %v7899, %v7895
          %v8028 = vpack.c.b16 %v7900, %v7896
          %8157 = vmatpush.bf16.msra.mxu0 %v7929
          %8158 = vmatpush.bf16.msra.mxu0 %v7925
          %8159 = vmatpush.bf16.msra.mxu0 %v7921
          %8160 = vmatpush.bf16.msra.mxu0 %v7917
          %8161 = vmatpush.bf16.msra.mxu0 %v7913
          %8162 = vmatpush.bf16.msra.mxu0 %v7909
          %8163 = vmatpush.bf16.msra.mxu0 %v7905
          %8164 = vmatpush.bf16.msra.mxu0 %v7901
          %8165 = vmatmul.bf16.gmra.mxu0 %v7373
          %v8166 = vpop.f32.mrf.mxu0
          %v8167 = vadd.f32 %v7509, %v8166
          %v8168 = vpop.f32.mrf.mxu0
          %8169 = vdwg.mxu0
          %8170 = vmatpush.bf16.msra.mxu0 %v7961
          %8171 = vmatpush.bf16.msra.mxu0 %v7957
          %8172 = vmatpush.bf16.msra.mxu0 %v7953
          %8173 = vmatpush.bf16.msra.mxu0 %v7949
          %8174 = vmatpush.bf16.msra.mxu0 %v7945
          %8175 = vmatpush.bf16.msra.mxu0 %v7941
          %8176 = vmatpush.bf16.msra.mxu0 %v7937
          %8177 = vmatpush.bf16.msra.mxu0 %v7933
          %8178 = vmatmul.bf16.gmra.mxu0 %v7374
          %v8179 = vpop.f32.mrf.mxu0
          %v8180 = vadd.f32 %v8167, %v8179
          %v8181 = vpop.f32.mrf.mxu0
          %8182 = vdwg.mxu0
          %8183 = vmatpush.bf16.msra.mxu0 %v7993
          %8184 = vmatpush.bf16.msra.mxu0 %v7989
          %8185 = vmatpush.bf16.msra.mxu0 %v7985
          %8186 = vmatpush.bf16.msra.mxu0 %v7981
          %8187 = vmatpush.bf16.msra.mxu0 %v7977
          %8188 = vmatpush.bf16.msra.mxu0 %v7973
          %8189 = vmatpush.bf16.msra.mxu0 %v7969
          %8190 = vmatpush.bf16.msra.mxu0 %v7965
          %8191 = vmatmul.bf16.gmra.mxu0 %v7375
          %v8192 = vpop.f32.mrf.mxu0
          %v8193 = vadd.f32 %v8180, %v8192
          %v8194 = vpop.f32.mrf.mxu0
          %8195 = vdwg.mxu0
          %8196 = vmatpush.bf16.msra.mxu0 %v8025
          %8197 = vmatpush.bf16.msra.mxu0 %v8021
          %8198 = vmatpush.bf16.msra.mxu0 %v8017
          %8199 = vmatpush.bf16.msra.mxu0 %v8013
          %8200 = vmatpush.bf16.msra.mxu0 %v8009
          %8201 = vmatpush.bf16.msra.mxu0 %v8005
          %8202 = vmatpush.bf16.msra.mxu0 %v8001
          %8203 = vmatpush.bf16.msra.mxu0 %v7997
          %8204 = vmatmul.bf16.gmra.mxu0 %v7376
          %v8205 = vpop.f32.mrf.mxu0
          %v8206 = vadd.f32 %v8193, %v8205
          %v8207 = vpop.f32.mrf.mxu0
          %8208 = vdwg.mxu0
          %8209 = vmatpush.bf16.msra.mxu0 %v7930
          %8210 = vmatpush.bf16.msra.mxu0 %v7926
          %8211 = vmatpush.bf16.msra.mxu0 %v7922
          %8212 = vmatpush.bf16.msra.mxu0 %v7918
          %8213 = vmatpush.bf16.msra.mxu0 %v7914
          %8214 = vmatpush.bf16.msra.mxu0 %v7910
          %8215 = vmatpush.bf16.msra.mxu0 %v7906
          %8216 = vmatpush.bf16.msra.mxu0 %v7902
          %8217 = vmatmul.bf16.gmra.mxu0 %v7373
          %v8218 = vpop.f32.mrf.mxu0
          %v8219 = vadd.f32 %v7510, %v8218
          %v8220 = vpop.f32.mrf.mxu0
          %8221 = vdwg.mxu0
          %8222 = vmatpush.bf16.msra.mxu0 %v7962
          %8223 = vmatpush.bf16.msra.mxu0 %v7958
          %8224 = vmatpush.bf16.msra.mxu0 %v7954
          %8225 = vmatpush.bf16.msra.mxu0 %v7950
          %8226 = vmatpush.bf16.msra.mxu0 %v7946
          %8227 = vmatpush.bf16.msra.mxu0 %v7942
          %8228 = vmatpush.bf16.msra.mxu0 %v7938
          %8229 = vmatpush.bf16.msra.mxu0 %v7934
          %8230 = vmatmul.bf16.gmra.mxu0 %v7374
          %v8231 = vpop.f32.mrf.mxu0
          %v8232 = vadd.f32 %v8219, %v8231
          %v8233 = vpop.f32.mrf.mxu0
          %8234 = vdwg.mxu0
          %8235 = vmatpush.bf16.msra.mxu0 %v7994
          %8236 = vmatpush.bf16.msra.mxu0 %v7990
          %8237 = vmatpush.bf16.msra.mxu0 %v7986
          %8238 = vmatpush.bf16.msra.mxu0 %v7982
          %8239 = vmatpush.bf16.msra.mxu0 %v7978
          %8240 = vmatpush.bf16.msra.mxu0 %v7974
          %8241 = vmatpush.bf16.msra.mxu0 %v7970
          %8242 = vmatpush.bf16.msra.mxu0 %v7966
          %8243 = vmatmul.bf16.gmra.mxu0 %v7375
          %v8244 = vpop.f32.mrf.mxu0
          %v8245 = vadd.f32 %v8232, %v8244
          %v8246 = vpop.f32.mrf.mxu0
          %8247 = vdwg.mxu0
          %8248 = vmatpush.bf16.msra.mxu0 %v8026
          %8249 = vmatpush.bf16.msra.mxu0 %v8022
          %8250 = vmatpush.bf16.msra.mxu0 %v8018
          %8251 = vmatpush.bf16.msra.mxu0 %v8014
          %8252 = vmatpush.bf16.msra.mxu0 %v8010
          %8253 = vmatpush.bf16.msra.mxu0 %v8006
          %8254 = vmatpush.bf16.msra.mxu0 %v8002
          %8255 = vmatpush.bf16.msra.mxu0 %v7998
          %8256 = vmatmul.bf16.gmra.mxu0 %v7376
          %v8257 = vpop.f32.mrf.mxu0
          %v8258 = vadd.f32 %v8245, %v8257
          %v8259 = vpop.f32.mrf.mxu0
          %8260 = vdwg.mxu0
          %8261 = vmatpush.bf16.msra.mxu0 %v7931
          %8262 = vmatpush.bf16.msra.mxu0 %v7927
          %8263 = vmatpush.bf16.msra.mxu0 %v7923
          %8264 = vmatpush.bf16.msra.mxu0 %v7919
          %8265 = vmatpush.bf16.msra.mxu0 %v7915
          %8266 = vmatpush.bf16.msra.mxu0 %v7911
          %8267 = vmatpush.bf16.msra.mxu0 %v7907
          %8268 = vmatpush.bf16.msra.mxu0 %v7903
          %8269 = vmatmul.bf16.gmra.mxu0 %v7373
          %v8270 = vpop.f32.mrf.mxu0
          %v8271 = vadd.f32 %v7511, %v8270
          %v8272 = vpop.f32.mrf.mxu0
          %8273 = vdwg.mxu0
          %8274 = vmatpush.bf16.msra.mxu0 %v7963
          %8275 = vmatpush.bf16.msra.mxu0 %v7959
          %8276 = vmatpush.bf16.msra.mxu0 %v7955
          %8277 = vmatpush.bf16.msra.mxu0 %v7951
          %8278 = vmatpush.bf16.msra.mxu0 %v7947
          %8279 = vmatpush.bf16.msra.mxu0 %v7943
          %8280 = vmatpush.bf16.msra.mxu0 %v7939
          %8281 = vmatpush.bf16.msra.mxu0 %v7935
          %8282 = vmatmul.bf16.gmra.mxu0 %v7374
          %v8283 = vpop.f32.mrf.mxu0
          %v8284 = vadd.f32 %v8271, %v8283
          %v8285 = vpop.f32.mrf.mxu0
          %8286 = vdwg.mxu0
          %8287 = vmatpush.bf16.msra.mxu0 %v7995
          %8288 = vmatpush.bf16.msra.mxu0 %v7991
          %8289 = vmatpush.bf16.msra.mxu0 %v7987
          %8290 = vmatpush.bf16.msra.mxu0 %v7983
          %8291 = vmatpush.bf16.msra.mxu0 %v7979
          %8292 = vmatpush.bf16.msra.mxu0 %v7975
          %8293 = vmatpush.bf16.msra.mxu0 %v7971
          %8294 = vmatpush.bf16.msra.mxu0 %v7967
          %8295 = vmatmul.bf16.gmra.mxu0 %v7375
          %v8296 = vpop.f32.mrf.mxu0
          %v8297 = vadd.f32 %v8284, %v8296
          %v8298 = vpop.f32.mrf.mxu0
          %8299 = vdwg.mxu0
          %8300 = vmatpush.bf16.msra.mxu0 %v8027
          %8301 = vmatpush.bf16.msra.mxu0 %v8023
          %8302 = vmatpush.bf16.msra.mxu0 %v8019
          %8303 = vmatpush.bf16.msra.mxu0 %v8015
          %8304 = vmatpush.bf16.msra.mxu0 %v8011
          %8305 = vmatpush.bf16.msra.mxu0 %v8007
          %8306 = vmatpush.bf16.msra.mxu0 %v8003
          %8307 = vmatpush.bf16.msra.mxu0 %v7999
          %8308 = vmatmul.bf16.gmra.mxu0 %v7376
          %v8309 = vpop.f32.mrf.mxu0
          %v8310 = vadd.f32 %v8297, %v8309
          %v8311 = vpop.f32.mrf.mxu0
          %8312 = vdwg.mxu0
          %8313 = vmatpush.bf16.msra.mxu0 %v7932
          %8314 = vmatpush.bf16.msra.mxu0 %v7928
          %8315 = vmatpush.bf16.msra.mxu0 %v7924
          %8316 = vmatpush.bf16.msra.mxu0 %v7920
          %8317 = vmatpush.bf16.msra.mxu0 %v7916
          %8318 = vmatpush.bf16.msra.mxu0 %v7912
          %8319 = vmatpush.bf16.msra.mxu0 %v7908
          %8320 = vmatpush.bf16.msra.mxu0 %v7904
          %8321 = vmatmul.bf16.gmra.mxu0 %v7373
          %v8322 = vpop.f32.mrf.mxu0
          %v8323 = vadd.f32 %v7512, %v8322
          %v8324 = vpop.f32.mrf.mxu0
          %8325 = vdwg.mxu0
          %8326 = vmatpush.bf16.msra.mxu0 %v7964
          %8327 = vmatpush.bf16.msra.mxu0 %v7960
          %8328 = vmatpush.bf16.msra.mxu0 %v7956
          %8329 = vmatpush.bf16.msra.mxu0 %v7952
          %8330 = vmatpush.bf16.msra.mxu0 %v7948
          %8331 = vmatpush.bf16.msra.mxu0 %v7944
          %8332 = vmatpush.bf16.msra.mxu0 %v7940
          %8333 = vmatpush.bf16.msra.mxu0 %v7936
          %8334 = vmatmul.bf16.gmra.mxu0 %v7374
          %v8335 = vpop.f32.mrf.mxu0
          %v8336 = vadd.f32 %v8323, %v8335
          %v8337 = vpop.f32.mrf.mxu0
          %8338 = vdwg.mxu0
          %8339 = vmatpush.bf16.msra.mxu0 %v7996
          %8340 = vmatpush.bf16.msra.mxu0 %v7992
          %8341 = vmatpush.bf16.msra.mxu0 %v7988
          %8342 = vmatpush.bf16.msra.mxu0 %v7984
          %8343 = vmatpush.bf16.msra.mxu0 %v7980
          %8344 = vmatpush.bf16.msra.mxu0 %v7976
          %8345 = vmatpush.bf16.msra.mxu0 %v7972
          %8346 = vmatpush.bf16.msra.mxu0 %v7968
          %8347 = vmatmul.bf16.gmra.mxu0 %v7375
          %v8348 = vpop.f32.mrf.mxu0
          %v8349 = vadd.f32 %v8336, %v8348
          %v8350 = vpop.f32.mrf.mxu0
          %8351 = vdwg.mxu0
          %8352 = vmatpush.bf16.msra.mxu0 %v8028
          %8353 = vmatpush.bf16.msra.mxu0 %v8024
          %8354 = vmatpush.bf16.msra.mxu0 %v8020
          %8355 = vmatpush.bf16.msra.mxu0 %v8016
          %8356 = vmatpush.bf16.msra.mxu0 %v8012
          %8357 = vmatpush.bf16.msra.mxu0 %v8008
          %8358 = vmatpush.bf16.msra.mxu0 %v8004
          %8359 = vmatpush.bf16.msra.mxu0 %v8000
          %8360 = vmatmul.bf16.gmra.mxu0 %v7376
          %v8361 = vpop.f32.mrf.mxu0
          %v8362 = vadd.f32 %v8349, %v8361
          %v8363 = vpop.f32.mrf.mxu0
          %8364 = vdwg.mxu0
          %v8365 = vpack.c.bf16 %v6226, %v6226
          %v8366 = vpack.c.bf16 %v6278, %v6278
          %v8367 = vpack.c.bf16 %v6330, %v6330
          %v8368 = vpack.c.bf16 %v6382, %v6382
          %v8369 = vld [vmem:[%s4] sm:$0xf]
          %v8370 = vld [vmem:[%s4 + $0x4] sm:$0xf]
          %v8371 = vld [vmem:[%s4 + $0x8] sm:$0xf]
          %v8372 = vld [vmem:[%s4 + $0xc] sm:$0xf]
          %v8373 = vld [vmem:[%s4 + $0x10] sm:$0xf]
          %v8374 = vld [vmem:[%s4 + $0x14] sm:$0xf]
          %v8375 = vld [vmem:[%s4 + $0x18] sm:$0xf]
          %v8376 = vld [vmem:[%s4 + $0x1c] sm:$0xf]
          %v8377 = vld [vmem:[%s4 + $0x20] sm:$0xf]
          %v8378 = vld [vmem:[%s4 + $0x24] sm:$0xf]
          %v8379 = vld [vmem:[%s4 + $0x28] sm:$0xf]
          %v8380 = vld [vmem:[%s4 + $0x2c] sm:$0xf]
          %v8381 = vld [vmem:[%s4 + $0x30] sm:$0xf]
          %v8382 = vld [vmem:[%s4 + $0x34] sm:$0xf]
          %v8383 = vld [vmem:[%s4 + $0x38] sm:$0xf]
          %v8384 = vld [vmem:[%s4 + $0x3c] sm:$0xf]
          %v8385 = vld [vmem:[%s4 + $0x40] sm:$0xf]
          %v8386 = vld [vmem:[%s4 + $0x44] sm:$0xf]
          %v8387 = vld [vmem:[%s4 + $0x48] sm:$0xf]
          %v8388 = vld [vmem:[%s4 + $0x4c] sm:$0xf]
          %v8389 = vld [vmem:[%s4 + $0x50] sm:$0xf]
          %v8390 = vld [vmem:[%s4 + $0x54] sm:$0xf]
          %v8391 = vld [vmem:[%s4 + $0x58] sm:$0xf]
          %v8392 = vld [vmem:[%s4 + $0x5c] sm:$0xf]
          %v8393 = vld [vmem:[%s4 + $0x60] sm:$0xf]
          %v8394 = vld [vmem:[%s4 + $0x64] sm:$0xf]
          %v8395 = vld [vmem:[%s4 + $0x68] sm:$0xf]
          %v8396 = vld [vmem:[%s4 + $0x6c] sm:$0xf]
          %v8397 = vld [vmem:[%s4 + $0x70] sm:$0xf]
          %v8398 = vld [vmem:[%s4 + $0x74] sm:$0xf]
          %v8399 = vld [vmem:[%s4 + $0x78] sm:$0xf]
          %v8400 = vld [vmem:[%s4 + $0x7c] sm:$0xf]
          %v8401 = vld [vmem:[%s4 + $0x80] sm:$0xf]
          %v8402 = vld [vmem:[%s4 + $0x84] sm:$0xf]
          %v8403 = vld [vmem:[%s4 + $0x88] sm:$0xf]
          %v8404 = vld [vmem:[%s4 + $0x8c] sm:$0xf]
          %v8405 = vld [vmem:[%s4 + $0x90] sm:$0xf]
          %v8406 = vld [vmem:[%s4 + $0x94] sm:$0xf]
          %v8407 = vld [vmem:[%s4 + $0x98] sm:$0xf]
          %v8408 = vld [vmem:[%s4 + $0x9c] sm:$0xf]
          %v8409 = vld [vmem:[%s4 + $0xa0] sm:$0xf]
          %v8410 = vld [vmem:[%s4 + $0xa4] sm:$0xf]
          %v8411 = vld [vmem:[%s4 + $0xa8] sm:$0xf]
          %v8412 = vld [vmem:[%s4 + $0xac] sm:$0xf]
          %v8413 = vld [vmem:[%s4 + $0xb0] sm:$0xf]
          %v8414 = vld [vmem:[%s4 + $0xb4] sm:$0xf]
          %v8415 = vld [vmem:[%s4 + $0xb8] sm:$0xf]
          %v8416 = vld [vmem:[%s4 + $0xbc] sm:$0xf]
          %v8417 = vld [vmem:[%s4 + $0xc0] sm:$0xf]
          %v8418 = vld [vmem:[%s4 + $0xc4] sm:$0xf]
          %v8419 = vld [vmem:[%s4 + $0xc8] sm:$0xf]
          %v8420 = vld [vmem:[%s4 + $0xcc] sm:$0xf]
          %v8421 = vld [vmem:[%s4 + $0xd0] sm:$0xf]
          %v8422 = vld [vmem:[%s4 + $0xd4] sm:$0xf]
          %v8423 = vld [vmem:[%s4 + $0xd8] sm:$0xf]
          %v8424 = vld [vmem:[%s4 + $0xdc] sm:$0xf]
          %v8425 = vld [vmem:[%s4 + $0xe0] sm:$0xf]
          %v8426 = vld [vmem:[%s4 + $0xe4] sm:$0xf]
          %v8427 = vld [vmem:[%s4 + $0xe8] sm:$0xf]
          %v8428 = vld [vmem:[%s4 + $0xec] sm:$0xf]
          %v8429 = vld [vmem:[%s4 + $0xf0] sm:$0xf]
          %v8430 = vld [vmem:[%s4 + $0xf4] sm:$0xf]
          %v8431 = vld [vmem:[%s4 + $0xf8] sm:$0xf]
          %v8432 = vld [vmem:[%s4 + $0xfc] sm:$0xf]
          %v8433 = vpack.c.bf16 %v8206, %v8206
          %v8434 = vpack.c.bf16 %v8258, %v8258
          %v8435 = vpack.c.bf16 %v8310, %v8310
          %v8436 = vpack.c.bf16 %v8362, %v8362
          %v8437 = vld [vmem:[%s5] sm:$0xf]
          %v8438 = vld [vmem:[%s5 + $0x4] sm:$0xf]
          %v8439 = vld [vmem:[%s5 + $0x8] sm:$0xf]
          %v8440 = vld [vmem:[%s5 + $0xc] sm:$0xf]
          %v8441 = vld [vmem:[%s5 + $0x10] sm:$0xf]
          %v8442 = vld [vmem:[%s5 + $0x14] sm:$0xf]
          %v8443 = vld [vmem:[%s5 + $0x18] sm:$0xf]
          %v8444 = vld [vmem:[%s5 + $0x1c] sm:$0xf]
          %v8445 = vld [vmem:[%s5 + $0x20] sm:$0xf]
          %v8446 = vld [vmem:[%s5 + $0x24] sm:$0xf]
          %v8447 = vld [vmem:[%s5 + $0x28] sm:$0xf]
          %v8448 = vld [vmem:[%s5 + $0x2c] sm:$0xf]
          %v8449 = vld [vmem:[%s5 + $0x30] sm:$0xf]
          %v8450 = vld [vmem:[%s5 + $0x34] sm:$0xf]
          %v8451 = vld [vmem:[%s5 + $0x38] sm:$0xf]
          %v8452 = vld [vmem:[%s5 + $0x3c] sm:$0xf]
          %v8453 = vld [vmem:[%s5 + $0x40] sm:$0xf]
          %v8454 = vld [vmem:[%s5 + $0x44] sm:$0xf]
          %v8455 = vld [vmem:[%s5 + $0x48] sm:$0xf]
          %v8456 = vld [vmem:[%s5 + $0x4c] sm:$0xf]
          %v8457 = vld [vmem:[%s5 + $0x50] sm:$0xf]
          %v8458 = vld [vmem:[%s5 + $0x54] sm:$0xf]
          %v8459 = vld [vmem:[%s5 + $0x58] sm:$0xf]
          %v8460 = vld [vmem:[%s5 + $0x5c] sm:$0xf]
          %v8461 = vld [vmem:[%s5 + $0x60] sm:$0xf]
          %v8462 = vld [vmem:[%s5 + $0x64] sm:$0xf]
          %v8463 = vld [vmem:[%s5 + $0x68] sm:$0xf]
          %v8464 = vld [vmem:[%s5 + $0x6c] sm:$0xf]
          %v8465 = vld [vmem:[%s5 + $0x70] sm:$0xf]
          %v8466 = vld [vmem:[%s5 + $0x74] sm:$0xf]
          %v8467 = vld [vmem:[%s5 + $0x78] sm:$0xf]
          %v8468 = vld [vmem:[%s5 + $0x7c] sm:$0xf]
          %v8469 = vld [vmem:[%s5 + $0x80] sm:$0xf]
          %v8470 = vld [vmem:[%s5 + $0x84] sm:$0xf]
          %v8471 = vld [vmem:[%s5 + $0x88] sm:$0xf]
          %v8472 = vld [vmem:[%s5 + $0x8c] sm:$0xf]
          %v8473 = vld [vmem:[%s5 + $0x90] sm:$0xf]
          %v8474 = vld [vmem:[%s5 + $0x94] sm:$0xf]
          %v8475 = vld [vmem:[%s5 + $0x98] sm:$0xf]
          %v8476 = vld [vmem:[%s5 + $0x9c] sm:$0xf]
          %v8477 = vld [vmem:[%s5 + $0xa0] sm:$0xf]
          %v8478 = vld [vmem:[%s5 + $0xa4] sm:$0xf]
          %v8479 = vld [vmem:[%s5 + $0xa8] sm:$0xf]
          %v8480 = vld [vmem:[%s5 + $0xac] sm:$0xf]
          %v8481 = vld [vmem:[%s5 + $0xb0] sm:$0xf]
          %v8482 = vld [vmem:[%s5 + $0xb4] sm:$0xf]
          %v8483 = vld [vmem:[%s5 + $0xb8] sm:$0xf]
          %v8484 = vld [vmem:[%s5 + $0xbc] sm:$0xf]
          %v8485 = vld [vmem:[%s5 + $0xc0] sm:$0xf]
          %v8486 = vld [vmem:[%s5 + $0xc4] sm:$0xf]
          %v8487 = vld [vmem:[%s5 + $0xc8] sm:$0xf]
          %v8488 = vld [vmem:[%s5 + $0xcc] sm:$0xf]
          %v8489 = vld [vmem:[%s5 + $0xd0] sm:$0xf]
          %v8490 = vld [vmem:[%s5 + $0xd4] sm:$0xf]
          %v8491 = vld [vmem:[%s5 + $0xd8] sm:$0xf]
          %v8492 = vld [vmem:[%s5 + $0xdc] sm:$0xf]
          %v8493 = vld [vmem:[%s5 + $0xe0] sm:$0xf]
          %v8494 = vld [vmem:[%s5 + $0xe4] sm:$0xf]
          %v8495 = vld [vmem:[%s5 + $0xe8] sm:$0xf]
          %v8496 = vld [vmem:[%s5 + $0xec] sm:$0xf]
          %v8497 = vld [vmem:[%s5 + $0xf0] sm:$0xf]
          %v8498 = vld [vmem:[%s5 + $0xf4] sm:$0xf]
          %v8499 = vld [vmem:[%s5 + $0xf8] sm:$0xf]
          %v8500 = vld [vmem:[%s5 + $0xfc] sm:$0xf]
          %v8565 = vunpack.c.l.b16 %v8437
          %v8566 = vunpack.c.l.b16 %v8438
          %v8567 = vunpack.c.l.b16 %v8439
          %v8568 = vunpack.c.l.b16 %v8440
          %v8569 = vunpack.c.l.b16 %v8441
          %v8570 = vunpack.c.l.b16 %v8442
          %v8571 = vunpack.c.l.b16 %v8443
          %v8572 = vunpack.c.l.b16 %v8444
          %v8573 = vunpack.c.l.b16 %v8445
          %v8574 = vunpack.c.l.b16 %v8446
          %v8575 = vunpack.c.l.b16 %v8447
          %v8576 = vunpack.c.l.b16 %v8448
          %v8577 = vunpack.c.l.b16 %v8449
          %v8578 = vunpack.c.l.b16 %v8450
          %v8579 = vunpack.c.l.b16 %v8451
          %v8580 = vunpack.c.l.b16 %v8452
          %v8581 = vunpack.c.l.b16 %v8453
          %v8582 = vunpack.c.l.b16 %v8454
          %v8583 = vunpack.c.l.b16 %v8455
          %v8584 = vunpack.c.l.b16 %v8456
          %v8585 = vunpack.c.l.b16 %v8457
          %v8586 = vunpack.c.l.b16 %v8458
          %v8587 = vunpack.c.l.b16 %v8459
          %v8588 = vunpack.c.l.b16 %v8460
          %v8589 = vunpack.c.l.b16 %v8461
          %v8590 = vunpack.c.l.b16 %v8462
          %v8591 = vunpack.c.l.b16 %v8463
          %v8592 = vunpack.c.l.b16 %v8464
          %v8593 = vunpack.c.l.b16 %v8465
          %v8594 = vunpack.c.l.b16 %v8466
          %v8595 = vunpack.c.l.b16 %v8467
          %v8596 = vunpack.c.l.b16 %v8468
          %v8597 = vunpack.c.l.b16 %v8469
          %v8598 = vunpack.c.l.b16 %v8470
          %v8599 = vunpack.c.l.b16 %v8471
          %v8600 = vunpack.c.l.b16 %v8472
          %v8601 = vunpack.c.l.b16 %v8473
          %v8602 = vunpack.c.l.b16 %v8474
          %v8603 = vunpack.c.l.b16 %v8475
          %v8604 = vunpack.c.l.b16 %v8476
          %v8605 = vunpack.c.l.b16 %v8477
          %v8606 = vunpack.c.l.b16 %v8478
          %v8607 = vunpack.c.l.b16 %v8479
          %v8608 = vunpack.c.l.b16 %v8480
          %v8609 = vunpack.c.l.b16 %v8481
          %v8610 = vunpack.c.l.b16 %v8482
          %v8611 = vunpack.c.l.b16 %v8483
          %v8612 = vunpack.c.l.b16 %v8484
          %v8613 = vunpack.c.l.b16 %v8485
          %v8614 = vunpack.c.l.b16 %v8486
          %v8615 = vunpack.c.l.b16 %v8487
          %v8616 = vunpack.c.l.b16 %v8488
          %v8617 = vunpack.c.l.b16 %v8489
          %v8618 = vunpack.c.l.b16 %v8490
          %v8619 = vunpack.c.l.b16 %v8491
          %v8620 = vunpack.c.l.b16 %v8492
          %v8621 = vunpack.c.l.b16 %v8493
          %v8622 = vunpack.c.l.b16 %v8494
          %v8623 = vunpack.c.l.b16 %v8495
          %v8624 = vunpack.c.l.b16 %v8496
          %v8625 = vunpack.c.l.b16 %v8497
          %v8626 = vunpack.c.l.b16 %v8498
          %v8627 = vunpack.c.l.b16 %v8499
          %v8628 = vunpack.c.l.b16 %v8500
          %v8629 = vpack.c.b16 %v8566, %v8565
          %v8630 = vpack.c.b16 %v8568, %v8567
          %v8631 = vpack.c.b16 %v8570, %v8569
          %v8632 = vpack.c.b16 %v8572, %v8571
          %v8633 = vpack.c.b16 %v8574, %v8573
          %v8634 = vpack.c.b16 %v8576, %v8575
          %v8635 = vpack.c.b16 %v8578, %v8577
          %v8636 = vpack.c.b16 %v8580, %v8579
          %v8637 = vpack.c.b16 %v8582, %v8581
          %v8638 = vpack.c.b16 %v8584, %v8583
          %v8639 = vpack.c.b16 %v8586, %v8585
          %v8640 = vpack.c.b16 %v8588, %v8587
          %v8641 = vpack.c.b16 %v8590, %v8589
          %v8642 = vpack.c.b16 %v8592, %v8591
          %v8643 = vpack.c.b16 %v8594, %v8593
          %v8644 = vpack.c.b16 %v8596, %v8595
          %v8645 = vpack.c.b16 %v8598, %v8597
          %v8646 = vpack.c.b16 %v8600, %v8599
          %v8647 = vpack.c.b16 %v8602, %v8601
          %v8648 = vpack.c.b16 %v8604, %v8603
          %v8649 = vpack.c.b16 %v8606, %v8605
          %v8650 = vpack.c.b16 %v8608, %v8607
          %v8651 = vpack.c.b16 %v8610, %v8609
          %v8652 = vpack.c.b16 %v8612, %v8611
          %v8653 = vpack.c.b16 %v8614, %v8613
          %v8654 = vpack.c.b16 %v8616, %v8615
          %v8655 = vpack.c.b16 %v8618, %v8617
          %v8656 = vpack.c.b16 %v8620, %v8619
          %v8657 = vpack.c.b16 %v8622, %v8621
          %v8658 = vpack.c.b16 %v8624, %v8623
          %v8659 = vpack.c.b16 %v8626, %v8625
          %v8660 = vpack.c.b16 %v8628, %v8627
          %8693 = vmatpush.bf16.msra.mxu0 %v8636
          %8694 = vmatpush.bf16.msra.mxu0 %v8635
          %8695 = vmatpush.bf16.msra.mxu0 %v8634
          %8696 = vmatpush.bf16.msra.mxu0 %v8633
          %8697 = vmatpush.bf16.msra.mxu0 %v8632
          %8698 = vmatpush.bf16.msra.mxu0 %v8631
          %8699 = vmatpush.bf16.msra.mxu0 %v8630
          %8700 = vmatpush.bf16.msra.mxu0 %v8629
          %8701 = vmatmul.bf16.gmra.mxu0 %v8433
          %v8702 = vpop.f32.mrf.mxu0
          %v8703 = vadd.f32 0.0, %v8702
          %v8704 = vpop.f32.mrf.mxu0
          %8705 = vdwg.mxu0
          %8706 = vmatpush.bf16.msra.mxu0 %v8644
          %8707 = vmatpush.bf16.msra.mxu0 %v8643
          %8708 = vmatpush.bf16.msra.mxu0 %v8642
          %8709 = vmatpush.bf16.msra.mxu0 %v8641
          %8710 = vmatpush.bf16.msra.mxu0 %v8640
          %8711 = vmatpush.bf16.msra.mxu0 %v8639
          %8712 = vmatpush.bf16.msra.mxu0 %v8638
          %8713 = vmatpush.bf16.msra.mxu0 %v8637
          %8714 = vmatmul.bf16.gmra.mxu0 %v8434
          %v8715 = vpop.f32.mrf.mxu0
          %v8716 = vadd.f32 %v8703, %v8715
          %v8717 = vpop.f32.mrf.mxu0
          %8718 = vdwg.mxu0
          %8719 = vmatpush.bf16.msra.mxu0 %v8652
          %8720 = vmatpush.bf16.msra.mxu0 %v8651
          %8721 = vmatpush.bf16.msra.mxu0 %v8650
          %8722 = vmatpush.bf16.msra.mxu0 %v8649
          %8723 = vmatpush.bf16.msra.mxu0 %v8648
          %8724 = vmatpush.bf16.msra.mxu0 %v8647
          %8725 = vmatpush.bf16.msra.mxu0 %v8646
          %8726 = vmatpush.bf16.msra.mxu0 %v8645
          %8727 = vmatmul.bf16.gmra.mxu0 %v8435
          %v8728 = vpop.f32.mrf.mxu0
          %v8729 = vadd.f32 %v8716, %v8728
          %v8730 = vpop.f32.mrf.mxu0
          %8731 = vdwg.mxu0
          %8732 = vmatpush.bf16.msra.mxu0 %v8660
          %8733 = vmatpush.bf16.msra.mxu0 %v8659
          %8734 = vmatpush.bf16.msra.mxu0 %v8658
          %8735 = vmatpush.bf16.msra.mxu0 %v8657
          %8736 = vmatpush.bf16.msra.mxu0 %v8656
          %8737 = vmatpush.bf16.msra.mxu0 %v8655
          %8738 = vmatpush.bf16.msra.mxu0 %v8654
          %8739 = vmatpush.bf16.msra.mxu0 %v8653
          %8740 = vmatmul.bf16.gmra.mxu0 %v8436
          %v8741 = vpop.f32.mrf.mxu0
          %v8742 = vadd.f32 %v8729, %v8741
          %v8743 = vpop.f32.mrf.mxu0
          %8744 = vdwg.mxu0
          %v8809 = vunpack.c.l.b16 %v8369
          %v8810 = vunpack.c.l.b16 %v8370
          %v8811 = vunpack.c.l.b16 %v8371
          %v8812 = vunpack.c.l.b16 %v8372
          %v8813 = vunpack.c.l.b16 %v8373
          %v8814 = vunpack.c.l.b16 %v8374
          %v8815 = vunpack.c.l.b16 %v8375
          %v8816 = vunpack.c.l.b16 %v8376
          %v8817 = vunpack.c.l.b16 %v8377
          %v8818 = vunpack.c.l.b16 %v8378
          %v8819 = vunpack.c.l.b16 %v8379
          %v8820 = vunpack.c.l.b16 %v8380
          %v8821 = vunpack.c.l.b16 %v8381
          %v8822 = vunpack.c.l.b16 %v8382
          %v8823 = vunpack.c.l.b16 %v8383
          %v8824 = vunpack.c.l.b16 %v8384
          %v8825 = vunpack.c.l.b16 %v8385
          %v8826 = vunpack.c.l.b16 %v8386
          %v8827 = vunpack.c.l.b16 %v8387
          %v8828 = vunpack.c.l.b16 %v8388
          %v8829 = vunpack.c.l.b16 %v8389
          %v8830 = vunpack.c.l.b16 %v8390
          %v8831 = vunpack.c.l.b16 %v8391
          %v8832 = vunpack.c.l.b16 %v8392
          %v8833 = vunpack.c.l.b16 %v8393
          %v8834 = vunpack.c.l.b16 %v8394
          %v8835 = vunpack.c.l.b16 %v8395
          %v8836 = vunpack.c.l.b16 %v8396
          %v8837 = vunpack.c.l.b16 %v8397
          %v8838 = vunpack.c.l.b16 %v8398
          %v8839 = vunpack.c.l.b16 %v8399
          %v8840 = vunpack.c.l.b16 %v8400
          %v8841 = vunpack.c.l.b16 %v8401
          %v8842 = vunpack.c.l.b16 %v8402
          %v8843 = vunpack.c.l.b16 %v8403
          %v8844 = vunpack.c.l.b16 %v8404
          %v8845 = vunpack.c.l.b16 %v8405
          %v8846 = vunpack.c.l.b16 %v8406
          %v8847 = vunpack.c.l.b16 %v8407
          %v8848 = vunpack.c.l.b16 %v8408
          %v8849 = vunpack.c.l.b16 %v8409
          %v8850 = vunpack.c.l.b16 %v8410
          %v8851 = vunpack.c.l.b16 %v8411
          %v8852 = vunpack.c.l.b16 %v8412
          %v8853 = vunpack.c.l.b16 %v8413
          %v8854 = vunpack.c.l.b16 %v8414
          %v8855 = vunpack.c.l.b16 %v8415
          %v8856 = vunpack.c.l.b16 %v8416
          %v8857 = vunpack.c.l.b16 %v8417
          %v8858 = vunpack.c.l.b16 %v8418
          %v8859 = vunpack.c.l.b16 %v8419
          %v8860 = vunpack.c.l.b16 %v8420
          %v8861 = vunpack.c.l.b16 %v8421
          %v8862 = vunpack.c.l.b16 %v8422
          %v8863 = vunpack.c.l.b16 %v8423
          %v8864 = vunpack.c.l.b16 %v8424
          %v8865 = vunpack.c.l.b16 %v8425
          %v8866 = vunpack.c.l.b16 %v8426
          %v8867 = vunpack.c.l.b16 %v8427
          %v8868 = vunpack.c.l.b16 %v8428
          %v8869 = vunpack.c.l.b16 %v8429
          %v8870 = vunpack.c.l.b16 %v8430
          %v8871 = vunpack.c.l.b16 %v8431
          %v8872 = vunpack.c.l.b16 %v8432
          %v8873 = vpack.c.b16 %v8810, %v8809
          %v8874 = vpack.c.b16 %v8812, %v8811
          %v8875 = vpack.c.b16 %v8814, %v8813
          %v8876 = vpack.c.b16 %v8816, %v8815
          %v8877 = vpack.c.b16 %v8818, %v8817
          %v8878 = vpack.c.b16 %v8820, %v8819
          %v8879 = vpack.c.b16 %v8822, %v8821
          %v8880 = vpack.c.b16 %v8824, %v8823
          %v8881 = vpack.c.b16 %v8826, %v8825
          %v8882 = vpack.c.b16 %v8828, %v8827
          %v8883 = vpack.c.b16 %v8830, %v8829
          %v8884 = vpack.c.b16 %v8832, %v8831
          %v8885 = vpack.c.b16 %v8834, %v8833
          %v8886 = vpack.c.b16 %v8836, %v8835
          %v8887 = vpack.c.b16 %v8838, %v8837
          %v8888 = vpack.c.b16 %v8840, %v8839
          %v8889 = vpack.c.b16 %v8842, %v8841
          %v8890 = vpack.c.b16 %v8844, %v8843
          %v8891 = vpack.c.b16 %v8846, %v8845
          %v8892 = vpack.c.b16 %v8848, %v8847
          %v8893 = vpack.c.b16 %v8850, %v8849
          %v8894 = vpack.c.b16 %v8852, %v8851
          %v8895 = vpack.c.b16 %v8854, %v8853
          %v8896 = vpack.c.b16 %v8856, %v8855
          %v8897 = vpack.c.b16 %v8858, %v8857
          %v8898 = vpack.c.b16 %v8860, %v8859
          %v8899 = vpack.c.b16 %v8862, %v8861
          %v8900 = vpack.c.b16 %v8864, %v8863
          %v8901 = vpack.c.b16 %v8866, %v8865
          %v8902 = vpack.c.b16 %v8868, %v8867
          %v8903 = vpack.c.b16 %v8870, %v8869
          %v8904 = vpack.c.b16 %v8872, %v8871
          %8937 = vmatpush.bf16.msra.mxu0 %v8880
          %8938 = vmatpush.bf16.msra.mxu0 %v8879
          %8939 = vmatpush.bf16.msra.mxu0 %v8878
          %8940 = vmatpush.bf16.msra.mxu0 %v8877
          %8941 = vmatpush.bf16.msra.mxu0 %v8876
          %8942 = vmatpush.bf16.msra.mxu0 %v8875
          %8943 = vmatpush.bf16.msra.mxu0 %v8874
          %8944 = vmatpush.bf16.msra.mxu0 %v8873
          %8945 = vmatmul.bf16.gmra.mxu0 %v8365
          %v8946 = vpop.f32.mrf.mxu0
          %v8947 = vadd.f32 %v8742, %v8946
          %v8948 = vpop.f32.mrf.mxu0
          %8949 = vdwg.mxu0
          %8950 = vmatpush.bf16.msra.mxu0 %v8888
          %8951 = vmatpush.bf16.msra.mxu0 %v8887
          %8952 = vmatpush.bf16.msra.mxu0 %v8886
          %8953 = vmatpush.bf16.msra.mxu0 %v8885
          %8954 = vmatpush.bf16.msra.mxu0 %v8884
          %8955 = vmatpush.bf16.msra.mxu0 %v8883
          %8956 = vmatpush.bf16.msra.mxu0 %v8882
          %8957 = vmatpush.bf16.msra.mxu0 %v8881
          %8958 = vmatmul.bf16.gmra.mxu0 %v8366
          %v8959 = vpop.f32.mrf.mxu0
          %v8960 = vadd.f32 %v8947, %v8959
          %v8961 = vpop.f32.mrf.mxu0
          %8962 = vdwg.mxu0
          %8963 = vmatpush.bf16.msra.mxu0 %v8896
          %8964 = vmatpush.bf16.msra.mxu0 %v8895
          %8965 = vmatpush.bf16.msra.mxu0 %v8894
          %8966 = vmatpush.bf16.msra.mxu0 %v8893
          %8967 = vmatpush.bf16.msra.mxu0 %v8892
          %8968 = vmatpush.bf16.msra.mxu0 %v8891
          %8969 = vmatpush.bf16.msra.mxu0 %v8890
          %8970 = vmatpush.bf16.msra.mxu0 %v8889
          %8971 = vmatmul.bf16.gmra.mxu0 %v8367
          %v8972 = vpop.f32.mrf.mxu0
          %v8973 = vadd.f32 %v8960, %v8972
          %v8974 = vpop.f32.mrf.mxu0
          %8975 = vdwg.mxu0
          %8976 = vmatpush.bf16.msra.mxu0 %v8904
          %8977 = vmatpush.bf16.msra.mxu0 %v8903
          %8978 = vmatpush.bf16.msra.mxu0 %v8902
          %8979 = vmatpush.bf16.msra.mxu0 %v8901
          %8980 = vmatpush.bf16.msra.mxu0 %v8900
          %8981 = vmatpush.bf16.msra.mxu0 %v8899
          %8982 = vmatpush.bf16.msra.mxu0 %v8898
          %8983 = vmatpush.bf16.msra.mxu0 %v8897
          %8984 = vmatmul.bf16.gmra.mxu0 %v8368
          %v8985 = vpop.f32.mrf.mxu0
          %v8986 = vadd.f32 %v8973, %v8985
          %v8987 = vpop.f32.mrf.mxu0
          %8988 = vdwg.mxu0
          %v8989 = vld [vmem:[#allocation10] sm:$0x1]
          %v8991 = vperm.slane %v8989, 0
          %v8993 = vadd.f32 %v8986, %v8991
          %v8994 = vpack.c.bf16 %v8993, %v8993
          %v8995 = vld [vmem:[#allocation12] sm:$0xff]
          %v8996 = vld [vmem:[#allocation12 + $0x8] sm:$0xff]
          %v8997 = vld [vmem:[#allocation12 + $0x10] sm:$0xff]
          %v8998 = vld [vmem:[#allocation12 + $0x18] sm:$0xff]
          %v8999 = vld [vmem:[#allocation12 + $0x20] sm:$0xff]
          %v9000 = vld [vmem:[#allocation12 + $0x28] sm:$0xff]
          %v9001 = vld [vmem:[#allocation12 + $0x30] sm:$0x11]
          %v9002 = vld [vmem:[#allocation12 + $0x38] sm:$0x11]
          %v9011 = vunpack.c.l.b16 %v8995
          %v9012 = vunpack.c.h.b16 %v8995
          %v9013 = vunpack.c.l.b16 %v8996
          %v9014 = vunpack.c.h.b16 %v8996
          %v9015 = vunpack.c.l.b16 %v8997
          %v9016 = vunpack.c.h.b16 %v8997
          %v9017 = vunpack.c.l.b16 %v8998
          %v9018 = vunpack.c.h.b16 %v8998
          %v9019 = vunpack.c.l.b16 %v8999
          %v9020 = vunpack.c.h.b16 %v8999
          %v9021 = vunpack.c.l.b16 %v9000
          %v9022 = vunpack.c.h.b16 %v9000
          %v9023 = vunpack.c.l.b16 %v9001
          %v9024 = vunpack.c.h.b16 %v9001
          %v9025 = vunpack.c.l.b16 %v9002
          %v9026 = vunpack.c.h.b16 %v9002
          %v9027 = vpack.c.b16 %v9015, %v9011
          %v9028 = vpack.c.b16 %v9016, %v9012
          %v9029 = vpack.c.b16 %v9017, %v9013
          %v9030 = vpack.c.b16 %v9018, %v9014
          %v9031 = vpack.c.b16 %v9023, %v9019
          %v9032 = vpack.c.b16 %v9024, %v9020
          %v9033 = vpack.c.b16 %v9025, %v9021
          %v9034 = vpack.c.b16 %v9026, %v9022
          %vm9039 = vcmask 211968
          %v9041 = vsel %vm9039, %v8994, 0
          %vm9043 = vcmask 1044480
          %v9045 = vsel %vm9043, %v9031, 0
          %v9048 = vsel %vm9043, %v9032, 0
          %v9051 = vsel %vm9043, %v9033, 0
          %v9054 = vsel %vm9043, %v9034, 0
          %9056 = vmatpush.bf16.msra.mxu0 0
          %9057 = vmatpush.bf16.msra.mxu0 0
          %9058 = vmatpush.bf16.msra.mxu0 0
          %9059 = vmatpush.bf16.msra.mxu0 0
          %9060 = vmatpush.bf16.msra.mxu0 0
          %9061 = vmatpush.bf16.msra.mxu0 0
          %9062 = vmatpush.bf16.msra.mxu0 %v9045
          %9063 = vmatpush.bf16.msra.mxu0 %v9027
          %9064 = vmatmul.bf16.gmra.mxu0 %v9041
          %v9065 = vpop.f32.mrf.mxu0
          %v9066 = vadd.f32 0.0, %v9065
          %v9067 = vpop.f32.mrf.mxu0
          %9068 = vdwg.mxu0
          %9069 = vmatpush.bf16.msra.mxu0 0
          %9070 = vmatpush.bf16.msra.mxu0 0
          %9071 = vmatpush.bf16.msra.mxu0 0
          %9072 = vmatpush.bf16.msra.mxu0 0
          %9073 = vmatpush.bf16.msra.mxu0 0
          %9074 = vmatpush.bf16.msra.mxu0 0
          %9075 = vmatpush.bf16.msra.mxu0 %v9048
          %9076 = vmatpush.bf16.msra.mxu0 %v9028
          %9077 = vmatmul.bf16.gmra.mxu0 %v9041
          %v9078 = vpop.f32.mrf.mxu0
          %v9079 = vadd.f32 0.0, %v9078
          %v9080 = vpop.f32.mrf.mxu0
          %9081 = vdwg.mxu0
          %9082 = vmatpush.bf16.msra.mxu0 0
          %9083 = vmatpush.bf16.msra.mxu0 0
          %9084 = vmatpush.bf16.msra.mxu0 0
          %9085 = vmatpush.bf16.msra.mxu0 0
          %9086 = vmatpush.bf16.msra.mxu0 0
          %9087 = vmatpush.bf16.msra.mxu0 0
          %9088 = vmatpush.bf16.msra.mxu0 %v9051
          %9089 = vmatpush.bf16.msra.mxu0 %v9029
          %9090 = vmatmul.bf16.gmra.mxu0 %v9041
          %v9091 = vpop.f32.mrf.mxu0
          %v9092 = vadd.f32 0.0, %v9091
          %v9093 = vpop.f32.mrf.mxu0
          %9094 = vdwg.mxu0
          %9095 = vmatpush.bf16.msra.mxu0 0
          %9096 = vmatpush.bf16.msra.mxu0 0
          %9097 = vmatpush.bf16.msra.mxu0 0
          %9098 = vmatpush.bf16.msra.mxu0 0
          %9099 = vmatpush.bf16.msra.mxu0 0
          %9100 = vmatpush.bf16.msra.mxu0 0
          %9101 = vmatpush.bf16.msra.mxu0 %v9054
          %9102 = vmatpush.bf16.msra.mxu0 %v9030
          %9103 = vmatmul.bf16.gmra.mxu0 %v9041
          %v9104 = vpop.f32.mrf.mxu0
          %v9105 = vadd.f32 0.0, %v9104
          %v9106 = vpop.f32.mrf.mxu0
          %9107 = vdwg.mxu0
          %v9108 = vld [vmem:[#allocation3] sm:$0xff]
          %v9113 = vrot.slane %v9079, 6
          %v9114 = vrot.slane %v9092, 4
          %v9115 = vrot.slane %v9105, 2
          %vm9116 = vcmask 1041408
          %v9117 = vsel %vm9116, %v9066, %v9113
          %vm9118 = vcmask 1045508
          %v9119 = vsel %vm9118, %v9114, %v9115
          %vm9120 = vcmask 1043456
          %v9121 = vsel %vm9120, %v9117, %v9119
          %v9123 = vadd.f32 %v9108, %v9121
          %9124 = vst [vmem:[#allocation13] sm:$0xff] %v9123
        $region84: #{tpu_custom_call.1} parent=51 // pred_fallthru
          _
        // Predicated region
        $region85: #{tpu_custom_call.1} parent=51 // pred_check
          %p9125 = pneg %p209
        $region86: #{tpu_custom_call.1} parent=51 // pred_check_branch
          %9127 = sbr.rel (%p9125) target = $region88
        $region87: #{tpu_custom_call.1} parent=51 // pred_region
          %9129 = vsyncadd [#allocation5], 0
          %s9131 = sshll.u32 [#allocation13], 4
          %s9132 = int_to_ptr.vmem [resolvable:$true] %s9131
          %s9133 = sshll.u32 %s8, 4
          %s9134 = int_to_ptr.hbm [resolvable:$true] %s9133
          %9136 = dma.vmem_to_hbm [thread:$0]  %s9132, 128, %s9134, [#allocation5]
        $region88: #{tpu_custom_call.1} parent=51 // pred_fallthru
          _
        // Predicated region
        $region89: #{tpu_custom_call.1} parent=51 // pred_check
          %p9137 = pneg %p209
        $region90: #{tpu_custom_call.1} parent=51 // pred_check_branch
          %9139 = sbr.rel (%p9137) target = $region92
        $region91: #{tpu_custom_call.1} parent=51 // pred_region
          %9141 = dma.done [#allocation5], 128
        $region92: #{tpu_custom_call.1} parent=51 // pred_fallthru
          _
      $region52: #{tpu_custom_call.1} parent=5 // pred_fallthru
        _
      %p9142 = scmp.le.s32.totalorder 2, %s18
      // Predicated region
      $region93: #{tpu_custom_call.1} parent=5 // pred_check
        %p9143 = pneg %p9142
      $region94: #{tpu_custom_call.1} parent=5 // pred_check_branch
        %9145 = sbr.rel (%p9143) target = $region96
      $region95: #{tpu_custom_call.1} parent=5 // pred_region
        %s9146 = ssub.s32 %s18, 2
      $region96: #{tpu_custom_call.1} parent=5 // pred_fallthru
        _
    $region6: #{tpu_custom_call.1} parent=1 // loop_footer
      %s22 = sadd.s32 1, %s18
    $region7: #{tpu_custom_call.1} parent=1 // loop_footer_branch
      %17 = sbr.rel target = $region3
    $region8: #{tpu_custom_call.1} parent=1 // loop_exit
      _
    %9147 = vsyncpa [#allocation4], 1
    %s9148 = scalar_lea.sflag [#allocation4], 1
    %9149 = vsyncpa %s9148, 1
    %9150 = vsyncpa [#allocation7], 1
    %9151 = vsyncpa [#allocation11], 1
    %9152 = vsyncpa [#allocation5], 1
    %s9153 = scalar_lea.sflag [#allocation5], 1
    %9154 = vsyncpa %s9153, 1

</llo_original>
